<compile_context>
chip_gen: v7x
topology: tpu7x:2x2x1
jax: 0.10.0
libtpu: 0.0.40
codegen_flags: <defaults>
</compile_context>

<pallas_src>
import jax
import jax.numpy as jnp
import numpy as np
from jax import lax
from jax.experimental import pallas as pl
from jax.experimental.pallas import tpu as pltpu


def _mish(v):
    # mish(v) = v * tanh(softplus(v)) with a single EUP exp:
    #   n = exp(-|v|)
    #   v >= 0: tanh(softplus(v)) = (2n + 1)   / (2n^2 + 2n + 1)
    #   v <  0: tanh(softplus(v)) = (n^2 + 2n) / (n^2 + 2n + 2)
    # The divide stays exact: pl.reciprocal(approx=True) would free VALU slots
    # but risks the 2e-4 accuracy budget of this block.
    n = jnp.exp(-jnp.abs(v))
    n2 = n * n
    num = jnp.where(v >= 0.0, 2.0 * n + 1.0, n2 + 2.0 * n)
    den = jnp.where(v >= 0.0, 2.0 * n2 + 2.0 * n + 1.0, n2 + 2.0 * n + 2.0)
    return v * (num / den)


def _split_bf16(v):
    # f32 -> (hi, lo) bf16 pair with hi + lo ~= v to ~16 mantissa bits.
    hi = v.astype(jnp.bfloat16)
    lo = (v - hi.astype(jnp.float32)).astype(jnp.bfloat16)
    return hi, lo


def _make_kernel(c_in, c_out, cond_dim, t, k, block_b, n_groups, has_res,
                 eps=1e-5):
    pad = k // 2
    m = block_b * t
    gsize = c_out // n_groups
    inv_n = 1.0 / float(gsize * t)

    def mm3(a_hi, a_lo, w_hi, w_lo):
        # "bf16x3" matmul: native bf16 MXU passes, f32 accumulation.  The
        # dropped lo*lo term is ~2^-18 relative -> well inside tolerance.
        return (jnp.dot(a_hi, w_hi, preferred_element_type=jnp.float32)
                + jnp.dot(a_hi, w_lo, preferred_element_type=jnp.float32)
                + jnp.dot(a_lo, w_hi, preferred_element_type=jnp.float32))

    def conv(h2d, whi_ref, wlo_ref, b_ref, masks_ref):
        # h2d: (m, c) f32 -- block_b batch rows of t timesteps stacked on the
        # sublane axis.  Each tap = sublane roll + masked matmul; no im2col
        # operand and no sublane-misaligned slices.
        acc = b_ref[...]                                     # (1, c_out) f32
        for kk in range(k):
            d = kk - pad                                     # temporal offset
            if d == 0:
                shifted = h2d
            else:
                shifted = pltpu.roll(h2d, (-d) % m, axis=0)  # row i <- row i+d
            s_hi, s_lo = _split_bf16(shifted)
            contrib = mm3(s_hi, s_lo, whi_ref[kk], wlo_ref[kk])
            if d != 0:
                contrib = contrib * masks_ref[kk]            # zero padded rows
            acc = acc + contrib
        return acc                                           # (m, c_out) f32

    def gnorm(h2d, sel, selt, gamma, beta):
        # Per-(row, group) statistics batched across block_b rows via a
        # (C, G) one-hot selector; two-pass variance for numerical safety.
        h3 = h2d.reshape(block_b, t, c_out)
        colsum = jnp.sum(h3, axis=1)                                  # (bb, C)
        mean_g = jnp.dot(colsum, sel,
                         preferred_element_type=jnp.float32) * inv_n  # (bb, G)
        mean_c = jnp.dot(mean_g, selt,
                         preferred_element_type=jnp.float32)          # (bb, C)
        centered = h3 - mean_c[:, None, :]
        colsq = jnp.sum(centered * centered, axis=1)                  # (bb, C)
        var_g = jnp.dot(colsq, sel,
                        preferred_element_type=jnp.float32) * inv_n
        var_c = jnp.dot(var_g, selt, preferred_element_type=jnp.float32)
        inv_std = lax.rsqrt(var_c + eps)
        return centered * inv_std[:, None, :] * gamma + beta          # (bb,t,C)

    def kernel(x_ref, cond_ref, masks_ref,
               w1h_ref, w1l_ref, b1_ref, g1w_ref, g1b_ref,
               wsc_ref, wbc_ref, bsc_ref, bbc_ref,
               w2h_ref, w2l_ref, b2_ref, g2w_ref, g2b_ref,
               *rest):
        if has_res:
            wrh_ref, wrl_ref, br_ref, sel_ref, selt_ref, out_ref = rest
        else:
            sel_ref, selt_ref, out_ref = rest

        sel = sel_ref[...]
        selt = selt_ref[...]
        x2 = x_ref[...].astype(jnp.float32)                  # (m, c_in)

        # ---- block 0: conv (K masked-roll taps) -> GroupNorm -> Mish -------
        h = conv(x2, w1h_ref, w1l_ref, b1_ref, masks_ref)
        h3 = _mish(gnorm(h, sel, selt, g1w_ref[...], g1b_ref[...]))

        # ---- FiLM conditioning: Mish -> Linear (pre-split scale / bias) ----
        cm = _mish(cond_ref[...].reshape(block_b, cond_dim).astype(jnp.float32))
        scale = jnp.dot(cm, wsc_ref[...],
                        preferred_element_type=jnp.float32) + bsc_ref[...]
        fbias = jnp.dot(cm, wbc_ref[...],
                        preferred_element_type=jnp.float32) + bbc_ref[...]
        h3 = scale[:, None, :] * h3 + fbias[:, None, :]

        # ---- block 1: conv -> GroupNorm -> Mish -----------------------------
        h2 = conv(h3.reshape(m, c_out), w2h_ref, w2l_ref, b2_ref, masks_ref)
        o3 = _mish(gnorm(h2, sel, selt, g2w_ref[...], g2b_ref[...]))

        # ---- residual: 1x1 conv, or identity shortcut (no matmul) ----------
        if has_res:
            x_hi, x_lo = _split_bf16(x2)
            res = mm3(x_hi, x_lo, wrh_ref[...], wrl_ref[...]) + br_ref[...]
        else:
            res = x2

        out_ref[...] = (o3.reshape(m, c_out) + res).astype(out_ref.dtype)

    return kernel


def _pick_block_b(batch, t):
    # Biggest block that (a) divides B, (b) keeps block_b*T a multiple of 8
    # sublanes (or the whole batch), (c) prefers an even step count >= 2 so
    # both v7x TensorCores stay fed, (d) puts block_b*T near MXU-friendly M.
    cands = [bb for bb in range(1, batch + 1)
             if batch % bb == 0 and ((bb * t) % 8 == 0 or bb == batch)]
    if not cands:
        return batch
    target_m = 256

    def key(bb):
        steps = batch // bb
        pref = 0 if (steps >= 2 and steps % 2 == 0) else (1 if steps >= 2 else 2)
        return (pref, abs(bb * t - target_m))

    return min(cands, key=key)


def conditional_residual_block_1d(x, cond, params, *, n_groups=8,
                                  kernel_size=3, block_b=None):
    B, c_in, t = x.shape
    cond_dim = cond.shape[1]
    c_out = int(params["b1"].shape[0])
    k = kernel_size
    assert c_out % n_groups == 0
    gsize = c_out // n_groups
    has_res = "wr" in params
    if not has_res:
        # PyTorch only takes the identity shortcut when channel counts match.
        assert c_in == c_out, "identity residual requires c_in == c_out"

    if block_b is None:
        block_b = _pick_block_b(B, t)
    assert B % block_b == 0
    m = block_b * t
    assert (m % 8 == 0) or (block_b == B), \
        "block_b * T must be a multiple of 8 (sublane tiling)"

    # ---------------- host-side layout plumbing ------------------------------
    # batch*time -> sublanes (M axis), channels -> lanes.
    x_flat = jnp.transpose(x, (0, 2, 1)).reshape(B * t, c_in)
    cond3 = cond.reshape(B, 1, cond_dim)

    # Per-tap conv matrices (K, c_in, c_out), pre-split into bf16 hi/lo pairs.
    w1h, w1l = _split_bf16(jnp.transpose(params["w1"], (2, 1, 0))
                           .astype(jnp.float32))
    w2h, w2l = _split_bf16(jnp.transpose(params["w2"], (2, 1, 0))
                           .astype(jnp.float32))
    b1 = params["b1"].reshape(1, c_out).astype(jnp.float32)
    b2 = params["b2"].reshape(1, c_out).astype(jnp.float32)
    g1w = params["gn1_w"].reshape(1, c_out).astype(jnp.float32)
    g1b = params["gn1_b"].reshape(1, c_out).astype(jnp.float32)
    g2w = params["gn2_w"].reshape(1, c_out).astype(jnp.float32)
    g2b = params["gn2_b"].reshape(1, c_out).astype(jnp.float32)
    # FiLM linear pre-split into scale / bias halves (no in-kernel lane split).
    wl = params["wl"].astype(jnp.float32)                    # (2*c_out, cond)
    bl = params["bl"].astype(jnp.float32)
    wsc = jnp.transpose(wl[:c_out], (1, 0))                  # (cond, c_out)
    wbc = jnp.transpose(wl[c_out:], (1, 0))
    bsc = bl[:c_out].reshape(1, c_out)
    bbc = bl[c_out:].reshape(1, c_out)

    weights = [w1h, w1l, b1, g1w, g1b, wsc, wbc, bsc, bbc,
               w2h, w2l, b2, g2w, g2b]
    if has_res:
        wr = jnp.transpose(params["wr"][:, :, 0], (1, 0)).astype(jnp.float32)
        wrh, wrl = _split_bf16(wr)
        br = params["br"].reshape(1, c_out).astype(jnp.float32)
        weights += [wrh, wrl, br]

    # GroupNorm one-hot channel->group selector and its transpose: 2*C*G
    # floats instead of a CxC averaging matrix.
    grp = np.arange(c_out) // gsize
    sel_np = (grp[:, None] == np.arange(n_groups)[None, :]).astype(np.float32)
    weights += [jnp.asarray(sel_np), jnp.asarray(np.ascontiguousarray(sel_np.T))]

    # Per-tap row-validity masks for the rolled conv operands (zero padding at
    # each batch row's temporal edges); identical for every grid step.
    pad = k // 2
    pos = np.arange(m) % t
    mask_np = np.stack(
        [((pos + (kk - pad) >= 0) & (pos + (kk - pad) < t))
         .astype(np.float32).reshape(m, 1) for kk in range(k)])
    masks = jnp.asarray(mask_np)                             # (k, m, 1)

    resident = [masks] + weights                             # constant per step
    kern = _make_kernel(c_in, c_out, cond_dim, t, k, block_b, n_groups, has_res)

    # ---------------- cost estimate & VMEM budget ----------------------------
    def _nbytes(a):
        return int(a.size) * jnp.dtype(a.dtype).itemsize

    out_itemsize = jnp.dtype(x.dtype).itemsize
    flops = (2 * B * t * c_out * k * (c_in + c_out)
             + (2 * B * t * c_in * c_out if has_res else 0)
             + 4 * B * cond_dim * c_out
             + 12 * B * t * c_out)
    transcendentals = 2 * B * t * c_out + B * cond_dim
    resident_bytes = sum(_nbytes(a) for a in resident)
    stream_bytes = (_nbytes(x_flat) + _nbytes(cond3)
                    + B * t * c_out * out_itemsize)
    cost = pl.CostEstimate(flops=int(flops),
                           transcendentals=int(transcendentals),
                           bytes_accessed=int(resident_bytes + stream_bytes))

    try:
        vmem_cap = int(pltpu.get_tpu_info().vmem_capacity_bytes)
    except Exception:
        vmem_cap = 64 * 2 ** 20                              # v7x-safe default
    act_block_bytes = (m * c_in * 4 + block_b * cond_dim * 4
                       + m * c_out * max(out_itemsize, 4))

    def _vmem_limit(weight_bufs):
        budget = int(1.25 * (weight_bufs * resident_bytes
                             + 2 * act_block_bytes)) + (8 << 20)
        return max(16 << 20, min(budget, int(0.85 * vmem_cap)))

    out_shape = jax.ShapeDtypeStruct((B * t, c_out), x.dtype)
    n_steps = B // block_b

    def _run(single_buffer_weights):
        def resident_spec(arr):
            zeros = (0,) * arr.ndim
            if single_buffer_weights:
                # Constant index map -> double-buffering is pure VMEM waste.
                return pl.BlockSpec(arr.shape, lambda b, _z=zeros: _z,
                                    pipeline_mode=pl.Buffered(1))
            return pl.BlockSpec(arr.shape, lambda b, _z=zeros: _z)

        grid_spec = pltpu.PrefetchScalarGridSpec(
            num_scalar_prefetch=0,
            grid=(n_steps,),
            in_specs=[
                pl.BlockSpec((m, c_in), lambda b: (b, 0)),
                pl.BlockSpec((block_b, 1, cond_dim), lambda b: (b, 0, 0)),
            ] + [resident_spec(a) for a in resident],
            out_specs=pl.BlockSpec((m, c_out), lambda b: (b, 0)),
        )
        return pl.pallas_call(
            kern,
            out_shape=out_shape,
            grid_spec=grid_spec,
            compiler_params=pltpu.CompilerParams(
                dimension_semantics=("parallel",),
                vmem_limit_bytes=_vmem_limit(1 if single_buffer_weights else 2),
            ),
            cost_estimate=cost,
        )(x_flat, cond3, *resident)

    try:
        out_flat = _run(True)
    except Exception:
        # Fallback if this jax build rejects pipeline_mode=pl.Buffered(1).
        out_flat = _run(False)

    return jnp.transpose(out_flat.reshape(B, t, c_out), (0, 2, 1))


# ---------------------------- pure-JAX reference -----------------------------
def reference(x, cond, params, n_groups=8, eps=1e-5):
    def mish(v):
        return v * jnp.tanh(jax.nn.softplus(v))

    def conv1d(inp, w, b):
        p = w.shape[2] // 2
        out = lax.conv_general_dilated(inp, w, (1,), [(p, p)],
                                       dimension_numbers=("NCH", "OIH", "NCH"))
        return out + b[None, :, None]

    def gn(v, gamma, beta):
        Bv, C, T = v.shape
        vg = v.reshape(Bv, n_groups, (C // n_groups) * T)
        mn = vg.mean(-1, keepdims=True)
        var = vg.var(-1, keepdims=True)
        vn = ((vg - mn) / jnp.sqrt(var + eps)).reshape(Bv, C, T)
        return vn * gamma[None, :, None] + beta[None, :, None]

    c_out = params["b1"].shape[0]
    out = mish(gn(conv1d(x, params["w1"], params["b1"]),
                  params["gn1_w"], params["gn1_b"]))
    embed = mish(cond) @ params["wl"].T + params["bl"]        # (B, 2*c_out)
    scale = embed[:, :c_out][:, :, None]
    bias = embed[:, c_out:][:, :, None]
    out = scale * out + bias
    out = mish(gn(conv1d(out, params["w2"], params["b2"]),
                  params["gn2_w"], params["gn2_b"]))
    res = conv1d(x, params["wr"], params["br"]) if "wr" in params else x
    return out + res


if __name__ == "__main__":
    B, C_IN, C_OUT, COND_DIM, T, K, N_GROUPS = 2, 4, 16, 8, 16, 3, 8

    key = jax.random.PRNGKey(0)
    keys = jax.random.split(key, 14)
    s = 0.3
    params = {
        "w1": jax.random.normal(keys[0], (C_OUT, C_IN, K), jnp.float32) * s,
        "b1": jax.random.normal(keys[1], (C_OUT,), jnp.float32) * s,
        "gn1_w": 1.0 + 0.1 * jax.random.normal(keys[2], (C_OUT,), jnp.float32),
        "gn1_b": 0.1 * jax.random.normal(keys[3], (C_OUT,), jnp.float32),
        "w2": jax.random.normal(keys[4], (C_OUT, C_OUT, K), jnp.float32) * s,
        "b2": jax.random.normal(keys[5], (C_OUT,), jnp.float32) * s,
        "gn2_w": 1.0 + 0.1 * jax.random.normal(keys[6], (C_OUT,), jnp.float32),
        "gn2_b": 0.1 * jax.random.normal(keys[7], (C_OUT,), jnp.float32),
        "wl": jax.random.normal(keys[8], (2 * C_OUT, COND_DIM), jnp.float32) * s,
        "bl": jax.random.normal(keys[9], (2 * C_OUT,), jnp.float32) * s,
        "wr": jax.random.normal(keys[10], (C_OUT, C_IN, 1), jnp.float32) * s,
        "br": jax.random.normal(keys[11], (C_OUT,), jnp.float32) * s,
    }
    x = jax.random.normal(keys[12], (B, C_IN, T), jnp.float32)
    cond = jax.random.normal(keys[13], (B, COND_DIM), jnp.float32)

    out = conditional_residual_block_1d(x, cond, params,
                                        n_groups=N_GROUPS, kernel_size=K)
    out = jax.block_until_ready(out)
    ref = reference(x, cond, params, n_groups=N_GROUPS)
    assert out.shape == (B, C_OUT, T)
    np.testing.assert_allclose(np.asarray(out), np.asarray(ref),
                               rtol=2e-4, atol=2e-4)

    # Identity-shortcut variant (c_in == c_out -> no 1x1 residual conv).
    params_id = {kname: v for kname, v in params.items()
                 if kname not in ("wr", "br")}
    params_id["w1"] = jax.random.normal(keys[10], (C_OUT, C_OUT, K),
                                        jnp.float32) * s
    x_id = jax.random.normal(keys[11], (B, C_OUT, T), jnp.float32)
    out_id = jax.block_until_ready(
        conditional_residual_block_1d(x_id, cond, params_id,
                                      n_groups=N_GROUPS, kernel_size=K))
    ref_id = reference(x_id, cond, params_id, n_groups=N_GROUPS)
    np.testing.assert_allclose(np.asarray(out_id), np.asarray(ref_id),
                               rtol=2e-4, atol=2e-4)

    print("KERNEL_OK")
</pallas_src>

<mosaic_0001>
module attributes {stable_mosaic.version = 11 : i64} {
  func.func @kernel(%arg0: i32, %arg1: memref<16x4xf32, #tpu.memory_space<vmem>>, %arg2: memref<1x1x8xf32, #tpu.memory_space<vmem>>, %arg3: memref<3x16x1xf32, #tpu.memory_space<vmem>>, %arg4: memref<3x4x16xbf16, #tpu.memory_space<vmem>>, %arg5: memref<3x4x16xbf16, #tpu.memory_space<vmem>>, %arg6: memref<1x16xf32, #tpu.memory_space<vmem>>, %arg7: memref<1x16xf32, #tpu.memory_space<vmem>>, %arg8: memref<1x16xf32, #tpu.memory_space<vmem>>, %arg9: memref<8x16xf32, #tpu.memory_space<vmem>>, %arg10: memref<8x16xf32, #tpu.memory_space<vmem>>, %arg11: memref<1x16xf32, #tpu.memory_space<vmem>>, %arg12: memref<1x16xf32, #tpu.memory_space<vmem>>, %arg13: memref<3x16x16xbf16, #tpu.memory_space<vmem>>, %arg14: memref<3x16x16xbf16, #tpu.memory_space<vmem>>, %arg15: memref<1x16xf32, #tpu.memory_space<vmem>>, %arg16: memref<1x16xf32, #tpu.memory_space<vmem>>, %arg17: memref<1x16xf32, #tpu.memory_space<vmem>>, %arg18: memref<4x16xbf16, #tpu.memory_space<vmem>>, %arg19: memref<4x16xbf16, #tpu.memory_space<vmem>>, %arg20: memref<1x16xf32, #tpu.memory_space<vmem>>, %arg21: memref<16x8xf32, #tpu.memory_space<vmem>>, %arg22: memref<8x16xf32, #tpu.memory_space<vmem>>, %arg23: memref<16x16xf32, #tpu.memory_space<vmem>>) attributes {dimension_semantics = [#tpu.dimension_semantics<parallel>], iteration_bounds = array<i64: 2>, scalar_prefetch = 0 : i64, scratch_operands = 0 : i64, tpu.core_type = #tpu.core_type<tc>, window_params = [{transform_indices = @transform_0, window_bounds = array<i64: 16, 4>}, {transform_indices = @transform_1, window_bounds = array<i64: 1, 1, 8>}, {pipeline_mode = #tpu.pipeline_mode<synchronous>, transform_indices = @transform_2, window_bounds = array<i64: 3, 16, 1>}, {pipeline_mode = #tpu.pipeline_mode<synchronous>, transform_indices = @transform_3, window_bounds = array<i64: 3, 4, 16>}, {pipeline_mode = #tpu.pipeline_mode<synchronous>, transform_indices = @transform_4, window_bounds = array<i64: 3, 4, 16>}, {pipeline_mode = #tpu.pipeline_mode<synchronous>, transform_indices = @transform_5, window_bounds = array<i64: 1, 16>}, {pipeline_mode = #tpu.pipeline_mode<synchronous>, transform_indices = @transform_6, window_bounds = array<i64: 1, 16>}, {pipeline_mode = #tpu.pipeline_mode<synchronous>, transform_indices = @transform_7, window_bounds = array<i64: 1, 16>}, {pipeline_mode = #tpu.pipeline_mode<synchronous>, transform_indices = @transform_8, window_bounds = array<i64: 8, 16>}, {pipeline_mode = #tpu.pipeline_mode<synchronous>, transform_indices = @transform_9, window_bounds = array<i64: 8, 16>}, {pipeline_mode = #tpu.pipeline_mode<synchronous>, transform_indices = @transform_10, window_bounds = array<i64: 1, 16>}, {pipeline_mode = #tpu.pipeline_mode<synchronous>, transform_indices = @transform_11, window_bounds = array<i64: 1, 16>}, {pipeline_mode = #tpu.pipeline_mode<synchronous>, transform_indices = @transform_12, window_bounds = array<i64: 3, 16, 16>}, {pipeline_mode = #tpu.pipeline_mode<synchronous>, transform_indices = @transform_13, window_bounds = array<i64: 3, 16, 16>}, {pipeline_mode = #tpu.pipeline_mode<synchronous>, transform_indices = @transform_14, window_bounds = array<i64: 1, 16>}, {pipeline_mode = #tpu.pipeline_mode<synchronous>, transform_indices = @transform_15, window_bounds = array<i64: 1, 16>}, {pipeline_mode = #tpu.pipeline_mode<synchronous>, transform_indices = @transform_16, window_bounds = array<i64: 1, 16>}, {pipeline_mode = #tpu.pipeline_mode<synchronous>, transform_indices = @transform_17, window_bounds = array<i64: 4, 16>}, {pipeline_mode = #tpu.pipeline_mode<synchronous>, transform_indices = @transform_18, window_bounds = array<i64: 4, 16>}, {pipeline_mode = #tpu.pipeline_mode<synchronous>, transform_indices = @transform_19, window_bounds = array<i64: 1, 16>}, {pipeline_mode = #tpu.pipeline_mode<synchronous>, transform_indices = @transform_20, window_bounds = array<i64: 16, 8>}, {pipeline_mode = #tpu.pipeline_mode<synchronous>, transform_indices = @transform_21, window_bounds = array<i64: 8, 16>}, {transform_indices = @transform_22, window_bounds = array<i64: 16, 16>}]} {
    %c0 = arith.constant 0 : index
    %c0_0 = arith.constant 0 : index
    %0 = vector.load %arg21[%c0, %c0_0] : memref<16x8xf32, #tpu.memory_space<vmem>>, vector<16x8xf32>
    %c0_1 = arith.constant 0 : index
    %c0_2 = arith.constant 0 : index
    %1 = vector.load %arg22[%c0_1, %c0_2] : memref<8x16xf32, #tpu.memory_space<vmem>>, vector<8x16xf32>
    %c0_3 = arith.constant 0 : index
    %c0_4 = arith.constant 0 : index
    %2 = vector.load %arg1[%c0_3, %c0_4] : memref<16x4xf32, #tpu.memory_space<vmem>>, vector<16x4xf32>
    %c0_5 = arith.constant 0 : index
    %c0_6 = arith.constant 0 : index
    %3 = vector.load %arg6[%c0_5, %c0_6] : memref<1x16xf32, #tpu.memory_space<vmem>>, vector<1x16xf32>
    %c1_i32 = arith.constant 1 : i32
    %4 = tpu.dynamic_rotate %2 by %c1_i32 dim 0 : vector<16x4xf32>, i32 -> vector<16x4xf32>
    %5 = arith.truncf %4 : vector<16x4xf32> to vector<16x4xbf16>
    %6 = arith.extf %5 : vector<16x4xbf16> to vector<16x4xf32>
    %7 = arith.subf %4, %6 : vector<16x4xf32>
    %8 = arith.truncf %7 : vector<16x4xf32> to vector<16x4xbf16>
    %c0_7 = arith.constant 0 : index
    %c0_8 = arith.constant 0 : index
    %c0_9 = arith.constant 0 : index
    %9 = vector.load %arg4[%c0_7, %c0_8, %c0_9] : memref<3x4x16xbf16, #tpu.memory_space<vmem>>, vector<1x4x16xbf16>
    %10 = vector.shape_cast %9 : vector<1x4x16xbf16> to vector<4x16xbf16>
    %c0_10 = arith.constant 0 : index
    %c0_11 = arith.constant 0 : index
    %c0_12 = arith.constant 0 : index
    %11 = vector.load %arg5[%c0_10, %c0_11, %c0_12] : memref<3x4x16xbf16, #tpu.memory_space<vmem>>, vector<1x4x16xbf16>
    %12 = vector.shape_cast %11 : vector<1x4x16xbf16> to vector<4x16xbf16>
    %cst = arith.constant dense<0.000000e+00> : vector<16x16xf32>
    %13 = tpu.matmul %5, %10, %cst {dimension_numbers = #tpu.dot_dimension_numbers<[1], [0], [0], [1], [0, 0, 1, 1], [], []>} : vector<16x4xbf16>, vector<4x16xbf16>, vector<16x16xf32> -> vector<16x16xf32>
    %cst_13 = arith.constant dense<0.000000e+00> : vector<16x16xf32>
    %14 = tpu.matmul %5, %12, %cst_13 {dimension_numbers = #tpu.dot_dimension_numbers<[1], [0], [0], [1], [0, 0, 1, 1], [], []>} : vector<16x4xbf16>, vector<4x16xbf16>, vector<16x16xf32> -> vector<16x16xf32>
    %15 = arith.addf %13, %14 : vector<16x16xf32>
    %cst_14 = arith.constant dense<0.000000e+00> : vector<16x16xf32>
    %16 = tpu.matmul %8, %10, %cst_14 {dimension_numbers = #tpu.dot_dimension_numbers<[1], [0], [0], [1], [0, 0, 1, 1], [], []>} : vector<16x4xbf16>, vector<4x16xbf16>, vector<16x16xf32> -> vector<16x16xf32>
    %17 = arith.addf %15, %16 : vector<16x16xf32>
    %c0_15 = arith.constant 0 : index
    %c0_16 = arith.constant 0 : index
    %c0_17 = arith.constant 0 : index
    %18 = vector.load %arg3[%c0_15, %c0_16, %c0_17] : memref<3x16x1xf32, #tpu.memory_space<vmem>>, vector<1x16x1xf32>
    %19 = vector.shape_cast %18 : vector<1x16x1xf32> to vector<16x1xf32>
    %20 = vector.broadcast %19 : vector<16x1xf32> to vector<16x16xf32>
    %21 = arith.mulf %17, %20 : vector<16x16xf32>
    %22 = vector.broadcast %3 : vector<1x16xf32> to vector<16x16xf32>
    %23 = arith.addf %22, %21 : vector<16x16xf32>
    %24 = arith.truncf %2 : vector<16x4xf32> to vector<16x4xbf16>
    %25 = arith.extf %24 : vector<16x4xbf16> to vector<16x4xf32>
    %26 = arith.subf %2, %25 : vector<16x4xf32>
    %27 = arith.truncf %26 : vector<16x4xf32> to vector<16x4xbf16>
    %c1 = arith.constant 1 : index
    %c0_18 = arith.constant 0 : index
    %c0_19 = arith.constant 0 : index
    %28 = vector.load %arg4[%c1, %c0_18, %c0_19] : memref<3x4x16xbf16, #tpu.memory_space<vmem>>, vector<1x4x16xbf16>
    %29 = vector.shape_cast %28 : vector<1x4x16xbf16> to vector<4x16xbf16>
    %c1_20 = arith.constant 1 : index
    %c0_21 = arith.constant 0 : index
    %c0_22 = arith.constant 0 : index
    %30 = vector.load %arg5[%c1_20, %c0_21, %c0_22] : memref<3x4x16xbf16, #tpu.memory_space<vmem>>, vector<1x4x16xbf16>
    %31 = vector.shape_cast %30 : vector<1x4x16xbf16> to vector<4x16xbf16>
    %cst_23 = arith.constant dense<0.000000e+00> : vector<16x16xf32>
    %32 = tpu.matmul %24, %29, %cst_23 {dimension_numbers = #tpu.dot_dimension_numbers<[1], [0], [0], [1], [0, 0, 1, 1], [], []>} : vector<16x4xbf16>, vector<4x16xbf16>, vector<16x16xf32> -> vector<16x16xf32>
    %cst_24 = arith.constant dense<0.000000e+00> : vector<16x16xf32>
    %33 = tpu.matmul %24, %31, %cst_24 {dimension_numbers = #tpu.dot_dimension_numbers<[1], [0], [0], [1], [0, 0, 1, 1], [], []>} : vector<16x4xbf16>, vector<4x16xbf16>, vector<16x16xf32> -> vector<16x16xf32>
    %34 = arith.addf %32, %33 : vector<16x16xf32>
    %cst_25 = arith.constant dense<0.000000e+00> : vector<16x16xf32>
    %35 = tpu.matmul %27, %29, %cst_25 {dimension_numbers = #tpu.dot_dimension_numbers<[1], [0], [0], [1], [0, 0, 1, 1], [], []>} : vector<16x4xbf16>, vector<4x16xbf16>, vector<16x16xf32> -> vector<16x16xf32>
    %36 = arith.addf %34, %35 : vector<16x16xf32>
    %37 = arith.addf %23, %36 : vector<16x16xf32>
    %c15_i32 = arith.constant 15 : i32
    %38 = tpu.dynamic_rotate %2 by %c15_i32 dim 0 : vector<16x4xf32>, i32 -> vector<16x4xf32>
    %39 = arith.truncf %38 : vector<16x4xf32> to vector<16x4xbf16>
    %40 = arith.extf %39 : vector<16x4xbf16> to vector<16x4xf32>
    %41 = arith.subf %38, %40 : vector<16x4xf32>
    %42 = arith.truncf %41 : vector<16x4xf32> to vector<16x4xbf16>
    %c2 = arith.constant 2 : index
    %c0_26 = arith.constant 0 : index
    %c0_27 = arith.constant 0 : index
    %43 = vector.load %arg4[%c2, %c0_26, %c0_27] : memref<3x4x16xbf16, #tpu.memory_space<vmem>>, vector<1x4x16xbf16>
    %44 = vector.shape_cast %43 : vector<1x4x16xbf16> to vector<4x16xbf16>
    %c2_28 = arith.constant 2 : index
    %c0_29 = arith.constant 0 : index
    %c0_30 = arith.constant 0 : index
    %45 = vector.load %arg5[%c2_28, %c0_29, %c0_30] : memref<3x4x16xbf16, #tpu.memory_space<vmem>>, vector<1x4x16xbf16>
    %46 = vector.shape_cast %45 : vector<1x4x16xbf16> to vector<4x16xbf16>
    %cst_31 = arith.constant dense<0.000000e+00> : vector<16x16xf32>
    %47 = tpu.matmul %39, %44, %cst_31 {dimension_numbers = #tpu.dot_dimension_numbers<[1], [0], [0], [1], [0, 0, 1, 1], [], []>} : vector<16x4xbf16>, vector<4x16xbf16>, vector<16x16xf32> -> vector<16x16xf32>
    %cst_32 = arith.constant dense<0.000000e+00> : vector<16x16xf32>
    %48 = tpu.matmul %39, %46, %cst_32 {dimension_numbers = #tpu.dot_dimension_numbers<[1], [0], [0], [1], [0, 0, 1, 1], [], []>} : vector<16x4xbf16>, vector<4x16xbf16>, vector<16x16xf32> -> vector<16x16xf32>
    %49 = arith.addf %47, %48 : vector<16x16xf32>
    %cst_33 = arith.constant dense<0.000000e+00> : vector<16x16xf32>
    %50 = tpu.matmul %42, %44, %cst_33 {dimension_numbers = #tpu.dot_dimension_numbers<[1], [0], [0], [1], [0, 0, 1, 1], [], []>} : vector<16x4xbf16>, vector<4x16xbf16>, vector<16x16xf32> -> vector<16x16xf32>
    %51 = arith.addf %49, %50 : vector<16x16xf32>
    %c2_34 = arith.constant 2 : index
    %c0_35 = arith.constant 0 : index
    %c0_36 = arith.constant 0 : index
    %52 = vector.load %arg3[%c2_34, %c0_35, %c0_36] : memref<3x16x1xf32, #tpu.memory_space<vmem>>, vector<1x16x1xf32>
    %53 = vector.shape_cast %52 : vector<1x16x1xf32> to vector<16x1xf32>
    %54 = vector.broadcast %53 : vector<16x1xf32> to vector<16x16xf32>
    %55 = arith.mulf %51, %54 : vector<16x16xf32>
    %56 = arith.addf %37, %55 : vector<16x16xf32>
    %c0_37 = arith.constant 0 : index
    %c0_38 = arith.constant 0 : index
    %57 = vector.load %arg7[%c0_37, %c0_38] : memref<1x16xf32, #tpu.memory_space<vmem>>, vector<1x16xf32>
    %c0_39 = arith.constant 0 : index
    %c0_40 = arith.constant 0 : index
    %58 = vector.load %arg8[%c0_39, %c0_40] : memref<1x16xf32, #tpu.memory_space<vmem>>, vector<1x16xf32>
    %59 = vector.shape_cast %56 : vector<16x16xf32> to vector<1x16x16xf32>
    %cst_41 = arith.constant dense<0.000000e+00> : vector<1x16xf32>
    %60 = vector.multi_reduction <add>, %59, %cst_41 [1] : vector<1x16x16xf32> to vector<1x16xf32>
    %cst_42 = arith.constant dense<0.000000e+00> : vector<1x8xf32>
    %61 = tpu.matmul %60, %0, %cst_42 {dimension_numbers = #tpu.dot_dimension_numbers<[1], [0], [0], [1], [0, 0, 1, 1], [], []>} : vector<1x16xf32>, vector<16x8xf32>, vector<1x8xf32> -> vector<1x8xf32>
    %cst_43 = arith.constant 3.125000e-02 : f32
    %62 = vector.broadcast %cst_43 : f32 to vector<1x8xf32>
    %63 = arith.mulf %61, %62 : vector<1x8xf32>
    %cst_44 = arith.constant dense<0.000000e+00> : vector<1x16xf32>
    %64 = tpu.matmul %63, %1, %cst_44 {dimension_numbers = #tpu.dot_dimension_numbers<[1], [0], [0], [1], [0, 0, 1, 1], [], []>} : vector<1x8xf32>, vector<8x16xf32>, vector<1x16xf32> -> vector<1x16xf32>
    %65 = vector.shape_cast %64 : vector<1x16xf32> to vector<1x1x16xf32>
    %66 = vector.broadcast %65 : vector<1x1x16xf32> to vector<1x16x16xf32>
    %67 = arith.subf %59, %66 : vector<1x16x16xf32>
    %68 = arith.mulf %67, %67 : vector<1x16x16xf32>
    %cst_45 = arith.constant dense<0.000000e+00> : vector<1x16xf32>
    %69 = vector.multi_reduction <add>, %68, %cst_45 [1] : vector<1x16x16xf32> to vector<1x16xf32>
    %cst_46 = arith.constant dense<0.000000e+00> : vector<1x8xf32>
    %70 = tpu.matmul %69, %0, %cst_46 {dimension_numbers = #tpu.dot_dimension_numbers<[1], [0], [0], [1], [0, 0, 1, 1], [], []>} : vector<1x16xf32>, vector<16x8xf32>, vector<1x8xf32> -> vector<1x8xf32>
    %cst_47 = arith.constant 3.125000e-02 : f32
    %71 = vector.broadcast %cst_47 : f32 to vector<1x8xf32>
    %72 = arith.mulf %70, %71 : vector<1x8xf32>
    %cst_48 = arith.constant dense<0.000000e+00> : vector<1x16xf32>
    %73 = tpu.matmul %72, %1, %cst_48 {dimension_numbers = #tpu.dot_dimension_numbers<[1], [0], [0], [1], [0, 0, 1, 1], [], []>} : vector<1x8xf32>, vector<8x16xf32>, vector<1x16xf32> -> vector<1x16xf32>
    %cst_49 = arith.constant 9.99999974E-6 : f32
    %74 = vector.broadcast %cst_49 : f32 to vector<1x16xf32>
    %75 = arith.addf %73, %74 : vector<1x16xf32>
    %76 = math.rsqrt %75 : vector<1x16xf32>
    %77 = vector.shape_cast %76 : vector<1x16xf32> to vector<1x1x16xf32>
    %78 = vector.broadcast %77 : vector<1x1x16xf32> to vector<1x16x16xf32>
    %79 = arith.mulf %67, %78 : vector<1x16x16xf32>
    %80 = vector.shape_cast %57 : vector<1x16xf32> to vector<1x1x16xf32>
    %81 = vector.broadcast %80 : vector<1x1x16xf32> to vector<1x16x16xf32>
    %82 = arith.mulf %79, %81 : vector<1x16x16xf32>
    %83 = vector.shape_cast %58 : vector<1x16xf32> to vector<1x1x16xf32>
    %84 = vector.broadcast %83 : vector<1x1x16xf32> to vector<1x16x16xf32>
    %85 = arith.addf %82, %84 : vector<1x16x16xf32>
    %86 = math.absf %85 : vector<1x16x16xf32>
    %cst_50 = arith.constant 0.000000e+00 : f32
    %87 = vector.broadcast %cst_50 : f32 to vector<1x16x16xf32>
    %88 = arith.subf %87, %86 : vector<1x16x16xf32>
    %89 = math.exp %88 : vector<1x16x16xf32>
    %90 = arith.mulf %89, %89 : vector<1x16x16xf32>
    %cst_51 = arith.constant 0.000000e+00 : f32
    %91 = vector.broadcast %cst_51 : f32 to vector<1x16x16xf32>
    %92 = arith.cmpf oge, %85, %91 : vector<1x16x16xf32>
    %cst_52 = arith.constant 2.000000e+00 : f32
    %93 = vector.broadcast %cst_52 : f32 to vector<1x16x16xf32>
    %94 = arith.mulf %93, %89 : vector<1x16x16xf32>
    %cst_53 = arith.constant 1.000000e+00 : f32
    %95 = vector.broadcast %cst_53 : f32 to vector<1x16x16xf32>
    %96 = arith.addf %94, %95 : vector<1x16x16xf32>
    %cst_54 = arith.constant 2.000000e+00 : f32
    %97 = vector.broadcast %cst_54 : f32 to vector<1x16x16xf32>
    %98 = arith.mulf %97, %89 : vector<1x16x16xf32>
    %99 = arith.addf %90, %98 : vector<1x16x16xf32>
    %100 = arith.select %92, %96, %99 : vector<1x16x16xi1>, vector<1x16x16xf32>
    %cst_55 = arith.constant 0.000000e+00 : f32
    %101 = vector.broadcast %cst_55 : f32 to vector<1x16x16xf32>
    %102 = arith.cmpf oge, %85, %101 : vector<1x16x16xf32>
    %cst_56 = arith.constant 2.000000e+00 : f32
    %103 = vector.broadcast %cst_56 : f32 to vector<1x16x16xf32>
    %104 = arith.mulf %103, %90 : vector<1x16x16xf32>
    %cst_57 = arith.constant 2.000000e+00 : f32
    %105 = vector.broadcast %cst_57 : f32 to vector<1x16x16xf32>
    %106 = arith.mulf %105, %89 : vector<1x16x16xf32>
    %107 = arith.addf %104, %106 : vector<1x16x16xf32>
    %cst_58 = arith.constant 1.000000e+00 : f32
    %108 = vector.broadcast %cst_58 : f32 to vector<1x16x16xf32>
    %109 = arith.addf %107, %108 : vector<1x16x16xf32>
    %cst_59 = arith.constant 2.000000e+00 : f32
    %110 = vector.broadcast %cst_59 : f32 to vector<1x16x16xf32>
    %111 = arith.mulf %110, %89 : vector<1x16x16xf32>
    %112 = arith.addf %90, %111 : vector<1x16x16xf32>
    %cst_60 = arith.constant 2.000000e+00 : f32
    %113 = vector.broadcast %cst_60 : f32 to vector<1x16x16xf32>
    %114 = arith.addf %112, %113 : vector<1x16x16xf32>
    %115 = arith.select %102, %109, %114 : vector<1x16x16xi1>, vector<1x16x16xf32>
    %116 = arith.divf %100, %115 : vector<1x16x16xf32>
    %117 = arith.mulf %85, %116 : vector<1x16x16xf32>
    %c0_61 = arith.constant 0 : index
    %c0_62 = arith.constant 0 : index
    %c0_63 = arith.constant 0 : index
    %118 = vector.load %arg2[%c0_61, %c0_62, %c0_63] : memref<1x1x8xf32, #tpu.memory_space<vmem>>, vector<1x1x8xf32>
    %119 = vector.shape_cast %118 : vector<1x1x8xf32> to vector<1x8xf32>
    %120 = math.absf %119 : vector<1x8xf32>
    %cst_64 = arith.constant 0.000000e+00 : f32
    %121 = vector.broadcast %cst_64 : f32 to vector<1x8xf32>
    %122 = arith.subf %121, %120 : vector<1x8xf32>
    %123 = math.exp %122 : vector<1x8xf32>
    %124 = arith.mulf %123, %123 : vector<1x8xf32>
    %cst_65 = arith.constant 0.000000e+00 : f32
    %125 = vector.broadcast %cst_65 : f32 to vector<1x8xf32>
    %126 = arith.cmpf oge, %119, %125 : vector<1x8xf32>
    %cst_66 = arith.constant 2.000000e+00 : f32
    %127 = vector.broadcast %cst_66 : f32 to vector<1x8xf32>
    %128 = arith.mulf %127, %123 : vector<1x8xf32>
    %cst_67 = arith.constant 1.000000e+00 : f32
    %129 = vector.broadcast %cst_67 : f32 to vector<1x8xf32>
    %130 = arith.addf %128, %129 : vector<1x8xf32>
    %cst_68 = arith.constant 2.000000e+00 : f32
    %131 = vector.broadcast %cst_68 : f32 to vector<1x8xf32>
    %132 = arith.mulf %131, %123 : vector<1x8xf32>
    %133 = arith.addf %124, %132 : vector<1x8xf32>
    %134 = arith.select %126, %130, %133 : vector<1x8xi1>, vector<1x8xf32>
    %cst_69 = arith.constant 0.000000e+00 : f32
    %135 = vector.broadcast %cst_69 : f32 to vector<1x8xf32>
    %136 = arith.cmpf oge, %119, %135 : vector<1x8xf32>
    %cst_70 = arith.constant 2.000000e+00 : f32
    %137 = vector.broadcast %cst_70 : f32 to vector<1x8xf32>
    %138 = arith.mulf %137, %124 : vector<1x8xf32>
    %cst_71 = arith.constant 2.000000e+00 : f32
    %139 = vector.broadcast %cst_71 : f32 to vector<1x8xf32>
    %140 = arith.mulf %139, %123 : vector<1x8xf32>
    %141 = arith.addf %138, %140 : vector<1x8xf32>
    %cst_72 = arith.constant 1.000000e+00 : f32
    %142 = vector.broadcast %cst_72 : f32 to vector<1x8xf32>
    %143 = arith.addf %141, %142 : vector<1x8xf32>
    %cst_73 = arith.constant 2.000000e+00 : f32
    %144 = vector.broadcast %cst_73 : f32 to vector<1x8xf32>
    %145 = arith.mulf %144, %123 : vector<1x8xf32>
    %146 = arith.addf %124, %145 : vector<1x8xf32>
    %cst_74 = arith.constant 2.000000e+00 : f32
    %147 = vector.broadcast %cst_74 : f32 to vector<1x8xf32>
    %148 = arith.addf %146, %147 : vector<1x8xf32>
    %149 = arith.select %136, %143, %148 : vector<1x8xi1>, vector<1x8xf32>
    %150 = arith.divf %134, %149 : vector<1x8xf32>
    %151 = arith.mulf %119, %150 : vector<1x8xf32>
    %c0_75 = arith.constant 0 : index
    %c0_76 = arith.constant 0 : index
    %152 = vector.load %arg9[%c0_75, %c0_76] : memref<8x16xf32, #tpu.memory_space<vmem>>, vector<8x16xf32>
    %cst_77 = arith.constant dense<0.000000e+00> : vector<1x16xf32>
    %153 = tpu.matmul %151, %152, %cst_77 {dimension_numbers = #tpu.dot_dimension_numbers<[1], [0], [0], [1], [0, 0, 1, 1], [], []>} : vector<1x8xf32>, vector<8x16xf32>, vector<1x16xf32> -> vector<1x16xf32>
    %c0_78 = arith.constant 0 : index
    %c0_79 = arith.constant 0 : index
    %154 = vector.load %arg11[%c0_78, %c0_79] : memref<1x16xf32, #tpu.memory_space<vmem>>, vector<1x16xf32>
    %155 = arith.addf %153, %154 : vector<1x16xf32>
    %c0_80 = arith.constant 0 : index
    %c0_81 = arith.constant 0 : index
    %156 = vector.load %arg10[%c0_80, %c0_81] : memref<8x16xf32, #tpu.memory_space<vmem>>, vector<8x16xf32>
    %cst_82 = arith.constant dense<0.000000e+00> : vector<1x16xf32>
    %157 = tpu.matmul %151, %156, %cst_82 {dimension_numbers = #tpu.dot_dimension_numbers<[1], [0], [0], [1], [0, 0, 1, 1], [], []>} : vector<1x8xf32>, vector<8x16xf32>, vector<1x16xf32> -> vector<1x16xf32>
    %c0_83 = arith.constant 0 : index
    %c0_84 = arith.constant 0 : index
    %158 = vector.load %arg12[%c0_83, %c0_84] : memref<1x16xf32, #tpu.memory_space<vmem>>, vector<1x16xf32>
    %159 = arith.addf %157, %158 : vector<1x16xf32>
    %160 = vector.shape_cast %155 : vector<1x16xf32> to vector<1x1x16xf32>
    %161 = vector.broadcast %160 : vector<1x1x16xf32> to vector<1x16x16xf32>
    %162 = arith.mulf %161, %117 : vector<1x16x16xf32>
    %163 = vector.shape_cast %159 : vector<1x16xf32> to vector<1x1x16xf32>
    %164 = vector.broadcast %163 : vector<1x1x16xf32> to vector<1x16x16xf32>
    %165 = arith.addf %162, %164 : vector<1x16x16xf32>
    %166 = vector.shape_cast %165 : vector<1x16x16xf32> to vector<16x16xf32>
    %c0_85 = arith.constant 0 : index
    %c0_86 = arith.constant 0 : index
    %167 = vector.load %arg15[%c0_85, %c0_86] : memref<1x16xf32, #tpu.memory_space<vmem>>, vector<1x16xf32>
    %c1_i32_87 = arith.constant 1 : i32
    %168 = tpu.dynamic_rotate %166 by %c1_i32_87 dim 0 : vector<16x16xf32>, i32 -> vector<16x16xf32>
    %169 = arith.truncf %168 : vector<16x16xf32> to vector<16x16xbf16>
    %170 = arith.extf %169 : vector<16x16xbf16> to vector<16x16xf32>
    %171 = arith.subf %168, %170 : vector<16x16xf32>
    %172 = arith.truncf %171 : vector<16x16xf32> to vector<16x16xbf16>
    %c0_88 = arith.constant 0 : index
    %c0_89 = arith.constant 0 : index
    %c0_90 = arith.constant 0 : index
    %173 = vector.load %arg13[%c0_88, %c0_89, %c0_90] : memref<3x16x16xbf16, #tpu.memory_space<vmem>>, vector<1x16x16xbf16>
    %174 = vector.shape_cast %173 : vector<1x16x16xbf16> to vector<16x16xbf16>
    %c0_91 = arith.constant 0 : index
    %c0_92 = arith.constant 0 : index
    %c0_93 = arith.constant 0 : index
    %175 = vector.load %arg14[%c0_91, %c0_92, %c0_93] : memref<3x16x16xbf16, #tpu.memory_space<vmem>>, vector<1x16x16xbf16>
    %176 = vector.shape_cast %175 : vector<1x16x16xbf16> to vector<16x16xbf16>
    %cst_94 = arith.constant dense<0.000000e+00> : vector<16x16xf32>
    %177 = tpu.matmul %169, %174, %cst_94 {dimension_numbers = #tpu.dot_dimension_numbers<[1], [0], [0], [1], [0, 0, 1, 1], [], []>} : vector<16x16xbf16>, vector<16x16xbf16>, vector<16x16xf32> -> vector<16x16xf32>
    %cst_95 = arith.constant dense<0.000000e+00> : vector<16x16xf32>
    %178 = tpu.matmul %169, %176, %cst_95 {dimension_numbers = #tpu.dot_dimension_numbers<[1], [0], [0], [1], [0, 0, 1, 1], [], []>} : vector<16x16xbf16>, vector<16x16xbf16>, vector<16x16xf32> -> vector<16x16xf32>
    %179 = arith.addf %177, %178 : vector<16x16xf32>
    %cst_96 = arith.constant dense<0.000000e+00> : vector<16x16xf32>
    %180 = tpu.matmul %172, %174, %cst_96 {dimension_numbers = #tpu.dot_dimension_numbers<[1], [0], [0], [1], [0, 0, 1, 1], [], []>} : vector<16x16xbf16>, vector<16x16xbf16>, vector<16x16xf32> -> vector<16x16xf32>
    %181 = arith.addf %179, %180 : vector<16x16xf32>
    %c0_97 = arith.constant 0 : index
    %c0_98 = arith.constant 0 : index
    %c0_99 = arith.constant 0 : index
    %182 = vector.load %arg3[%c0_97, %c0_98, %c0_99] : memref<3x16x1xf32, #tpu.memory_space<vmem>>, vector<1x16x1xf32>
    %183 = vector.shape_cast %182 : vector<1x16x1xf32> to vector<16x1xf32>
    %184 = vector.broadcast %183 : vector<16x1xf32> to vector<16x16xf32>
    %185 = arith.mulf %181, %184 : vector<16x16xf32>
    %186 = vector.broadcast %167 : vector<1x16xf32> to vector<16x16xf32>
    %187 = arith.addf %186, %185 : vector<16x16xf32>
    %188 = arith.truncf %166 : vector<16x16xf32> to vector<16x16xbf16>
    %189 = arith.extf %188 : vector<16x16xbf16> to vector<16x16xf32>
    %190 = arith.subf %166, %189 : vector<16x16xf32>
    %191 = arith.truncf %190 : vector<16x16xf32> to vector<16x16xbf16>
    %c1_100 = arith.constant 1 : index
    %c0_101 = arith.constant 0 : index
    %c0_102 = arith.constant 0 : index
    %192 = vector.load %arg13[%c1_100, %c0_101, %c0_102] : memref<3x16x16xbf16, #tpu.memory_space<vmem>>, vector<1x16x16xbf16>
    %193 = vector.shape_cast %192 : vector<1x16x16xbf16> to vector<16x16xbf16>
    %c1_103 = arith.constant 1 : index
    %c0_104 = arith.constant 0 : index
    %c0_105 = arith.constant 0 : index
    %194 = vector.load %arg14[%c1_103, %c0_104, %c0_105] : memref<3x16x16xbf16, #tpu.memory_space<vmem>>, vector<1x16x16xbf16>
    %195 = vector.shape_cast %194 : vector<1x16x16xbf16> to vector<16x16xbf16>
    %cst_106 = arith.constant dense<0.000000e+00> : vector<16x16xf32>
    %196 = tpu.matmul %188, %193, %cst_106 {dimension_numbers = #tpu.dot_dimension_numbers<[1], [0], [0], [1], [0, 0, 1, 1], [], []>} : vector<16x16xbf16>, vector<16x16xbf16>, vector<16x16xf32> -> vector<16x16xf32>
    %cst_107 = arith.constant dense<0.000000e+00> : vector<16x16xf32>
    %197 = tpu.matmul %188, %195, %cst_107 {dimension_numbers = #tpu.dot_dimension_numbers<[1], [0], [0], [1], [0, 0, 1, 1], [], []>} : vector<16x16xbf16>, vector<16x16xbf16>, vector<16x16xf32> -> vector<16x16xf32>
    %198 = arith.addf %196, %197 : vector<16x16xf32>
    %cst_108 = arith.constant dense<0.000000e+00> : vector<16x16xf32>
    %199 = tpu.matmul %191, %193, %cst_108 {dimension_numbers = #tpu.dot_dimension_numbers<[1], [0], [0], [1], [0, 0, 1, 1], [], []>} : vector<16x16xbf16>, vector<16x16xbf16>, vector<16x16xf32> -> vector<16x16xf32>
    %200 = arith.addf %198, %199 : vector<16x16xf32>
    %201 = arith.addf %187, %200 : vector<16x16xf32>
    %c15_i32_109 = arith.constant 15 : i32
    %202 = tpu.dynamic_rotate %166 by %c15_i32_109 dim 0 : vector<16x16xf32>, i32 -> vector<16x16xf32>
    %203 = arith.truncf %202 : vector<16x16xf32> to vector<16x16xbf16>
    %204 = arith.extf %203 : vector<16x16xbf16> to vector<16x16xf32>
    %205 = arith.subf %202, %204 : vector<16x16xf32>
    %206 = arith.truncf %205 : vector<16x16xf32> to vector<16x16xbf16>
    %c2_110 = arith.constant 2 : index
    %c0_111 = arith.constant 0 : index
    %c0_112 = arith.constant 0 : index
    %207 = vector.load %arg13[%c2_110, %c0_111, %c0_112] : memref<3x16x16xbf16, #tpu.memory_space<vmem>>, vector<1x16x16xbf16>
    %208 = vector.shape_cast %207 : vector<1x16x16xbf16> to vector<16x16xbf16>
    %c2_113 = arith.constant 2 : index
    %c0_114 = arith.constant 0 : index
    %c0_115 = arith.constant 0 : index
    %209 = vector.load %arg14[%c2_113, %c0_114, %c0_115] : memref<3x16x16xbf16, #tpu.memory_space<vmem>>, vector<1x16x16xbf16>
    %210 = vector.shape_cast %209 : vector<1x16x16xbf16> to vector<16x16xbf16>
    %cst_116 = arith.constant dense<0.000000e+00> : vector<16x16xf32>
    %211 = tpu.matmul %203, %208, %cst_116 {dimension_numbers = #tpu.dot_dimension_numbers<[1], [0], [0], [1], [0, 0, 1, 1], [], []>} : vector<16x16xbf16>, vector<16x16xbf16>, vector<16x16xf32> -> vector<16x16xf32>
    %cst_117 = arith.constant dense<0.000000e+00> : vector<16x16xf32>
    %212 = tpu.matmul %203, %210, %cst_117 {dimension_numbers = #tpu.dot_dimension_numbers<[1], [0], [0], [1], [0, 0, 1, 1], [], []>} : vector<16x16xbf16>, vector<16x16xbf16>, vector<16x16xf32> -> vector<16x16xf32>
    %213 = arith.addf %211, %212 : vector<16x16xf32>
    %cst_118 = arith.constant dense<0.000000e+00> : vector<16x16xf32>
    %214 = tpu.matmul %206, %208, %cst_118 {dimension_numbers = #tpu.dot_dimension_numbers<[1], [0], [0], [1], [0, 0, 1, 1], [], []>} : vector<16x16xbf16>, vector<16x16xbf16>, vector<16x16xf32> -> vector<16x16xf32>
    %215 = arith.addf %213, %214 : vector<16x16xf32>
    %c2_119 = arith.constant 2 : index
    %c0_120 = arith.constant 0 : index
    %c0_121 = arith.constant 0 : index
    %216 = vector.load %arg3[%c2_119, %c0_120, %c0_121] : memref<3x16x1xf32, #tpu.memory_space<vmem>>, vector<1x16x1xf32>
    %217 = vector.shape_cast %216 : vector<1x16x1xf32> to vector<16x1xf32>
    %218 = vector.broadcast %217 : vector<16x1xf32> to vector<16x16xf32>
    %219 = arith.mulf %215, %218 : vector<16x16xf32>
    %220 = arith.addf %201, %219 : vector<16x16xf32>
    %c0_122 = arith.constant 0 : index
    %c0_123 = arith.constant 0 : index
    %221 = vector.load %arg16[%c0_122, %c0_123] : memref<1x16xf32, #tpu.memory_space<vmem>>, vector<1x16xf32>
    %c0_124 = arith.constant 0 : index
    %c0_125 = arith.constant 0 : index
    %222 = vector.load %arg17[%c0_124, %c0_125] : memref<1x16xf32, #tpu.memory_space<vmem>>, vector<1x16xf32>
    %223 = vector.shape_cast %220 : vector<16x16xf32> to vector<1x16x16xf32>
    %cst_126 = arith.constant dense<0.000000e+00> : vector<1x16xf32>
    %224 = vector.multi_reduction <add>, %223, %cst_126 [1] : vector<1x16x16xf32> to vector<1x16xf32>
    %cst_127 = arith.constant dense<0.000000e+00> : vector<1x8xf32>
    %225 = tpu.matmul %224, %0, %cst_127 {dimension_numbers = #tpu.dot_dimension_numbers<[1], [0], [0], [1], [0, 0, 1, 1], [], []>} : vector<1x16xf32>, vector<16x8xf32>, vector<1x8xf32> -> vector<1x8xf32>
    %cst_128 = arith.constant 3.125000e-02 : f32
    %226 = vector.broadcast %cst_128 : f32 to vector<1x8xf32>
    %227 = arith.mulf %225, %226 : vector<1x8xf32>
    %cst_129 = arith.constant dense<0.000000e+00> : vector<1x16xf32>
    %228 = tpu.matmul %227, %1, %cst_129 {dimension_numbers = #tpu.dot_dimension_numbers<[1], [0], [0], [1], [0, 0, 1, 1], [], []>} : vector<1x8xf32>, vector<8x16xf32>, vector<1x16xf32> -> vector<1x16xf32>
    %229 = vector.shape_cast %228 : vector<1x16xf32> to vector<1x1x16xf32>
    %230 = vector.broadcast %229 : vector<1x1x16xf32> to vector<1x16x16xf32>
    %231 = arith.subf %223, %230 : vector<1x16x16xf32>
    %232 = arith.mulf %231, %231 : vector<1x16x16xf32>
    %cst_130 = arith.constant dense<0.000000e+00> : vector<1x16xf32>
    %233 = vector.multi_reduction <add>, %232, %cst_130 [1] : vector<1x16x16xf32> to vector<1x16xf32>
    %cst_131 = arith.constant dense<0.000000e+00> : vector<1x8xf32>
    %234 = tpu.matmul %233, %0, %cst_131 {dimension_numbers = #tpu.dot_dimension_numbers<[1], [0], [0], [1], [0, 0, 1, 1], [], []>} : vector<1x16xf32>, vector<16x8xf32>, vector<1x8xf32> -> vector<1x8xf32>
    %cst_132 = arith.constant 3.125000e-02 : f32
    %235 = vector.broadcast %cst_132 : f32 to vector<1x8xf32>
    %236 = arith.mulf %234, %235 : vector<1x8xf32>
    %cst_133 = arith.constant dense<0.000000e+00> : vector<1x16xf32>
    %237 = tpu.matmul %236, %1, %cst_133 {dimension_numbers = #tpu.dot_dimension_numbers<[1], [0], [0], [1], [0, 0, 1, 1], [], []>} : vector<1x8xf32>, vector<8x16xf32>, vector<1x16xf32> -> vector<1x16xf32>
    %cst_134 = arith.constant 9.99999974E-6 : f32
    %238 = vector.broadcast %cst_134 : f32 to vector<1x16xf32>
    %239 = arith.addf %237, %238 : vector<1x16xf32>
    %240 = math.rsqrt %239 : vector<1x16xf32>
    %241 = vector.shape_cast %240 : vector<1x16xf32> to vector<1x1x16xf32>
    %242 = vector.broadcast %241 : vector<1x1x16xf32> to vector<1x16x16xf32>
    %243 = arith.mulf %231, %242 : vector<1x16x16xf32>
    %244 = vector.shape_cast %221 : vector<1x16xf32> to vector<1x1x16xf32>
    %245 = vector.broadcast %244 : vector<1x1x16xf32> to vector<1x16x16xf32>
    %246 = arith.mulf %243, %245 : vector<1x16x16xf32>
    %247 = vector.shape_cast %222 : vector<1x16xf32> to vector<1x1x16xf32>
    %248 = vector.broadcast %247 : vector<1x1x16xf32> to vector<1x16x16xf32>
    %249 = arith.addf %246, %248 : vector<1x16x16xf32>
    %250 = math.absf %249 : vector<1x16x16xf32>
    %cst_135 = arith.constant 0.000000e+00 : f32
    %251 = vector.broadcast %cst_135 : f32 to vector<1x16x16xf32>
    %252 = arith.subf %251, %250 : vector<1x16x16xf32>
    %253 = math.exp %252 : vector<1x16x16xf32>
    %254 = arith.mulf %253, %253 : vector<1x16x16xf32>
    %cst_136 = arith.constant 0.000000e+00 : f32
    %255 = vector.broadcast %cst_136 : f32 to vector<1x16x16xf32>
    %256 = arith.cmpf oge, %249, %255 : vector<1x16x16xf32>
    %cst_137 = arith.constant 2.000000e+00 : f32
    %257 = vector.broadcast %cst_137 : f32 to vector<1x16x16xf32>
    %258 = arith.mulf %257, %253 : vector<1x16x16xf32>
    %cst_138 = arith.constant 1.000000e+00 : f32
    %259 = vector.broadcast %cst_138 : f32 to vector<1x16x16xf32>
    %260 = arith.addf %258, %259 : vector<1x16x16xf32>
    %cst_139 = arith.constant 2.000000e+00 : f32
    %261 = vector.broadcast %cst_139 : f32 to vector<1x16x16xf32>
    %262 = arith.mulf %261, %253 : vector<1x16x16xf32>
    %263 = arith.addf %254, %262 : vector<1x16x16xf32>
    %264 = arith.select %256, %260, %263 : vector<1x16x16xi1>, vector<1x16x16xf32>
    %cst_140 = arith.constant 0.000000e+00 : f32
    %265 = vector.broadcast %cst_140 : f32 to vector<1x16x16xf32>
    %266 = arith.cmpf oge, %249, %265 : vector<1x16x16xf32>
    %cst_141 = arith.constant 2.000000e+00 : f32
    %267 = vector.broadcast %cst_141 : f32 to vector<1x16x16xf32>
    %268 = arith.mulf %267, %254 : vector<1x16x16xf32>
    %cst_142 = arith.constant 2.000000e+00 : f32
    %269 = vector.broadcast %cst_142 : f32 to vector<1x16x16xf32>
    %270 = arith.mulf %269, %253 : vector<1x16x16xf32>
    %271 = arith.addf %268, %270 : vector<1x16x16xf32>
    %cst_143 = arith.constant 1.000000e+00 : f32
    %272 = vector.broadcast %cst_143 : f32 to vector<1x16x16xf32>
    %273 = arith.addf %271, %272 : vector<1x16x16xf32>
    %cst_144 = arith.constant 2.000000e+00 : f32
    %274 = vector.broadcast %cst_144 : f32 to vector<1x16x16xf32>
    %275 = arith.mulf %274, %253 : vector<1x16x16xf32>
    %276 = arith.addf %254, %275 : vector<1x16x16xf32>
    %cst_145 = arith.constant 2.000000e+00 : f32
    %277 = vector.broadcast %cst_145 : f32 to vector<1x16x16xf32>
    %278 = arith.addf %276, %277 : vector<1x16x16xf32>
    %279 = arith.select %266, %273, %278 : vector<1x16x16xi1>, vector<1x16x16xf32>
    %280 = arith.divf %264, %279 : vector<1x16x16xf32>
    %281 = arith.mulf %249, %280 : vector<1x16x16xf32>
    %282 = arith.truncf %2 : vector<16x4xf32> to vector<16x4xbf16>
    %283 = arith.extf %282 : vector<16x4xbf16> to vector<16x4xf32>
    %284 = arith.subf %2, %283 : vector<16x4xf32>
    %285 = arith.truncf %284 : vector<16x4xf32> to vector<16x4xbf16>
    %c0_146 = arith.constant 0 : index
    %c0_147 = arith.constant 0 : index
    %286 = vector.load %arg18[%c0_146, %c0_147] : memref<4x16xbf16, #tpu.memory_space<vmem>>, vector<4x16xbf16>
    %c0_148 = arith.constant 0 : index
    %c0_149 = arith.constant 0 : index
    %287 = vector.load %arg19[%c0_148, %c0_149] : memref<4x16xbf16, #tpu.memory_space<vmem>>, vector<4x16xbf16>
    %cst_150 = arith.constant dense<0.000000e+00> : vector<16x16xf32>
    %288 = tpu.matmul %282, %286, %cst_150 {dimension_numbers = #tpu.dot_dimension_numbers<[1], [0], [0], [1], [0, 0, 1, 1], [], []>} : vector<16x4xbf16>, vector<4x16xbf16>, vector<16x16xf32> -> vector<16x16xf32>
    %cst_151 = arith.constant dense<0.000000e+00> : vector<16x16xf32>
    %289 = tpu.matmul %282, %287, %cst_151 {dimension_numbers = #tpu.dot_dimension_numbers<[1], [0], [0], [1], [0, 0, 1, 1], [], []>} : vector<16x4xbf16>, vector<4x16xbf16>, vector<16x16xf32> -> vector<16x16xf32>
    %290 = arith.addf %288, %289 : vector<16x16xf32>
    %cst_152 = arith.constant dense<0.000000e+00> : vector<16x16xf32>
    %291 = tpu.matmul %285, %286, %cst_152 {dimension_numbers = #tpu.dot_dimension_numbers<[1], [0], [0], [1], [0, 0, 1, 1], [], []>} : vector<16x4xbf16>, vector<4x16xbf16>, vector<16x16xf32> -> vector<16x16xf32>
    %292 = arith.addf %290, %291 : vector<16x16xf32>
    %c0_153 = arith.constant 0 : index
    %c0_154 = arith.constant 0 : index
    %293 = vector.load %arg20[%c0_153, %c0_154] : memref<1x16xf32, #tpu.memory_space<vmem>>, vector<1x16xf32>
    %294 = vector.broadcast %293 : vector<1x16xf32> to vector<16x16xf32>
    %295 = arith.addf %292, %294 : vector<16x16xf32>
    %296 = vector.shape_cast %281 : vector<1x16x16xf32> to vector<16x16xf32>
    %297 = arith.addf %296, %295 : vector<16x16xf32>
    %c0_155 = arith.constant 0 : index
    %c0_156 = arith.constant 0 : index
    %298 = vector.load %arg23[%c0_155, %c0_156] : memref<16x16xf32, #tpu.memory_space<vmem>>, vector<16x16xf32>
    tpu.vector_store %arg23[%c0_155, %c0_156], %297 {strides = array<i32>} : memref<16x16xf32, #tpu.memory_space<vmem>>, vector<16x16xf32>,
    return
  }
  func.func @transform_0(%arg0: i32) -> (i32, i32) {
    %c0_i32 = arith.constant 0 : i32
    %c0_i32_0 = arith.constant 0 : i32
    return %arg0, %c0_i32 : i32, i32
  }
  func.func @transform_1(%arg0: i32) -> (i32, i32, i32) {
    %c0_i32 = arith.constant 0 : i32
    %c0_i32_0 = arith.constant 0 : i32
    %c0_i32_1 = arith.constant 0 : i32
    return %arg0, %c0_i32, %c0_i32_0 : i32, i32, i32
  }
  func.func @transform_2(%arg0: i32) -> (i32, i32, i32) {
    %c0_i32 = arith.constant 0 : i32
    %c0_i32_0 = arith.constant 0 : i32
    %c0_i32_1 = arith.constant 0 : i32
    %c0_i32_2 = arith.constant 0 : i32
    return %c0_i32, %c0_i32_0, %c0_i32_1 : i32, i32, i32
  }
  func.func @transform_3(%arg0: i32) -> (i32, i32, i32) {
    %c0_i32 = arith.constant 0 : i32
    %c0_i32_0 = arith.constant 0 : i32
    %c0_i32_1 = arith.constant 0 : i32
    %c0_i32_2 = arith.constant 0 : i32
    return %c0_i32, %c0_i32_0, %c0_i32_1 : i32, i32, i32
  }
  func.func @transform_4(%arg0: i32) -> (i32, i32, i32) {
    %c0_i32 = arith.constant 0 : i32
    %c0_i32_0 = arith.constant 0 : i32
    %c0_i32_1 = arith.constant 0 : i32
    %c0_i32_2 = arith.constant 0 : i32
    return %c0_i32, %c0_i32_0, %c0_i32_1 : i32, i32, i32
  }
  func.func @transform_5(%arg0: i32) -> (i32, i32) {
    %c0_i32 = arith.constant 0 : i32
    %c0_i32_0 = arith.constant 0 : i32
    %c0_i32_1 = arith.constant 0 : i32
    return %c0_i32, %c0_i32_0 : i32, i32
  }
  func.func @transform_6(%arg0: i32) -> (i32, i32) {
    %c0_i32 = arith.constant 0 : i32
    %c0_i32_0 = arith.constant 0 : i32
    %c0_i32_1 = arith.constant 0 : i32
    return %c0_i32, %c0_i32_0 : i32, i32
  }
  func.func @transform_7(%arg0: i32) -> (i32, i32) {
    %c0_i32 = arith.constant 0 : i32
    %c0_i32_0 = arith.constant 0 : i32
    %c0_i32_1 = arith.constant 0 : i32
    return %c0_i32, %c0_i32_0 : i32, i32
  }
  func.func @transform_8(%arg0: i32) -> (i32, i32) {
    %c0_i32 = arith.constant 0 : i32
    %c0_i32_0 = arith.constant 0 : i32
    %c0_i32_1 = arith.constant 0 : i32
    return %c0_i32, %c0_i32_0 : i32, i32
  }
  func.func @transform_9(%arg0: i32) -> (i32, i32) {
    %c0_i32 = arith.constant 0 : i32
    %c0_i32_0 = arith.constant 0 : i32
    %c0_i32_1 = arith.constant 0 : i32
    return %c0_i32, %c0_i32_0 : i32, i32
  }
  func.func @transform_10(%arg0: i32) -> (i32, i32) {
    %c0_i32 = arith.constant 0 : i32
    %c0_i32_0 = arith.constant 0 : i32
    %c0_i32_1 = arith.constant 0 : i32
    return %c0_i32, %c0_i32_0 : i32, i32
  }
  func.func @transform_11(%arg0: i32) -> (i32, i32) {
    %c0_i32 = arith.constant 0 : i32
    %c0_i32_0 = arith.constant 0 : i32
    %c0_i32_1 = arith.constant 0 : i32
    return %c0_i32, %c0_i32_0 : i32, i32
  }
  func.func @transform_12(%arg0: i32) -> (i32, i32, i32) {
    %c0_i32 = arith.constant 0 : i32
    %c0_i32_0 = arith.constant 0 : i32
    %c0_i32_1 = arith.constant 0 : i32
    %c0_i32_2 = arith.constant 0 : i32
    return %c0_i32, %c0_i32_0, %c0_i32_1 : i32, i32, i32
  }
  func.func @transform_13(%arg0: i32) -> (i32, i32, i32) {
    %c0_i32 = arith.constant 0 : i32
    %c0_i32_0 = arith.constant 0 : i32
    %c0_i32_1 = arith.constant 0 : i32
    %c0_i32_2 = arith.constant 0 : i32
    return %c0_i32, %c0_i32_0, %c0_i32_1 : i32, i32, i32
  }
  func.func @transform_14(%arg0: i32) -> (i32, i32) {
    %c0_i32 = arith.constant 0 : i32
    %c0_i32_0 = arith.constant 0 : i32
    %c0_i32_1 = arith.constant 0 : i32
    return %c0_i32, %c0_i32_0 : i32, i32
  }
  func.func @transform_15(%arg0: i32) -> (i32, i32) {
    %c0_i32 = arith.constant 0 : i32
    %c0_i32_0 = arith.constant 0 : i32
    %c0_i32_1 = arith.constant 0 : i32
    return %c0_i32, %c0_i32_0 : i32, i32
  }
  func.func @transform_16(%arg0: i32) -> (i32, i32) {
    %c0_i32 = arith.constant 0 : i32
    %c0_i32_0 = arith.constant 0 : i32
    %c0_i32_1 = arith.constant 0 : i32
    return %c0_i32, %c0_i32_0 : i32, i32
  }
  func.func @transform_17(%arg0: i32) -> (i32, i32) {
    %c0_i32 = arith.constant 0 : i32
    %c0_i32_0 = arith.constant 0 : i32
    %c0_i32_1 = arith.constant 0 : i32
    return %c0_i32, %c0_i32_0 : i32, i32
  }
  func.func @transform_18(%arg0: i32) -> (i32, i32) {
    %c0_i32 = arith.constant 0 : i32
    %c0_i32_0 = arith.constant 0 : i32
    %c0_i32_1 = arith.constant 0 : i32
    return %c0_i32, %c0_i32_0 : i32, i32
  }
  func.func @transform_19(%arg0: i32) -> (i32, i32) {
    %c0_i32 = arith.constant 0 : i32
    %c0_i32_0 = arith.constant 0 : i32
    %c0_i32_1 = arith.constant 0 : i32
    return %c0_i32, %c0_i32_0 : i32, i32
  }
  func.func @transform_20(%arg0: i32) -> (i32, i32) {
    %c0_i32 = arith.constant 0 : i32
    %c0_i32_0 = arith.constant 0 : i32
    %c0_i32_1 = arith.constant 0 : i32
    return %c0_i32, %c0_i32_0 : i32, i32
  }
  func.func @transform_21(%arg0: i32) -> (i32, i32) {
    %c0_i32 = arith.constant 0 : i32
    %c0_i32_0 = arith.constant 0 : i32
    %c0_i32_1 = arith.constant 0 : i32
    return %c0_i32, %c0_i32_0 : i32, i32
  }
  func.func @transform_22(%arg0: i32) -> (i32, i32) {
    %c0_i32 = arith.constant 0 : i32
    %c0_i32_0 = arith.constant 0 : i32
    return %arg0, %c0_i32 : i32, i32
  }
}

module attributes {stable_mosaic.version = 11 : i64} {
  func.func @kernel(%arg0: i32, %arg1: memref<16x4xf32, #tpu.memory_space<vmem>>, %arg2: memref<1x1x8xf32, #tpu.memory_space<vmem>>, %arg3: memref<3x16x1xf32, #tpu.memory_space<vmem>>, %arg4: memref<3x4x16xbf16, #tpu.memory_space<vmem>>, %arg5: memref<3x4x16xbf16, #tpu.memory_space<vmem>>, %arg6: memref<1x16xf32, #tpu.memory_space<vmem>>, %arg7: memref<1x16xf32, #tpu.memory_space<vmem>>, %arg8: memref<1x16xf32, #tpu.memory_space<vmem>>, %arg9: memref<8x16xf32, #tpu.memory_space<vmem>>, %arg10: memref<8x16xf32, #tpu.memory_space<vmem>>, %arg11: memref<1x16xf32, #tpu.memory_space<vmem>>, %arg12: memref<1x16xf32, #tpu.memory_space<vmem>>, %arg13: memref<3x16x16xbf16, #tpu.memory_space<vmem>>, %arg14: memref<3x16x16xbf16, #tpu.memory_space<vmem>>, %arg15: memref<1x16xf32, #tpu.memory_space<vmem>>, %arg16: memref<1x16xf32, #tpu.memory_space<vmem>>, %arg17: memref<1x16xf32, #tpu.memory_space<vmem>>, %arg18: memref<4x16xbf16, #tpu.memory_space<vmem>>, %arg19: memref<4x16xbf16, #tpu.memory_space<vmem>>, %arg20: memref<1x16xf32, #tpu.memory_space<vmem>>, %arg21: memref<16x8xf32, #tpu.memory_space<vmem>>, %arg22: memref<8x16xf32, #tpu.memory_space<vmem>>, %arg23: memref<16x16xf32, #tpu.memory_space<vmem>>) attributes {dimension_semantics = [#tpu.dimension_semantics<parallel>], iteration_bounds = array<i64: 2>, scalar_prefetch = 0 : i64, scratch_operands = 0 : i64, tpu.core_type = #tpu.core_type<tc>, window_params = [{transform_indices = @transform_0, window_bounds = array<i64: 16, 4>}, {transform_indices = @transform_1, window_bounds = array<i64: 1, 1, 8>}, {pipeline_mode = #tpu.pipeline_mode<synchronous>, transform_indices = @transform_2, window_bounds = array<i64: 3, 16, 1>}, {pipeline_mode = #tpu.pipeline_mode<synchronous>, transform_indices = @transform_3, window_bounds = array<i64: 3, 4, 16>}, {pipeline_mode = #tpu.pipeline_mode<synchronous>, transform_indices = @transform_4, window_bounds = array<i64: 3, 4, 16>}, {pipeline_mode = #tpu.pipeline_mode<synchronous>, transform_indices = @transform_5, window_bounds = array<i64: 1, 16>}, {pipeline_mode = #tpu.pipeline_mode<synchronous>, transform_indices = @transform_6, window_bounds = array<i64: 1, 16>}, {pipeline_mode = #tpu.pipeline_mode<synchronous>, transform_indices = @transform_7, window_bounds = array<i64: 1, 16>}, {pipeline_mode = #tpu.pipeline_mode<synchronous>, transform_indices = @transform_8, window_bounds = array<i64: 8, 16>}, {pipeline_mode = #tpu.pipeline_mode<synchronous>, transform_indices = @transform_9, window_bounds = array<i64: 8, 16>}, {pipeline_mode = #tpu.pipeline_mode<synchronous>, transform_indices = @transform_10, window_bounds = array<i64: 1, 16>}, {pipeline_mode = #tpu.pipeline_mode<synchronous>, transform_indices = @transform_11, window_bounds = array<i64: 1, 16>}, {pipeline_mode = #tpu.pipeline_mode<synchronous>, transform_indices = @transform_12, window_bounds = array<i64: 3, 16, 16>}, {pipeline_mode = #tpu.pipeline_mode<synchronous>, transform_indices = @transform_13, window_bounds = array<i64: 3, 16, 16>}, {pipeline_mode = #tpu.pipeline_mode<synchronous>, transform_indices = @transform_14, window_bounds = array<i64: 1, 16>}, {pipeline_mode = #tpu.pipeline_mode<synchronous>, transform_indices = @transform_15, window_bounds = array<i64: 1, 16>}, {pipeline_mode = #tpu.pipeline_mode<synchronous>, transform_indices = @transform_16, window_bounds = array<i64: 1, 16>}, {pipeline_mode = #tpu.pipeline_mode<synchronous>, transform_indices = @transform_17, window_bounds = array<i64: 4, 16>}, {pipeline_mode = #tpu.pipeline_mode<synchronous>, transform_indices = @transform_18, window_bounds = array<i64: 4, 16>}, {pipeline_mode = #tpu.pipeline_mode<synchronous>, transform_indices = @transform_19, window_bounds = array<i64: 1, 16>}, {pipeline_mode = #tpu.pipeline_mode<synchronous>, transform_indices = @transform_20, window_bounds = array<i64: 16, 8>}, {pipeline_mode = #tpu.pipeline_mode<synchronous>, transform_indices = @transform_21, window_bounds = array<i64: 8, 16>}, {transform_indices = @transform_22, window_bounds = array<i64: 16, 16>}]} {
    %c0 = arith.constant 0 : index
    %c0_0 = arith.constant 0 : index
    %0 = vector.load %arg21[%c0, %c0_0] : memref<16x8xf32, #tpu.memory_space<vmem>>, vector<16x8xf32>
    %c0_1 = arith.constant 0 : index
    %c0_2 = arith.constant 0 : index
    %1 = vector.load %arg22[%c0_1, %c0_2] : memref<8x16xf32, #tpu.memory_space<vmem>>, vector<8x16xf32>
    %c0_3 = arith.constant 0 : index
    %c0_4 = arith.constant 0 : index
    %2 = vector.load %arg1[%c0_3, %c0_4] : memref<16x4xf32, #tpu.memory_space<vmem>>, vector<16x4xf32>
    %c0_5 = arith.constant 0 : index
    %c0_6 = arith.constant 0 : index
    %3 = vector.load %arg6[%c0_5, %c0_6] : memref<1x16xf32, #tpu.memory_space<vmem>>, vector<1x16xf32>
    %c1_i32 = arith.constant 1 : i32
    %4 = tpu.dynamic_rotate %2 by %c1_i32 dim 0 : vector<16x4xf32>, i32 -> vector<16x4xf32>
    %5 = arith.truncf %4 : vector<16x4xf32> to vector<16x4xbf16>
    %6 = arith.extf %5 : vector<16x4xbf16> to vector<16x4xf32>
    %7 = arith.subf %4, %6 : vector<16x4xf32>
    %8 = arith.truncf %7 : vector<16x4xf32> to vector<16x4xbf16>
    %c0_7 = arith.constant 0 : index
    %c0_8 = arith.constant 0 : index
    %c0_9 = arith.constant 0 : index
    %9 = vector.load %arg4[%c0_7, %c0_8, %c0_9] : memref<3x4x16xbf16, #tpu.memory_space<vmem>>, vector<1x4x16xbf16>
    %10 = vector.shape_cast %9 : vector<1x4x16xbf16> to vector<4x16xbf16>
    %c0_10 = arith.constant 0 : index
    %c0_11 = arith.constant 0 : index
    %c0_12 = arith.constant 0 : index
    %11 = vector.load %arg5[%c0_10, %c0_11, %c0_12] : memref<3x4x16xbf16, #tpu.memory_space<vmem>>, vector<1x4x16xbf16>
    %12 = vector.shape_cast %11 : vector<1x4x16xbf16> to vector<4x16xbf16>
    %cst = arith.constant dense<0.000000e+00> : vector<16x16xf32>
    %13 = tpu.matmul %5, %10, %cst {dimension_numbers = #tpu.dot_dimension_numbers<[1], [0], [0], [1], [0, 0, 1, 1], [], []>} : vector<16x4xbf16>, vector<4x16xbf16>, vector<16x16xf32> -> vector<16x16xf32>
    %cst_13 = arith.constant dense<0.000000e+00> : vector<16x16xf32>
    %14 = tpu.matmul %5, %12, %cst_13 {dimension_numbers = #tpu.dot_dimension_numbers<[1], [0], [0], [1], [0, 0, 1, 1], [], []>} : vector<16x4xbf16>, vector<4x16xbf16>, vector<16x16xf32> -> vector<16x16xf32>
    %15 = arith.addf %13, %14 : vector<16x16xf32>
    %cst_14 = arith.constant dense<0.000000e+00> : vector<16x16xf32>
    %16 = tpu.matmul %8, %10, %cst_14 {dimension_numbers = #tpu.dot_dimension_numbers<[1], [0], [0], [1], [0, 0, 1, 1], [], []>} : vector<16x4xbf16>, vector<4x16xbf16>, vector<16x16xf32> -> vector<16x16xf32>
    %17 = arith.addf %15, %16 : vector<16x16xf32>
    %c0_15 = arith.constant 0 : index
    %c0_16 = arith.constant 0 : index
    %c0_17 = arith.constant 0 : index
    %18 = vector.load %arg3[%c0_15, %c0_16, %c0_17] : memref<3x16x1xf32, #tpu.memory_space<vmem>>, vector<1x16x1xf32>
    %19 = vector.shape_cast %18 : vector<1x16x1xf32> to vector<16x1xf32>
    %20 = vector.broadcast %19 : vector<16x1xf32> to vector<16x16xf32>
    %21 = arith.mulf %17, %20 : vector<16x16xf32>
    %22 = vector.broadcast %3 : vector<1x16xf32> to vector<16x16xf32>
    %23 = arith.addf %22, %21 : vector<16x16xf32>
    %24 = arith.truncf %2 : vector<16x4xf32> to vector<16x4xbf16>
    %25 = arith.extf %24 : vector<16x4xbf16> to vector<16x4xf32>
    %26 = arith.subf %2, %25 : vector<16x4xf32>
    %27 = arith.truncf %26 : vector<16x4xf32> to vector<16x4xbf16>
    %c1 = arith.constant 1 : index
    %c0_18 = arith.constant 0 : index
    %c0_19 = arith.constant 0 : index
    %28 = vector.load %arg4[%c1, %c0_18, %c0_19] : memref<3x4x16xbf16, #tpu.memory_space<vmem>>, vector<1x4x16xbf16>
    %29 = vector.shape_cast %28 : vector<1x4x16xbf16> to vector<4x16xbf16>
    %c1_20 = arith.constant 1 : index
    %c0_21 = arith.constant 0 : index
    %c0_22 = arith.constant 0 : index
    %30 = vector.load %arg5[%c1_20, %c0_21, %c0_22] : memref<3x4x16xbf16, #tpu.memory_space<vmem>>, vector<1x4x16xbf16>
    %31 = vector.shape_cast %30 : vector<1x4x16xbf16> to vector<4x16xbf16>
    %cst_23 = arith.constant dense<0.000000e+00> : vector<16x16xf32>
    %32 = tpu.matmul %24, %29, %cst_23 {dimension_numbers = #tpu.dot_dimension_numbers<[1], [0], [0], [1], [0, 0, 1, 1], [], []>} : vector<16x4xbf16>, vector<4x16xbf16>, vector<16x16xf32> -> vector<16x16xf32>
    %cst_24 = arith.constant dense<0.000000e+00> : vector<16x16xf32>
    %33 = tpu.matmul %24, %31, %cst_24 {dimension_numbers = #tpu.dot_dimension_numbers<[1], [0], [0], [1], [0, 0, 1, 1], [], []>} : vector<16x4xbf16>, vector<4x16xbf16>, vector<16x16xf32> -> vector<16x16xf32>
    %34 = arith.addf %32, %33 : vector<16x16xf32>
    %cst_25 = arith.constant dense<0.000000e+00> : vector<16x16xf32>
    %35 = tpu.matmul %27, %29, %cst_25 {dimension_numbers = #tpu.dot_dimension_numbers<[1], [0], [0], [1], [0, 0, 1, 1], [], []>} : vector<16x4xbf16>, vector<4x16xbf16>, vector<16x16xf32> -> vector<16x16xf32>
    %36 = arith.addf %34, %35 : vector<16x16xf32>
    %37 = arith.addf %23, %36 : vector<16x16xf32>
    %c15_i32 = arith.constant 15 : i32
    %38 = tpu.dynamic_rotate %2 by %c15_i32 dim 0 : vector<16x4xf32>, i32 -> vector<16x4xf32>
    %39 = arith.truncf %38 : vector<16x4xf32> to vector<16x4xbf16>
    %40 = arith.extf %39 : vector<16x4xbf16> to vector<16x4xf32>
    %41 = arith.subf %38, %40 : vector<16x4xf32>
    %42 = arith.truncf %41 : vector<16x4xf32> to vector<16x4xbf16>
    %c2 = arith.constant 2 : index
    %c0_26 = arith.constant 0 : index
    %c0_27 = arith.constant 0 : index
    %43 = vector.load %arg4[%c2, %c0_26, %c0_27] : memref<3x4x16xbf16, #tpu.memory_space<vmem>>, vector<1x4x16xbf16>
    %44 = vector.shape_cast %43 : vector<1x4x16xbf16> to vector<4x16xbf16>
    %c2_28 = arith.constant 2 : index
    %c0_29 = arith.constant 0 : index
    %c0_30 = arith.constant 0 : index
    %45 = vector.load %arg5[%c2_28, %c0_29, %c0_30] : memref<3x4x16xbf16, #tpu.memory_space<vmem>>, vector<1x4x16xbf16>
    %46 = vector.shape_cast %45 : vector<1x4x16xbf16> to vector<4x16xbf16>
    %cst_31 = arith.constant dense<0.000000e+00> : vector<16x16xf32>
    %47 = tpu.matmul %39, %44, %cst_31 {dimension_numbers = #tpu.dot_dimension_numbers<[1], [0], [0], [1], [0, 0, 1, 1], [], []>} : vector<16x4xbf16>, vector<4x16xbf16>, vector<16x16xf32> -> vector<16x16xf32>
    %cst_32 = arith.constant dense<0.000000e+00> : vector<16x16xf32>
    %48 = tpu.matmul %39, %46, %cst_32 {dimension_numbers = #tpu.dot_dimension_numbers<[1], [0], [0], [1], [0, 0, 1, 1], [], []>} : vector<16x4xbf16>, vector<4x16xbf16>, vector<16x16xf32> -> vector<16x16xf32>
    %49 = arith.addf %47, %48 : vector<16x16xf32>
    %cst_33 = arith.constant dense<0.000000e+00> : vector<16x16xf32>
    %50 = tpu.matmul %42, %44, %cst_33 {dimension_numbers = #tpu.dot_dimension_numbers<[1], [0], [0], [1], [0, 0, 1, 1], [], []>} : vector<16x4xbf16>, vector<4x16xbf16>, vector<16x16xf32> -> vector<16x16xf32>
    %51 = arith.addf %49, %50 : vector<16x16xf32>
    %c2_34 = arith.constant 2 : index
    %c0_35 = arith.constant 0 : index
    %c0_36 = arith.constant 0 : index
    %52 = vector.load %arg3[%c2_34, %c0_35, %c0_36] : memref<3x16x1xf32, #tpu.memory_space<vmem>>, vector<1x16x1xf32>
    %53 = vector.shape_cast %52 : vector<1x16x1xf32> to vector<16x1xf32>
    %54 = vector.broadcast %53 : vector<16x1xf32> to vector<16x16xf32>
    %55 = arith.mulf %51, %54 : vector<16x16xf32>
    %56 = arith.addf %37, %55 : vector<16x16xf32>
    %c0_37 = arith.constant 0 : index
    %c0_38 = arith.constant 0 : index
    %57 = vector.load %arg7[%c0_37, %c0_38] : memref<1x16xf32, #tpu.memory_space<vmem>>, vector<1x16xf32>
    %c0_39 = arith.constant 0 : index
    %c0_40 = arith.constant 0 : index
    %58 = vector.load %arg8[%c0_39, %c0_40] : memref<1x16xf32, #tpu.memory_space<vmem>>, vector<1x16xf32>
    %59 = vector.shape_cast %56 : vector<16x16xf32> to vector<1x16x16xf32>
    %cst_41 = arith.constant dense<0.000000e+00> : vector<1x16xf32>
    %60 = vector.multi_reduction <add>, %59, %cst_41 [1] : vector<1x16x16xf32> to vector<1x16xf32>
    %cst_42 = arith.constant dense<0.000000e+00> : vector<1x8xf32>
    %61 = tpu.matmul %60, %0, %cst_42 {dimension_numbers = #tpu.dot_dimension_numbers<[1], [0], [0], [1], [0, 0, 1, 1], [], []>} : vector<1x16xf32>, vector<16x8xf32>, vector<1x8xf32> -> vector<1x8xf32>
    %cst_43 = arith.constant 3.125000e-02 : f32
    %62 = vector.broadcast %cst_43 : f32 to vector<1x8xf32>
    %63 = arith.mulf %61, %62 : vector<1x8xf32>
    %cst_44 = arith.constant dense<0.000000e+00> : vector<1x16xf32>
    %64 = tpu.matmul %63, %1, %cst_44 {dimension_numbers = #tpu.dot_dimension_numbers<[1], [0], [0], [1], [0, 0, 1, 1], [], []>} : vector<1x8xf32>, vector<8x16xf32>, vector<1x16xf32> -> vector<1x16xf32>
    %65 = vector.shape_cast %64 : vector<1x16xf32> to vector<1x1x16xf32>
    %66 = vector.broadcast %65 : vector<1x1x16xf32> to vector<1x16x16xf32>
    %67 = arith.subf %59, %66 : vector<1x16x16xf32>
    %68 = arith.mulf %67, %67 : vector<1x16x16xf32>
    %cst_45 = arith.constant dense<0.000000e+00> : vector<1x16xf32>
    %69 = vector.multi_reduction <add>, %68, %cst_45 [1] : vector<1x16x16xf32> to vector<1x16xf32>
    %cst_46 = arith.constant dense<0.000000e+00> : vector<1x8xf32>
    %70 = tpu.matmul %69, %0, %cst_46 {dimension_numbers = #tpu.dot_dimension_numbers<[1], [0], [0], [1], [0, 0, 1, 1], [], []>} : vector<1x16xf32>, vector<16x8xf32>, vector<1x8xf32> -> vector<1x8xf32>
    %cst_47 = arith.constant 3.125000e-02 : f32
    %71 = vector.broadcast %cst_47 : f32 to vector<1x8xf32>
    %72 = arith.mulf %70, %71 : vector<1x8xf32>
    %cst_48 = arith.constant dense<0.000000e+00> : vector<1x16xf32>
    %73 = tpu.matmul %72, %1, %cst_48 {dimension_numbers = #tpu.dot_dimension_numbers<[1], [0], [0], [1], [0, 0, 1, 1], [], []>} : vector<1x8xf32>, vector<8x16xf32>, vector<1x16xf32> -> vector<1x16xf32>
    %cst_49 = arith.constant 9.99999974E-6 : f32
    %74 = vector.broadcast %cst_49 : f32 to vector<1x16xf32>
    %75 = arith.addf %73, %74 : vector<1x16xf32>
    %76 = math.rsqrt %75 : vector<1x16xf32>
    %77 = vector.shape_cast %76 : vector<1x16xf32> to vector<1x1x16xf32>
    %78 = vector.broadcast %77 : vector<1x1x16xf32> to vector<1x16x16xf32>
    %79 = arith.mulf %67, %78 : vector<1x16x16xf32>
    %80 = vector.shape_cast %57 : vector<1x16xf32> to vector<1x1x16xf32>
    %81 = vector.broadcast %80 : vector<1x1x16xf32> to vector<1x16x16xf32>
    %82 = arith.mulf %79, %81 : vector<1x16x16xf32>
    %83 = vector.shape_cast %58 : vector<1x16xf32> to vector<1x1x16xf32>
    %84 = vector.broadcast %83 : vector<1x1x16xf32> to vector<1x16x16xf32>
    %85 = arith.addf %82, %84 : vector<1x16x16xf32>
    %86 = math.absf %85 : vector<1x16x16xf32>
    %cst_50 = arith.constant 0.000000e+00 : f32
    %87 = vector.broadcast %cst_50 : f32 to vector<1x16x16xf32>
    %88 = arith.subf %87, %86 : vector<1x16x16xf32>
    %89 = math.exp %88 : vector<1x16x16xf32>
    %90 = arith.mulf %89, %89 : vector<1x16x16xf32>
    %cst_51 = arith.constant 0.000000e+00 : f32
    %91 = vector.broadcast %cst_51 : f32 to vector<1x16x16xf32>
    %92 = arith.cmpf oge, %85, %91 : vector<1x16x16xf32>
    %cst_52 = arith.constant 2.000000e+00 : f32
    %93 = vector.broadcast %cst_52 : f32 to vector<1x16x16xf32>
    %94 = arith.mulf %93, %89 : vector<1x16x16xf32>
    %cst_53 = arith.constant 1.000000e+00 : f32
    %95 = vector.broadcast %cst_53 : f32 to vector<1x16x16xf32>
    %96 = arith.addf %94, %95 : vector<1x16x16xf32>
    %cst_54 = arith.constant 2.000000e+00 : f32
    %97 = vector.broadcast %cst_54 : f32 to vector<1x16x16xf32>
    %98 = arith.mulf %97, %89 : vector<1x16x16xf32>
    %99 = arith.addf %90, %98 : vector<1x16x16xf32>
    %100 = arith.select %92, %96, %99 : vector<1x16x16xi1>, vector<1x16x16xf32>
    %cst_55 = arith.constant 0.000000e+00 : f32
    %101 = vector.broadcast %cst_55 : f32 to vector<1x16x16xf32>
    %102 = arith.cmpf oge, %85, %101 : vector<1x16x16xf32>
    %cst_56 = arith.constant 2.000000e+00 : f32
    %103 = vector.broadcast %cst_56 : f32 to vector<1x16x16xf32>
    %104 = arith.mulf %103, %90 : vector<1x16x16xf32>
    %cst_57 = arith.constant 2.000000e+00 : f32
    %105 = vector.broadcast %cst_57 : f32 to vector<1x16x16xf32>
    %106 = arith.mulf %105, %89 : vector<1x16x16xf32>
    %107 = arith.addf %104, %106 : vector<1x16x16xf32>
    %cst_58 = arith.constant 1.000000e+00 : f32
    %108 = vector.broadcast %cst_58 : f32 to vector<1x16x16xf32>
    %109 = arith.addf %107, %108 : vector<1x16x16xf32>
    %cst_59 = arith.constant 2.000000e+00 : f32
    %110 = vector.broadcast %cst_59 : f32 to vector<1x16x16xf32>
    %111 = arith.mulf %110, %89 : vector<1x16x16xf32>
    %112 = arith.addf %90, %111 : vector<1x16x16xf32>
    %cst_60 = arith.constant 2.000000e+00 : f32
    %113 = vector.broadcast %cst_60 : f32 to vector<1x16x16xf32>
    %114 = arith.addf %112, %113 : vector<1x16x16xf32>
    %115 = arith.select %102, %109, %114 : vector<1x16x16xi1>, vector<1x16x16xf32>
    %116 = arith.divf %100, %115 : vector<1x16x16xf32>
    %117 = arith.mulf %85, %116 : vector<1x16x16xf32>
    %c0_61 = arith.constant 0 : index
    %c0_62 = arith.constant 0 : index
    %c0_63 = arith.constant 0 : index
    %118 = vector.load %arg2[%c0_61, %c0_62, %c0_63] : memref<1x1x8xf32, #tpu.memory_space<vmem>>, vector<1x1x8xf32>
    %119 = vector.shape_cast %118 : vector<1x1x8xf32> to vector<1x8xf32>
    %120 = math.absf %119 : vector<1x8xf32>
    %cst_64 = arith.constant 0.000000e+00 : f32
    %121 = vector.broadcast %cst_64 : f32 to vector<1x8xf32>
    %122 = arith.subf %121, %120 : vector<1x8xf32>
    %123 = math.exp %122 : vector<1x8xf32>
    %124 = arith.mulf %123, %123 : vector<1x8xf32>
    %cst_65 = arith.constant 0.000000e+00 : f32
    %125 = vector.broadcast %cst_65 : f32 to vector<1x8xf32>
    %126 = arith.cmpf oge, %119, %125 : vector<1x8xf32>
    %cst_66 = arith.constant 2.000000e+00 : f32
    %127 = vector.broadcast %cst_66 : f32 to vector<1x8xf32>
    %128 = arith.mulf %127, %123 : vector<1x8xf32>
    %cst_67 = arith.constant 1.000000e+00 : f32
    %129 = vector.broadcast %cst_67 : f32 to vector<1x8xf32>
    %130 = arith.addf %128, %129 : vector<1x8xf32>
    %cst_68 = arith.constant 2.000000e+00 : f32
    %131 = vector.broadcast %cst_68 : f32 to vector<1x8xf32>
    %132 = arith.mulf %131, %123 : vector<1x8xf32>
    %133 = arith.addf %124, %132 : vector<1x8xf32>
    %134 = arith.select %126, %130, %133 : vector<1x8xi1>, vector<1x8xf32>
    %cst_69 = arith.constant 0.000000e+00 : f32
    %135 = vector.broadcast %cst_69 : f32 to vector<1x8xf32>
    %136 = arith.cmpf oge, %119, %135 : vector<1x8xf32>
    %cst_70 = arith.constant 2.000000e+00 : f32
    %137 = vector.broadcast %cst_70 : f32 to vector<1x8xf32>
    %138 = arith.mulf %137, %124 : vector<1x8xf32>
    %cst_71 = arith.constant 2.000000e+00 : f32
    %139 = vector.broadcast %cst_71 : f32 to vector<1x8xf32>
    %140 = arith.mulf %139, %123 : vector<1x8xf32>
    %141 = arith.addf %138, %140 : vector<1x8xf32>
    %cst_72 = arith.constant 1.000000e+00 : f32
    %142 = vector.broadcast %cst_72 : f32 to vector<1x8xf32>
    %143 = arith.addf %141, %142 : vector<1x8xf32>
    %cst_73 = arith.constant 2.000000e+00 : f32
    %144 = vector.broadcast %cst_73 : f32 to vector<1x8xf32>
    %145 = arith.mulf %144, %123 : vector<1x8xf32>
    %146 = arith.addf %124, %145 : vector<1x8xf32>
    %cst_74 = arith.constant 2.000000e+00 : f32
    %147 = vector.broadcast %cst_74 : f32 to vector<1x8xf32>
    %148 = arith.addf %146, %147 : vector<1x8xf32>
    %149 = arith.select %136, %143, %148 : vector<1x8xi1>, vector<1x8xf32>
    %150 = arith.divf %134, %149 : vector<1x8xf32>
    %151 = arith.mulf %119, %150 : vector<1x8xf32>
    %c0_75 = arith.constant 0 : index
    %c0_76 = arith.constant 0 : index
    %152 = vector.load %arg9[%c0_75, %c0_76] : memref<8x16xf32, #tpu.memory_space<vmem>>, vector<8x16xf32>
    %cst_77 = arith.constant dense<0.000000e+00> : vector<1x16xf32>
    %153 = tpu.matmul %151, %152, %cst_77 {dimension_numbers = #tpu.dot_dimension_numbers<[1], [0], [0], [1], [0, 0, 1, 1], [], []>} : vector<1x8xf32>, vector<8x16xf32>, vector<1x16xf32> -> vector<1x16xf32>
    %c0_78 = arith.constant 0 : index
    %c0_79 = arith.constant 0 : index
    %154 = vector.load %arg11[%c0_78, %c0_79] : memref<1x16xf32, #tpu.memory_space<vmem>>, vector<1x16xf32>
    %155 = arith.addf %153, %154 : vector<1x16xf32>
    %c0_80 = arith.constant 0 : index
    %c0_81 = arith.constant 0 : index
    %156 = vector.load %arg10[%c0_80, %c0_81] : memref<8x16xf32, #tpu.memory_space<vmem>>, vector<8x16xf32>
    %cst_82 = arith.constant dense<0.000000e+00> : vector<1x16xf32>
    %157 = tpu.matmul %151, %156, %cst_82 {dimension_numbers = #tpu.dot_dimension_numbers<[1], [0], [0], [1], [0, 0, 1, 1], [], []>} : vector<1x8xf32>, vector<8x16xf32>, vector<1x16xf32> -> vector<1x16xf32>
    %c0_83 = arith.constant 0 : index
    %c0_84 = arith.constant 0 : index
    %158 = vector.load %arg12[%c0_83, %c0_84] : memref<1x16xf32, #tpu.memory_space<vmem>>, vector<1x16xf32>
    %159 = arith.addf %157, %158 : vector<1x16xf32>
    %160 = vector.shape_cast %155 : vector<1x16xf32> to vector<1x1x16xf32>
    %161 = vector.broadcast %160 : vector<1x1x16xf32> to vector<1x16x16xf32>
    %162 = arith.mulf %161, %117 : vector<1x16x16xf32>
    %163 = vector.shape_cast %159 : vector<1x16xf32> to vector<1x1x16xf32>
    %164 = vector.broadcast %163 : vector<1x1x16xf32> to vector<1x16x16xf32>
    %165 = arith.addf %162, %164 : vector<1x16x16xf32>
    %166 = vector.shape_cast %165 : vector<1x16x16xf32> to vector<16x16xf32>
    %c0_85 = arith.constant 0 : index
    %c0_86 = arith.constant 0 : index
    %167 = vector.load %arg15[%c0_85, %c0_86] : memref<1x16xf32, #tpu.memory_space<vmem>>, vector<1x16xf32>
    %c1_i32_87 = arith.constant 1 : i32
    %168 = tpu.dynamic_rotate %166 by %c1_i32_87 dim 0 : vector<16x16xf32>, i32 -> vector<16x16xf32>
    %169 = arith.truncf %168 : vector<16x16xf32> to vector<16x16xbf16>
    %170 = arith.extf %169 : vector<16x16xbf16> to vector<16x16xf32>
    %171 = arith.subf %168, %170 : vector<16x16xf32>
    %172 = arith.truncf %171 : vector<16x16xf32> to vector<16x16xbf16>
    %c0_88 = arith.constant 0 : index
    %c0_89 = arith.constant 0 : index
    %c0_90 = arith.constant 0 : index
    %173 = vector.load %arg13[%c0_88, %c0_89, %c0_90] : memref<3x16x16xbf16, #tpu.memory_space<vmem>>, vector<1x16x16xbf16>
    %174 = vector.shape_cast %173 : vector<1x16x16xbf16> to vector<16x16xbf16>
    %c0_91 = arith.constant 0 : index
    %c0_92 = arith.constant 0 : index
    %c0_93 = arith.constant 0 : index
    %175 = vector.load %arg14[%c0_91, %c0_92, %c0_93] : memref<3x16x16xbf16, #tpu.memory_space<vmem>>, vector<1x16x16xbf16>
    %176 = vector.shape_cast %175 : vector<1x16x16xbf16> to vector<16x16xbf16>
    %cst_94 = arith.constant dense<0.000000e+00> : vector<16x16xf32>
    %177 = tpu.matmul %169, %174, %cst_94 {dimension_numbers = #tpu.dot_dimension_numbers<[1], [0], [0], [1], [0, 0, 1, 1], [], []>} : vector<16x16xbf16>, vector<16x16xbf16>, vector<16x16xf32> -> vector<16x16xf32>
    %cst_95 = arith.constant dense<0.000000e+00> : vector<16x16xf32>
    %178 = tpu.matmul %169, %176, %cst_95 {dimension_numbers = #tpu.dot_dimension_numbers<[1], [0], [0], [1], [0, 0, 1, 1], [], []>} : vector<16x16xbf16>, vector<16x16xbf16>, vector<16x16xf32> -> vector<16x16xf32>
    %179 = arith.addf %177, %178 : vector<16x16xf32>
    %cst_96 = arith.constant dense<0.000000e+00> : vector<16x16xf32>
    %180 = tpu.matmul %172, %174, %cst_96 {dimension_numbers = #tpu.dot_dimension_numbers<[1], [0], [0], [1], [0, 0, 1, 1], [], []>} : vector<16x16xbf16>, vector<16x16xbf16>, vector<16x16xf32> -> vector<16x16xf32>
    %181 = arith.addf %179, %180 : vector<16x16xf32>
    %c0_97 = arith.constant 0 : index
    %c0_98 = arith.constant 0 : index
    %c0_99 = arith.constant 0 : index
    %182 = vector.load %arg3[%c0_97, %c0_98, %c0_99] : memref<3x16x1xf32, #tpu.memory_space<vmem>>, vector<1x16x1xf32>
    %183 = vector.shape_cast %182 : vector<1x16x1xf32> to vector<16x1xf32>
    %184 = vector.broadcast %183 : vector<16x1xf32> to vector<16x16xf32>
    %185 = arith.mulf %181, %184 : vector<16x16xf32>
    %186 = vector.broadcast %167 : vector<1x16xf32> to vector<16x16xf32>
    %187 = arith.addf %186, %185 : vector<16x16xf32>
    %188 = arith.truncf %166 : vector<16x16xf32> to vector<16x16xbf16>
    %189 = arith.extf %188 : vector<16x16xbf16> to vector<16x16xf32>
    %190 = arith.subf %166, %189 : vector<16x16xf32>
    %191 = arith.truncf %190 : vector<16x16xf32> to vector<16x16xbf16>
    %c1_100 = arith.constant 1 : index
    %c0_101 = arith.constant 0 : index
    %c0_102 = arith.constant 0 : index
    %192 = vector.load %arg13[%c1_100, %c0_101, %c0_102] : memref<3x16x16xbf16, #tpu.memory_space<vmem>>, vector<1x16x16xbf16>
    %193 = vector.shape_cast %192 : vector<1x16x16xbf16> to vector<16x16xbf16>
    %c1_103 = arith.constant 1 : index
    %c0_104 = arith.constant 0 : index
    %c0_105 = arith.constant 0 : index
    %194 = vector.load %arg14[%c1_103, %c0_104, %c0_105] : memref<3x16x16xbf16, #tpu.memory_space<vmem>>, vector<1x16x16xbf16>
    %195 = vector.shape_cast %194 : vector<1x16x16xbf16> to vector<16x16xbf16>
    %cst_106 = arith.constant dense<0.000000e+00> : vector<16x16xf32>
    %196 = tpu.matmul %188, %193, %cst_106 {dimension_numbers = #tpu.dot_dimension_numbers<[1], [0], [0], [1], [0, 0, 1, 1], [], []>} : vector<16x16xbf16>, vector<16x16xbf16>, vector<16x16xf32> -> vector<16x16xf32>
    %cst_107 = arith.constant dense<0.000000e+00> : vector<16x16xf32>
    %197 = tpu.matmul %188, %195, %cst_107 {dimension_numbers = #tpu.dot_dimension_numbers<[1], [0], [0], [1], [0, 0, 1, 1], [], []>} : vector<16x16xbf16>, vector<16x16xbf16>, vector<16x16xf32> -> vector<16x16xf32>
    %198 = arith.addf %196, %197 : vector<16x16xf32>
    %cst_108 = arith.constant dense<0.000000e+00> : vector<16x16xf32>
    %199 = tpu.matmul %191, %193, %cst_108 {dimension_numbers = #tpu.dot_dimension_numbers<[1], [0], [0], [1], [0, 0, 1, 1], [], []>} : vector<16x16xbf16>, vector<16x16xbf16>, vector<16x16xf32> -> vector<16x16xf32>
    %200 = arith.addf %198, %199 : vector<16x16xf32>
    %201 = arith.addf %187, %200 : vector<16x16xf32>
    %c15_i32_109 = arith.constant 15 : i32
    %202 = tpu.dynamic_rotate %166 by %c15_i32_109 dim 0 : vector<16x16xf32>, i32 -> vector<16x16xf32>
    %203 = arith.truncf %202 : vector<16x16xf32> to vector<16x16xbf16>
    %204 = arith.extf %203 : vector<16x16xbf16> to vector<16x16xf32>
    %205 = arith.subf %202, %204 : vector<16x16xf32>
    %206 = arith.truncf %205 : vector<16x16xf32> to vector<16x16xbf16>
    %c2_110 = arith.constant 2 : index
    %c0_111 = arith.constant 0 : index
    %c0_112 = arith.constant 0 : index
    %207 = vector.load %arg13[%c2_110, %c0_111, %c0_112] : memref<3x16x16xbf16, #tpu.memory_space<vmem>>, vector<1x16x16xbf16>
    %208 = vector.shape_cast %207 : vector<1x16x16xbf16> to vector<16x16xbf16>
    %c2_113 = arith.constant 2 : index
    %c0_114 = arith.constant 0 : index
    %c0_115 = arith.constant 0 : index
    %209 = vector.load %arg14[%c2_113, %c0_114, %c0_115] : memref<3x16x16xbf16, #tpu.memory_space<vmem>>, vector<1x16x16xbf16>
    %210 = vector.shape_cast %209 : vector<1x16x16xbf16> to vector<16x16xbf16>
    %cst_116 = arith.constant dense<0.000000e+00> : vector<16x16xf32>
    %211 = tpu.matmul %203, %208, %cst_116 {dimension_numbers = #tpu.dot_dimension_numbers<[1], [0], [0], [1], [0, 0, 1, 1], [], []>} : vector<16x16xbf16>, vector<16x16xbf16>, vector<16x16xf32> -> vector<16x16xf32>
    %cst_117 = arith.constant dense<0.000000e+00> : vector<16x16xf32>
    %212 = tpu.matmul %203, %210, %cst_117 {dimension_numbers = #tpu.dot_dimension_numbers<[1], [0], [0], [1], [0, 0, 1, 1], [], []>} : vector<16x16xbf16>, vector<16x16xbf16>, vector<16x16xf32> -> vector<16x16xf32>
    %213 = arith.addf %211, %212 : vector<16x16xf32>
    %cst_118 = arith.constant dense<0.000000e+00> : vector<16x16xf32>
    %214 = tpu.matmul %206, %208, %cst_118 {dimension_numbers = #tpu.dot_dimension_numbers<[1], [0], [0], [1], [0, 0, 1, 1], [], []>} : vector<16x16xbf16>, vector<16x16xbf16>, vector<16x16xf32> -> vector<16x16xf32>
    %215 = arith.addf %213, %214 : vector<16x16xf32>
    %c2_119 = arith.constant 2 : index
    %c0_120 = arith.constant 0 : index
    %c0_121 = arith.constant 0 : index
    %216 = vector.load %arg3[%c2_119, %c0_120, %c0_121] : memref<3x16x1xf32, #tpu.memory_space<vmem>>, vector<1x16x1xf32>
    %217 = vector.shape_cast %216 : vector<1x16x1xf32> to vector<16x1xf32>
    %218 = vector.broadcast %217 : vector<16x1xf32> to vector<16x16xf32>
    %219 = arith.mulf %215, %218 : vector<16x16xf32>
    %220 = arith.addf %201, %219 : vector<16x16xf32>
    %c0_122 = arith.constant 0 : index
    %c0_123 = arith.constant 0 : index
    %221 = vector.load %arg16[%c0_122, %c0_123] : memref<1x16xf32, #tpu.memory_space<vmem>>, vector<1x16xf32>
    %c0_124 = arith.constant 0 : index
    %c0_125 = arith.constant 0 : index
    %222 = vector.load %arg17[%c0_124, %c0_125] : memref<1x16xf32, #tpu.memory_space<vmem>>, vector<1x16xf32>
    %223 = vector.shape_cast %220 : vector<16x16xf32> to vector<1x16x16xf32>
    %cst_126 = arith.constant dense<0.000000e+00> : vector<1x16xf32>
    %224 = vector.multi_reduction <add>, %223, %cst_126 [1] : vector<1x16x16xf32> to vector<1x16xf32>
    %cst_127 = arith.constant dense<0.000000e+00> : vector<1x8xf32>
    %225 = tpu.matmul %224, %0, %cst_127 {dimension_numbers = #tpu.dot_dimension_numbers<[1], [0], [0], [1], [0, 0, 1, 1], [], []>} : vector<1x16xf32>, vector<16x8xf32>, vector<1x8xf32> -> vector<1x8xf32>
    %cst_128 = arith.constant 3.125000e-02 : f32
    %226 = vector.broadcast %cst_128 : f32 to vector<1x8xf32>
    %227 = arith.mulf %225, %226 : vector<1x8xf32>
    %cst_129 = arith.constant dense<0.000000e+00> : vector<1x16xf32>
    %228 = tpu.matmul %227, %1, %cst_129 {dimension_numbers = #tpu.dot_dimension_numbers<[1], [0], [0], [1], [0, 0, 1, 1], [], []>} : vector<1x8xf32>, vector<8x16xf32>, vector<1x16xf32> -> vector<1x16xf32>
    %229 = vector.shape_cast %228 : vector<1x16xf32> to vector<1x1x16xf32>
    %230 = vector.broadcast %229 : vector<1x1x16xf32> to vector<1x16x16xf32>
    %231 = arith.subf %223, %230 : vector<1x16x16xf32>
    %232 = arith.mulf %231, %231 : vector<1x16x16xf32>
    %cst_130 = arith.constant dense<0.000000e+00> : vector<1x16xf32>
    %233 = vector.multi_reduction <add>, %232, %cst_130 [1] : vector<1x16x16xf32> to vector<1x16xf32>
    %cst_131 = arith.constant dense<0.000000e+00> : vector<1x8xf32>
    %234 = tpu.matmul %233, %0, %cst_131 {dimension_numbers = #tpu.dot_dimension_numbers<[1], [0], [0], [1], [0, 0, 1, 1], [], []>} : vector<1x16xf32>, vector<16x8xf32>, vector<1x8xf32> -> vector<1x8xf32>
    %cst_132 = arith.constant 3.125000e-02 : f32
    %235 = vector.broadcast %cst_132 : f32 to vector<1x8xf32>
    %236 = arith.mulf %234, %235 : vector<1x8xf32>
    %cst_133 = arith.constant dense<0.000000e+00> : vector<1x16xf32>
    %237 = tpu.matmul %236, %1, %cst_133 {dimension_numbers = #tpu.dot_dimension_numbers<[1], [0], [0], [1], [0, 0, 1, 1], [], []>} : vector<1x8xf32>, vector<8x16xf32>, vector<1x16xf32> -> vector<1x16xf32>
    %cst_134 = arith.constant 9.99999974E-6 : f32
    %238 = vector.broadcast %cst_134 : f32 to vector<1x16xf32>
    %239 = arith.addf %237, %238 : vector<1x16xf32>
    %240 = math.rsqrt %239 : vector<1x16xf32>
    %241 = vector.shape_cast %240 : vector<1x16xf32> to vector<1x1x16xf32>
    %242 = vector.broadcast %241 : vector<1x1x16xf32> to vector<1x16x16xf32>
    %243 = arith.mulf %231, %242 : vector<1x16x16xf32>
    %244 = vector.shape_cast %221 : vector<1x16xf32> to vector<1x1x16xf32>
    %245 = vector.broadcast %244 : vector<1x1x16xf32> to vector<1x16x16xf32>
    %246 = arith.mulf %243, %245 : vector<1x16x16xf32>
    %247 = vector.shape_cast %222 : vector<1x16xf32> to vector<1x1x16xf32>
    %248 = vector.broadcast %247 : vector<1x1x16xf32> to vector<1x16x16xf32>
    %249 = arith.addf %246, %248 : vector<1x16x16xf32>
    %250 = math.absf %249 : vector<1x16x16xf32>
    %cst_135 = arith.constant 0.000000e+00 : f32
    %251 = vector.broadcast %cst_135 : f32 to vector<1x16x16xf32>
    %252 = arith.subf %251, %250 : vector<1x16x16xf32>
    %253 = math.exp %252 : vector<1x16x16xf32>
    %254 = arith.mulf %253, %253 : vector<1x16x16xf32>
    %cst_136 = arith.constant 0.000000e+00 : f32
    %255 = vector.broadcast %cst_136 : f32 to vector<1x16x16xf32>
    %256 = arith.cmpf oge, %249, %255 : vector<1x16x16xf32>
    %cst_137 = arith.constant 2.000000e+00 : f32
    %257 = vector.broadcast %cst_137 : f32 to vector<1x16x16xf32>
    %258 = arith.mulf %257, %253 : vector<1x16x16xf32>
    %cst_138 = arith.constant 1.000000e+00 : f32
    %259 = vector.broadcast %cst_138 : f32 to vector<1x16x16xf32>
    %260 = arith.addf %258, %259 : vector<1x16x16xf32>
    %cst_139 = arith.constant 2.000000e+00 : f32
    %261 = vector.broadcast %cst_139 : f32 to vector<1x16x16xf32>
    %262 = arith.mulf %261, %253 : vector<1x16x16xf32>
    %263 = arith.addf %254, %262 : vector<1x16x16xf32>
    %264 = arith.select %256, %260, %263 : vector<1x16x16xi1>, vector<1x16x16xf32>
    %cst_140 = arith.constant 0.000000e+00 : f32
    %265 = vector.broadcast %cst_140 : f32 to vector<1x16x16xf32>
    %266 = arith.cmpf oge, %249, %265 : vector<1x16x16xf32>
    %cst_141 = arith.constant 2.000000e+00 : f32
    %267 = vector.broadcast %cst_141 : f32 to vector<1x16x16xf32>
    %268 = arith.mulf %267, %254 : vector<1x16x16xf32>
    %cst_142 = arith.constant 2.000000e+00 : f32
    %269 = vector.broadcast %cst_142 : f32 to vector<1x16x16xf32>
    %270 = arith.mulf %269, %253 : vector<1x16x16xf32>
    %271 = arith.addf %268, %270 : vector<1x16x16xf32>
    %cst_143 = arith.constant 1.000000e+00 : f32
    %272 = vector.broadcast %cst_143 : f32 to vector<1x16x16xf32>
    %273 = arith.addf %271, %272 : vector<1x16x16xf32>
    %cst_144 = arith.constant 2.000000e+00 : f32
    %274 = vector.broadcast %cst_144 : f32 to vector<1x16x16xf32>
    %275 = arith.mulf %274, %253 : vector<1x16x16xf32>
    %276 = arith.addf %254, %275 : vector<1x16x16xf32>
    %cst_145 = arith.constant 2.000000e+00 : f32
    %277 = vector.broadcast %cst_145 : f32 to vector<1x16x16xf32>
    %278 = arith.addf %276, %277 : vector<1x16x16xf32>
    %279 = arith.select %266, %273, %278 : vector<1x16x16xi1>, vector<1x16x16xf32>
    %280 = arith.divf %264, %279 : vector<1x16x16xf32>
    %281 = arith.mulf %249, %280 : vector<1x16x16xf32>
    %282 = arith.truncf %2 : vector<16x4xf32> to vector<16x4xbf16>
    %283 = arith.extf %282 : vector<16x4xbf16> to vector<16x4xf32>
    %284 = arith.subf %2, %283 : vector<16x4xf32>
    %285 = arith.truncf %284 : vector<16x4xf32> to vector<16x4xbf16>
    %c0_146 = arith.constant 0 : index
    %c0_147 = arith.constant 0 : index
    %286 = vector.load %arg18[%c0_146, %c0_147] : memref<4x16xbf16, #tpu.memory_space<vmem>>, vector<4x16xbf16>
    %c0_148 = arith.constant 0 : index
    %c0_149 = arith.constant 0 : index
    %287 = vector.load %arg19[%c0_148, %c0_149] : memref<4x16xbf16, #tpu.memory_space<vmem>>, vector<4x16xbf16>
    %cst_150 = arith.constant dense<0.000000e+00> : vector<16x16xf32>
    %288 = tpu.matmul %282, %286, %cst_150 {dimension_numbers = #tpu.dot_dimension_numbers<[1], [0], [0], [1], [0, 0, 1, 1], [], []>} : vector<16x4xbf16>, vector<4x16xbf16>, vector<16x16xf32> -> vector<16x16xf32>
    %cst_151 = arith.constant dense<0.000000e+00> : vector<16x16xf32>
    %289 = tpu.matmul %282, %287, %cst_151 {dimension_numbers = #tpu.dot_dimension_numbers<[1], [0], [0], [1], [0, 0, 1, 1], [], []>} : vector<16x4xbf16>, vector<4x16xbf16>, vector<16x16xf32> -> vector<16x16xf32>
    %290 = arith.addf %288, %289 : vector<16x16xf32>
    %cst_152 = arith.constant dense<0.000000e+00> : vector<16x16xf32>
    %291 = tpu.matmul %285, %286, %cst_152 {dimension_numbers = #tpu.dot_dimension_numbers<[1], [0], [0], [1], [0, 0, 1, 1], [], []>} : vector<16x4xbf16>, vector<4x16xbf16>, vector<16x16xf32> -> vector<16x16xf32>
    %292 = arith.addf %290, %291 : vector<16x16xf32>
    %c0_153 = arith.constant 0 : index
    %c0_154 = arith.constant 0 : index
    %293 = vector.load %arg20[%c0_153, %c0_154] : memref<1x16xf32, #tpu.memory_space<vmem>>, vector<1x16xf32>
    %294 = vector.broadcast %293 : vector<1x16xf32> to vector<16x16xf32>
    %295 = arith.addf %292, %294 : vector<16x16xf32>
    %296 = vector.shape_cast %281 : vector<1x16x16xf32> to vector<16x16xf32>
    %297 = arith.addf %296, %295 : vector<16x16xf32>
    %c0_155 = arith.constant 0 : index
    %c0_156 = arith.constant 0 : index
    %298 = vector.load %arg23[%c0_155, %c0_156] : memref<16x16xf32, #tpu.memory_space<vmem>>, vector<16x16xf32>
    tpu.vector_store %arg23[%c0_155, %c0_156], %297 {strides = array<i32>} : memref<16x16xf32, #tpu.memory_space<vmem>>, vector<16x16xf32>,
    return
  }
  func.func @transform_0(%arg0: i32) -> (i32, i32) {
    %c0_i32 = arith.constant 0 : i32
    %c0_i32_0 = arith.constant 0 : i32
    return %arg0, %c0_i32 : i32, i32
  }
  func.func @transform_1(%arg0: i32) -> (i32, i32, i32) {
    %c0_i32 = arith.constant 0 : i32
    %c0_i32_0 = arith.constant 0 : i32
    %c0_i32_1 = arith.constant 0 : i32
    return %arg0, %c0_i32, %c0_i32_0 : i32, i32, i32
  }
  func.func @transform_2(%arg0: i32) -> (i32, i32, i32) {
    %c0_i32 = arith.constant 0 : i32
    %c0_i32_0 = arith.constant 0 : i32
    %c0_i32_1 = arith.constant 0 : i32
    %c0_i32_2 = arith.constant 0 : i32
    return %c0_i32, %c0_i32_0, %c0_i32_1 : i32, i32, i32
  }
  func.func @transform_3(%arg0: i32) -> (i32, i32, i32) {
    %c0_i32 = arith.constant 0 : i32
    %c0_i32_0 = arith.constant 0 : i32
    %c0_i32_1 = arith.constant 0 : i32
    %c0_i32_2 = arith.constant 0 : i32
    return %c0_i32, %c0_i32_0, %c0_i32_1 : i32, i32, i32
  }
  func.func @transform_4(%arg0: i32) -> (i32, i32, i32) {
    %c0_i32 = arith.constant 0 : i32
    %c0_i32_0 = arith.constant 0 : i32
    %c0_i32_1 = arith.constant 0 : i32
    %c0_i32_2 = arith.constant 0 : i32
    return %c0_i32, %c0_i32_0, %c0_i32_1 : i32, i32, i32
  }
  func.func @transform_5(%arg0: i32) -> (i32, i32) {
    %c0_i32 = arith.constant 0 : i32
    %c0_i32_0 = arith.constant 0 : i32
    %c0_i32_1 = arith.constant 0 : i32
    return %c0_i32, %c0_i32_0 : i32, i32
  }
  func.func @transform_6(%arg0: i32) -> (i32, i32) {
    %c0_i32 = arith.constant 0 : i32
    %c0_i32_0 = arith.constant 0 : i32
    %c0_i32_1 = arith.constant 0 : i32
    return %c0_i32, %c0_i32_0 : i32, i32
  }
  func.func @transform_7(%arg0: i32) -> (i32, i32) {
    %c0_i32 = arith.constant 0 : i32
    %c0_i32_0 = arith.constant 0 : i32
    %c0_i32_1 = arith.constant 0 : i32
    return %c0_i32, %c0_i32_0 : i32, i32
  }
  func.func @transform_8(%arg0: i32) -> (i32, i32) {
    %c0_i32 = arith.constant 0 : i32
    %c0_i32_0 = arith.constant 0 : i32
    %c0_i32_1 = arith.constant 0 : i32
    return %c0_i32, %c0_i32_0 : i32, i32
  }
  func.func @transform_9(%arg0: i32) -> (i32, i32) {
    %c0_i32 = arith.constant 0 : i32
    %c0_i32_0 = arith.constant 0 : i32
    %c0_i32_1 = arith.constant 0 : i32
    return %c0_i32, %c0_i32_0 : i32, i32
  }
  func.func @transform_10(%arg0: i32) -> (i32, i32) {
    %c0_i32 = arith.constant 0 : i32
    %c0_i32_0 = arith.constant 0 : i32
    %c0_i32_1 = arith.constant 0 : i32
    return %c0_i32, %c0_i32_0 : i32, i32
  }
  func.func @transform_11(%arg0: i32) -> (i32, i32) {
    %c0_i32 = arith.constant 0 : i32
    %c0_i32_0 = arith.constant 0 : i32
    %c0_i32_1 = arith.constant 0 : i32
    return %c0_i32, %c0_i32_0 : i32, i32
  }
  func.func @transform_12(%arg0: i32) -> (i32, i32, i32) {
    %c0_i32 = arith.constant 0 : i32
    %c0_i32_0 = arith.constant 0 : i32
    %c0_i32_1 = arith.constant 0 : i32
    %c0_i32_2 = arith.constant 0 : i32
    return %c0_i32, %c0_i32_0, %c0_i32_1 : i32, i32, i32
  }
  func.func @transform_13(%arg0: i32) -> (i32, i32, i32) {
    %c0_i32 = arith.constant 0 : i32
    %c0_i32_0 = arith.constant 0 : i32
    %c0_i32_1 = arith.constant 0 : i32
    %c0_i32_2 = arith.constant 0 : i32
    return %c0_i32, %c0_i32_0, %c0_i32_1 : i32, i32, i32
  }
  func.func @transform_14(%arg0: i32) -> (i32, i32) {
    %c0_i32 = arith.constant 0 : i32
    %c0_i32_0 = arith.constant 0 : i32
    %c0_i32_1 = arith.constant 0 : i32
    return %c0_i32, %c0_i32_0 : i32, i32
  }
  func.func @transform_15(%arg0: i32) -> (i32, i32) {
    %c0_i32 = arith.constant 0 : i32
    %c0_i32_0 = arith.constant 0 : i32
    %c0_i32_1 = arith.constant 0 : i32
    return %c0_i32, %c0_i32_0 : i32, i32
  }
  func.func @transform_16(%arg0: i32) -> (i32, i32) {
    %c0_i32 = arith.constant 0 : i32
    %c0_i32_0 = arith.constant 0 : i32
    %c0_i32_1 = arith.constant 0 : i32
    return %c0_i32, %c0_i32_0 : i32, i32
  }
  func.func @transform_17(%arg0: i32) -> (i32, i32) {
    %c0_i32 = arith.constant 0 : i32
    %c0_i32_0 = arith.constant 0 : i32
    %c0_i32_1 = arith.constant 0 : i32
    return %c0_i32, %c0_i32_0 : i32, i32
  }
  func.func @transform_18(%arg0: i32) -> (i32, i32) {
    %c0_i32 = arith.constant 0 : i32
    %c0_i32_0 = arith.constant 0 : i32
    %c0_i32_1 = arith.constant 0 : i32
    return %c0_i32, %c0_i32_0 : i32, i32
  }
  func.func @transform_19(%arg0: i32) -> (i32, i32) {
    %c0_i32 = arith.constant 0 : i32
    %c0_i32_0 = arith.constant 0 : i32
    %c0_i32_1 = arith.constant 0 : i32
    return %c0_i32, %c0_i32_0 : i32, i32
  }
  func.func @transform_20(%arg0: i32) -> (i32, i32) {
    %c0_i32 = arith.constant 0 : i32
    %c0_i32_0 = arith.constant 0 : i32
    %c0_i32_1 = arith.constant 0 : i32
    return %c0_i32, %c0_i32_0 : i32, i32
  }
  func.func @transform_21(%arg0: i32) -> (i32, i32) {
    %c0_i32 = arith.constant 0 : i32
    %c0_i32_0 = arith.constant 0 : i32
    %c0_i32_1 = arith.constant 0 : i32
    return %c0_i32, %c0_i32_0 : i32, i32
  }
  func.func @transform_22(%arg0: i32) -> (i32, i32) {
    %c0_i32 = arith.constant 0 : i32
    %c0_i32_0 = arith.constant 0 : i32
    return %arg0, %c0_i32 : i32, i32
  }
}

</mosaic_0001>

<llo_original>
// kernel: tpu_custom_call.1
$region0: #{tpu_custom_call.1}
  #allocation0 [shape = 'u32[]', space=smem, size = 0x4, offset = 0x4, fixed_abs, tag = 'smem constant byte address 0x4 - core index']
  #allocation1 [shape = 'u32[144,128]{1,0:T(1,128)}', space=vmem, size = 0x12000, scoped, tag = 'internal scratch']
  %s0 = inlined_call_operand.vmem [shape: f32[32,4], index: 0, kind: input, shape index: {}]
  %s1 = inlined_call_operand.vmem [shape: f32[2,1,8], index: 1, kind: input, shape index: {}]
  %s2 = inlined_call_operand.vmem [shape: f32[3,16,1], index: 2, kind: input, shape index: {}]
  %s3 = inlined_call_operand.vmem [shape: bf16[3,4,16], index: 3, kind: input, shape index: {}]
  %s4 = inlined_call_operand.vmem [shape: bf16[3,4,16], index: 4, kind: input, shape index: {}]
  %s5 = inlined_call_operand.vmem [shape: f32[1,16], index: 5, kind: input, shape index: {}]
  %s6 = inlined_call_operand.vmem [shape: f32[1,16], index: 6, kind: input, shape index: {}]
  %s7 = inlined_call_operand.vmem [shape: f32[1,16], index: 7, kind: input, shape index: {}]
  %s8 = inlined_call_operand.vmem [shape: f32[8,16], index: 8, kind: input, shape index: {}]
  %s9 = inlined_call_operand.vmem [shape: f32[8,16], index: 9, kind: input, shape index: {}]
  %s10 = inlined_call_operand.vmem [shape: f32[1,16], index: 10, kind: input, shape index: {}]
  %s11 = inlined_call_operand.vmem [shape: f32[1,16], index: 11, kind: input, shape index: {}]
  %s12 = inlined_call_operand.vmem [shape: bf16[3,16,16], index: 12, kind: input, shape index: {}]
  %s13 = inlined_call_operand.vmem [shape: bf16[3,16,16], index: 13, kind: input, shape index: {}]
  %s14 = inlined_call_operand.vmem [shape: f32[1,16], index: 14, kind: input, shape index: {}]
  %s15 = inlined_call_operand.vmem [shape: f32[1,16], index: 15, kind: input, shape index: {}]
  %s16 = inlined_call_operand.vmem [shape: f32[1,16], index: 16, kind: input, shape index: {}]
  %s17 = inlined_call_operand.vmem [shape: bf16[4,16], index: 17, kind: input, shape index: {}]
  %s18 = inlined_call_operand.vmem [shape: bf16[4,16], index: 18, kind: input, shape index: {}]
  %s19 = inlined_call_operand.vmem [shape: f32[1,16], index: 19, kind: input, shape index: {}]
  %s20 = inlined_call_operand.vmem [shape: f32[16,8], index: 20, kind: input, shape index: {}]
  %s21 = inlined_call_operand.vmem [shape: f32[8,16], index: 21, kind: input, shape index: {}]
  %s22 = inlined_call_operand.vmem [shape: f32[32,16], index: 22, kind: output, shape index: {}]
  %s23 = sld [smem:[#allocation0]]
  $region121: #{tpu_custom_call.1} parent=0
    _
  %s25 = ssub.s32 1, %s23
  %s26 = scalar_select 0, %s25, %s23
  loop: start=0, step=1, limit=4
  $region2: #{tpu_custom_call.1} parent=0 // loop_pre_header
    _
  $region3: #{tpu_custom_call.1} parent=0 // loop_header
    %s28 = sphi 0, %s32
    %p29 = scmp.ge.s32.totalorder %s28, 4
    %s38 = sphi 0, %s40
    %s41 = sphi 0, %s38
    %s42 = sphi 0, %s41
    %s58 = sphi 0, %s42
    %s64 = sphi 0, %s66
    %s67 = sphi 0, %s64
    %s68 = sphi 0, %s67
    %s84 = sphi 0, %s68
    %s88 = sphi 0, %s88
    %s90 = sphi 0, %s88
    %s91 = sphi 0, %s90
    %s105 = sphi 0, %s91
    %s109 = sphi 0, %s109
    %s111 = sphi 0, %s109
    %s112 = sphi 0, %s111
    %s126 = sphi 0, %s112
    %s130 = sphi 0, %s130
    %s132 = sphi 0, %s130
    %s133 = sphi 0, %s132
    %s147 = sphi 0, %s133
    %s151 = sphi 0, %s151
    %s153 = sphi 0, %s151
    %s154 = sphi 0, %s153
    %s168 = sphi 0, %s154
    %s172 = sphi 0, %s172
    %s174 = sphi 0, %s172
    %s175 = sphi 0, %s174
    %s189 = sphi 0, %s175
    %s193 = sphi 0, %s193
    %s195 = sphi 0, %s193
    %s196 = sphi 0, %s195
    %s210 = sphi 0, %s196
    %s214 = sphi 0, %s214
    %s216 = sphi 0, %s214
    %s217 = sphi 0, %s216
    %s231 = sphi 0, %s217
    %s235 = sphi 0, %s235
    %s237 = sphi 0, %s235
    %s238 = sphi 0, %s237
    %s252 = sphi 0, %s238
    %s256 = sphi 0, %s256
    %s258 = sphi 0, %s256
    %s259 = sphi 0, %s258
    %s273 = sphi 0, %s259
    %s277 = sphi 0, %s277
    %s279 = sphi 0, %s277
    %s280 = sphi 0, %s279
    %s294 = sphi 0, %s280
    %s298 = sphi 0, %s298
    %s300 = sphi 0, %s298
    %s301 = sphi 0, %s300
    %s315 = sphi 0, %s301
    %s319 = sphi 0, %s319
    %s321 = sphi 0, %s319
    %s322 = sphi 0, %s321
    %s336 = sphi 0, %s322
    %s340 = sphi 0, %s340
    %s342 = sphi 0, %s340
    %s343 = sphi 0, %s342
    %s357 = sphi 0, %s343
    %s361 = sphi 0, %s361
    %s363 = sphi 0, %s361
    %s364 = sphi 0, %s363
    %s378 = sphi 0, %s364
    %s382 = sphi 0, %s382
    %s384 = sphi 0, %s382
    %s385 = sphi 0, %s384
    %s399 = sphi 0, %s385
    %s403 = sphi 0, %s403
    %s405 = sphi 0, %s403
    %s406 = sphi 0, %s405
    %s420 = sphi 0, %s406
    %s424 = sphi 0, %s424
    %s426 = sphi 0, %s424
    %s427 = sphi 0, %s426
    %s441 = sphi 0, %s427
    %s445 = sphi 0, %s445
    %s447 = sphi 0, %s445
    %s448 = sphi 0, %s447
    %s462 = sphi 0, %s448
    %s466 = sphi 0, %s466
    %s468 = sphi 0, %s466
    %s469 = sphi 0, %s468
    %s483 = sphi 0, %s469
    %s487 = sphi 0, %s487
    %s489 = sphi 0, %s487
    %s490 = sphi 0, %s489
    %s504 = sphi 0, %s490
    %s510 = sphi 0, %s512
    %s513 = sphi 0, %s510
    %s514 = sphi 0, %s513
    %s530 = sphi 0, %s514
  $region4: #{tpu_custom_call.1} parent=0 // loop_header_branch
    %31 = sbr.rel (%p29) target = $region8
  $region5: #{tpu_custom_call.1} parent=0 // loop_body
    %s33 = ssub.s32 %s28, 1
    %s34 = ssub.s32 %s28, 2
    %s35 = sadd.s32 %s28, 1
    %s36 = ssub.s32 %s28, %s35
    %p37 = scmp.eq.s32.totalorder %s36, 0
    %s39 = sadd.s32 %s38, 1
    %s40 = scalar_select %p37, %s38, %s39
    %p43 = pneg %p37
    %p44 = scmp.eq.s32.totalorder %s28, 1
    %p45 = por %p43, %p44
    %p46 = scmp.ne.s32.totalorder %s38, %s41
    %p47 = scmp.eq.s32.totalorder %s28, 0
    %p48 = por %p46, %p47
    %p49 = scmp.ne.s32.totalorder %s38, %s41
    %p50 = scmp.eq.s32.totalorder %s33, 1
    %p51 = por %p49, %p50
    %p52 = scmp.ne.s32.totalorder %s41, %s42
    %p53 = scmp.eq.s32.totalorder %s33, 0
    %p54 = por %p52, %p53
    %p55 = scmp.ne.s32.totalorder %s41, %s42
    %p56 = scmp.eq.s32.totalorder %s34, 1
    %p57 = por %p55, %p56
    %p59 = scmp.ne.s32.totalorder %s42, %s58
    %p60 = scmp.eq.s32.totalorder %s34, 0
    %p61 = por %p59, %p60
    %s62 = ssub.s32 %s28, %s35
    %p63 = scmp.eq.s32.totalorder %s62, 0
    %s65 = sadd.s32 %s64, 1
    %s66 = scalar_select %p63, %s64, %s65
    %p69 = pneg %p63
    %p70 = scmp.eq.s32.totalorder %s28, 1
    %p71 = por %p69, %p70
    %p72 = scmp.ne.s32.totalorder %s64, %s67
    %p73 = scmp.eq.s32.totalorder %s28, 0
    %p74 = por %p72, %p73
    %p75 = scmp.ne.s32.totalorder %s64, %s67
    %p76 = scmp.eq.s32.totalorder %s33, 1
    %p77 = por %p75, %p76
    %p78 = scmp.ne.s32.totalorder %s67, %s68
    %p79 = scmp.eq.s32.totalorder %s33, 0
    %p80 = por %p78, %p79
    %p81 = scmp.ne.s32.totalorder %s67, %s68
    %p82 = scmp.eq.s32.totalorder %s34, 1
    %p83 = por %p81, %p82
    %p85 = scmp.ne.s32.totalorder %s68, %s84
    %p86 = scmp.eq.s32.totalorder %s34, 0
    %p87 = por %p85, %p86
    %s89 = sadd.s32 %s88, 1
    %p92 = scmp.eq.s32.totalorder %s28, 1
    %p93 = scmp.ne.s32.totalorder %s88, %s90
    %p94 = scmp.eq.s32.totalorder %s28, 0
    %p95 = por %p93, %p94
    %p96 = scmp.ne.s32.totalorder %s88, %s90
    %p97 = scmp.eq.s32.totalorder %s33, 1
    %p98 = por %p96, %p97
    %p99 = scmp.ne.s32.totalorder %s90, %s91
    %p100 = scmp.eq.s32.totalorder %s33, 0
    %p101 = por %p99, %p100
    %p102 = scmp.ne.s32.totalorder %s90, %s91
    %p103 = scmp.eq.s32.totalorder %s34, 1
    %p104 = por %p102, %p103
    %p106 = scmp.ne.s32.totalorder %s91, %s105
    %p107 = scmp.eq.s32.totalorder %s34, 0
    %p108 = por %p106, %p107
    %s110 = sadd.s32 %s109, 1
    %p113 = scmp.eq.s32.totalorder %s28, 1
    %p114 = scmp.ne.s32.totalorder %s109, %s111
    %p115 = scmp.eq.s32.totalorder %s28, 0
    %p116 = por %p114, %p115
    %p117 = scmp.ne.s32.totalorder %s109, %s111
    %p118 = scmp.eq.s32.totalorder %s33, 1
    %p119 = por %p117, %p118
    %p120 = scmp.ne.s32.totalorder %s111, %s112
    %p121 = scmp.eq.s32.totalorder %s33, 0
    %p122 = por %p120, %p121
    %p123 = scmp.ne.s32.totalorder %s111, %s112
    %p124 = scmp.eq.s32.totalorder %s34, 1
    %p125 = por %p123, %p124
    %p127 = scmp.ne.s32.totalorder %s112, %s126
    %p128 = scmp.eq.s32.totalorder %s34, 0
    %p129 = por %p127, %p128
    %s131 = sadd.s32 %s130, 1
    %p134 = scmp.eq.s32.totalorder %s28, 1
    %p135 = scmp.ne.s32.totalorder %s130, %s132
    %p136 = scmp.eq.s32.totalorder %s28, 0
    %p137 = por %p135, %p136
    %p138 = scmp.ne.s32.totalorder %s130, %s132
    %p139 = scmp.eq.s32.totalorder %s33, 1
    %p140 = por %p138, %p139
    %p141 = scmp.ne.s32.totalorder %s132, %s133
    %p142 = scmp.eq.s32.totalorder %s33, 0
    %p143 = por %p141, %p142
    %p144 = scmp.ne.s32.totalorder %s132, %s133
    %p145 = scmp.eq.s32.totalorder %s34, 1
    %p146 = por %p144, %p145
    %p148 = scmp.ne.s32.totalorder %s133, %s147
    %p149 = scmp.eq.s32.totalorder %s34, 0
    %p150 = por %p148, %p149
    %s152 = sadd.s32 %s151, 1
    %p155 = scmp.eq.s32.totalorder %s28, 1
    %p156 = scmp.ne.s32.totalorder %s151, %s153
    %p157 = scmp.eq.s32.totalorder %s28, 0
    %p158 = por %p156, %p157
    %p159 = scmp.ne.s32.totalorder %s151, %s153
    %p160 = scmp.eq.s32.totalorder %s33, 1
    %p161 = por %p159, %p160
    %p162 = scmp.ne.s32.totalorder %s153, %s154
    %p163 = scmp.eq.s32.totalorder %s33, 0
    %p164 = por %p162, %p163
    %p165 = scmp.ne.s32.totalorder %s153, %s154
    %p166 = scmp.eq.s32.totalorder %s34, 1
    %p167 = por %p165, %p166
    %p169 = scmp.ne.s32.totalorder %s154, %s168
    %p170 = scmp.eq.s32.totalorder %s34, 0
    %p171 = por %p169, %p170
    %s173 = sadd.s32 %s172, 1
    %p176 = scmp.eq.s32.totalorder %s28, 1
    %p177 = scmp.ne.s32.totalorder %s172, %s174
    %p178 = scmp.eq.s32.totalorder %s28, 0
    %p179 = por %p177, %p178
    %p180 = scmp.ne.s32.totalorder %s172, %s174
    %p181 = scmp.eq.s32.totalorder %s33, 1
    %p182 = por %p180, %p181
    %p183 = scmp.ne.s32.totalorder %s174, %s175
    %p184 = scmp.eq.s32.totalorder %s33, 0
    %p185 = por %p183, %p184
    %p186 = scmp.ne.s32.totalorder %s174, %s175
    %p187 = scmp.eq.s32.totalorder %s34, 1
    %p188 = por %p186, %p187
    %p190 = scmp.ne.s32.totalorder %s175, %s189
    %p191 = scmp.eq.s32.totalorder %s34, 0
    %p192 = por %p190, %p191
    %s194 = sadd.s32 %s193, 1
    %p197 = scmp.eq.s32.totalorder %s28, 1
    %p198 = scmp.ne.s32.totalorder %s193, %s195
    %p199 = scmp.eq.s32.totalorder %s28, 0
    %p200 = por %p198, %p199
    %p201 = scmp.ne.s32.totalorder %s193, %s195
    %p202 = scmp.eq.s32.totalorder %s33, 1
    %p203 = por %p201, %p202
    %p204 = scmp.ne.s32.totalorder %s195, %s196
    %p205 = scmp.eq.s32.totalorder %s33, 0
    %p206 = por %p204, %p205
    %p207 = scmp.ne.s32.totalorder %s195, %s196
    %p208 = scmp.eq.s32.totalorder %s34, 1
    %p209 = por %p207, %p208
    %p211 = scmp.ne.s32.totalorder %s196, %s210
    %p212 = scmp.eq.s32.totalorder %s34, 0
    %p213 = por %p211, %p212
    %s215 = sadd.s32 %s214, 1
    %p218 = scmp.eq.s32.totalorder %s28, 1
    %p219 = scmp.ne.s32.totalorder %s214, %s216
    %p220 = scmp.eq.s32.totalorder %s28, 0
    %p221 = por %p219, %p220
    %p222 = scmp.ne.s32.totalorder %s214, %s216
    %p223 = scmp.eq.s32.totalorder %s33, 1
    %p224 = por %p222, %p223
    %p225 = scmp.ne.s32.totalorder %s216, %s217
    %p226 = scmp.eq.s32.totalorder %s33, 0
    %p227 = por %p225, %p226
    %p228 = scmp.ne.s32.totalorder %s216, %s217
    %p229 = scmp.eq.s32.totalorder %s34, 1
    %p230 = por %p228, %p229
    %p232 = scmp.ne.s32.totalorder %s217, %s231
    %p233 = scmp.eq.s32.totalorder %s34, 0
    %p234 = por %p232, %p233
    %s236 = sadd.s32 %s235, 1
    %p239 = scmp.eq.s32.totalorder %s28, 1
    %p240 = scmp.ne.s32.totalorder %s235, %s237
    %p241 = scmp.eq.s32.totalorder %s28, 0
    %p242 = por %p240, %p241
    %p243 = scmp.ne.s32.totalorder %s235, %s237
    %p244 = scmp.eq.s32.totalorder %s33, 1
    %p245 = por %p243, %p244
    %p246 = scmp.ne.s32.totalorder %s237, %s238
    %p247 = scmp.eq.s32.totalorder %s33, 0
    %p248 = por %p246, %p247
    %p249 = scmp.ne.s32.totalorder %s237, %s238
    %p250 = scmp.eq.s32.totalorder %s34, 1
    %p251 = por %p249, %p250
    %p253 = scmp.ne.s32.totalorder %s238, %s252
    %p254 = scmp.eq.s32.totalorder %s34, 0
    %p255 = por %p253, %p254
    %s257 = sadd.s32 %s256, 1
    %p260 = scmp.eq.s32.totalorder %s28, 1
    %p261 = scmp.ne.s32.totalorder %s256, %s258
    %p262 = scmp.eq.s32.totalorder %s28, 0
    %p263 = por %p261, %p262
    %p264 = scmp.ne.s32.totalorder %s256, %s258
    %p265 = scmp.eq.s32.totalorder %s33, 1
    %p266 = por %p264, %p265
    %p267 = scmp.ne.s32.totalorder %s258, %s259
    %p268 = scmp.eq.s32.totalorder %s33, 0
    %p269 = por %p267, %p268
    %p270 = scmp.ne.s32.totalorder %s258, %s259
    %p271 = scmp.eq.s32.totalorder %s34, 1
    %p272 = por %p270, %p271
    %p274 = scmp.ne.s32.totalorder %s259, %s273
    %p275 = scmp.eq.s32.totalorder %s34, 0
    %p276 = por %p274, %p275
    %s278 = sadd.s32 %s277, 1
    %p281 = scmp.eq.s32.totalorder %s28, 1
    %p282 = scmp.ne.s32.totalorder %s277, %s279
    %p283 = scmp.eq.s32.totalorder %s28, 0
    %p284 = por %p282, %p283
    %p285 = scmp.ne.s32.totalorder %s277, %s279
    %p286 = scmp.eq.s32.totalorder %s33, 1
    %p287 = por %p285, %p286
    %p288 = scmp.ne.s32.totalorder %s279, %s280
    %p289 = scmp.eq.s32.totalorder %s33, 0
    %p290 = por %p288, %p289
    %p291 = scmp.ne.s32.totalorder %s279, %s280
    %p292 = scmp.eq.s32.totalorder %s34, 1
    %p293 = por %p291, %p292
    %p295 = scmp.ne.s32.totalorder %s280, %s294
    %p296 = scmp.eq.s32.totalorder %s34, 0
    %p297 = por %p295, %p296
    %s299 = sadd.s32 %s298, 1
    %p302 = scmp.eq.s32.totalorder %s28, 1
    %p303 = scmp.ne.s32.totalorder %s298, %s300
    %p304 = scmp.eq.s32.totalorder %s28, 0
    %p305 = por %p303, %p304
    %p306 = scmp.ne.s32.totalorder %s298, %s300
    %p307 = scmp.eq.s32.totalorder %s33, 1
    %p308 = por %p306, %p307
    %p309 = scmp.ne.s32.totalorder %s300, %s301
    %p310 = scmp.eq.s32.totalorder %s33, 0
    %p311 = por %p309, %p310
    %p312 = scmp.ne.s32.totalorder %s300, %s301
    %p313 = scmp.eq.s32.totalorder %s34, 1
    %p314 = por %p312, %p313
    %p316 = scmp.ne.s32.totalorder %s301, %s315
    %p317 = scmp.eq.s32.totalorder %s34, 0
    %p318 = por %p316, %p317
    %s320 = sadd.s32 %s319, 1
    %p323 = scmp.eq.s32.totalorder %s28, 1
    %p324 = scmp.ne.s32.totalorder %s319, %s321
    %p325 = scmp.eq.s32.totalorder %s28, 0
    %p326 = por %p324, %p325
    %p327 = scmp.ne.s32.totalorder %s319, %s321
    %p328 = scmp.eq.s32.totalorder %s33, 1
    %p329 = por %p327, %p328
    %p330 = scmp.ne.s32.totalorder %s321, %s322
    %p331 = scmp.eq.s32.totalorder %s33, 0
    %p332 = por %p330, %p331
    %p333 = scmp.ne.s32.totalorder %s321, %s322
    %p334 = scmp.eq.s32.totalorder %s34, 1
    %p335 = por %p333, %p334
    %p337 = scmp.ne.s32.totalorder %s322, %s336
    %p338 = scmp.eq.s32.totalorder %s34, 0
    %p339 = por %p337, %p338
    %s341 = sadd.s32 %s340, 1
    %p344 = scmp.eq.s32.totalorder %s28, 1
    %p345 = scmp.ne.s32.totalorder %s340, %s342
    %p346 = scmp.eq.s32.totalorder %s28, 0
    %p347 = por %p345, %p346
    %p348 = scmp.ne.s32.totalorder %s340, %s342
    %p349 = scmp.eq.s32.totalorder %s33, 1
    %p350 = por %p348, %p349
    %p351 = scmp.ne.s32.totalorder %s342, %s343
    %p352 = scmp.eq.s32.totalorder %s33, 0
    %p353 = por %p351, %p352
    %p354 = scmp.ne.s32.totalorder %s342, %s343
    %p355 = scmp.eq.s32.totalorder %s34, 1
    %p356 = por %p354, %p355
    %p358 = scmp.ne.s32.totalorder %s343, %s357
    %p359 = scmp.eq.s32.totalorder %s34, 0
    %p360 = por %p358, %p359
    %s362 = sadd.s32 %s361, 1
    %p365 = scmp.eq.s32.totalorder %s28, 1
    %p366 = scmp.ne.s32.totalorder %s361, %s363
    %p367 = scmp.eq.s32.totalorder %s28, 0
    %p368 = por %p366, %p367
    %p369 = scmp.ne.s32.totalorder %s361, %s363
    %p370 = scmp.eq.s32.totalorder %s33, 1
    %p371 = por %p369, %p370
    %p372 = scmp.ne.s32.totalorder %s363, %s364
    %p373 = scmp.eq.s32.totalorder %s33, 0
    %p374 = por %p372, %p373
    %p375 = scmp.ne.s32.totalorder %s363, %s364
    %p376 = scmp.eq.s32.totalorder %s34, 1
    %p377 = por %p375, %p376
    %p379 = scmp.ne.s32.totalorder %s364, %s378
    %p380 = scmp.eq.s32.totalorder %s34, 0
    %p381 = por %p379, %p380
    %s383 = sadd.s32 %s382, 1
    %p386 = scmp.eq.s32.totalorder %s28, 1
    %p387 = scmp.ne.s32.totalorder %s382, %s384
    %p388 = scmp.eq.s32.totalorder %s28, 0
    %p389 = por %p387, %p388
    %p390 = scmp.ne.s32.totalorder %s382, %s384
    %p391 = scmp.eq.s32.totalorder %s33, 1
    %p392 = por %p390, %p391
    %p393 = scmp.ne.s32.totalorder %s384, %s385
    %p394 = scmp.eq.s32.totalorder %s33, 0
    %p395 = por %p393, %p394
    %p396 = scmp.ne.s32.totalorder %s384, %s385
    %p397 = scmp.eq.s32.totalorder %s34, 1
    %p398 = por %p396, %p397
    %p400 = scmp.ne.s32.totalorder %s385, %s399
    %p401 = scmp.eq.s32.totalorder %s34, 0
    %p402 = por %p400, %p401
    %s404 = sadd.s32 %s403, 1
    %p407 = scmp.eq.s32.totalorder %s28, 1
    %p408 = scmp.ne.s32.totalorder %s403, %s405
    %p409 = scmp.eq.s32.totalorder %s28, 0
    %p410 = por %p408, %p409
    %p411 = scmp.ne.s32.totalorder %s403, %s405
    %p412 = scmp.eq.s32.totalorder %s33, 1
    %p413 = por %p411, %p412
    %p414 = scmp.ne.s32.totalorder %s405, %s406
    %p415 = scmp.eq.s32.totalorder %s33, 0
    %p416 = por %p414, %p415
    %p417 = scmp.ne.s32.totalorder %s405, %s406
    %p418 = scmp.eq.s32.totalorder %s34, 1
    %p419 = por %p417, %p418
    %p421 = scmp.ne.s32.totalorder %s406, %s420
    %p422 = scmp.eq.s32.totalorder %s34, 0
    %p423 = por %p421, %p422
    %s425 = sadd.s32 %s424, 1
    %p428 = scmp.eq.s32.totalorder %s28, 1
    %p429 = scmp.ne.s32.totalorder %s424, %s426
    %p430 = scmp.eq.s32.totalorder %s28, 0
    %p431 = por %p429, %p430
    %p432 = scmp.ne.s32.totalorder %s424, %s426
    %p433 = scmp.eq.s32.totalorder %s33, 1
    %p434 = por %p432, %p433
    %p435 = scmp.ne.s32.totalorder %s426, %s427
    %p436 = scmp.eq.s32.totalorder %s33, 0
    %p437 = por %p435, %p436
    %p438 = scmp.ne.s32.totalorder %s426, %s427
    %p439 = scmp.eq.s32.totalorder %s34, 1
    %p440 = por %p438, %p439
    %p442 = scmp.ne.s32.totalorder %s427, %s441
    %p443 = scmp.eq.s32.totalorder %s34, 0
    %p444 = por %p442, %p443
    %s446 = sadd.s32 %s445, 1
    %p449 = scmp.eq.s32.totalorder %s28, 1
    %p450 = scmp.ne.s32.totalorder %s445, %s447
    %p451 = scmp.eq.s32.totalorder %s28, 0
    %p452 = por %p450, %p451
    %p453 = scmp.ne.s32.totalorder %s445, %s447
    %p454 = scmp.eq.s32.totalorder %s33, 1
    %p455 = por %p453, %p454
    %p456 = scmp.ne.s32.totalorder %s447, %s448
    %p457 = scmp.eq.s32.totalorder %s33, 0
    %p458 = por %p456, %p457
    %p459 = scmp.ne.s32.totalorder %s447, %s448
    %p460 = scmp.eq.s32.totalorder %s34, 1
    %p461 = por %p459, %p460
    %p463 = scmp.ne.s32.totalorder %s448, %s462
    %p464 = scmp.eq.s32.totalorder %s34, 0
    %p465 = por %p463, %p464
    %s467 = sadd.s32 %s466, 1
    %p470 = scmp.eq.s32.totalorder %s28, 1
    %p471 = scmp.ne.s32.totalorder %s466, %s468
    %p472 = scmp.eq.s32.totalorder %s28, 0
    %p473 = por %p471, %p472
    %p474 = scmp.ne.s32.totalorder %s466, %s468
    %p475 = scmp.eq.s32.totalorder %s33, 1
    %p476 = por %p474, %p475
    %p477 = scmp.ne.s32.totalorder %s468, %s469
    %p478 = scmp.eq.s32.totalorder %s33, 0
    %p479 = por %p477, %p478
    %p480 = scmp.ne.s32.totalorder %s468, %s469
    %p481 = scmp.eq.s32.totalorder %s34, 1
    %p482 = por %p480, %p481
    %p484 = scmp.ne.s32.totalorder %s469, %s483
    %p485 = scmp.eq.s32.totalorder %s34, 0
    %p486 = por %p484, %p485
    %s488 = sadd.s32 %s487, 1
    %p491 = scmp.eq.s32.totalorder %s28, 1
    %p492 = scmp.ne.s32.totalorder %s487, %s489
    %p493 = scmp.eq.s32.totalorder %s28, 0
    %p494 = por %p492, %p493
    %p495 = scmp.ne.s32.totalorder %s487, %s489
    %p496 = scmp.eq.s32.totalorder %s33, 1
    %p497 = por %p495, %p496
    %p498 = scmp.ne.s32.totalorder %s489, %s490
    %p499 = scmp.eq.s32.totalorder %s33, 0
    %p500 = por %p498, %p499
    %p501 = scmp.ne.s32.totalorder %s489, %s490
    %p502 = scmp.eq.s32.totalorder %s34, 1
    %p503 = por %p501, %p502
    %p505 = scmp.ne.s32.totalorder %s490, %s504
    %p506 = scmp.eq.s32.totalorder %s34, 0
    %p507 = por %p505, %p506
    %s508 = ssub.s32 %s28, %s35
    %p509 = scmp.eq.s32.totalorder %s508, 0
    %s511 = sadd.s32 %s510, 1
    %s512 = scalar_select %p509, %s510, %s511
    %p515 = pneg %p509
    %p516 = scmp.eq.s32.totalorder %s28, 1
    %p517 = por %p515, %p516
    %p518 = scmp.ne.s32.totalorder %s510, %s513
    %p519 = scmp.eq.s32.totalorder %s28, 0
    %p520 = por %p518, %p519
    %p521 = scmp.ne.s32.totalorder %s510, %s513
    %p522 = scmp.eq.s32.totalorder %s33, 1
    %p523 = por %p521, %p522
    %p524 = scmp.ne.s32.totalorder %s513, %s514
    %p525 = scmp.eq.s32.totalorder %s33, 0
    %p526 = por %p524, %p525
    %p527 = scmp.ne.s32.totalorder %s513, %s514
    %p528 = scmp.eq.s32.totalorder %s34, 1
    %p529 = por %p527, %p528
    %p531 = scmp.ne.s32.totalorder %s514, %s530
    %p532 = scmp.eq.s32.totalorder %s34, 0
    %p533 = por %p531, %p532
    %p534 = scmp.le.s32.totalorder 1, %s28
    %p535 = scmp.lt.s32.totalorder %s28, 3
    %p536 = pnand %p534, %p535
    %p537 = pneg %p536
    // Predicated region
    $region9: #{tpu_custom_call.1} parent=5 // pred_check
      _
    $region10: #{tpu_custom_call.1} parent=5 // pred_check_branch
      %539 = sbr.rel (%p536) target = $region12
    $region11: #{tpu_custom_call.1} parent=5 // pred_region
      %s540 = ssub.s32 %s28, 1
      // Predicated region
      $region13: #{tpu_custom_call.1} parent=11 // pred_check
        %p541 = pneg %p101
      $region14: #{tpu_custom_call.1} parent=11 // pred_check_branch
        %543 = sbr.rel (%p541) target = $region16
      $region15: #{tpu_custom_call.1} parent=11 // pred_region
        _
      $region16: #{tpu_custom_call.1} parent=11 // pred_fallthru
        _
      // Predicated region
      $region17: #{tpu_custom_call.1} parent=11 // pred_check
        %p544 = pneg %p122
      $region18: #{tpu_custom_call.1} parent=11 // pred_check_branch
        %546 = sbr.rel (%p544) target = $region20
      $region19: #{tpu_custom_call.1} parent=11 // pred_region
        _
      $region20: #{tpu_custom_call.1} parent=11 // pred_fallthru
        _
      // Predicated region
      $region21: #{tpu_custom_call.1} parent=11 // pred_check
        %p547 = pneg %p143
      $region22: #{tpu_custom_call.1} parent=11 // pred_check_branch
        %549 = sbr.rel (%p547) target = $region24
      $region23: #{tpu_custom_call.1} parent=11 // pred_region
        _
      $region24: #{tpu_custom_call.1} parent=11 // pred_fallthru
        _
      // Predicated region
      $region25: #{tpu_custom_call.1} parent=11 // pred_check
        %p550 = pneg %p164
      $region26: #{tpu_custom_call.1} parent=11 // pred_check_branch
        %552 = sbr.rel (%p550) target = $region28
      $region27: #{tpu_custom_call.1} parent=11 // pred_region
        _
      $region28: #{tpu_custom_call.1} parent=11 // pred_fallthru
        _
      // Predicated region
      $region29: #{tpu_custom_call.1} parent=11 // pred_check
        %p553 = pneg %p185
      $region30: #{tpu_custom_call.1} parent=11 // pred_check_branch
        %555 = sbr.rel (%p553) target = $region32
      $region31: #{tpu_custom_call.1} parent=11 // pred_region
        _
      $region32: #{tpu_custom_call.1} parent=11 // pred_fallthru
        _
      // Predicated region
      $region33: #{tpu_custom_call.1} parent=11 // pred_check
        %p556 = pneg %p206
      $region34: #{tpu_custom_call.1} parent=11 // pred_check_branch
        %558 = sbr.rel (%p556) target = $region36
      $region35: #{tpu_custom_call.1} parent=11 // pred_region
        _
      $region36: #{tpu_custom_call.1} parent=11 // pred_fallthru
        _
      // Predicated region
      $region37: #{tpu_custom_call.1} parent=11 // pred_check
        %p559 = pneg %p227
      $region38: #{tpu_custom_call.1} parent=11 // pred_check_branch
        %561 = sbr.rel (%p559) target = $region40
      $region39: #{tpu_custom_call.1} parent=11 // pred_region
        _
      $region40: #{tpu_custom_call.1} parent=11 // pred_fallthru
        _
      // Predicated region
      $region41: #{tpu_custom_call.1} parent=11 // pred_check
        %p562 = pneg %p248
      $region42: #{tpu_custom_call.1} parent=11 // pred_check_branch
        %564 = sbr.rel (%p562) target = $region44
      $region43: #{tpu_custom_call.1} parent=11 // pred_region
        _
      $region44: #{tpu_custom_call.1} parent=11 // pred_fallthru
        _
      // Predicated region
      $region45: #{tpu_custom_call.1} parent=11 // pred_check
        %p565 = pneg %p269
      $region46: #{tpu_custom_call.1} parent=11 // pred_check_branch
        %567 = sbr.rel (%p565) target = $region48
      $region47: #{tpu_custom_call.1} parent=11 // pred_region
        _
      $region48: #{tpu_custom_call.1} parent=11 // pred_fallthru
        _
      // Predicated region
      $region49: #{tpu_custom_call.1} parent=11 // pred_check
        %p568 = pneg %p290
      $region50: #{tpu_custom_call.1} parent=11 // pred_check_branch
        %570 = sbr.rel (%p568) target = $region52
      $region51: #{tpu_custom_call.1} parent=11 // pred_region
        _
      $region52: #{tpu_custom_call.1} parent=11 // pred_fallthru
        _
      // Predicated region
      $region53: #{tpu_custom_call.1} parent=11 // pred_check
        %p571 = pneg %p311
      $region54: #{tpu_custom_call.1} parent=11 // pred_check_branch
        %573 = sbr.rel (%p571) target = $region56
      $region55: #{tpu_custom_call.1} parent=11 // pred_region
        _
      $region56: #{tpu_custom_call.1} parent=11 // pred_fallthru
        _
      // Predicated region
      $region57: #{tpu_custom_call.1} parent=11 // pred_check
        %p574 = pneg %p332
      $region58: #{tpu_custom_call.1} parent=11 // pred_check_branch
        %576 = sbr.rel (%p574) target = $region60
      $region59: #{tpu_custom_call.1} parent=11 // pred_region
        _
      $region60: #{tpu_custom_call.1} parent=11 // pred_fallthru
        _
      // Predicated region
      $region61: #{tpu_custom_call.1} parent=11 // pred_check
        %p577 = pneg %p353
      $region62: #{tpu_custom_call.1} parent=11 // pred_check_branch
        %579 = sbr.rel (%p577) target = $region64
      $region63: #{tpu_custom_call.1} parent=11 // pred_region
        _
      $region64: #{tpu_custom_call.1} parent=11 // pred_fallthru
        _
      // Predicated region
      $region65: #{tpu_custom_call.1} parent=11 // pred_check
        %p580 = pneg %p374
      $region66: #{tpu_custom_call.1} parent=11 // pred_check_branch
        %582 = sbr.rel (%p580) target = $region68
      $region67: #{tpu_custom_call.1} parent=11 // pred_region
        _
      $region68: #{tpu_custom_call.1} parent=11 // pred_fallthru
        _
      // Predicated region
      $region69: #{tpu_custom_call.1} parent=11 // pred_check
        %p583 = pneg %p395
      $region70: #{tpu_custom_call.1} parent=11 // pred_check_branch
        %585 = sbr.rel (%p583) target = $region72
      $region71: #{tpu_custom_call.1} parent=11 // pred_region
        _
      $region72: #{tpu_custom_call.1} parent=11 // pred_fallthru
        _
      // Predicated region
      $region73: #{tpu_custom_call.1} parent=11 // pred_check
        %p586 = pneg %p416
      $region74: #{tpu_custom_call.1} parent=11 // pred_check_branch
        %588 = sbr.rel (%p586) target = $region76
      $region75: #{tpu_custom_call.1} parent=11 // pred_region
        _
      $region76: #{tpu_custom_call.1} parent=11 // pred_fallthru
        _
      // Predicated region
      $region77: #{tpu_custom_call.1} parent=11 // pred_check
        %p589 = pneg %p437
      $region78: #{tpu_custom_call.1} parent=11 // pred_check_branch
        %591 = sbr.rel (%p589) target = $region80
      $region79: #{tpu_custom_call.1} parent=11 // pred_region
        _
      $region80: #{tpu_custom_call.1} parent=11 // pred_fallthru
        _
      // Predicated region
      $region81: #{tpu_custom_call.1} parent=11 // pred_check
        %p592 = pneg %p458
      $region82: #{tpu_custom_call.1} parent=11 // pred_check_branch
        %594 = sbr.rel (%p592) target = $region84
      $region83: #{tpu_custom_call.1} parent=11 // pred_region
        _
      $region84: #{tpu_custom_call.1} parent=11 // pred_fallthru
        _
      // Predicated region
      $region85: #{tpu_custom_call.1} parent=11 // pred_check
        %p595 = pneg %p479
      $region86: #{tpu_custom_call.1} parent=11 // pred_check_branch
        %597 = sbr.rel (%p595) target = $region88
      $region87: #{tpu_custom_call.1} parent=11 // pred_region
        _
      $region88: #{tpu_custom_call.1} parent=11 // pred_fallthru
        _
      // Predicated region
      $region89: #{tpu_custom_call.1} parent=11 // pred_check
        %p598 = pneg %p500
      $region90: #{tpu_custom_call.1} parent=11 // pred_check_branch
        %600 = sbr.rel (%p598) target = $region92
      $region91: #{tpu_custom_call.1} parent=11 // pred_region
        _
      $region92: #{tpu_custom_call.1} parent=11 // pred_fallthru
        _
    $region12: #{tpu_custom_call.1} parent=5 // pred_fallthru
      _
    %p601 = scmp.lt.s32.totalorder %s28, 2
    // Predicated region
    $region93: #{tpu_custom_call.1} parent=5 // pred_check
      %p602 = pneg %p601
    $region94: #{tpu_custom_call.1} parent=5 // pred_check_branch
      %604 = sbr.rel (%p602) target = $region96
    $region95: #{tpu_custom_call.1} parent=5 // pred_region
      // Predicated region
      $region97: #{tpu_custom_call.1} parent=95 // pred_check
        %p605 = pneg %p48
      $region98: #{tpu_custom_call.1} parent=95 // pred_check_branch
        %607 = sbr.rel (%p605) target = $region100
      $region99: #{tpu_custom_call.1} parent=95 // pred_region
        %s608 = smul.u32 2, %s28
        %p609 = scmp.lt.s32.totalorder %s608, 3
        %s610 = scalar_select %p609, %s608, 3
        %s611 = smul.addr %s610, 8
        %s612 = scalar_lea.vmem %s0, %s611
        %s613 = smul.u32 2, %s28
      $region100: #{tpu_custom_call.1} parent=95 // pred_fallthru
        _
      // Predicated region
      $region101: #{tpu_custom_call.1} parent=95 // pred_check
        %p614 = pneg %p74
      $region102: #{tpu_custom_call.1} parent=95 // pred_check_branch
        %616 = sbr.rel (%p614) target = $region104
      $region103: #{tpu_custom_call.1} parent=95 // pred_region
        %p617 = scmp.lt.s32.totalorder %s28, 1
        %s618 = scalar_select %p617, %s28, 1
        %s619 = scalar_lea.vmem %s1, %s618
      $region104: #{tpu_custom_call.1} parent=95 // pred_fallthru
        _
    $region96: #{tpu_custom_call.1} parent=5 // pred_fallthru
      _
    %p620 = scmp.le.s32.totalorder 1, %s28
    %p621 = scmp.lt.s32.totalorder %s28, 3
    %p622 = pnand %p620, %p621
    %p623 = pneg %p622
    // Predicated region
    $region105: #{tpu_custom_call.1} parent=5 // pred_check
      _
    $region106: #{tpu_custom_call.1} parent=5 // pred_check_branch
      %625 = sbr.rel (%p622) target = $region108
    $region107: #{tpu_custom_call.1} parent=5 // pred_region
      %s626 = ssub.s32 %s28, 1
      %s627 = smul.u32 2, %s33
      %p628 = scmp.lt.s32.totalorder %s627, 3
      %s629 = scalar_select %p628, %s627, 3
      %s630 = smul.addr %s629, 8
      %s631 = scalar_lea.vmem %s0, %s630
      %p632 = pneg %p54
      %p633 = pneg %p51
      %p634 = scmp.lt.s32.totalorder %s33, 1
      %s635 = scalar_select %p634, %s33, 1
      %s636 = scalar_lea.vmem %s1, %s635
      %p637 = pneg %p80
      %p638 = pneg %p77
      %p639 = pneg %p101
      %p640 = pneg %p98
      %p641 = pneg %p122
      %p642 = pneg %p119
      %p643 = pneg %p143
      %p644 = pneg %p140
      %p645 = pneg %p164
      %p646 = pneg %p161
      %p647 = pneg %p185
      %p648 = pneg %p182
      %p649 = pneg %p206
      %p650 = pneg %p203
      %p651 = pneg %p227
      %p652 = pneg %p224
      %p653 = pneg %p248
      %p654 = pneg %p245
      %p655 = pneg %p269
      %p656 = pneg %p266
      %p657 = pneg %p290
      %p658 = pneg %p287
      %p659 = pneg %p311
      %p660 = pneg %p308
      %p661 = pneg %p332
      %p662 = pneg %p329
      %p663 = pneg %p353
      %p664 = pneg %p350
      %p665 = pneg %p374
      %p666 = pneg %p371
      %p667 = pneg %p395
      %p668 = pneg %p392
      %p669 = pneg %p416
      %p670 = pneg %p413
      %p671 = pneg %p437
      %p672 = pneg %p434
      %p673 = pneg %p458
      %p674 = pneg %p455
      %p675 = pneg %p479
      %p676 = pneg %p476
      %p677 = pneg %p500
      %p678 = pneg %p497
      %p679 = pneg %p526
      %p680 = pneg %p523
      %s681 = smul.u32 2, %s33
      %p682 = scmp.lt.s32.totalorder %s681, 3
      %s683 = scalar_select %p682, %s681, 3
      %s684 = smul.addr %s683, 8
      %s685 = scalar_lea.vmem %s22, %s684
      %s686 = smul.u32 2, %s33
      %p687 = scmp.lt.s32.totalorder %s686, 3
      %s688 = scalar_select %p687, %s686, 3
      %s689 = smul.addr %s688, 8
      %s690 = scalar_lea.vmem %s0, %s689
      %s691 = smul.u32 2, %s33
      %p692 = scmp.lt.s32.totalorder %s33, 1
      %s693 = scalar_select %p692, %s33, 1
      %s694 = scalar_lea.vmem %s1, %s693
      %s695 = smul.u32 2, %s33
      %p696 = scmp.lt.s32.totalorder %s695, 3
      %s697 = scalar_select %p696, %s695, 3
      %s698 = smul.addr %s697, 8
      %s699 = scalar_lea.vmem %s22, %s698
      %s700 = smul.u32 2, %s33
      %v702 = vld [vmem:[%s20] sm:$0xff]
      %v703 = vld [vmem:[%s20 + $0x8] sm:$0xff]
      %v704 = vld [vmem:[%s21] sm:$0xff]
      %v705 = vld [vmem:[%s690] sm:$0xff]
      %v706 = vld [vmem:[%s690 + $0x8] sm:$0xff]
      %v707 = vld [vmem:[%s5] sm:$0x1]
      %v708 = vrot.slane %v705, 7
      %v709 = vrot.slane %v706, 7
      %v710 = vlaneseq
      %v711 = vshrl.u32 %v710, 7
      %vm712 = vcmp.lt.s32.totalorder %v711, 1
      %v713 = vsel %vm712, %v708, %v709
      %v714 = vsel %vm712, %v709, %v708
      %v715 = vpack.c.bf16 %v713, %v714
      %v716 = vunpack.c.l.bf16 %v715
      %v717 = vunpack.c.h.bf16 %v715
      %v718 = vsub.f32 %v714, %v716
      %v719 = vsub.f32 %v713, %v717
      %v720 = vpack.c.bf16 %v719, %v718
      %v721 = vld [vmem:[%s3] sm:$0x3]
      %v722 = vld [vmem:[%s4] sm:$0x3]
      %vm723 = vcmask 31744
      %v725 = vsel %vm723, %v715, 0
      %vm727 = vcmask 1041408
      %v729 = vsel %vm727, %v722, 0
      %731 = vmatprep.subr.bf16.mxu0 0
      %732 = vmatpush1.bf16.msra.mxu0 %v729
      %733 = vmatprep.subr.bf16.mxu0 0
      %734 = vmatpush1.bf16.msra.mxu0 0
      %735 = vmatprep.subr.bf16.mxu0 0
      %736 = vmatpush1.bf16.msra.mxu0 0
      %737 = vmatprep.subr.bf16.mxu0 0
      %738 = vmatpush1.bf16.msra.mxu0 0
      %739 = vmatprep.subr.bf16.mxu0 0
      %740 = vmatpush1.bf16.msra.mxu0 0
      %741 = vmatprep.subr.bf16.mxu0 0
      %742 = vmatpush1.bf16.msra.mxu0 0
      %743 = vmatprep.subr.bf16.mxu0 0
      %744 = vmatpush1.bf16.msra.mxu0 0
      %745 = vmatprep.subr.bf16.mxu0 0
      %746 = vmatpush1.bf16.msra.mxu0 0
      %747 = vmatprep.subr.bf16.mxu0 0
      %748 = vmatpush1.bf16.msra.mxu0 0
      %749 = vmatprep.subr.bf16.mxu0 0
      %750 = vmatpush1.bf16.msra.mxu0 0
      %751 = vmatprep.subr.bf16.mxu0 0
      %752 = vmatpush1.bf16.msra.mxu0 0
      %753 = vmatprep.subr.bf16.mxu0 0
      %754 = vmatpush1.bf16.msra.mxu0 0
      %755 = vmatprep.subr.bf16.mxu0 0
      %756 = vmatpush1.bf16.msra.mxu0 0
      %757 = vmatprep.subr.bf16.mxu0 0
      %758 = vmatpush1.bf16.msra.mxu0 0
      %759 = vmatprep.subr.bf16.mxu0 0
      %760 = vmatpush1.bf16.msra.mxu0 0
      %761 = vmatprep.subr.bf16.mxu0 0
      %762 = vmatpush1.bf16.msra.mxu0 0
      %763 = vmatprep.mubr.bf16.mxu0 0
      %764 = vmatmul.mubr.bf16.gmra.mrb[0].mxu0 %v725
      %v765 = vpop.f32.mrb[0].mxu0
      %v766 = vadd.f32 0.0, %v765
      %v767 = vpop.f32.mrb[0].mxu0
      %v768 = vpop.f32.mrb[0].mxu0
      %v769 = vadd.f32 0.0, %v768
      %v770 = vpop.f32.mrb[0].mxu0
      %771 = vdwg.mxu0
      %v773 = vsel %vm727, %v721, 0
      %775 = vmatprep.subr.bf16.mxu0 0
      %776 = vmatpush1.bf16.msra.mxu0 %v773
      %777 = vmatprep.subr.bf16.mxu0 0
      %778 = vmatpush1.bf16.msra.mxu0 0
      %779 = vmatprep.subr.bf16.mxu0 0
      %780 = vmatpush1.bf16.msra.mxu0 0
      %781 = vmatprep.subr.bf16.mxu0 0
      %782 = vmatpush1.bf16.msra.mxu0 0
      %783 = vmatprep.subr.bf16.mxu0 0
      %784 = vmatpush1.bf16.msra.mxu0 0
      %785 = vmatprep.subr.bf16.mxu0 0
      %786 = vmatpush1.bf16.msra.mxu0 0
      %787 = vmatprep.subr.bf16.mxu0 0
      %788 = vmatpush1.bf16.msra.mxu0 0
      %789 = vmatprep.subr.bf16.mxu0 0
      %790 = vmatpush1.bf16.msra.mxu0 0
      %791 = vmatprep.subr.bf16.mxu0 0
      %792 = vmatpush1.bf16.msra.mxu0 0
      %793 = vmatprep.subr.bf16.mxu0 0
      %794 = vmatpush1.bf16.msra.mxu0 0
      %795 = vmatprep.subr.bf16.mxu0 0
      %796 = vmatpush1.bf16.msra.mxu0 0
      %797 = vmatprep.subr.bf16.mxu0 0
      %798 = vmatpush1.bf16.msra.mxu0 0
      %799 = vmatprep.subr.bf16.mxu0 0
      %800 = vmatpush1.bf16.msra.mxu0 0
      %801 = vmatprep.subr.bf16.mxu0 0
      %802 = vmatpush1.bf16.msra.mxu0 0
      %803 = vmatprep.subr.bf16.mxu0 0
      %804 = vmatpush1.bf16.msra.mxu0 0
      %805 = vmatprep.subr.bf16.mxu0 0
      %806 = vmatpush1.bf16.msra.mxu0 0
      %807 = vmatprep.mubr.bf16.mxu0 0
      %808 = vmatmul.mubr.bf16.gmra.mrb[0].mxu0 %v725
      %v809 = vpop.f32.mrb[0].mxu0
      %v810 = vadd.f32 %v766, %v809
      %v811 = vpop.f32.mrb[0].mxu0
      %v812 = vpop.f32.mrb[0].mxu0
      %v813 = vadd.f32 %v769, %v812
      %v814 = vpop.f32.mrb[0].mxu0
      %815 = vdwg.mxu0
      %v817 = vsel %vm723, %v720, 0
      %819 = vmatprep.subr.bf16.mxu0 0
      %820 = vmatpush1.bf16.msra.mxu0 %v773
      %821 = vmatprep.subr.bf16.mxu0 0
      %822 = vmatpush1.bf16.msra.mxu0 0
      %823 = vmatprep.subr.bf16.mxu0 0
      %824 = vmatpush1.bf16.msra.mxu0 0
      %825 = vmatprep.subr.bf16.mxu0 0
      %826 = vmatpush1.bf16.msra.mxu0 0
      %827 = vmatprep.subr.bf16.mxu0 0
      %828 = vmatpush1.bf16.msra.mxu0 0
      %829 = vmatprep.subr.bf16.mxu0 0
      %830 = vmatpush1.bf16.msra.mxu0 0
      %831 = vmatprep.subr.bf16.mxu0 0
      %832 = vmatpush1.bf16.msra.mxu0 0
      %833 = vmatprep.subr.bf16.mxu0 0
      %834 = vmatpush1.bf16.msra.mxu0 0
      %835 = vmatprep.subr.bf16.mxu0 0
      %836 = vmatpush1.bf16.msra.mxu0 0
      %837 = vmatprep.subr.bf16.mxu0 0
      %838 = vmatpush1.bf16.msra.mxu0 0
      %839 = vmatprep.subr.bf16.mxu0 0
      %840 = vmatpush1.bf16.msra.mxu0 0
      %841 = vmatprep.subr.bf16.mxu0 0
      %842 = vmatpush1.bf16.msra.mxu0 0
      %843 = vmatprep.subr.bf16.mxu0 0
      %844 = vmatpush1.bf16.msra.mxu0 0
      %845 = vmatprep.subr.bf16.mxu0 0
      %846 = vmatpush1.bf16.msra.mxu0 0
      %847 = vmatprep.subr.bf16.mxu0 0
      %848 = vmatpush1.bf16.msra.mxu0 0
      %849 = vmatprep.subr.bf16.mxu0 0
      %850 = vmatpush1.bf16.msra.mxu0 0
      %851 = vmatprep.mubr.bf16.mxu0 0
      %852 = vmatmul.mubr.bf16.gmra.mrb[0].mxu0 %v817
      %v853 = vpop.f32.mrb[0].mxu0
      %v854 = vadd.f32 0.0, %v853
      %v855 = vpop.f32.mrb[0].mxu0
      %v856 = vpop.f32.mrb[0].mxu0
      %v857 = vadd.f32 0.0, %v856
      %v858 = vpop.f32.mrb[0].mxu0
      %859 = vdwg.mxu0
      %v860 = vadd.f32 %v810, %v854
      %v861 = vadd.f32 %v813, %v857
      %v862 = vld [vmem:[%s2] sm:$0xff]
      %v863 = vld [vmem:[%s2 + $0x8] sm:$0xff]
      %865 = vset.pattern.permute.xlu0 0
      %866 = vperm.xlu0 %865, %v862
      %v867 = vpop.permute.xlu0 %866
      %870 = vset.pattern.permute.xlu0 0
      %871 = vperm.xlu0 %870, %v863
      %v872 = vpop.permute.xlu0 %871
      %v874 = vmul.f32 %v860, %v867
      %v875 = vmul.f32 %v861, %v872
      %v877 = vlaneseq
      %v878 = vshrl.u32 %v877, 7
      %v879 = vsub.s32 0, %v878
      %v880 = vrot.slane %v707, %v879
      %v882 = vadd.f32 %v880, %v874
      %v883 = vadd.f32 %v880, %v875
      %v884 = vpack.c.bf16 %v706, %v705
      %v885 = vunpack.c.l.bf16 %v884
      %v886 = vunpack.c.h.bf16 %v884
      %v887 = vsub.f32 %v705, %v885
      %v888 = vsub.f32 %v706, %v886
      %v889 = vpack.c.bf16 %v888, %v887
      %s890 = scalar_lea.vmem %s3, 2
      %v891 = vld [vmem:[%s890] sm:$0x3]
      %s892 = scalar_lea.vmem %s4, 2
      %v893 = vld [vmem:[%s892] sm:$0x3]
      %v895 = vsel %vm723, %v884, 0
      %v898 = vsel %vm727, %v893, 0
      %900 = vmatprep.subr.bf16.mxu0 0
      %901 = vmatpush1.bf16.msra.mxu0 %v898
      %902 = vmatprep.subr.bf16.mxu0 0
      %903 = vmatpush1.bf16.msra.mxu0 0
      %904 = vmatprep.subr.bf16.mxu0 0
      %905 = vmatpush1.bf16.msra.mxu0 0
      %906 = vmatprep.subr.bf16.mxu0 0
      %907 = vmatpush1.bf16.msra.mxu0 0
      %908 = vmatprep.subr.bf16.mxu0 0
      %909 = vmatpush1.bf16.msra.mxu0 0
      %910 = vmatprep.subr.bf16.mxu0 0
      %911 = vmatpush1.bf16.msra.mxu0 0
      %912 = vmatprep.subr.bf16.mxu0 0
      %913 = vmatpush1.bf16.msra.mxu0 0
      %914 = vmatprep.subr.bf16.mxu0 0
      %915 = vmatpush1.bf16.msra.mxu0 0
      %916 = vmatprep.subr.bf16.mxu0 0
      %917 = vmatpush1.bf16.msra.mxu0 0
      %918 = vmatprep.subr.bf16.mxu0 0
      %919 = vmatpush1.bf16.msra.mxu0 0
      %920 = vmatprep.subr.bf16.mxu0 0
      %921 = vmatpush1.bf16.msra.mxu0 0
      %922 = vmatprep.subr.bf16.mxu0 0
      %923 = vmatpush1.bf16.msra.mxu0 0
      %924 = vmatprep.subr.bf16.mxu0 0
      %925 = vmatpush1.bf16.msra.mxu0 0
      %926 = vmatprep.subr.bf16.mxu0 0
      %927 = vmatpush1.bf16.msra.mxu0 0
      %928 = vmatprep.subr.bf16.mxu0 0
      %929 = vmatpush1.bf16.msra.mxu0 0
      %930 = vmatprep.subr.bf16.mxu0 0
      %931 = vmatpush1.bf16.msra.mxu0 0
      %932 = vmatprep.mubr.bf16.mxu0 0
      %933 = vmatmul.mubr.bf16.gmra.mrb[0].mxu0 %v895
      %v934 = vpop.f32.mrb[0].mxu0
      %v935 = vadd.f32 0.0, %v934
      %v936 = vpop.f32.mrb[0].mxu0
      %v937 = vpop.f32.mrb[0].mxu0
      %v938 = vadd.f32 0.0, %v937
      %v939 = vpop.f32.mrb[0].mxu0
      %940 = vdwg.mxu0
      %v942 = vsel %vm727, %v891, 0
      %944 = vmatprep.subr.bf16.mxu0 0
      %945 = vmatpush1.bf16.msra.mxu0 %v942
      %946 = vmatprep.subr.bf16.mxu0 0
      %947 = vmatpush1.bf16.msra.mxu0 0
      %948 = vmatprep.subr.bf16.mxu0 0
      %949 = vmatpush1.bf16.msra.mxu0 0
      %950 = vmatprep.subr.bf16.mxu0 0
      %951 = vmatpush1.bf16.msra.mxu0 0
      %952 = vmatprep.subr.bf16.mxu0 0
      %953 = vmatpush1.bf16.msra.mxu0 0
      %954 = vmatprep.subr.bf16.mxu0 0
      %955 = vmatpush1.bf16.msra.mxu0 0
      %956 = vmatprep.subr.bf16.mxu0 0
      %957 = vmatpush1.bf16.msra.mxu0 0
      %958 = vmatprep.subr.bf16.mxu0 0
      %959 = vmatpush1.bf16.msra.mxu0 0
      %960 = vmatprep.subr.bf16.mxu0 0
      %961 = vmatpush1.bf16.msra.mxu0 0
      %962 = vmatprep.subr.bf16.mxu0 0
      %963 = vmatpush1.bf16.msra.mxu0 0
      %964 = vmatprep.subr.bf16.mxu0 0
      %965 = vmatpush1.bf16.msra.mxu0 0
      %966 = vmatprep.subr.bf16.mxu0 0
      %967 = vmatpush1.bf16.msra.mxu0 0
      %968 = vmatprep.subr.bf16.mxu0 0
      %969 = vmatpush1.bf16.msra.mxu0 0
      %970 = vmatprep.subr.bf16.mxu0 0
      %971 = vmatpush1.bf16.msra.mxu0 0
      %972 = vmatprep.subr.bf16.mxu0 0
      %973 = vmatpush1.bf16.msra.mxu0 0
      %974 = vmatprep.subr.bf16.mxu0 0
      %975 = vmatpush1.bf16.msra.mxu0 0
      %976 = vmatprep.mubr.bf16.mxu0 0
      %977 = vmatmul.mubr.bf16.gmra.mrb[0].mxu0 %v895
      %v978 = vpop.f32.mrb[0].mxu0
      %v979 = vadd.f32 %v935, %v978
      %v980 = vpop.f32.mrb[0].mxu0
      %v981 = vpop.f32.mrb[0].mxu0
      %v982 = vadd.f32 %v938, %v981
      %v983 = vpop.f32.mrb[0].mxu0
      %984 = vdwg.mxu0
      %v986 = vsel %vm723, %v889, 0
      %988 = vmatprep.subr.bf16.mxu0 0
      %989 = vmatpush1.bf16.msra.mxu0 %v942
      %990 = vmatprep.subr.bf16.mxu0 0
      %991 = vmatpush1.bf16.msra.mxu0 0
      %992 = vmatprep.subr.bf16.mxu0 0
      %993 = vmatpush1.bf16.msra.mxu0 0
      %994 = vmatprep.subr.bf16.mxu0 0
      %995 = vmatpush1.bf16.msra.mxu0 0
      %996 = vmatprep.subr.bf16.mxu0 0
      %997 = vmatpush1.bf16.msra.mxu0 0
      %998 = vmatprep.subr.bf16.mxu0 0
      %999 = vmatpush1.bf16.msra.mxu0 0
      %1000 = vmatprep.subr.bf16.mxu0 0
      %1001 = vmatpush1.bf16.msra.mxu0 0
      %1002 = vmatprep.subr.bf16.mxu0 0
      %1003 = vmatpush1.bf16.msra.mxu0 0
      %1004 = vmatprep.subr.bf16.mxu0 0
      %1005 = vmatpush1.bf16.msra.mxu0 0
      %1006 = vmatprep.subr.bf16.mxu0 0
      %1007 = vmatpush1.bf16.msra.mxu0 0
      %1008 = vmatprep.subr.bf16.mxu0 0
      %1009 = vmatpush1.bf16.msra.mxu0 0
      %1010 = vmatprep.subr.bf16.mxu0 0
      %1011 = vmatpush1.bf16.msra.mxu0 0
      %1012 = vmatprep.subr.bf16.mxu0 0
      %1013 = vmatpush1.bf16.msra.mxu0 0
      %1014 = vmatprep.subr.bf16.mxu0 0
      %1015 = vmatpush1.bf16.msra.mxu0 0
      %1016 = vmatprep.subr.bf16.mxu0 0
      %1017 = vmatpush1.bf16.msra.mxu0 0
      %1018 = vmatprep.subr.bf16.mxu0 0
      %1019 = vmatpush1.bf16.msra.mxu0 0
      %1020 = vmatprep.mubr.bf16.mxu0 0
      %1021 = vmatmul.mubr.bf16.gmra.mrb[0].mxu0 %v986
      %v1022 = vpop.f32.mrb[0].mxu0
      %v1023 = vadd.f32 0.0, %v1022
      %v1024 = vpop.f32.mrb[0].mxu0
      %v1025 = vpop.f32.mrb[0].mxu0
      %v1026 = vadd.f32 0.0, %v1025
      %v1027 = vpop.f32.mrb[0].mxu0
      %1028 = vdwg.mxu0
      %v1029 = vadd.f32 %v979, %v1023
      %v1030 = vadd.f32 %v982, %v1026
      %v1031 = vadd.f32 %v882, %v1029
      %v1032 = vadd.f32 %v883, %v1030
      %v1033 = vrot.slane %v705, 1
      %v1034 = vrot.slane %v706, 1
      %vm1035 = vcmp.lt.s32.totalorder %v711, 7
      %v1036 = vsel %vm1035, %v1033, %v1034
      %v1037 = vsel %vm1035, %v1034, %v1033
      %v1038 = vpack.c.bf16 %v1037, %v1036
      %v1039 = vunpack.c.l.bf16 %v1038
      %v1040 = vunpack.c.h.bf16 %v1038
      %v1041 = vsub.f32 %v1036, %v1039
      %v1042 = vsub.f32 %v1037, %v1040
      %v1043 = vpack.c.bf16 %v1042, %v1041
      %s1044 = scalar_lea.vmem %s3, 4
      %v1045 = vld [vmem:[%s1044] sm:$0x3]
      %s1046 = scalar_lea.vmem %s4, 4
      %v1047 = vld [vmem:[%s1046] sm:$0x3]
      %v1049 = vsel %vm723, %v1038, 0
      %v1052 = vsel %vm727, %v1047, 0
      %1054 = vmatprep.subr.bf16.mxu0 0
      %1055 = vmatpush1.bf16.msra.mxu0 %v1052
      %1056 = vmatprep.subr.bf16.mxu0 0
      %1057 = vmatpush1.bf16.msra.mxu0 0
      %1058 = vmatprep.subr.bf16.mxu0 0
      %1059 = vmatpush1.bf16.msra.mxu0 0
      %1060 = vmatprep.subr.bf16.mxu0 0
      %1061 = vmatpush1.bf16.msra.mxu0 0
      %1062 = vmatprep.subr.bf16.mxu0 0
      %1063 = vmatpush1.bf16.msra.mxu0 0
      %1064 = vmatprep.subr.bf16.mxu0 0
      %1065 = vmatpush1.bf16.msra.mxu0 0
      %1066 = vmatprep.subr.bf16.mxu0 0
      %1067 = vmatpush1.bf16.msra.mxu0 0
      %1068 = vmatprep.subr.bf16.mxu0 0
      %1069 = vmatpush1.bf16.msra.mxu0 0
      %1070 = vmatprep.subr.bf16.mxu0 0
      %1071 = vmatpush1.bf16.msra.mxu0 0
      %1072 = vmatprep.subr.bf16.mxu0 0
      %1073 = vmatpush1.bf16.msra.mxu0 0
      %1074 = vmatprep.subr.bf16.mxu0 0
      %1075 = vmatpush1.bf16.msra.mxu0 0
      %1076 = vmatprep.subr.bf16.mxu0 0
      %1077 = vmatpush1.bf16.msra.mxu0 0
      %1078 = vmatprep.subr.bf16.mxu0 0
      %1079 = vmatpush1.bf16.msra.mxu0 0
      %1080 = vmatprep.subr.bf16.mxu0 0
      %1081 = vmatpush1.bf16.msra.mxu0 0
      %1082 = vmatprep.subr.bf16.mxu0 0
      %1083 = vmatpush1.bf16.msra.mxu0 0
      %1084 = vmatprep.subr.bf16.mxu0 0
      %1085 = vmatpush1.bf16.msra.mxu0 0
      %1086 = vmatprep.mubr.bf16.mxu0 0
      %1087 = vmatmul.mubr.bf16.gmra.mrb[0].mxu0 %v1049
      %v1088 = vpop.f32.mrb[0].mxu0
      %v1089 = vadd.f32 0.0, %v1088
      %v1090 = vpop.f32.mrb[0].mxu0
      %v1091 = vpop.f32.mrb[0].mxu0
      %v1092 = vadd.f32 0.0, %v1091
      %v1093 = vpop.f32.mrb[0].mxu0
      %1094 = vdwg.mxu0
      %v1096 = vsel %vm727, %v1045, 0
      %1098 = vmatprep.subr.bf16.mxu0 0
      %1099 = vmatpush1.bf16.msra.mxu0 %v1096
      %1100 = vmatprep.subr.bf16.mxu0 0
      %1101 = vmatpush1.bf16.msra.mxu0 0
      %1102 = vmatprep.subr.bf16.mxu0 0
      %1103 = vmatpush1.bf16.msra.mxu0 0
      %1104 = vmatprep.subr.bf16.mxu0 0
      %1105 = vmatpush1.bf16.msra.mxu0 0
      %1106 = vmatprep.subr.bf16.mxu0 0
      %1107 = vmatpush1.bf16.msra.mxu0 0
      %1108 = vmatprep.subr.bf16.mxu0 0
      %1109 = vmatpush1.bf16.msra.mxu0 0
      %1110 = vmatprep.subr.bf16.mxu0 0
      %1111 = vmatpush1.bf16.msra.mxu0 0
      %1112 = vmatprep.subr.bf16.mxu0 0
      %1113 = vmatpush1.bf16.msra.mxu0 0
      %1114 = vmatprep.subr.bf16.mxu0 0
      %1115 = vmatpush1.bf16.msra.mxu0 0
      %1116 = vmatprep.subr.bf16.mxu0 0
      %1117 = vmatpush1.bf16.msra.mxu0 0
      %1118 = vmatprep.subr.bf16.mxu0 0
      %1119 = vmatpush1.bf16.msra.mxu0 0
      %1120 = vmatprep.subr.bf16.mxu0 0
      %1121 = vmatpush1.bf16.msra.mxu0 0
      %1122 = vmatprep.subr.bf16.mxu0 0
      %1123 = vmatpush1.bf16.msra.mxu0 0
      %1124 = vmatprep.subr.bf16.mxu0 0
      %1125 = vmatpush1.bf16.msra.mxu0 0
      %1126 = vmatprep.subr.bf16.mxu0 0
      %1127 = vmatpush1.bf16.msra.mxu0 0
      %1128 = vmatprep.subr.bf16.mxu0 0
      %1129 = vmatpush1.bf16.msra.mxu0 0
      %1130 = vmatprep.mubr.bf16.mxu0 0
      %1131 = vmatmul.mubr.bf16.gmra.mrb[0].mxu0 %v1049
      %v1132 = vpop.f32.mrb[0].mxu0
      %v1133 = vadd.f32 %v1089, %v1132
      %v1134 = vpop.f32.mrb[0].mxu0
      %v1135 = vpop.f32.mrb[0].mxu0
      %v1136 = vadd.f32 %v1092, %v1135
      %v1137 = vpop.f32.mrb[0].mxu0
      %1138 = vdwg.mxu0
      %v1140 = vsel %vm723, %v1043, 0
      %1142 = vmatprep.subr.bf16.mxu0 0
      %1143 = vmatpush1.bf16.msra.mxu0 %v1096
      %1144 = vmatprep.subr.bf16.mxu0 0
      %1145 = vmatpush1.bf16.msra.mxu0 0
      %1146 = vmatprep.subr.bf16.mxu0 0
      %1147 = vmatpush1.bf16.msra.mxu0 0
      %1148 = vmatprep.subr.bf16.mxu0 0
      %1149 = vmatpush1.bf16.msra.mxu0 0
      %1150 = vmatprep.subr.bf16.mxu0 0
      %1151 = vmatpush1.bf16.msra.mxu0 0
      %1152 = vmatprep.subr.bf16.mxu0 0
      %1153 = vmatpush1.bf16.msra.mxu0 0
      %1154 = vmatprep.subr.bf16.mxu0 0
      %1155 = vmatpush1.bf16.msra.mxu0 0
      %1156 = vmatprep.subr.bf16.mxu0 0
      %1157 = vmatpush1.bf16.msra.mxu0 0
      %1158 = vmatprep.subr.bf16.mxu0 0
      %1159 = vmatpush1.bf16.msra.mxu0 0
      %1160 = vmatprep.subr.bf16.mxu0 0
      %1161 = vmatpush1.bf16.msra.mxu0 0
      %1162 = vmatprep.subr.bf16.mxu0 0
      %1163 = vmatpush1.bf16.msra.mxu0 0
      %1164 = vmatprep.subr.bf16.mxu0 0
      %1165 = vmatpush1.bf16.msra.mxu0 0
      %1166 = vmatprep.subr.bf16.mxu0 0
      %1167 = vmatpush1.bf16.msra.mxu0 0
      %1168 = vmatprep.subr.bf16.mxu0 0
      %1169 = vmatpush1.bf16.msra.mxu0 0
      %1170 = vmatprep.subr.bf16.mxu0 0
      %1171 = vmatpush1.bf16.msra.mxu0 0
      %1172 = vmatprep.subr.bf16.mxu0 0
      %1173 = vmatpush1.bf16.msra.mxu0 0
      %1174 = vmatprep.mubr.bf16.mxu0 0
      %1175 = vmatmul.mubr.bf16.gmra.mrb[0].mxu0 %v1140
      %v1176 = vpop.f32.mrb[0].mxu0
      %v1177 = vadd.f32 0.0, %v1176
      %v1178 = vpop.f32.mrb[0].mxu0
      %v1179 = vpop.f32.mrb[0].mxu0
      %v1180 = vadd.f32 0.0, %v1179
      %v1181 = vpop.f32.mrb[0].mxu0
      %1182 = vdwg.mxu0
      %v1183 = vadd.f32 %v1133, %v1177
      %v1184 = vadd.f32 %v1136, %v1180
      %s1185 = scalar_lea.vmem %s2, 32
      %v1186 = vld [vmem:[%s1185] sm:$0xff]
      %v1187 = vld [vmem:[%s1185 + $0x8] sm:$0xff]
      %1189 = vset.pattern.permute.xlu0 0
      %1190 = vperm.xlu0 %1189, %v1186
      %v1191 = vpop.permute.xlu0 %1190
      %1194 = vset.pattern.permute.xlu0 0
      %1195 = vperm.xlu0 %1194, %v1187
      %v1196 = vpop.permute.xlu0 %1195
      %v1198 = vmul.f32 %v1183, %v1191
      %v1199 = vmul.f32 %v1184, %v1196
      %v1200 = vadd.f32 %v1031, %v1198
      %v1201 = vadd.f32 %v1032, %v1199
      %v1202 = vld [vmem:[%s6] sm:$0x1]
      %v1203 = vld [vmem:[%s7] sm:$0x1]
      %vm1204 = vcmask 130048
      %v1205 = vsel %vm1204, %v1200, 0.0
      %v1206 = vsel %vm1204, %v1201, 0.0
      %v1207 = vadd.f32 %v1205, %v1206
      %v1208 = vrot.slane %v1207, 4
      %v1209 = vadd.f32 %v1207, %v1208
      %v1210 = vrot.slane %v1209, 2
      %v1211 = vadd.f32 %v1209, %v1210
      %v1212 = vrot.slane %v1211, 1
      %v1213 = vadd.f32 %v1211, %v1212
      %v1215 = vsel %vm1204, %v1213, 0
      %1217 = vmatprep.subr.mxu0 0.0
      %1218 = vmatpush1.msra.mxu0 %v702
      %1219 = vmatprep.subr.mxu0 0.0
      %1220 = vmatpush1.msra.mxu0 %v703
      %1221 = vmatprep.subr.mxu0 0.0
      %1222 = vmatpush1.msra.mxu0 0.0
      %1223 = vmatprep.subr.mxu0 0.0
      %1224 = vmatpush1.msra.mxu0 0.0
      %1225 = vmatprep.subr.mxu0 0.0
      %1226 = vmatpush1.msra.mxu0 0.0
      %1227 = vmatprep.subr.mxu0 0.0
      %1228 = vmatpush1.msra.mxu0 0.0
      %1229 = vmatprep.subr.mxu0 0.0
      %1230 = vmatpush1.msra.mxu0 0.0
      %1231 = vmatprep.subr.mxu0 0.0
      %1232 = vmatpush1.msra.mxu0 0.0
      %1233 = vmatprep.subr.mxu0 0.0
      %1234 = vmatpush1.msra.mxu0 0.0
      %1235 = vmatprep.subr.mxu0 0.0
      %1236 = vmatpush1.msra.mxu0 0.0
      %1237 = vmatprep.subr.mxu0 0.0
      %1238 = vmatpush1.msra.mxu0 0.0
      %1239 = vmatprep.subr.mxu0 0.0
      %1240 = vmatpush1.msra.mxu0 0.0
      %1241 = vmatprep.subr.mxu0 0.0
      %1242 = vmatpush1.msra.mxu0 0.0
      %1243 = vmatprep.subr.mxu0 0.0
      %1244 = vmatpush1.msra.mxu0 0.0
      %1245 = vmatprep.subr.mxu0 0.0
      %1246 = vmatpush1.msra.mxu0 0.0
      %1247 = vmatprep.subr.mxu0 0.0
      %1248 = vmatpush1.msra.mxu0 0.0
      %1249 = vmatprep.subr.mxu0 0.0
      %1250 = vmatpush1.msra.mxu0 0.0
      %1251 = vmatprep.subr.mxu0 0.0
      %1252 = vmatpush1.msra.mxu0 0.0
      %1253 = vmatprep.subr.mxu0 0.0
      %1254 = vmatpush1.msra.mxu0 0.0
      %1255 = vmatprep.subr.mxu0 0.0
      %1256 = vmatpush1.msra.mxu0 0.0
      %1257 = vmatprep.subr.mxu0 0.0
      %1258 = vmatpush1.msra.mxu0 0.0
      %1259 = vmatprep.subr.mxu0 0.0
      %1260 = vmatpush1.msra.mxu0 0.0
      %1261 = vmatprep.subr.mxu0 0.0
      %1262 = vmatpush1.msra.mxu0 0.0
      %1263 = vmatprep.subr.mxu0 0.0
      %1264 = vmatpush1.msra.mxu0 0.0
      %1265 = vmatprep.subr.mxu0 0.0
      %1266 = vmatpush1.msra.mxu0 0.0
      %1267 = vmatprep.subr.mxu0 0.0
      %1268 = vmatpush1.msra.mxu0 0.0
      %1269 = vmatprep.subr.mxu0 0.0
      %1270 = vmatpush1.msra.mxu0 0.0
      %1271 = vmatprep.subr.mxu0 0.0
      %1272 = vmatpush1.msra.mxu0 0.0
      %1273 = vmatprep.subr.mxu0 0.0
      %1274 = vmatpush1.msra.mxu0 0.0
      %1275 = vmatprep.subr.mxu0 0.0
      %1276 = vmatpush1.msra.mxu0 0.0
      %1277 = vmatprep.subr.mxu0 0.0
      %1278 = vmatpush1.msra.mxu0 0.0
      %1279 = vmatprep.subr.mxu0 0.0
      %1280 = vmatpush1.msra.mxu0 0.0
      %1281 = vmatprep.mubr.f32.mxu0 0.0
      %1282 = vmatmul.mubr.f32.gmra.mrb[0].mxu0 %v1215
      %v1283 = vpop.f32.mrb[0].mxu0
      %v1284 = vadd.f32 0.0, %v1283
      %v1285 = vpop.f32.mrb[0].mxu0
      %1286 = vdwg.mxu0
      %v1287 = vmul.f32 %v1284, 0.03125
      %vm1288 = vcmask 64512
      %v1290 = vsel %vm1288, %v1287, 0
      %1292 = vmatprep.subr.mxu0 0.0
      %1293 = vmatpush1.msra.mxu0 %v704
      %1294 = vmatprep.subr.mxu0 0.0
      %1295 = vmatpush1.msra.mxu0 0.0
      %1296 = vmatprep.subr.mxu0 0.0
      %1297 = vmatpush1.msra.mxu0 0.0
      %1298 = vmatprep.subr.mxu0 0.0
      %1299 = vmatpush1.msra.mxu0 0.0
      %1300 = vmatprep.subr.mxu0 0.0
      %1301 = vmatpush1.msra.mxu0 0.0
      %1302 = vmatprep.subr.mxu0 0.0
      %1303 = vmatpush1.msra.mxu0 0.0
      %1304 = vmatprep.subr.mxu0 0.0
      %1305 = vmatpush1.msra.mxu0 0.0
      %1306 = vmatprep.subr.mxu0 0.0
      %1307 = vmatpush1.msra.mxu0 0.0
      %1308 = vmatprep.subr.mxu0 0.0
      %1309 = vmatpush1.msra.mxu0 0.0
      %1310 = vmatprep.subr.mxu0 0.0
      %1311 = vmatpush1.msra.mxu0 0.0
      %1312 = vmatprep.subr.mxu0 0.0
      %1313 = vmatpush1.msra.mxu0 0.0
      %1314 = vmatprep.subr.mxu0 0.0
      %1315 = vmatpush1.msra.mxu0 0.0
      %1316 = vmatprep.subr.mxu0 0.0
      %1317 = vmatpush1.msra.mxu0 0.0
      %1318 = vmatprep.subr.mxu0 0.0
      %1319 = vmatpush1.msra.mxu0 0.0
      %1320 = vmatprep.subr.mxu0 0.0
      %1321 = vmatpush1.msra.mxu0 0.0
      %1322 = vmatprep.subr.mxu0 0.0
      %1323 = vmatpush1.msra.mxu0 0.0
      %1324 = vmatprep.subr.mxu0 0.0
      %1325 = vmatpush1.msra.mxu0 0.0
      %1326 = vmatprep.subr.mxu0 0.0
      %1327 = vmatpush1.msra.mxu0 0.0
      %1328 = vmatprep.subr.mxu0 0.0
      %1329 = vmatpush1.msra.mxu0 0.0
      %1330 = vmatprep.subr.mxu0 0.0
      %1331 = vmatpush1.msra.mxu0 0.0
      %1332 = vmatprep.subr.mxu0 0.0
      %1333 = vmatpush1.msra.mxu0 0.0
      %1334 = vmatprep.subr.mxu0 0.0
      %1335 = vmatpush1.msra.mxu0 0.0
      %1336 = vmatprep.subr.mxu0 0.0
      %1337 = vmatpush1.msra.mxu0 0.0
      %1338 = vmatprep.subr.mxu0 0.0
      %1339 = vmatpush1.msra.mxu0 0.0
      %1340 = vmatprep.subr.mxu0 0.0
      %1341 = vmatpush1.msra.mxu0 0.0
      %1342 = vmatprep.subr.mxu0 0.0
      %1343 = vmatpush1.msra.mxu0 0.0
      %1344 = vmatprep.subr.mxu0 0.0
      %1345 = vmatpush1.msra.mxu0 0.0
      %1346 = vmatprep.subr.mxu0 0.0
      %1347 = vmatpush1.msra.mxu0 0.0
      %1348 = vmatprep.subr.mxu0 0.0
      %1349 = vmatpush1.msra.mxu0 0.0
      %1350 = vmatprep.subr.mxu0 0.0
      %1351 = vmatpush1.msra.mxu0 0.0
      %1352 = vmatprep.subr.mxu0 0.0
      %1353 = vmatpush1.msra.mxu0 0.0
      %1354 = vmatprep.subr.mxu0 0.0
      %1355 = vmatpush1.msra.mxu0 0.0
      %1356 = vmatprep.mubr.f32.mxu0 0.0
      %1357 = vmatmul.mubr.f32.gmra.mrb[0].mxu0 %v1290
      %v1358 = vpop.f32.mrb[0].mxu0
      %v1359 = vadd.f32 0.0, %v1358
      %v1360 = vpop.f32.mrb[0].mxu0
      %1361 = vdwg.mxu0
      %v1362 = vlaneseq
      %v1363 = vshrl.u32 %v1362, 7
      %v1364 = vsub.s32 0, %v1363
      %v1365 = vrot.slane %v1359, %v1364
      %v1366 = vsub.f32 %v1200, %v1365
      %v1367 = vsub.f32 %v1201, %v1365
      %v1368 = vmul.f32 %v1366, %v1366
      %v1369 = vmul.f32 %v1367, %v1367
      %v1370 = vsel %vm1204, %v1368, 0.0
      %v1371 = vsel %vm1204, %v1369, 0.0
      %v1372 = vadd.f32 %v1370, %v1371
      %v1373 = vrot.slane %v1372, 4
      %v1374 = vadd.f32 %v1372, %v1373
      %v1375 = vrot.slane %v1374, 2
      %v1376 = vadd.f32 %v1374, %v1375
      %v1377 = vrot.slane %v1376, 1
      %v1378 = vadd.f32 %v1376, %v1377
      %v1380 = vsel %vm1204, %v1378, 0
      %1382 = vmatprep.subr.mxu0 0.0
      %1383 = vmatpush1.msra.mxu0 %v702
      %1384 = vmatprep.subr.mxu0 0.0
      %1385 = vmatpush1.msra.mxu0 %v703
      %1386 = vmatprep.subr.mxu0 0.0
      %1387 = vmatpush1.msra.mxu0 0.0
      %1388 = vmatprep.subr.mxu0 0.0
      %1389 = vmatpush1.msra.mxu0 0.0
      %1390 = vmatprep.subr.mxu0 0.0
      %1391 = vmatpush1.msra.mxu0 0.0
      %1392 = vmatprep.subr.mxu0 0.0
      %1393 = vmatpush1.msra.mxu0 0.0
      %1394 = vmatprep.subr.mxu0 0.0
      %1395 = vmatpush1.msra.mxu0 0.0
      %1396 = vmatprep.subr.mxu0 0.0
      %1397 = vmatpush1.msra.mxu0 0.0
      %1398 = vmatprep.subr.mxu0 0.0
      %1399 = vmatpush1.msra.mxu0 0.0
      %1400 = vmatprep.subr.mxu0 0.0
      %1401 = vmatpush1.msra.mxu0 0.0
      %1402 = vmatprep.subr.mxu0 0.0
      %1403 = vmatpush1.msra.mxu0 0.0
      %1404 = vmatprep.subr.mxu0 0.0
      %1405 = vmatpush1.msra.mxu0 0.0
      %1406 = vmatprep.subr.mxu0 0.0
      %1407 = vmatpush1.msra.mxu0 0.0
      %1408 = vmatprep.subr.mxu0 0.0
      %1409 = vmatpush1.msra.mxu0 0.0
      %1410 = vmatprep.subr.mxu0 0.0
      %1411 = vmatpush1.msra.mxu0 0.0
      %1412 = vmatprep.subr.mxu0 0.0
      %1413 = vmatpush1.msra.mxu0 0.0
      %1414 = vmatprep.subr.mxu0 0.0
      %1415 = vmatpush1.msra.mxu0 0.0
      %1416 = vmatprep.subr.mxu0 0.0
      %1417 = vmatpush1.msra.mxu0 0.0
      %1418 = vmatprep.subr.mxu0 0.0
      %1419 = vmatpush1.msra.mxu0 0.0
      %1420 = vmatprep.subr.mxu0 0.0
      %1421 = vmatpush1.msra.mxu0 0.0
      %1422 = vmatprep.subr.mxu0 0.0
      %1423 = vmatpush1.msra.mxu0 0.0
      %1424 = vmatprep.subr.mxu0 0.0
      %1425 = vmatpush1.msra.mxu0 0.0
      %1426 = vmatprep.subr.mxu0 0.0
      %1427 = vmatpush1.msra.mxu0 0.0
      %1428 = vmatprep.subr.mxu0 0.0
      %1429 = vmatpush1.msra.mxu0 0.0
      %1430 = vmatprep.subr.mxu0 0.0
      %1431 = vmatpush1.msra.mxu0 0.0
      %1432 = vmatprep.subr.mxu0 0.0
      %1433 = vmatpush1.msra.mxu0 0.0
      %1434 = vmatprep.subr.mxu0 0.0
      %1435 = vmatpush1.msra.mxu0 0.0
      %1436 = vmatprep.subr.mxu0 0.0
      %1437 = vmatpush1.msra.mxu0 0.0
      %1438 = vmatprep.subr.mxu0 0.0
      %1439 = vmatpush1.msra.mxu0 0.0
      %1440 = vmatprep.subr.mxu0 0.0
      %1441 = vmatpush1.msra.mxu0 0.0
      %1442 = vmatprep.subr.mxu0 0.0
      %1443 = vmatpush1.msra.mxu0 0.0
      %1444 = vmatprep.subr.mxu0 0.0
      %1445 = vmatpush1.msra.mxu0 0.0
      %1446 = vmatprep.mubr.f32.mxu0 0.0
      %1447 = vmatmul.mubr.f32.gmra.mrb[0].mxu0 %v1380
      %v1448 = vpop.f32.mrb[0].mxu0
      %v1449 = vadd.f32 0.0, %v1448
      %v1450 = vpop.f32.mrb[0].mxu0
      %1451 = vdwg.mxu0
      %v1452 = vmul.f32 %v1449, 0.03125
      %v1454 = vsel %vm1288, %v1452, 0
      %1456 = vmatprep.subr.mxu0 0.0
      %1457 = vmatpush1.msra.mxu0 %v704
      %1458 = vmatprep.subr.mxu0 0.0
      %1459 = vmatpush1.msra.mxu0 0.0
      %1460 = vmatprep.subr.mxu0 0.0
      %1461 = vmatpush1.msra.mxu0 0.0
      %1462 = vmatprep.subr.mxu0 0.0
      %1463 = vmatpush1.msra.mxu0 0.0
      %1464 = vmatprep.subr.mxu0 0.0
      %1465 = vmatpush1.msra.mxu0 0.0
      %1466 = vmatprep.subr.mxu0 0.0
      %1467 = vmatpush1.msra.mxu0 0.0
      %1468 = vmatprep.subr.mxu0 0.0
      %1469 = vmatpush1.msra.mxu0 0.0
      %1470 = vmatprep.subr.mxu0 0.0
      %1471 = vmatpush1.msra.mxu0 0.0
      %1472 = vmatprep.subr.mxu0 0.0
      %1473 = vmatpush1.msra.mxu0 0.0
      %1474 = vmatprep.subr.mxu0 0.0
      %1475 = vmatpush1.msra.mxu0 0.0
      %1476 = vmatprep.subr.mxu0 0.0
      %1477 = vmatpush1.msra.mxu0 0.0
      %1478 = vmatprep.subr.mxu0 0.0
      %1479 = vmatpush1.msra.mxu0 0.0
      %1480 = vmatprep.subr.mxu0 0.0
      %1481 = vmatpush1.msra.mxu0 0.0
      %1482 = vmatprep.subr.mxu0 0.0
      %1483 = vmatpush1.msra.mxu0 0.0
      %1484 = vmatprep.subr.mxu0 0.0
      %1485 = vmatpush1.msra.mxu0 0.0
      %1486 = vmatprep.subr.mxu0 0.0
      %1487 = vmatpush1.msra.mxu0 0.0
      %1488 = vmatprep.subr.mxu0 0.0
      %1489 = vmatpush1.msra.mxu0 0.0
      %1490 = vmatprep.subr.mxu0 0.0
      %1491 = vmatpush1.msra.mxu0 0.0
      %1492 = vmatprep.subr.mxu0 0.0
      %1493 = vmatpush1.msra.mxu0 0.0
      %1494 = vmatprep.subr.mxu0 0.0
      %1495 = vmatpush1.msra.mxu0 0.0
      %1496 = vmatprep.subr.mxu0 0.0
      %1497 = vmatpush1.msra.mxu0 0.0
      %1498 = vmatprep.subr.mxu0 0.0
      %1499 = vmatpush1.msra.mxu0 0.0
      %1500 = vmatprep.subr.mxu0 0.0
      %1501 = vmatpush1.msra.mxu0 0.0
      %1502 = vmatprep.subr.mxu0 0.0
      %1503 = vmatpush1.msra.mxu0 0.0
      %1504 = vmatprep.subr.mxu0 0.0
      %1505 = vmatpush1.msra.mxu0 0.0
      %1506 = vmatprep.subr.mxu0 0.0
      %1507 = vmatpush1.msra.mxu0 0.0
      %1508 = vmatprep.subr.mxu0 0.0
      %1509 = vmatpush1.msra.mxu0 0.0
      %1510 = vmatprep.subr.mxu0 0.0
      %1511 = vmatpush1.msra.mxu0 0.0
      %1512 = vmatprep.subr.mxu0 0.0
      %1513 = vmatpush1.msra.mxu0 0.0
      %1514 = vmatprep.subr.mxu0 0.0
      %1515 = vmatpush1.msra.mxu0 0.0
      %1516 = vmatprep.subr.mxu0 0.0
      %1517 = vmatpush1.msra.mxu0 0.0
      %1518 = vmatprep.subr.mxu0 0.0
      %1519 = vmatpush1.msra.mxu0 0.0
      %1520 = vmatprep.mubr.f32.mxu0 0.0
      %1521 = vmatmul.mubr.f32.gmra.mrb[0].mxu0 %v1454
      %v1522 = vpop.f32.mrb[0].mxu0
      %v1523 = vadd.f32 1e-05, %v1522
      %v1524 = vpop.f32.mrb[0].mxu0
      %1525 = vdwg.mxu0
      %v1526 = vrsqrt.pop %v1523
      %v1527 = vlaneseq
      %v1528 = vshrl.u32 %v1527, 7
      %v1529 = vsub.s32 0, %v1528
      %v1530 = vrot.slane %v1526, %v1529
      %v1531 = vmul.f32 %v1366, %v1530
      %v1532 = vmul.f32 %v1367, %v1530
      %v1534 = vlaneseq
      %v1535 = vshrl.u32 %v1534, 7
      %v1536 = vsub.s32 0, %v1535
      %v1537 = vrot.slane %v1202, %v1536
      %v1539 = vmul.f32 %v1531, %v1537
      %v1540 = vmul.f32 %v1532, %v1537
      %v1542 = vlaneseq
      %v1543 = vshrl.u32 %v1542, 7
      %v1544 = vsub.s32 0, %v1543
      %v1545 = vrot.slane %v1203, %v1544
      %v1547 = vadd.f32 %v1539, %v1545
      %v1548 = vadd.f32 %v1540, %v1545
      %v1549 = vand.u32 2147483647, %v1547
      %v1550 = vand.u32 2147483647, %v1548
      %v1551 = vsub.f32 0.0, %v1549
      %v1552 = vsub.f32 0.0, %v1550
      %v1553 = vmul.f32 %v1551, 1.442695
      %v1554 = vpow.pop %v1553
      %v1555 = vmul.f32 %v1552, 1.442695
      %v1556 = vpow.pop %v1555
      %v1557 = vmul.f32 %v1554, %v1554
      %v1558 = vmul.f32 %v1556, %v1556
      %vm1559 = vcmp.ge.f32.partialorder %v1547, 0.0
      %vm1560 = vcmp.ge.f32.partialorder %v1548, 0.0
      %v1561 = vmul.f32 %v1554, 2.0
      %v1562 = vmul.f32 %v1556, 2.0
      %v1563 = vadd.f32 %v1561, 1.0
      %v1564 = vadd.f32 %v1562, 1.0
      %v1565 = vadd.f32 %v1557, %v1561
      %v1566 = vadd.f32 %v1558, %v1562
      %v1567 = vsel %vm1559, %v1563, %v1565
      %v1568 = vsel %vm1560, %v1564, %v1566
      %v1569 = vmul.f32 %v1557, 2.0
      %v1570 = vmul.f32 %v1558, 2.0
      %v1571 = vadd.f32 %v1569, %v1561
      %v1572 = vadd.f32 %v1570, %v1562
      %v1573 = vadd.f32 %v1571, 1.0
      %v1574 = vadd.f32 %v1572, 1.0
      %v1575 = vadd.f32 %v1565, 2.0
      %v1576 = vadd.f32 %v1566, 2.0
      %v1577 = vsel %vm1559, %v1573, %v1575
      %v1578 = vsel %vm1560, %v1574, %v1576
      %v1579 = vrcp.pop %v1577
      %v1580 = vmul.f32 %v1567, %v1579
      %v1581 = vrcp.pop %v1578
      %v1582 = vmul.f32 %v1568, %v1581
      %v1583 = vmul.f32 %v1547, %v1580
      %v1584 = vmul.f32 %v1548, %v1582
      %v1585 = vld [vmem:[%s694] sm:$0x1]
      %v1586 = vand.u32 2147483647, %v1585
      %v1587 = vsub.f32 0.0, %v1586
      %v1588 = vmul.f32 %v1587, 1.442695
      %v1589 = vpow.pop %v1588
      %v1590 = vmul.f32 %v1589, %v1589
      %vm1591 = vcmp.ge.f32.partialorder %v1585, 0.0
      %v1592 = vmul.f32 %v1589, 2.0
      %v1593 = vadd.f32 %v1592, 1.0
      %v1594 = vadd.f32 %v1590, %v1592
      %v1595 = vsel %vm1591, %v1593, %v1594
      %v1596 = vmul.f32 %v1590, 2.0
      %v1597 = vadd.f32 %v1596, %v1592
      %v1598 = vadd.f32 %v1597, 1.0
      %v1599 = vadd.f32 %v1594, 2.0
      %v1600 = vsel %vm1591, %v1598, %v1599
      %v1601 = vrcp.pop %v1600
      %v1602 = vmul.f32 %v1595, %v1601
      %v1603 = vmul.f32 %v1585, %v1602
      %v1604 = vld [vmem:[%s8] sm:$0xff]
      %v1605 = vld [vmem:[%s10] sm:$0x1]
      %v1607 = vsel %vm1288, %v1603, 0
      %1609 = vmatprep.subr.mxu0 0.0
      %1610 = vmatpush1.msra.mxu0 %v1604
      %1611 = vmatprep.subr.mxu0 0.0
      %1612 = vmatpush1.msra.mxu0 0.0
      %1613 = vmatprep.subr.mxu0 0.0
      %1614 = vmatpush1.msra.mxu0 0.0
      %1615 = vmatprep.subr.mxu0 0.0
      %1616 = vmatpush1.msra.mxu0 0.0
      %1617 = vmatprep.subr.mxu0 0.0
      %1618 = vmatpush1.msra.mxu0 0.0
      %1619 = vmatprep.subr.mxu0 0.0
      %1620 = vmatpush1.msra.mxu0 0.0
      %1621 = vmatprep.subr.mxu0 0.0
      %1622 = vmatpush1.msra.mxu0 0.0
      %1623 = vmatprep.subr.mxu0 0.0
      %1624 = vmatpush1.msra.mxu0 0.0
      %1625 = vmatprep.subr.mxu0 0.0
      %1626 = vmatpush1.msra.mxu0 0.0
      %1627 = vmatprep.subr.mxu0 0.0
      %1628 = vmatpush1.msra.mxu0 0.0
      %1629 = vmatprep.subr.mxu0 0.0
      %1630 = vmatpush1.msra.mxu0 0.0
      %1631 = vmatprep.subr.mxu0 0.0
      %1632 = vmatpush1.msra.mxu0 0.0
      %1633 = vmatprep.subr.mxu0 0.0
      %1634 = vmatpush1.msra.mxu0 0.0
      %1635 = vmatprep.subr.mxu0 0.0
      %1636 = vmatpush1.msra.mxu0 0.0
      %1637 = vmatprep.subr.mxu0 0.0
      %1638 = vmatpush1.msra.mxu0 0.0
      %1639 = vmatprep.subr.mxu0 0.0
      %1640 = vmatpush1.msra.mxu0 0.0
      %1641 = vmatprep.subr.mxu0 0.0
      %1642 = vmatpush1.msra.mxu0 0.0
      %1643 = vmatprep.subr.mxu0 0.0
      %1644 = vmatpush1.msra.mxu0 0.0
      %1645 = vmatprep.subr.mxu0 0.0
      %1646 = vmatpush1.msra.mxu0 0.0
      %1647 = vmatprep.subr.mxu0 0.0
      %1648 = vmatpush1.msra.mxu0 0.0
      %1649 = vmatprep.subr.mxu0 0.0
      %1650 = vmatpush1.msra.mxu0 0.0
      %1651 = vmatprep.subr.mxu0 0.0
      %1652 = vmatpush1.msra.mxu0 0.0
      %1653 = vmatprep.subr.mxu0 0.0
      %1654 = vmatpush1.msra.mxu0 0.0
      %1655 = vmatprep.subr.mxu0 0.0
      %1656 = vmatpush1.msra.mxu0 0.0
      %1657 = vmatprep.subr.mxu0 0.0
      %1658 = vmatpush1.msra.mxu0 0.0
      %1659 = vmatprep.subr.mxu0 0.0
      %1660 = vmatpush1.msra.mxu0 0.0
      %1661 = vmatprep.subr.mxu0 0.0
      %1662 = vmatpush1.msra.mxu0 0.0
      %1663 = vmatprep.subr.mxu0 0.0
      %1664 = vmatpush1.msra.mxu0 0.0
      %1665 = vmatprep.subr.mxu0 0.0
      %1666 = vmatpush1.msra.mxu0 0.0
      %1667 = vmatprep.subr.mxu0 0.0
      %1668 = vmatpush1.msra.mxu0 0.0
      %1669 = vmatprep.subr.mxu0 0.0
      %1670 = vmatpush1.msra.mxu0 0.0
      %1671 = vmatprep.subr.mxu0 0.0
      %1672 = vmatpush1.msra.mxu0 0.0
      %1673 = vmatprep.mubr.f32.mxu0 0.0
      %1674 = vmatmul.mubr.f32.gmra.mrb[0].mxu0 %v1607
      %v1675 = vpop.f32.mrb[0].mxu0
      %v1676 = vadd.f32 %v1605, %v1675
      %v1677 = vpop.f32.mrb[0].mxu0
      %1678 = vdwg.mxu0
      %v1679 = vld [vmem:[%s9] sm:$0xff]
      %v1680 = vld [vmem:[%s11] sm:$0x1]
      %1681 = vmatprep.subr.mxu0 0.0
      %1682 = vmatpush1.msra.mxu0 %v1679
      %1683 = vmatprep.subr.mxu0 0.0
      %1684 = vmatpush1.msra.mxu0 0.0
      %1685 = vmatprep.subr.mxu0 0.0
      %1686 = vmatpush1.msra.mxu0 0.0
      %1687 = vmatprep.subr.mxu0 0.0
      %1688 = vmatpush1.msra.mxu0 0.0
      %1689 = vmatprep.subr.mxu0 0.0
      %1690 = vmatpush1.msra.mxu0 0.0
      %1691 = vmatprep.subr.mxu0 0.0
      %1692 = vmatpush1.msra.mxu0 0.0
      %1693 = vmatprep.subr.mxu0 0.0
      %1694 = vmatpush1.msra.mxu0 0.0
      %1695 = vmatprep.subr.mxu0 0.0
      %1696 = vmatpush1.msra.mxu0 0.0
      %1697 = vmatprep.subr.mxu0 0.0
      %1698 = vmatpush1.msra.mxu0 0.0
      %1699 = vmatprep.subr.mxu0 0.0
      %1700 = vmatpush1.msra.mxu0 0.0
      %1701 = vmatprep.subr.mxu0 0.0
      %1702 = vmatpush1.msra.mxu0 0.0
      %1703 = vmatprep.subr.mxu0 0.0
      %1704 = vmatpush1.msra.mxu0 0.0
      %1705 = vmatprep.subr.mxu0 0.0
      %1706 = vmatpush1.msra.mxu0 0.0
      %1707 = vmatprep.subr.mxu0 0.0
      %1708 = vmatpush1.msra.mxu0 0.0
      %1709 = vmatprep.subr.mxu0 0.0
      %1710 = vmatpush1.msra.mxu0 0.0
      %1711 = vmatprep.subr.mxu0 0.0
      %1712 = vmatpush1.msra.mxu0 0.0
      %1713 = vmatprep.subr.mxu0 0.0
      %1714 = vmatpush1.msra.mxu0 0.0
      %1715 = vmatprep.subr.mxu0 0.0
      %1716 = vmatpush1.msra.mxu0 0.0
      %1717 = vmatprep.subr.mxu0 0.0
      %1718 = vmatpush1.msra.mxu0 0.0
      %1719 = vmatprep.subr.mxu0 0.0
      %1720 = vmatpush1.msra.mxu0 0.0
      %1721 = vmatprep.subr.mxu0 0.0
      %1722 = vmatpush1.msra.mxu0 0.0
      %1723 = vmatprep.subr.mxu0 0.0
      %1724 = vmatpush1.msra.mxu0 0.0
      %1725 = vmatprep.subr.mxu0 0.0
      %1726 = vmatpush1.msra.mxu0 0.0
      %1727 = vmatprep.subr.mxu0 0.0
      %1728 = vmatpush1.msra.mxu0 0.0
      %1729 = vmatprep.subr.mxu0 0.0
      %1730 = vmatpush1.msra.mxu0 0.0
      %1731 = vmatprep.subr.mxu0 0.0
      %1732 = vmatpush1.msra.mxu0 0.0
      %1733 = vmatprep.subr.mxu0 0.0
      %1734 = vmatpush1.msra.mxu0 0.0
      %1735 = vmatprep.subr.mxu0 0.0
      %1736 = vmatpush1.msra.mxu0 0.0
      %1737 = vmatprep.subr.mxu0 0.0
      %1738 = vmatpush1.msra.mxu0 0.0
      %1739 = vmatprep.subr.mxu0 0.0
      %1740 = vmatpush1.msra.mxu0 0.0
      %1741 = vmatprep.subr.mxu0 0.0
      %1742 = vmatpush1.msra.mxu0 0.0
      %1743 = vmatprep.subr.mxu0 0.0
      %1744 = vmatpush1.msra.mxu0 0.0
      %1745 = vmatprep.mubr.f32.mxu0 0.0
      %1746 = vmatmul.mubr.f32.gmra.mrb[0].mxu0 %v1607
      %v1747 = vpop.f32.mrb[0].mxu0
      %v1748 = vadd.f32 %v1680, %v1747
      %v1749 = vpop.f32.mrb[0].mxu0
      %1750 = vdwg.mxu0
      %v1751 = vlaneseq
      %v1752 = vshrl.u32 %v1751, 7
      %v1753 = vsub.s32 0, %v1752
      %v1754 = vrot.slane %v1676, %v1753
      %v1755 = vmul.f32 %v1754, %v1583
      %v1756 = vmul.f32 %v1754, %v1584
      %v1757 = vlaneseq
      %v1758 = vshrl.u32 %v1757, 7
      %v1759 = vsub.s32 0, %v1758
      %v1760 = vrot.slane %v1748, %v1759
      %v1761 = vadd.f32 %v1755, %v1760
      %v1762 = vadd.f32 %v1756, %v1760
      %v1763 = vld [vmem:[%s14] sm:$0x1]
      %v1764 = vrot.slane %v1761, 7
      %v1765 = vrot.slane %v1762, 7
      %v1766 = vsel %vm712, %v1764, %v1765
      %v1767 = vsel %vm712, %v1765, %v1764
      %v1768 = vpack.c.bf16 %v1766, %v1767
      %v1769 = vunpack.c.l.bf16 %v1768
      %v1770 = vunpack.c.h.bf16 %v1768
      %v1771 = vsub.f32 %v1767, %v1769
      %v1772 = vsub.f32 %v1766, %v1770
      %v1773 = vpack.c.bf16 %v1772, %v1771
      %v1774 = vld [vmem:[%s12] sm:$0xf]
      %v1775 = vld [vmem:[%s12 + $0x4] sm:$0xf]
      %v1776 = vld [vmem:[%s13] sm:$0xf]
      %v1777 = vld [vmem:[%s13 + $0x4] sm:$0xf]
      %v1780 = vunpack.c.l.b16 %v1776
      %v1781 = vunpack.c.l.b16 %v1777
      %v1782 = vpack.c.b16 %v1781, %v1780
      %v1785 = vsel %vm1204, %v1768, 0
      %1787 = vmatprep.subr.bf16.mxu0 0
      %1788 = vmatpush1.bf16.msra.mxu0 %v1782
      %1789 = vmatprep.subr.bf16.mxu0 0
      %1790 = vmatpush1.bf16.msra.mxu0 0
      %1791 = vmatprep.subr.bf16.mxu0 0
      %1792 = vmatpush1.bf16.msra.mxu0 0
      %1793 = vmatprep.subr.bf16.mxu0 0
      %1794 = vmatpush1.bf16.msra.mxu0 0
      %1795 = vmatprep.subr.bf16.mxu0 0
      %1796 = vmatpush1.bf16.msra.mxu0 0
      %1797 = vmatprep.subr.bf16.mxu0 0
      %1798 = vmatpush1.bf16.msra.mxu0 0
      %1799 = vmatprep.subr.bf16.mxu0 0
      %1800 = vmatpush1.bf16.msra.mxu0 0
      %1801 = vmatprep.subr.bf16.mxu0 0
      %1802 = vmatpush1.bf16.msra.mxu0 0
      %1803 = vmatprep.subr.bf16.mxu0 0
      %1804 = vmatpush1.bf16.msra.mxu0 0
      %1805 = vmatprep.subr.bf16.mxu0 0
      %1806 = vmatpush1.bf16.msra.mxu0 0
      %1807 = vmatprep.subr.bf16.mxu0 0
      %1808 = vmatpush1.bf16.msra.mxu0 0
      %1809 = vmatprep.subr.bf16.mxu0 0
      %1810 = vmatpush1.bf16.msra.mxu0 0
      %1811 = vmatprep.subr.bf16.mxu0 0
      %1812 = vmatpush1.bf16.msra.mxu0 0
      %1813 = vmatprep.subr.bf16.mxu0 0
      %1814 = vmatpush1.bf16.msra.mxu0 0
      %1815 = vmatprep.subr.bf16.mxu0 0
      %1816 = vmatpush1.bf16.msra.mxu0 0
      %1817 = vmatprep.subr.bf16.mxu0 0
      %1818 = vmatpush1.bf16.msra.mxu0 0
      %1819 = vmatprep.mubr.bf16.mxu0 0
      %1820 = vmatmul.mubr.bf16.gmra.mrb[0].mxu0 %v1785
      %v1821 = vpop.f32.mrb[0].mxu0
      %v1822 = vadd.f32 0.0, %v1821
      %v1823 = vpop.f32.mrb[0].mxu0
      %v1824 = vpop.f32.mrb[0].mxu0
      %v1825 = vadd.f32 0.0, %v1824
      %v1826 = vpop.f32.mrb[0].mxu0
      %1827 = vdwg.mxu0
      %v1830 = vunpack.c.l.b16 %v1774
      %v1831 = vunpack.c.l.b16 %v1775
      %v1832 = vpack.c.b16 %v1831, %v1830
      %1834 = vmatprep.subr.bf16.mxu0 0
      %1835 = vmatpush1.bf16.msra.mxu0 %v1832
      %1836 = vmatprep.subr.bf16.mxu0 0
      %1837 = vmatpush1.bf16.msra.mxu0 0
      %1838 = vmatprep.subr.bf16.mxu0 0
      %1839 = vmatpush1.bf16.msra.mxu0 0
      %1840 = vmatprep.subr.bf16.mxu0 0
      %1841 = vmatpush1.bf16.msra.mxu0 0
      %1842 = vmatprep.subr.bf16.mxu0 0
      %1843 = vmatpush1.bf16.msra.mxu0 0
      %1844 = vmatprep.subr.bf16.mxu0 0
      %1845 = vmatpush1.bf16.msra.mxu0 0
      %1846 = vmatprep.subr.bf16.mxu0 0
      %1847 = vmatpush1.bf16.msra.mxu0 0
      %1848 = vmatprep.subr.bf16.mxu0 0
      %1849 = vmatpush1.bf16.msra.mxu0 0
      %1850 = vmatprep.subr.bf16.mxu0 0
      %1851 = vmatpush1.bf16.msra.mxu0 0
      %1852 = vmatprep.subr.bf16.mxu0 0
      %1853 = vmatpush1.bf16.msra.mxu0 0
      %1854 = vmatprep.subr.bf16.mxu0 0
      %1855 = vmatpush1.bf16.msra.mxu0 0
      %1856 = vmatprep.subr.bf16.mxu0 0
      %1857 = vmatpush1.bf16.msra.mxu0 0
      %1858 = vmatprep.subr.bf16.mxu0 0
      %1859 = vmatpush1.bf16.msra.mxu0 0
      %1860 = vmatprep.subr.bf16.mxu0 0
      %1861 = vmatpush1.bf16.msra.mxu0 0
      %1862 = vmatprep.subr.bf16.mxu0 0
      %1863 = vmatpush1.bf16.msra.mxu0 0
      %1864 = vmatprep.subr.bf16.mxu0 0
      %1865 = vmatpush1.bf16.msra.mxu0 0
      %1866 = vmatprep.mubr.bf16.mxu0 0
      %1867 = vmatmul.mubr.bf16.gmra.mrb[0].mxu0 %v1785
      %v1868 = vpop.f32.mrb[0].mxu0
      %v1869 = vadd.f32 %v1822, %v1868
      %v1870 = vpop.f32.mrb[0].mxu0
      %v1871 = vpop.f32.mrb[0].mxu0
      %v1872 = vadd.f32 %v1825, %v1871
      %v1873 = vpop.f32.mrb[0].mxu0
      %1874 = vdwg.mxu0
      %v1876 = vsel %vm1204, %v1773, 0
      %1878 = vmatprep.subr.bf16.mxu0 0
      %1879 = vmatpush1.bf16.msra.mxu0 %v1832
      %1880 = vmatprep.subr.bf16.mxu0 0
      %1881 = vmatpush1.bf16.msra.mxu0 0
      %1882 = vmatprep.subr.bf16.mxu0 0
      %1883 = vmatpush1.bf16.msra.mxu0 0
      %1884 = vmatprep.subr.bf16.mxu0 0
      %1885 = vmatpush1.bf16.msra.mxu0 0
      %1886 = vmatprep.subr.bf16.mxu0 0
      %1887 = vmatpush1.bf16.msra.mxu0 0
      %1888 = vmatprep.subr.bf16.mxu0 0
      %1889 = vmatpush1.bf16.msra.mxu0 0
      %1890 = vmatprep.subr.bf16.mxu0 0
      %1891 = vmatpush1.bf16.msra.mxu0 0
      %1892 = vmatprep.subr.bf16.mxu0 0
      %1893 = vmatpush1.bf16.msra.mxu0 0
      %1894 = vmatprep.subr.bf16.mxu0 0
      %1895 = vmatpush1.bf16.msra.mxu0 0
      %1896 = vmatprep.subr.bf16.mxu0 0
      %1897 = vmatpush1.bf16.msra.mxu0 0
      %1898 = vmatprep.subr.bf16.mxu0 0
      %1899 = vmatpush1.bf16.msra.mxu0 0
      %1900 = vmatprep.subr.bf16.mxu0 0
      %1901 = vmatpush1.bf16.msra.mxu0 0
      %1902 = vmatprep.subr.bf16.mxu0 0
      %1903 = vmatpush1.bf16.msra.mxu0 0
      %1904 = vmatprep.subr.bf16.mxu0 0
      %1905 = vmatpush1.bf16.msra.mxu0 0
      %1906 = vmatprep.subr.bf16.mxu0 0
      %1907 = vmatpush1.bf16.msra.mxu0 0
      %1908 = vmatprep.subr.bf16.mxu0 0
      %1909 = vmatpush1.bf16.msra.mxu0 0
      %1910 = vmatprep.mubr.bf16.mxu0 0
      %1911 = vmatmul.mubr.bf16.gmra.mrb[0].mxu0 %v1876
      %v1912 = vpop.f32.mrb[0].mxu0
      %v1913 = vadd.f32 0.0, %v1912
      %v1914 = vpop.f32.mrb[0].mxu0
      %v1915 = vpop.f32.mrb[0].mxu0
      %v1916 = vadd.f32 0.0, %v1915
      %v1917 = vpop.f32.mrb[0].mxu0
      %1918 = vdwg.mxu0
      %v1919 = vadd.f32 %v1869, %v1913
      %v1920 = vadd.f32 %v1872, %v1916
      %v1921 = vmul.f32 %v1919, %v867
      %v1922 = vmul.f32 %v1920, %v872
      %v1924 = vlaneseq
      %v1925 = vshrl.u32 %v1924, 7
      %v1926 = vsub.s32 0, %v1925
      %v1927 = vrot.slane %v1763, %v1926
      %v1929 = vadd.f32 %v1927, %v1921
      %v1930 = vadd.f32 %v1927, %v1922
      %v1931 = vpack.c.bf16 %v1762, %v1761
      %v1932 = vunpack.c.l.bf16 %v1931
      %v1933 = vunpack.c.h.bf16 %v1931
      %v1934 = vsub.f32 %v1761, %v1932
      %v1935 = vsub.f32 %v1762, %v1933
      %v1936 = vpack.c.bf16 %v1935, %v1934
      %s1937 = scalar_lea.vmem %s12, 8
      %v1938 = vld [vmem:[%s1937] sm:$0xf]
      %v1939 = vld [vmem:[%s1937 + $0x4] sm:$0xf]
      %s1940 = scalar_lea.vmem %s13, 8
      %v1941 = vld [vmem:[%s1940] sm:$0xf]
      %v1942 = vld [vmem:[%s1940 + $0x4] sm:$0xf]
      %v1945 = vunpack.c.l.b16 %v1941
      %v1946 = vunpack.c.l.b16 %v1942
      %v1947 = vpack.c.b16 %v1946, %v1945
      %v1950 = vsel %vm1204, %v1931, 0
      %1952 = vmatprep.subr.bf16.mxu0 0
      %1953 = vmatpush1.bf16.msra.mxu0 %v1947
      %1954 = vmatprep.subr.bf16.mxu0 0
      %1955 = vmatpush1.bf16.msra.mxu0 0
      %1956 = vmatprep.subr.bf16.mxu0 0
      %1957 = vmatpush1.bf16.msra.mxu0 0
      %1958 = vmatprep.subr.bf16.mxu0 0
      %1959 = vmatpush1.bf16.msra.mxu0 0
      %1960 = vmatprep.subr.bf16.mxu0 0
      %1961 = vmatpush1.bf16.msra.mxu0 0
      %1962 = vmatprep.subr.bf16.mxu0 0
      %1963 = vmatpush1.bf16.msra.mxu0 0
      %1964 = vmatprep.subr.bf16.mxu0 0
      %1965 = vmatpush1.bf16.msra.mxu0 0
      %1966 = vmatprep.subr.bf16.mxu0 0
      %1967 = vmatpush1.bf16.msra.mxu0 0
      %1968 = vmatprep.subr.bf16.mxu0 0
      %1969 = vmatpush1.bf16.msra.mxu0 0
      %1970 = vmatprep.subr.bf16.mxu0 0
      %1971 = vmatpush1.bf16.msra.mxu0 0
      %1972 = vmatprep.subr.bf16.mxu0 0
      %1973 = vmatpush1.bf16.msra.mxu0 0
      %1974 = vmatprep.subr.bf16.mxu0 0
      %1975 = vmatpush1.bf16.msra.mxu0 0
      %1976 = vmatprep.subr.bf16.mxu0 0
      %1977 = vmatpush1.bf16.msra.mxu0 0
      %1978 = vmatprep.subr.bf16.mxu0 0
      %1979 = vmatpush1.bf16.msra.mxu0 0
      %1980 = vmatprep.subr.bf16.mxu0 0
      %1981 = vmatpush1.bf16.msra.mxu0 0
      %1982 = vmatprep.subr.bf16.mxu0 0
      %1983 = vmatpush1.bf16.msra.mxu0 0
      %1984 = vmatprep.mubr.bf16.mxu0 0
      %1985 = vmatmul.mubr.bf16.gmra.mrb[0].mxu0 %v1950
      %v1986 = vpop.f32.mrb[0].mxu0
      %v1987 = vadd.f32 0.0, %v1986
      %v1988 = vpop.f32.mrb[0].mxu0
      %v1989 = vpop.f32.mrb[0].mxu0
      %v1990 = vadd.f32 0.0, %v1989
      %v1991 = vpop.f32.mrb[0].mxu0
      %1992 = vdwg.mxu0
      %v1995 = vunpack.c.l.b16 %v1938
      %v1996 = vunpack.c.l.b16 %v1939
      %v1997 = vpack.c.b16 %v1996, %v1995
      %1999 = vmatprep.subr.bf16.mxu0 0
      %2000 = vmatpush1.bf16.msra.mxu0 %v1997
      %2001 = vmatprep.subr.bf16.mxu0 0
      %2002 = vmatpush1.bf16.msra.mxu0 0
      %2003 = vmatprep.subr.bf16.mxu0 0
      %2004 = vmatpush1.bf16.msra.mxu0 0
      %2005 = vmatprep.subr.bf16.mxu0 0
      %2006 = vmatpush1.bf16.msra.mxu0 0
      %2007 = vmatprep.subr.bf16.mxu0 0
      %2008 = vmatpush1.bf16.msra.mxu0 0
      %2009 = vmatprep.subr.bf16.mxu0 0
      %2010 = vmatpush1.bf16.msra.mxu0 0
      %2011 = vmatprep.subr.bf16.mxu0 0
      %2012 = vmatpush1.bf16.msra.mxu0 0
      %2013 = vmatprep.subr.bf16.mxu0 0
      %2014 = vmatpush1.bf16.msra.mxu0 0
      %2015 = vmatprep.subr.bf16.mxu0 0
      %2016 = vmatpush1.bf16.msra.mxu0 0
      %2017 = vmatprep.subr.bf16.mxu0 0
      %2018 = vmatpush1.bf16.msra.mxu0 0
      %2019 = vmatprep.subr.bf16.mxu0 0
      %2020 = vmatpush1.bf16.msra.mxu0 0
      %2021 = vmatprep.subr.bf16.mxu0 0
      %2022 = vmatpush1.bf16.msra.mxu0 0
      %2023 = vmatprep.subr.bf16.mxu0 0
      %2024 = vmatpush1.bf16.msra.mxu0 0
      %2025 = vmatprep.subr.bf16.mxu0 0
      %2026 = vmatpush1.bf16.msra.mxu0 0
      %2027 = vmatprep.subr.bf16.mxu0 0
      %2028 = vmatpush1.bf16.msra.mxu0 0
      %2029 = vmatprep.subr.bf16.mxu0 0
      %2030 = vmatpush1.bf16.msra.mxu0 0
      %2031 = vmatprep.mubr.bf16.mxu0 0
      %2032 = vmatmul.mubr.bf16.gmra.mrb[0].mxu0 %v1950
      %v2033 = vpop.f32.mrb[0].mxu0
      %v2034 = vadd.f32 %v1987, %v2033
      %v2035 = vpop.f32.mrb[0].mxu0
      %v2036 = vpop.f32.mrb[0].mxu0
      %v2037 = vadd.f32 %v1990, %v2036
      %v2038 = vpop.f32.mrb[0].mxu0
      %2039 = vdwg.mxu0
      %v2041 = vsel %vm1204, %v1936, 0
      %2043 = vmatprep.subr.bf16.mxu0 0
      %2044 = vmatpush1.bf16.msra.mxu0 %v1997
      %2045 = vmatprep.subr.bf16.mxu0 0
      %2046 = vmatpush1.bf16.msra.mxu0 0
      %2047 = vmatprep.subr.bf16.mxu0 0
      %2048 = vmatpush1.bf16.msra.mxu0 0
      %2049 = vmatprep.subr.bf16.mxu0 0
      %2050 = vmatpush1.bf16.msra.mxu0 0
      %2051 = vmatprep.subr.bf16.mxu0 0
      %2052 = vmatpush1.bf16.msra.mxu0 0
      %2053 = vmatprep.subr.bf16.mxu0 0
      %2054 = vmatpush1.bf16.msra.mxu0 0
      %2055 = vmatprep.subr.bf16.mxu0 0
      %2056 = vmatpush1.bf16.msra.mxu0 0
      %2057 = vmatprep.subr.bf16.mxu0 0
      %2058 = vmatpush1.bf16.msra.mxu0 0
      %2059 = vmatprep.subr.bf16.mxu0 0
      %2060 = vmatpush1.bf16.msra.mxu0 0
      %2061 = vmatprep.subr.bf16.mxu0 0
      %2062 = vmatpush1.bf16.msra.mxu0 0
      %2063 = vmatprep.subr.bf16.mxu0 0
      %2064 = vmatpush1.bf16.msra.mxu0 0
      %2065 = vmatprep.subr.bf16.mxu0 0
      %2066 = vmatpush1.bf16.msra.mxu0 0
      %2067 = vmatprep.subr.bf16.mxu0 0
      %2068 = vmatpush1.bf16.msra.mxu0 0
      %2069 = vmatprep.subr.bf16.mxu0 0
      %2070 = vmatpush1.bf16.msra.mxu0 0
      %2071 = vmatprep.subr.bf16.mxu0 0
      %2072 = vmatpush1.bf16.msra.mxu0 0
      %2073 = vmatprep.subr.bf16.mxu0 0
      %2074 = vmatpush1.bf16.msra.mxu0 0
      %2075 = vmatprep.mubr.bf16.mxu0 0
      %2076 = vmatmul.mubr.bf16.gmra.mrb[0].mxu0 %v2041
      %v2077 = vpop.f32.mrb[0].mxu0
      %v2078 = vadd.f32 0.0, %v2077
      %v2079 = vpop.f32.mrb[0].mxu0
      %v2080 = vpop.f32.mrb[0].mxu0
      %v2081 = vadd.f32 0.0, %v2080
      %v2082 = vpop.f32.mrb[0].mxu0
      %2083 = vdwg.mxu0
      %v2084 = vadd.f32 %v2034, %v2078
      %v2085 = vadd.f32 %v2037, %v2081
      %v2086 = vadd.f32 %v1929, %v2084
      %v2087 = vadd.f32 %v1930, %v2085
      %v2088 = vrot.slane %v1761, 1
      %v2089 = vrot.slane %v1762, 1
      %v2090 = vsel %vm1035, %v2088, %v2089
      %v2091 = vsel %vm1035, %v2089, %v2088
      %v2092 = vpack.c.bf16 %v2091, %v2090
      %v2093 = vunpack.c.l.bf16 %v2092
      %v2094 = vunpack.c.h.bf16 %v2092
      %v2095 = vsub.f32 %v2090, %v2093
      %v2096 = vsub.f32 %v2091, %v2094
      %v2097 = vpack.c.bf16 %v2096, %v2095
      %s2098 = scalar_lea.vmem %s12, 16
      %v2099 = vld [vmem:[%s2098] sm:$0xf]
      %v2100 = vld [vmem:[%s2098 + $0x4] sm:$0xf]
      %s2101 = scalar_lea.vmem %s13, 16
      %v2102 = vld [vmem:[%s2101] sm:$0xf]
      %v2103 = vld [vmem:[%s2101 + $0x4] sm:$0xf]
      %v2106 = vunpack.c.l.b16 %v2102
      %v2107 = vunpack.c.l.b16 %v2103
      %v2108 = vpack.c.b16 %v2107, %v2106
      %v2111 = vsel %vm1204, %v2092, 0
      %2113 = vmatprep.subr.bf16.mxu0 0
      %2114 = vmatpush1.bf16.msra.mxu0 %v2108
      %2115 = vmatprep.subr.bf16.mxu0 0
      %2116 = vmatpush1.bf16.msra.mxu0 0
      %2117 = vmatprep.subr.bf16.mxu0 0
      %2118 = vmatpush1.bf16.msra.mxu0 0
      %2119 = vmatprep.subr.bf16.mxu0 0
      %2120 = vmatpush1.bf16.msra.mxu0 0
      %2121 = vmatprep.subr.bf16.mxu0 0
      %2122 = vmatpush1.bf16.msra.mxu0 0
      %2123 = vmatprep.subr.bf16.mxu0 0
      %2124 = vmatpush1.bf16.msra.mxu0 0
      %2125 = vmatprep.subr.bf16.mxu0 0
      %2126 = vmatpush1.bf16.msra.mxu0 0
      %2127 = vmatprep.subr.bf16.mxu0 0
      %2128 = vmatpush1.bf16.msra.mxu0 0
      %2129 = vmatprep.subr.bf16.mxu0 0
      %2130 = vmatpush1.bf16.msra.mxu0 0
      %2131 = vmatprep.subr.bf16.mxu0 0
      %2132 = vmatpush1.bf16.msra.mxu0 0
      %2133 = vmatprep.subr.bf16.mxu0 0
      %2134 = vmatpush1.bf16.msra.mxu0 0
      %2135 = vmatprep.subr.bf16.mxu0 0
      %2136 = vmatpush1.bf16.msra.mxu0 0
      %2137 = vmatprep.subr.bf16.mxu0 0
      %2138 = vmatpush1.bf16.msra.mxu0 0
      %2139 = vmatprep.subr.bf16.mxu0 0
      %2140 = vmatpush1.bf16.msra.mxu0 0
      %2141 = vmatprep.subr.bf16.mxu0 0
      %2142 = vmatpush1.bf16.msra.mxu0 0
      %2143 = vmatprep.subr.bf16.mxu0 0
      %2144 = vmatpush1.bf16.msra.mxu0 0
      %2145 = vmatprep.mubr.bf16.mxu0 0
      %2146 = vmatmul.mubr.bf16.gmra.mrb[0].mxu0 %v2111
      %v2147 = vpop.f32.mrb[0].mxu0
      %v2148 = vadd.f32 0.0, %v2147
      %v2149 = vpop.f32.mrb[0].mxu0
      %v2150 = vpop.f32.mrb[0].mxu0
      %v2151 = vadd.f32 0.0, %v2150
      %v2152 = vpop.f32.mrb[0].mxu0
      %2153 = vdwg.mxu0
      %v2156 = vunpack.c.l.b16 %v2099
      %v2157 = vunpack.c.l.b16 %v2100
      %v2158 = vpack.c.b16 %v2157, %v2156
      %2160 = vmatprep.subr.bf16.mxu0 0
      %2161 = vmatpush1.bf16.msra.mxu0 %v2158
      %2162 = vmatprep.subr.bf16.mxu0 0
      %2163 = vmatpush1.bf16.msra.mxu0 0
      %2164 = vmatprep.subr.bf16.mxu0 0
      %2165 = vmatpush1.bf16.msra.mxu0 0
      %2166 = vmatprep.subr.bf16.mxu0 0
      %2167 = vmatpush1.bf16.msra.mxu0 0
      %2168 = vmatprep.subr.bf16.mxu0 0
      %2169 = vmatpush1.bf16.msra.mxu0 0
      %2170 = vmatprep.subr.bf16.mxu0 0
      %2171 = vmatpush1.bf16.msra.mxu0 0
      %2172 = vmatprep.subr.bf16.mxu0 0
      %2173 = vmatpush1.bf16.msra.mxu0 0
      %2174 = vmatprep.subr.bf16.mxu0 0
      %2175 = vmatpush1.bf16.msra.mxu0 0
      %2176 = vmatprep.subr.bf16.mxu0 0
      %2177 = vmatpush1.bf16.msra.mxu0 0
      %2178 = vmatprep.subr.bf16.mxu0 0
      %2179 = vmatpush1.bf16.msra.mxu0 0
      %2180 = vmatprep.subr.bf16.mxu0 0
      %2181 = vmatpush1.bf16.msra.mxu0 0
      %2182 = vmatprep.subr.bf16.mxu0 0
      %2183 = vmatpush1.bf16.msra.mxu0 0
      %2184 = vmatprep.subr.bf16.mxu0 0
      %2185 = vmatpush1.bf16.msra.mxu0 0
      %2186 = vmatprep.subr.bf16.mxu0 0
      %2187 = vmatpush1.bf16.msra.mxu0 0
      %2188 = vmatprep.subr.bf16.mxu0 0
      %2189 = vmatpush1.bf16.msra.mxu0 0
      %2190 = vmatprep.subr.bf16.mxu0 0
      %2191 = vmatpush1.bf16.msra.mxu0 0
      %2192 = vmatprep.mubr.bf16.mxu0 0
      %2193 = vmatmul.mubr.bf16.gmra.mrb[0].mxu0 %v2111
      %v2194 = vpop.f32.mrb[0].mxu0
      %v2195 = vadd.f32 %v2148, %v2194
      %v2196 = vpop.f32.mrb[0].mxu0
      %v2197 = vpop.f32.mrb[0].mxu0
      %v2198 = vadd.f32 %v2151, %v2197
      %v2199 = vpop.f32.mrb[0].mxu0
      %2200 = vdwg.mxu0
      %v2202 = vsel %vm1204, %v2097, 0
      %2204 = vmatprep.subr.bf16.mxu0 0
      %2205 = vmatpush1.bf16.msra.mxu0 %v2158
      %2206 = vmatprep.subr.bf16.mxu0 0
      %2207 = vmatpush1.bf16.msra.mxu0 0
      %2208 = vmatprep.subr.bf16.mxu0 0
      %2209 = vmatpush1.bf16.msra.mxu0 0
      %2210 = vmatprep.subr.bf16.mxu0 0
      %2211 = vmatpush1.bf16.msra.mxu0 0
      %2212 = vmatprep.subr.bf16.mxu0 0
      %2213 = vmatpush1.bf16.msra.mxu0 0
      %2214 = vmatprep.subr.bf16.mxu0 0
      %2215 = vmatpush1.bf16.msra.mxu0 0
      %2216 = vmatprep.subr.bf16.mxu0 0
      %2217 = vmatpush1.bf16.msra.mxu0 0
      %2218 = vmatprep.subr.bf16.mxu0 0
      %2219 = vmatpush1.bf16.msra.mxu0 0
      %2220 = vmatprep.subr.bf16.mxu0 0
      %2221 = vmatpush1.bf16.msra.mxu0 0
      %2222 = vmatprep.subr.bf16.mxu0 0
      %2223 = vmatpush1.bf16.msra.mxu0 0
      %2224 = vmatprep.subr.bf16.mxu0 0
      %2225 = vmatpush1.bf16.msra.mxu0 0
      %2226 = vmatprep.subr.bf16.mxu0 0
      %2227 = vmatpush1.bf16.msra.mxu0 0
      %2228 = vmatprep.subr.bf16.mxu0 0
      %2229 = vmatpush1.bf16.msra.mxu0 0
      %2230 = vmatprep.subr.bf16.mxu0 0
      %2231 = vmatpush1.bf16.msra.mxu0 0
      %2232 = vmatprep.subr.bf16.mxu0 0
      %2233 = vmatpush1.bf16.msra.mxu0 0
      %2234 = vmatprep.subr.bf16.mxu0 0
      %2235 = vmatpush1.bf16.msra.mxu0 0
      %2236 = vmatprep.mubr.bf16.mxu0 0
      %2237 = vmatmul.mubr.bf16.gmra.mrb[0].mxu0 %v2202
      %v2238 = vpop.f32.mrb[0].mxu0
      %v2239 = vadd.f32 0.0, %v2238
      %v2240 = vpop.f32.mrb[0].mxu0
      %v2241 = vpop.f32.mrb[0].mxu0
      %v2242 = vadd.f32 0.0, %v2241
      %v2243 = vpop.f32.mrb[0].mxu0
      %2244 = vdwg.mxu0
      %v2245 = vadd.f32 %v2195, %v2239
      %v2246 = vadd.f32 %v2198, %v2242
      %v2247 = vmul.f32 %v2245, %v1191
      %v2248 = vmul.f32 %v2246, %v1196
      %v2249 = vadd.f32 %v2086, %v2247
      %v2250 = vadd.f32 %v2087, %v2248
      %v2251 = vld [vmem:[%s15] sm:$0x1]
      %v2252 = vld [vmem:[%s16] sm:$0x1]
      %v2253 = vsel %vm1204, %v2249, 0.0
      %v2254 = vsel %vm1204, %v2250, 0.0
      %v2255 = vadd.f32 %v2253, %v2254
      %v2256 = vrot.slane %v2255, 4
      %v2257 = vadd.f32 %v2255, %v2256
      %v2258 = vrot.slane %v2257, 2
      %v2259 = vadd.f32 %v2257, %v2258
      %v2260 = vrot.slane %v2259, 1
      %v2261 = vadd.f32 %v2259, %v2260
      %v2263 = vsel %vm1204, %v2261, 0
      %2265 = vmatprep.subr.mxu0 0.0
      %2266 = vmatpush1.msra.mxu0 %v702
      %2267 = vmatprep.subr.mxu0 0.0
      %2268 = vmatpush1.msra.mxu0 %v703
      %2269 = vmatprep.subr.mxu0 0.0
      %2270 = vmatpush1.msra.mxu0 0.0
      %2271 = vmatprep.subr.mxu0 0.0
      %2272 = vmatpush1.msra.mxu0 0.0
      %2273 = vmatprep.subr.mxu0 0.0
      %2274 = vmatpush1.msra.mxu0 0.0
      %2275 = vmatprep.subr.mxu0 0.0
      %2276 = vmatpush1.msra.mxu0 0.0
      %2277 = vmatprep.subr.mxu0 0.0
      %2278 = vmatpush1.msra.mxu0 0.0
      %2279 = vmatprep.subr.mxu0 0.0
      %2280 = vmatpush1.msra.mxu0 0.0
      %2281 = vmatprep.subr.mxu0 0.0
      %2282 = vmatpush1.msra.mxu0 0.0
      %2283 = vmatprep.subr.mxu0 0.0
      %2284 = vmatpush1.msra.mxu0 0.0
      %2285 = vmatprep.subr.mxu0 0.0
      %2286 = vmatpush1.msra.mxu0 0.0
      %2287 = vmatprep.subr.mxu0 0.0
      %2288 = vmatpush1.msra.mxu0 0.0
      %2289 = vmatprep.subr.mxu0 0.0
      %2290 = vmatpush1.msra.mxu0 0.0
      %2291 = vmatprep.subr.mxu0 0.0
      %2292 = vmatpush1.msra.mxu0 0.0
      %2293 = vmatprep.subr.mxu0 0.0
      %2294 = vmatpush1.msra.mxu0 0.0
      %2295 = vmatprep.subr.mxu0 0.0
      %2296 = vmatpush1.msra.mxu0 0.0
      %2297 = vmatprep.subr.mxu0 0.0
      %2298 = vmatpush1.msra.mxu0 0.0
      %2299 = vmatprep.subr.mxu0 0.0
      %2300 = vmatpush1.msra.mxu0 0.0
      %2301 = vmatprep.subr.mxu0 0.0
      %2302 = vmatpush1.msra.mxu0 0.0
      %2303 = vmatprep.subr.mxu0 0.0
      %2304 = vmatpush1.msra.mxu0 0.0
      %2305 = vmatprep.subr.mxu0 0.0
      %2306 = vmatpush1.msra.mxu0 0.0
      %2307 = vmatprep.subr.mxu0 0.0
      %2308 = vmatpush1.msra.mxu0 0.0
      %2309 = vmatprep.subr.mxu0 0.0
      %2310 = vmatpush1.msra.mxu0 0.0
      %2311 = vmatprep.subr.mxu0 0.0
      %2312 = vmatpush1.msra.mxu0 0.0
      %2313 = vmatprep.subr.mxu0 0.0
      %2314 = vmatpush1.msra.mxu0 0.0
      %2315 = vmatprep.subr.mxu0 0.0
      %2316 = vmatpush1.msra.mxu0 0.0
      %2317 = vmatprep.subr.mxu0 0.0
      %2318 = vmatpush1.msra.mxu0 0.0
      %2319 = vmatprep.subr.mxu0 0.0
      %2320 = vmatpush1.msra.mxu0 0.0
      %2321 = vmatprep.subr.mxu0 0.0
      %2322 = vmatpush1.msra.mxu0 0.0
      %2323 = vmatprep.subr.mxu0 0.0
      %2324 = vmatpush1.msra.mxu0 0.0
      %2325 = vmatprep.subr.mxu0 0.0
      %2326 = vmatpush1.msra.mxu0 0.0
      %2327 = vmatprep.subr.mxu0 0.0
      %2328 = vmatpush1.msra.mxu0 0.0
      %2329 = vmatprep.mubr.f32.mxu0 0.0
      %2330 = vmatmul.mubr.f32.gmra.mrb[0].mxu0 %v2263
      %v2331 = vpop.f32.mrb[0].mxu0
      %v2332 = vadd.f32 0.0, %v2331
      %v2333 = vpop.f32.mrb[0].mxu0
      %2334 = vdwg.mxu0
      %v2335 = vmul.f32 %v2332, 0.03125
      %v2337 = vsel %vm1288, %v2335, 0
      %2339 = vmatprep.subr.mxu0 0.0
      %2340 = vmatpush1.msra.mxu0 %v704
      %2341 = vmatprep.subr.mxu0 0.0
      %2342 = vmatpush1.msra.mxu0 0.0
      %2343 = vmatprep.subr.mxu0 0.0
      %2344 = vmatpush1.msra.mxu0 0.0
      %2345 = vmatprep.subr.mxu0 0.0
      %2346 = vmatpush1.msra.mxu0 0.0
      %2347 = vmatprep.subr.mxu0 0.0
      %2348 = vmatpush1.msra.mxu0 0.0
      %2349 = vmatprep.subr.mxu0 0.0
      %2350 = vmatpush1.msra.mxu0 0.0
      %2351 = vmatprep.subr.mxu0 0.0
      %2352 = vmatpush1.msra.mxu0 0.0
      %2353 = vmatprep.subr.mxu0 0.0
      %2354 = vmatpush1.msra.mxu0 0.0
      %2355 = vmatprep.subr.mxu0 0.0
      %2356 = vmatpush1.msra.mxu0 0.0
      %2357 = vmatprep.subr.mxu0 0.0
      %2358 = vmatpush1.msra.mxu0 0.0
      %2359 = vmatprep.subr.mxu0 0.0
      %2360 = vmatpush1.msra.mxu0 0.0
      %2361 = vmatprep.subr.mxu0 0.0
      %2362 = vmatpush1.msra.mxu0 0.0
      %2363 = vmatprep.subr.mxu0 0.0
      %2364 = vmatpush1.msra.mxu0 0.0
      %2365 = vmatprep.subr.mxu0 0.0
      %2366 = vmatpush1.msra.mxu0 0.0
      %2367 = vmatprep.subr.mxu0 0.0
      %2368 = vmatpush1.msra.mxu0 0.0
      %2369 = vmatprep.subr.mxu0 0.0
      %2370 = vmatpush1.msra.mxu0 0.0
      %2371 = vmatprep.subr.mxu0 0.0
      %2372 = vmatpush1.msra.mxu0 0.0
      %2373 = vmatprep.subr.mxu0 0.0
      %2374 = vmatpush1.msra.mxu0 0.0
      %2375 = vmatprep.subr.mxu0 0.0
      %2376 = vmatpush1.msra.mxu0 0.0
      %2377 = vmatprep.subr.mxu0 0.0
      %2378 = vmatpush1.msra.mxu0 0.0
      %2379 = vmatprep.subr.mxu0 0.0
      %2380 = vmatpush1.msra.mxu0 0.0
      %2381 = vmatprep.subr.mxu0 0.0
      %2382 = vmatpush1.msra.mxu0 0.0
      %2383 = vmatprep.subr.mxu0 0.0
      %2384 = vmatpush1.msra.mxu0 0.0
      %2385 = vmatprep.subr.mxu0 0.0
      %2386 = vmatpush1.msra.mxu0 0.0
      %2387 = vmatprep.subr.mxu0 0.0
      %2388 = vmatpush1.msra.mxu0 0.0
      %2389 = vmatprep.subr.mxu0 0.0
      %2390 = vmatpush1.msra.mxu0 0.0
      %2391 = vmatprep.subr.mxu0 0.0
      %2392 = vmatpush1.msra.mxu0 0.0
      %2393 = vmatprep.subr.mxu0 0.0
      %2394 = vmatpush1.msra.mxu0 0.0
      %2395 = vmatprep.subr.mxu0 0.0
      %2396 = vmatpush1.msra.mxu0 0.0
      %2397 = vmatprep.subr.mxu0 0.0
      %2398 = vmatpush1.msra.mxu0 0.0
      %2399 = vmatprep.subr.mxu0 0.0
      %2400 = vmatpush1.msra.mxu0 0.0
      %2401 = vmatprep.subr.mxu0 0.0
      %2402 = vmatpush1.msra.mxu0 0.0
      %2403 = vmatprep.mubr.f32.mxu0 0.0
      %2404 = vmatmul.mubr.f32.gmra.mrb[0].mxu0 %v2337
      %v2405 = vpop.f32.mrb[0].mxu0
      %v2406 = vadd.f32 0.0, %v2405
      %v2407 = vpop.f32.mrb[0].mxu0
      %2408 = vdwg.mxu0
      %v2409 = vlaneseq
      %v2410 = vshrl.u32 %v2409, 7
      %v2411 = vsub.s32 0, %v2410
      %v2412 = vrot.slane %v2406, %v2411
      %v2413 = vsub.f32 %v2249, %v2412
      %v2414 = vsub.f32 %v2250, %v2412
      %v2415 = vmul.f32 %v2413, %v2413
      %v2416 = vmul.f32 %v2414, %v2414
      %v2417 = vsel %vm1204, %v2415, 0.0
      %v2418 = vsel %vm1204, %v2416, 0.0
      %v2419 = vadd.f32 %v2417, %v2418
      %v2420 = vrot.slane %v2419, 4
      %v2421 = vadd.f32 %v2419, %v2420
      %v2422 = vrot.slane %v2421, 2
      %v2423 = vadd.f32 %v2421, %v2422
      %v2424 = vrot.slane %v2423, 1
      %v2425 = vadd.f32 %v2423, %v2424
      %v2427 = vsel %vm1204, %v2425, 0
      %2429 = vmatprep.subr.mxu0 0.0
      %2430 = vmatpush1.msra.mxu0 %v702
      %2431 = vmatprep.subr.mxu0 0.0
      %2432 = vmatpush1.msra.mxu0 %v703
      %2433 = vmatprep.subr.mxu0 0.0
      %2434 = vmatpush1.msra.mxu0 0.0
      %2435 = vmatprep.subr.mxu0 0.0
      %2436 = vmatpush1.msra.mxu0 0.0
      %2437 = vmatprep.subr.mxu0 0.0
      %2438 = vmatpush1.msra.mxu0 0.0
      %2439 = vmatprep.subr.mxu0 0.0
      %2440 = vmatpush1.msra.mxu0 0.0
      %2441 = vmatprep.subr.mxu0 0.0
      %2442 = vmatpush1.msra.mxu0 0.0
      %2443 = vmatprep.subr.mxu0 0.0
      %2444 = vmatpush1.msra.mxu0 0.0
      %2445 = vmatprep.subr.mxu0 0.0
      %2446 = vmatpush1.msra.mxu0 0.0
      %2447 = vmatprep.subr.mxu0 0.0
      %2448 = vmatpush1.msra.mxu0 0.0
      %2449 = vmatprep.subr.mxu0 0.0
      %2450 = vmatpush1.msra.mxu0 0.0
      %2451 = vmatprep.subr.mxu0 0.0
      %2452 = vmatpush1.msra.mxu0 0.0
      %2453 = vmatprep.subr.mxu0 0.0
      %2454 = vmatpush1.msra.mxu0 0.0
      %2455 = vmatprep.subr.mxu0 0.0
      %2456 = vmatpush1.msra.mxu0 0.0
      %2457 = vmatprep.subr.mxu0 0.0
      %2458 = vmatpush1.msra.mxu0 0.0
      %2459 = vmatprep.subr.mxu0 0.0
      %2460 = vmatpush1.msra.mxu0 0.0
      %2461 = vmatprep.subr.mxu0 0.0
      %2462 = vmatpush1.msra.mxu0 0.0
      %2463 = vmatprep.subr.mxu0 0.0
      %2464 = vmatpush1.msra.mxu0 0.0
      %2465 = vmatprep.subr.mxu0 0.0
      %2466 = vmatpush1.msra.mxu0 0.0
      %2467 = vmatprep.subr.mxu0 0.0
      %2468 = vmatpush1.msra.mxu0 0.0
      %2469 = vmatprep.subr.mxu0 0.0
      %2470 = vmatpush1.msra.mxu0 0.0
      %2471 = vmatprep.subr.mxu0 0.0
      %2472 = vmatpush1.msra.mxu0 0.0
      %2473 = vmatprep.subr.mxu0 0.0
      %2474 = vmatpush1.msra.mxu0 0.0
      %2475 = vmatprep.subr.mxu0 0.0
      %2476 = vmatpush1.msra.mxu0 0.0
      %2477 = vmatprep.subr.mxu0 0.0
      %2478 = vmatpush1.msra.mxu0 0.0
      %2479 = vmatprep.subr.mxu0 0.0
      %2480 = vmatpush1.msra.mxu0 0.0
      %2481 = vmatprep.subr.mxu0 0.0
      %2482 = vmatpush1.msra.mxu0 0.0
      %2483 = vmatprep.subr.mxu0 0.0
      %2484 = vmatpush1.msra.mxu0 0.0
      %2485 = vmatprep.subr.mxu0 0.0
      %2486 = vmatpush1.msra.mxu0 0.0
      %2487 = vmatprep.subr.mxu0 0.0
      %2488 = vmatpush1.msra.mxu0 0.0
      %2489 = vmatprep.subr.mxu0 0.0
      %2490 = vmatpush1.msra.mxu0 0.0
      %2491 = vmatprep.subr.mxu0 0.0
      %2492 = vmatpush1.msra.mxu0 0.0
      %2493 = vmatprep.mubr.f32.mxu0 0.0
      %2494 = vmatmul.mubr.f32.gmra.mrb[0].mxu0 %v2427
      %v2495 = vpop.f32.mrb[0].mxu0
      %v2496 = vadd.f32 0.0, %v2495
      %v2497 = vpop.f32.mrb[0].mxu0
      %2498 = vdwg.mxu0
      %v2499 = vmul.f32 %v2496, 0.03125
      %v2501 = vsel %vm1288, %v2499, 0
      %2503 = vmatprep.subr.mxu0 0.0
      %2504 = vmatpush1.msra.mxu0 %v704
      %2505 = vmatprep.subr.mxu0 0.0
      %2506 = vmatpush1.msra.mxu0 0.0
      %2507 = vmatprep.subr.mxu0 0.0
      %2508 = vmatpush1.msra.mxu0 0.0
      %2509 = vmatprep.subr.mxu0 0.0
      %2510 = vmatpush1.msra.mxu0 0.0
      %2511 = vmatprep.subr.mxu0 0.0
      %2512 = vmatpush1.msra.mxu0 0.0
      %2513 = vmatprep.subr.mxu0 0.0
      %2514 = vmatpush1.msra.mxu0 0.0
      %2515 = vmatprep.subr.mxu0 0.0
      %2516 = vmatpush1.msra.mxu0 0.0
      %2517 = vmatprep.subr.mxu0 0.0
      %2518 = vmatpush1.msra.mxu0 0.0
      %2519 = vmatprep.subr.mxu0 0.0
      %2520 = vmatpush1.msra.mxu0 0.0
      %2521 = vmatprep.subr.mxu0 0.0
      %2522 = vmatpush1.msra.mxu0 0.0
      %2523 = vmatprep.subr.mxu0 0.0
      %2524 = vmatpush1.msra.mxu0 0.0
      %2525 = vmatprep.subr.mxu0 0.0
      %2526 = vmatpush1.msra.mxu0 0.0
      %2527 = vmatprep.subr.mxu0 0.0
      %2528 = vmatpush1.msra.mxu0 0.0
      %2529 = vmatprep.subr.mxu0 0.0
      %2530 = vmatpush1.msra.mxu0 0.0
      %2531 = vmatprep.subr.mxu0 0.0
      %2532 = vmatpush1.msra.mxu0 0.0
      %2533 = vmatprep.subr.mxu0 0.0
      %2534 = vmatpush1.msra.mxu0 0.0
      %2535 = vmatprep.subr.mxu0 0.0
      %2536 = vmatpush1.msra.mxu0 0.0
      %2537 = vmatprep.subr.mxu0 0.0
      %2538 = vmatpush1.msra.mxu0 0.0
      %2539 = vmatprep.subr.mxu0 0.0
      %2540 = vmatpush1.msra.mxu0 0.0
      %2541 = vmatprep.subr.mxu0 0.0
      %2542 = vmatpush1.msra.mxu0 0.0
      %2543 = vmatprep.subr.mxu0 0.0
      %2544 = vmatpush1.msra.mxu0 0.0
      %2545 = vmatprep.subr.mxu0 0.0
      %2546 = vmatpush1.msra.mxu0 0.0
      %2547 = vmatprep.subr.mxu0 0.0
      %2548 = vmatpush1.msra.mxu0 0.0
      %2549 = vmatprep.subr.mxu0 0.0
      %2550 = vmatpush1.msra.mxu0 0.0
      %2551 = vmatprep.subr.mxu0 0.0
      %2552 = vmatpush1.msra.mxu0 0.0
      %2553 = vmatprep.subr.mxu0 0.0
      %2554 = vmatpush1.msra.mxu0 0.0
      %2555 = vmatprep.subr.mxu0 0.0
      %2556 = vmatpush1.msra.mxu0 0.0
      %2557 = vmatprep.subr.mxu0 0.0
      %2558 = vmatpush1.msra.mxu0 0.0
      %2559 = vmatprep.subr.mxu0 0.0
      %2560 = vmatpush1.msra.mxu0 0.0
      %2561 = vmatprep.subr.mxu0 0.0
      %2562 = vmatpush1.msra.mxu0 0.0
      %2563 = vmatprep.subr.mxu0 0.0
      %2564 = vmatpush1.msra.mxu0 0.0
      %2565 = vmatprep.subr.mxu0 0.0
      %2566 = vmatpush1.msra.mxu0 0.0
      %2567 = vmatprep.mubr.f32.mxu0 0.0
      %2568 = vmatmul.mubr.f32.gmra.mrb[0].mxu0 %v2501
      %v2569 = vpop.f32.mrb[0].mxu0
      %v2570 = vadd.f32 1e-05, %v2569
      %v2571 = vpop.f32.mrb[0].mxu0
      %2572 = vdwg.mxu0
      %v2573 = vrsqrt.pop %v2570
      %v2574 = vlaneseq
      %v2575 = vshrl.u32 %v2574, 7
      %v2576 = vsub.s32 0, %v2575
      %v2577 = vrot.slane %v2573, %v2576
      %v2578 = vmul.f32 %v2413, %v2577
      %v2579 = vmul.f32 %v2414, %v2577
      %v2581 = vlaneseq
      %v2582 = vshrl.u32 %v2581, 7
      %v2583 = vsub.s32 0, %v2582
      %v2584 = vrot.slane %v2251, %v2583
      %v2586 = vmul.f32 %v2578, %v2584
      %v2587 = vmul.f32 %v2579, %v2584
      %v2589 = vlaneseq
      %v2590 = vshrl.u32 %v2589, 7
      %v2591 = vsub.s32 0, %v2590
      %v2592 = vrot.slane %v2252, %v2591
      %v2594 = vadd.f32 %v2586, %v2592
      %v2595 = vadd.f32 %v2587, %v2592
      %v2596 = vand.u32 2147483647, %v2594
      %v2597 = vand.u32 2147483647, %v2595
      %v2598 = vsub.f32 0.0, %v2596
      %v2599 = vsub.f32 0.0, %v2597
      %v2600 = vmul.f32 %v2598, 1.442695
      %v2601 = vpow.pop %v2600
      %v2602 = vmul.f32 %v2599, 1.442695
      %v2603 = vpow.pop %v2602
      %v2604 = vmul.f32 %v2601, %v2601
      %v2605 = vmul.f32 %v2603, %v2603
      %vm2606 = vcmp.ge.f32.partialorder %v2594, 0.0
      %vm2607 = vcmp.ge.f32.partialorder %v2595, 0.0
      %v2608 = vmul.f32 %v2601, 2.0
      %v2609 = vmul.f32 %v2603, 2.0
      %v2610 = vadd.f32 %v2608, 1.0
      %v2611 = vadd.f32 %v2609, 1.0
      %v2612 = vadd.f32 %v2604, %v2608
      %v2613 = vadd.f32 %v2605, %v2609
      %v2614 = vsel %vm2606, %v2610, %v2612
      %v2615 = vsel %vm2607, %v2611, %v2613
      %v2616 = vmul.f32 %v2604, 2.0
      %v2617 = vmul.f32 %v2605, 2.0
      %v2618 = vadd.f32 %v2616, %v2608
      %v2619 = vadd.f32 %v2617, %v2609
      %v2620 = vadd.f32 %v2618, 1.0
      %v2621 = vadd.f32 %v2619, 1.0
      %v2622 = vadd.f32 %v2612, 2.0
      %v2623 = vadd.f32 %v2613, 2.0
      %v2624 = vsel %vm2606, %v2620, %v2622
      %v2625 = vsel %vm2607, %v2621, %v2623
      %v2626 = vrcp.pop %v2624
      %v2627 = vmul.f32 %v2614, %v2626
      %v2628 = vrcp.pop %v2625
      %v2629 = vmul.f32 %v2615, %v2628
      %v2630 = vmul.f32 %v2594, %v2627
      %v2631 = vmul.f32 %v2595, %v2629
      %v2632 = vld [vmem:[%s17] sm:$0x3]
      %v2633 = vld [vmem:[%s18] sm:$0x3]
      %v2635 = vsel %vm727, %v2633, 0
      %2637 = vmatprep.subr.bf16.mxu0 0
      %2638 = vmatpush1.bf16.msra.mxu0 %v2635
      %2639 = vmatprep.subr.bf16.mxu0 0
      %2640 = vmatpush1.bf16.msra.mxu0 0
      %2641 = vmatprep.subr.bf16.mxu0 0
      %2642 = vmatpush1.bf16.msra.mxu0 0
      %2643 = vmatprep.subr.bf16.mxu0 0
      %2644 = vmatpush1.bf16.msra.mxu0 0
      %2645 = vmatprep.subr.bf16.mxu0 0
      %2646 = vmatpush1.bf16.msra.mxu0 0
      %2647 = vmatprep.subr.bf16.mxu0 0
      %2648 = vmatpush1.bf16.msra.mxu0 0
      %2649 = vmatprep.subr.bf16.mxu0 0
      %2650 = vmatpush1.bf16.msra.mxu0 0
      %2651 = vmatprep.subr.bf16.mxu0 0
      %2652 = vmatpush1.bf16.msra.mxu0 0
      %2653 = vmatprep.subr.bf16.mxu0 0
      %2654 = vmatpush1.bf16.msra.mxu0 0
      %2655 = vmatprep.subr.bf16.mxu0 0
      %2656 = vmatpush1.bf16.msra.mxu0 0
      %2657 = vmatprep.subr.bf16.mxu0 0
      %2658 = vmatpush1.bf16.msra.mxu0 0
      %2659 = vmatprep.subr.bf16.mxu0 0
      %2660 = vmatpush1.bf16.msra.mxu0 0
      %2661 = vmatprep.subr.bf16.mxu0 0
      %2662 = vmatpush1.bf16.msra.mxu0 0
      %2663 = vmatprep.subr.bf16.mxu0 0
      %2664 = vmatpush1.bf16.msra.mxu0 0
      %2665 = vmatprep.subr.bf16.mxu0 0
      %2666 = vmatpush1.bf16.msra.mxu0 0
      %2667 = vmatprep.subr.bf16.mxu0 0
      %2668 = vmatpush1.bf16.msra.mxu0 0
      %2669 = vmatprep.mubr.bf16.mxu0 0
      %2670 = vmatmul.mubr.bf16.gmra.mrb[0].mxu0 %v895
      %v2671 = vpop.f32.mrb[0].mxu0
      %v2672 = vadd.f32 0.0, %v2671
      %v2673 = vpop.f32.mrb[0].mxu0
      %v2674 = vpop.f32.mrb[0].mxu0
      %v2675 = vadd.f32 0.0, %v2674
      %v2676 = vpop.f32.mrb[0].mxu0
      %2677 = vdwg.mxu0
      %v2679 = vsel %vm727, %v2632, 0
      %2681 = vmatprep.subr.bf16.mxu0 0
      %2682 = vmatpush1.bf16.msra.mxu0 %v2679
      %2683 = vmatprep.subr.bf16.mxu0 0
      %2684 = vmatpush1.bf16.msra.mxu0 0
      %2685 = vmatprep.subr.bf16.mxu0 0
      %2686 = vmatpush1.bf16.msra.mxu0 0
      %2687 = vmatprep.subr.bf16.mxu0 0
      %2688 = vmatpush1.bf16.msra.mxu0 0
      %2689 = vmatprep.subr.bf16.mxu0 0
      %2690 = vmatpush1.bf16.msra.mxu0 0
      %2691 = vmatprep.subr.bf16.mxu0 0
      %2692 = vmatpush1.bf16.msra.mxu0 0
      %2693 = vmatprep.subr.bf16.mxu0 0
      %2694 = vmatpush1.bf16.msra.mxu0 0
      %2695 = vmatprep.subr.bf16.mxu0 0
      %2696 = vmatpush1.bf16.msra.mxu0 0
      %2697 = vmatprep.subr.bf16.mxu0 0
      %2698 = vmatpush1.bf16.msra.mxu0 0
      %2699 = vmatprep.subr.bf16.mxu0 0
      %2700 = vmatpush1.bf16.msra.mxu0 0
      %2701 = vmatprep.subr.bf16.mxu0 0
      %2702 = vmatpush1.bf16.msra.mxu0 0
      %2703 = vmatprep.subr.bf16.mxu0 0
      %2704 = vmatpush1.bf16.msra.mxu0 0
      %2705 = vmatprep.subr.bf16.mxu0 0
      %2706 = vmatpush1.bf16.msra.mxu0 0
      %2707 = vmatprep.subr.bf16.mxu0 0
      %2708 = vmatpush1.bf16.msra.mxu0 0
      %2709 = vmatprep.subr.bf16.mxu0 0
      %2710 = vmatpush1.bf16.msra.mxu0 0
      %2711 = vmatprep.subr.bf16.mxu0 0
      %2712 = vmatpush1.bf16.msra.mxu0 0
      %2713 = vmatprep.mubr.bf16.mxu0 0
      %2714 = vmatmul.mubr.bf16.gmra.mrb[0].mxu0 %v895
      %v2715 = vpop.f32.mrb[0].mxu0
      %v2716 = vadd.f32 %v2672, %v2715
      %v2717 = vpop.f32.mrb[0].mxu0
      %v2718 = vpop.f32.mrb[0].mxu0
      %v2719 = vadd.f32 %v2675, %v2718
      %v2720 = vpop.f32.mrb[0].mxu0
      %2721 = vdwg.mxu0
      %2722 = vmatprep.subr.bf16.mxu0 0
      %2723 = vmatpush1.bf16.msra.mxu0 %v2679
      %2724 = vmatprep.subr.bf16.mxu0 0
      %2725 = vmatpush1.bf16.msra.mxu0 0
      %2726 = vmatprep.subr.bf16.mxu0 0
      %2727 = vmatpush1.bf16.msra.mxu0 0
      %2728 = vmatprep.subr.bf16.mxu0 0
      %2729 = vmatpush1.bf16.msra.mxu0 0
      %2730 = vmatprep.subr.bf16.mxu0 0
      %2731 = vmatpush1.bf16.msra.mxu0 0
      %2732 = vmatprep.subr.bf16.mxu0 0
      %2733 = vmatpush1.bf16.msra.mxu0 0
      %2734 = vmatprep.subr.bf16.mxu0 0
      %2735 = vmatpush1.bf16.msra.mxu0 0
      %2736 = vmatprep.subr.bf16.mxu0 0
      %2737 = vmatpush1.bf16.msra.mxu0 0
      %2738 = vmatprep.subr.bf16.mxu0 0
      %2739 = vmatpush1.bf16.msra.mxu0 0
      %2740 = vmatprep.subr.bf16.mxu0 0
      %2741 = vmatpush1.bf16.msra.mxu0 0
      %2742 = vmatprep.subr.bf16.mxu0 0
      %2743 = vmatpush1.bf16.msra.mxu0 0
      %2744 = vmatprep.subr.bf16.mxu0 0
      %2745 = vmatpush1.bf16.msra.mxu0 0
      %2746 = vmatprep.subr.bf16.mxu0 0
      %2747 = vmatpush1.bf16.msra.mxu0 0
      %2748 = vmatprep.subr.bf16.mxu0 0
      %2749 = vmatpush1.bf16.msra.mxu0 0
      %2750 = vmatprep.subr.bf16.mxu0 0
      %2751 = vmatpush1.bf16.msra.mxu0 0
      %2752 = vmatprep.subr.bf16.mxu0 0
      %2753 = vmatpush1.bf16.msra.mxu0 0
      %2754 = vmatprep.mubr.bf16.mxu0 0
      %2755 = vmatmul.mubr.bf16.gmra.mrb[0].mxu0 %v986
      %v2756 = vpop.f32.mrb[0].mxu0
      %v2757 = vadd.f32 0.0, %v2756
      %v2758 = vpop.f32.mrb[0].mxu0
      %v2759 = vpop.f32.mrb[0].mxu0
      %v2760 = vadd.f32 0.0, %v2759
      %v2761 = vpop.f32.mrb[0].mxu0
      %2762 = vdwg.mxu0
      %v2763 = vadd.f32 %v2716, %v2757
      %v2764 = vadd.f32 %v2719, %v2760
      %v2765 = vld [vmem:[%s19] sm:$0x1]
      %v2767 = vlaneseq
      %v2768 = vshrl.u32 %v2767, 7
      %v2769 = vsub.s32 0, %v2768
      %v2770 = vrot.slane %v2765, %v2769
      %v2772 = vadd.f32 %v2763, %v2770
      %v2773 = vadd.f32 %v2764, %v2770
      %v2774 = vadd.f32 %v2630, %v2772
      %v2775 = vadd.f32 %v2631, %v2773
      %2776 = vst.msk [vmem:[%s699] sm:$0xff] %vm1204, %v2774
      %2777 = vst.msk [vmem:[%s699 + $0x8] sm:$0xff] %vm1204, %v2775
      %s2778 = smul.u32 2, %s33
      %p2779 = scmp.lt.s32.totalorder %s2778, 3
      %s2780 = scalar_select %p2779, %s2778, 3
      %s2781 = smul.addr %s2780, 8
      %s2782 = scalar_lea.vmem %s22, %s2781
      // Predicated region
      $region109: #{tpu_custom_call.1} parent=107 // pred_check
        %p2783 = pneg %p523
      $region110: #{tpu_custom_call.1} parent=107 // pred_check_branch
        %2785 = sbr.rel (%p2783) target = $region112
      $region111: #{tpu_custom_call.1} parent=107 // pred_region
        %s2786 = smul.u32 2, %s33
      $region112: #{tpu_custom_call.1} parent=107 // pred_fallthru
        _
    $region108: #{tpu_custom_call.1} parent=5 // pred_fallthru
      _
    %p2787 = scmp.le.s32.totalorder 2, %s28
    // Predicated region
    $region113: #{tpu_custom_call.1} parent=5 // pred_check
      %p2788 = pneg %p2787
    $region114: #{tpu_custom_call.1} parent=5 // pred_check_branch
      %2790 = sbr.rel (%p2788) target = $region116
    $region115: #{tpu_custom_call.1} parent=5 // pred_region
      %s2791 = ssub.s32 %s28, 2
      // Predicated region
      $region117: #{tpu_custom_call.1} parent=115 // pred_check
        %p2792 = pneg %p529
      $region118: #{tpu_custom_call.1} parent=115 // pred_check_branch
        %2794 = sbr.rel (%p2792) target = $region120
      $region119: #{tpu_custom_call.1} parent=115 // pred_region
        %s2795 = smul.u32 2, %s34
        %p2796 = scmp.lt.s32.totalorder %s2795, 3
        %s2797 = scalar_select %p2796, %s2795, 3
        %s2798 = smul.addr %s2797, 8
        %s2799 = scalar_lea.vmem %s22, %s2798
      $region120: #{tpu_custom_call.1} parent=115 // pred_fallthru
        _
    $region116: #{tpu_custom_call.1} parent=5 // pred_fallthru
      _
  $region6: #{tpu_custom_call.1} parent=0 // loop_footer
    %s32 = sadd.s32 1, %s28
  $region7: #{tpu_custom_call.1} parent=0 // loop_footer_branch
    %27 = sbr.rel target = $region3
  $region8: #{tpu_custom_call.1} parent=0 // loop_exit
    _

// kernel: tpu_custom_call.1
$region0: #{tpu_custom_call.1}
  #allocation0 [shape = 'u32[]', space=smem, size = 0x4, offset = 0x4, fixed_abs, tag = 'smem constant byte address 0x4 - core index']
  #allocation1 [shape = 'u32[144,128]{1,0:T(1,128)}', space=vmem, size = 0x12000, scoped, tag = 'internal scratch']
  %s0 = inlined_call_operand.vmem [shape: f32[32,4], index: 0, kind: input, shape index: {}]
  %s1 = inlined_call_operand.vmem [shape: f32[2,1,8], index: 1, kind: input, shape index: {}]
  %s2 = inlined_call_operand.vmem [shape: f32[3,16,1], index: 2, kind: input, shape index: {}]
  %s3 = inlined_call_operand.vmem [shape: bf16[3,4,16], index: 3, kind: input, shape index: {}]
  %s4 = inlined_call_operand.vmem [shape: bf16[3,4,16], index: 4, kind: input, shape index: {}]
  %s5 = inlined_call_operand.vmem [shape: f32[1,16], index: 5, kind: input, shape index: {}]
  %s6 = inlined_call_operand.vmem [shape: f32[1,16], index: 6, kind: input, shape index: {}]
  %s7 = inlined_call_operand.vmem [shape: f32[1,16], index: 7, kind: input, shape index: {}]
  %s8 = inlined_call_operand.vmem [shape: f32[8,16], index: 8, kind: input, shape index: {}]
  %s9 = inlined_call_operand.vmem [shape: f32[8,16], index: 9, kind: input, shape index: {}]
  %s10 = inlined_call_operand.vmem [shape: f32[1,16], index: 10, kind: input, shape index: {}]
  %s11 = inlined_call_operand.vmem [shape: f32[1,16], index: 11, kind: input, shape index: {}]
  %s12 = inlined_call_operand.vmem [shape: bf16[3,16,16], index: 12, kind: input, shape index: {}]
  %s13 = inlined_call_operand.vmem [shape: bf16[3,16,16], index: 13, kind: input, shape index: {}]
  %s14 = inlined_call_operand.vmem [shape: f32[1,16], index: 14, kind: input, shape index: {}]
  %s15 = inlined_call_operand.vmem [shape: f32[1,16], index: 15, kind: input, shape index: {}]
  %s16 = inlined_call_operand.vmem [shape: f32[1,16], index: 16, kind: input, shape index: {}]
  %s17 = inlined_call_operand.vmem [shape: bf16[4,16], index: 17, kind: input, shape index: {}]
  %s18 = inlined_call_operand.vmem [shape: bf16[4,16], index: 18, kind: input, shape index: {}]
  %s19 = inlined_call_operand.vmem [shape: f32[1,16], index: 19, kind: input, shape index: {}]
  %s20 = inlined_call_operand.vmem [shape: f32[16,8], index: 20, kind: input, shape index: {}]
  %s21 = inlined_call_operand.vmem [shape: f32[8,16], index: 21, kind: input, shape index: {}]
  %s22 = inlined_call_operand.vmem [shape: f32[32,16], index: 22, kind: output, shape index: {}]
  %s23 = sld [smem:[#allocation0]]
  $region121: #{tpu_custom_call.1} parent=0
    _
  %s25 = ssub.s32 1, %s23
  %s26 = scalar_select 0, %s25, %s23
  loop: start=0, step=1, limit=4
  $region2: #{tpu_custom_call.1} parent=0 // loop_pre_header
    _
  $region3: #{tpu_custom_call.1} parent=0 // loop_header
    %s28 = sphi 0, %s32
    %p29 = scmp.ge.s32.totalorder %s28, 4
    %s38 = sphi 0, %s40
    %s41 = sphi 0, %s38
    %s42 = sphi 0, %s41
    %s58 = sphi 0, %s42
    %s64 = sphi 0, %s66
    %s67 = sphi 0, %s64
    %s68 = sphi 0, %s67
    %s84 = sphi 0, %s68
    %s88 = sphi 0, %s88
    %s90 = sphi 0, %s88
    %s91 = sphi 0, %s90
    %s105 = sphi 0, %s91
    %s109 = sphi 0, %s109
    %s111 = sphi 0, %s109
    %s112 = sphi 0, %s111
    %s126 = sphi 0, %s112
    %s130 = sphi 0, %s130
    %s132 = sphi 0, %s130
    %s133 = sphi 0, %s132
    %s147 = sphi 0, %s133
    %s151 = sphi 0, %s151
    %s153 = sphi 0, %s151
    %s154 = sphi 0, %s153
    %s168 = sphi 0, %s154
    %s172 = sphi 0, %s172
    %s174 = sphi 0, %s172
    %s175 = sphi 0, %s174
    %s189 = sphi 0, %s175
    %s193 = sphi 0, %s193
    %s195 = sphi 0, %s193
    %s196 = sphi 0, %s195
    %s210 = sphi 0, %s196
    %s214 = sphi 0, %s214
    %s216 = sphi 0, %s214
    %s217 = sphi 0, %s216
    %s231 = sphi 0, %s217
    %s235 = sphi 0, %s235
    %s237 = sphi 0, %s235
    %s238 = sphi 0, %s237
    %s252 = sphi 0, %s238
    %s256 = sphi 0, %s256
    %s258 = sphi 0, %s256
    %s259 = sphi 0, %s258
    %s273 = sphi 0, %s259
    %s277 = sphi 0, %s277
    %s279 = sphi 0, %s277
    %s280 = sphi 0, %s279
    %s294 = sphi 0, %s280
    %s298 = sphi 0, %s298
    %s300 = sphi 0, %s298
    %s301 = sphi 0, %s300
    %s315 = sphi 0, %s301
    %s319 = sphi 0, %s319
    %s321 = sphi 0, %s319
    %s322 = sphi 0, %s321
    %s336 = sphi 0, %s322
    %s340 = sphi 0, %s340
    %s342 = sphi 0, %s340
    %s343 = sphi 0, %s342
    %s357 = sphi 0, %s343
    %s361 = sphi 0, %s361
    %s363 = sphi 0, %s361
    %s364 = sphi 0, %s363
    %s378 = sphi 0, %s364
    %s382 = sphi 0, %s382
    %s384 = sphi 0, %s382
    %s385 = sphi 0, %s384
    %s399 = sphi 0, %s385
    %s403 = sphi 0, %s403
    %s405 = sphi 0, %s403
    %s406 = sphi 0, %s405
    %s420 = sphi 0, %s406
    %s424 = sphi 0, %s424
    %s426 = sphi 0, %s424
    %s427 = sphi 0, %s426
    %s441 = sphi 0, %s427
    %s445 = sphi 0, %s445
    %s447 = sphi 0, %s445
    %s448 = sphi 0, %s447
    %s462 = sphi 0, %s448
    %s466 = sphi 0, %s466
    %s468 = sphi 0, %s466
    %s469 = sphi 0, %s468
    %s483 = sphi 0, %s469
    %s487 = sphi 0, %s487
    %s489 = sphi 0, %s487
    %s490 = sphi 0, %s489
    %s504 = sphi 0, %s490
    %s510 = sphi 0, %s512
    %s513 = sphi 0, %s510
    %s514 = sphi 0, %s513
    %s530 = sphi 0, %s514
  $region4: #{tpu_custom_call.1} parent=0 // loop_header_branch
    %31 = sbr.rel (%p29) target = $region8
  $region5: #{tpu_custom_call.1} parent=0 // loop_body
    %s33 = ssub.s32 %s28, 1
    %s34 = ssub.s32 %s28, 2
    %s35 = sadd.s32 %s28, 1
    %s36 = ssub.s32 %s28, %s35
    %p37 = scmp.eq.s32.totalorder %s36, 0
    %s39 = sadd.s32 %s38, 1
    %s40 = scalar_select %p37, %s38, %s39
    %p43 = pneg %p37
    %p44 = scmp.eq.s32.totalorder %s28, 1
    %p45 = por %p43, %p44
    %p46 = scmp.ne.s32.totalorder %s38, %s41
    %p47 = scmp.eq.s32.totalorder %s28, 0
    %p48 = por %p46, %p47
    %p49 = scmp.ne.s32.totalorder %s38, %s41
    %p50 = scmp.eq.s32.totalorder %s33, 1
    %p51 = por %p49, %p50
    %p52 = scmp.ne.s32.totalorder %s41, %s42
    %p53 = scmp.eq.s32.totalorder %s33, 0
    %p54 = por %p52, %p53
    %p55 = scmp.ne.s32.totalorder %s41, %s42
    %p56 = scmp.eq.s32.totalorder %s34, 1
    %p57 = por %p55, %p56
    %p59 = scmp.ne.s32.totalorder %s42, %s58
    %p60 = scmp.eq.s32.totalorder %s34, 0
    %p61 = por %p59, %p60
    %s62 = ssub.s32 %s28, %s35
    %p63 = scmp.eq.s32.totalorder %s62, 0
    %s65 = sadd.s32 %s64, 1
    %s66 = scalar_select %p63, %s64, %s65
    %p69 = pneg %p63
    %p70 = scmp.eq.s32.totalorder %s28, 1
    %p71 = por %p69, %p70
    %p72 = scmp.ne.s32.totalorder %s64, %s67
    %p73 = scmp.eq.s32.totalorder %s28, 0
    %p74 = por %p72, %p73
    %p75 = scmp.ne.s32.totalorder %s64, %s67
    %p76 = scmp.eq.s32.totalorder %s33, 1
    %p77 = por %p75, %p76
    %p78 = scmp.ne.s32.totalorder %s67, %s68
    %p79 = scmp.eq.s32.totalorder %s33, 0
    %p80 = por %p78, %p79
    %p81 = scmp.ne.s32.totalorder %s67, %s68
    %p82 = scmp.eq.s32.totalorder %s34, 1
    %p83 = por %p81, %p82
    %p85 = scmp.ne.s32.totalorder %s68, %s84
    %p86 = scmp.eq.s32.totalorder %s34, 0
    %p87 = por %p85, %p86
    %s89 = sadd.s32 %s88, 1
    %p92 = scmp.eq.s32.totalorder %s28, 1
    %p93 = scmp.ne.s32.totalorder %s88, %s90
    %p94 = scmp.eq.s32.totalorder %s28, 0
    %p95 = por %p93, %p94
    %p96 = scmp.ne.s32.totalorder %s88, %s90
    %p97 = scmp.eq.s32.totalorder %s33, 1
    %p98 = por %p96, %p97
    %p99 = scmp.ne.s32.totalorder %s90, %s91
    %p100 = scmp.eq.s32.totalorder %s33, 0
    %p101 = por %p99, %p100
    %p102 = scmp.ne.s32.totalorder %s90, %s91
    %p103 = scmp.eq.s32.totalorder %s34, 1
    %p104 = por %p102, %p103
    %p106 = scmp.ne.s32.totalorder %s91, %s105
    %p107 = scmp.eq.s32.totalorder %s34, 0
    %p108 = por %p106, %p107
    %s110 = sadd.s32 %s109, 1
    %p113 = scmp.eq.s32.totalorder %s28, 1
    %p114 = scmp.ne.s32.totalorder %s109, %s111
    %p115 = scmp.eq.s32.totalorder %s28, 0
    %p116 = por %p114, %p115
    %p117 = scmp.ne.s32.totalorder %s109, %s111
    %p118 = scmp.eq.s32.totalorder %s33, 1
    %p119 = por %p117, %p118
    %p120 = scmp.ne.s32.totalorder %s111, %s112
    %p121 = scmp.eq.s32.totalorder %s33, 0
    %p122 = por %p120, %p121
    %p123 = scmp.ne.s32.totalorder %s111, %s112
    %p124 = scmp.eq.s32.totalorder %s34, 1
    %p125 = por %p123, %p124
    %p127 = scmp.ne.s32.totalorder %s112, %s126
    %p128 = scmp.eq.s32.totalorder %s34, 0
    %p129 = por %p127, %p128
    %s131 = sadd.s32 %s130, 1
    %p134 = scmp.eq.s32.totalorder %s28, 1
    %p135 = scmp.ne.s32.totalorder %s130, %s132
    %p136 = scmp.eq.s32.totalorder %s28, 0
    %p137 = por %p135, %p136
    %p138 = scmp.ne.s32.totalorder %s130, %s132
    %p139 = scmp.eq.s32.totalorder %s33, 1
    %p140 = por %p138, %p139
    %p141 = scmp.ne.s32.totalorder %s132, %s133
    %p142 = scmp.eq.s32.totalorder %s33, 0
    %p143 = por %p141, %p142
    %p144 = scmp.ne.s32.totalorder %s132, %s133
    %p145 = scmp.eq.s32.totalorder %s34, 1
    %p146 = por %p144, %p145
    %p148 = scmp.ne.s32.totalorder %s133, %s147
    %p149 = scmp.eq.s32.totalorder %s34, 0
    %p150 = por %p148, %p149
    %s152 = sadd.s32 %s151, 1
    %p155 = scmp.eq.s32.totalorder %s28, 1
    %p156 = scmp.ne.s32.totalorder %s151, %s153
    %p157 = scmp.eq.s32.totalorder %s28, 0
    %p158 = por %p156, %p157
    %p159 = scmp.ne.s32.totalorder %s151, %s153
    %p160 = scmp.eq.s32.totalorder %s33, 1
    %p161 = por %p159, %p160
    %p162 = scmp.ne.s32.totalorder %s153, %s154
    %p163 = scmp.eq.s32.totalorder %s33, 0
    %p164 = por %p162, %p163
    %p165 = scmp.ne.s32.totalorder %s153, %s154
    %p166 = scmp.eq.s32.totalorder %s34, 1
    %p167 = por %p165, %p166
    %p169 = scmp.ne.s32.totalorder %s154, %s168
    %p170 = scmp.eq.s32.totalorder %s34, 0
    %p171 = por %p169, %p170
    %s173 = sadd.s32 %s172, 1
    %p176 = scmp.eq.s32.totalorder %s28, 1
    %p177 = scmp.ne.s32.totalorder %s172, %s174
    %p178 = scmp.eq.s32.totalorder %s28, 0
    %p179 = por %p177, %p178
    %p180 = scmp.ne.s32.totalorder %s172, %s174
    %p181 = scmp.eq.s32.totalorder %s33, 1
    %p182 = por %p180, %p181
    %p183 = scmp.ne.s32.totalorder %s174, %s175
    %p184 = scmp.eq.s32.totalorder %s33, 0
    %p185 = por %p183, %p184
    %p186 = scmp.ne.s32.totalorder %s174, %s175
    %p187 = scmp.eq.s32.totalorder %s34, 1
    %p188 = por %p186, %p187
    %p190 = scmp.ne.s32.totalorder %s175, %s189
    %p191 = scmp.eq.s32.totalorder %s34, 0
    %p192 = por %p190, %p191
    %s194 = sadd.s32 %s193, 1
    %p197 = scmp.eq.s32.totalorder %s28, 1
    %p198 = scmp.ne.s32.totalorder %s193, %s195
    %p199 = scmp.eq.s32.totalorder %s28, 0
    %p200 = por %p198, %p199
    %p201 = scmp.ne.s32.totalorder %s193, %s195
    %p202 = scmp.eq.s32.totalorder %s33, 1
    %p203 = por %p201, %p202
    %p204 = scmp.ne.s32.totalorder %s195, %s196
    %p205 = scmp.eq.s32.totalorder %s33, 0
    %p206 = por %p204, %p205
    %p207 = scmp.ne.s32.totalorder %s195, %s196
    %p208 = scmp.eq.s32.totalorder %s34, 1
    %p209 = por %p207, %p208
    %p211 = scmp.ne.s32.totalorder %s196, %s210
    %p212 = scmp.eq.s32.totalorder %s34, 0
    %p213 = por %p211, %p212
    %s215 = sadd.s32 %s214, 1
    %p218 = scmp.eq.s32.totalorder %s28, 1
    %p219 = scmp.ne.s32.totalorder %s214, %s216
    %p220 = scmp.eq.s32.totalorder %s28, 0
    %p221 = por %p219, %p220
    %p222 = scmp.ne.s32.totalorder %s214, %s216
    %p223 = scmp.eq.s32.totalorder %s33, 1
    %p224 = por %p222, %p223
    %p225 = scmp.ne.s32.totalorder %s216, %s217
    %p226 = scmp.eq.s32.totalorder %s33, 0
    %p227 = por %p225, %p226
    %p228 = scmp.ne.s32.totalorder %s216, %s217
    %p229 = scmp.eq.s32.totalorder %s34, 1
    %p230 = por %p228, %p229
    %p232 = scmp.ne.s32.totalorder %s217, %s231
    %p233 = scmp.eq.s32.totalorder %s34, 0
    %p234 = por %p232, %p233
    %s236 = sadd.s32 %s235, 1
    %p239 = scmp.eq.s32.totalorder %s28, 1
    %p240 = scmp.ne.s32.totalorder %s235, %s237
    %p241 = scmp.eq.s32.totalorder %s28, 0
    %p242 = por %p240, %p241
    %p243 = scmp.ne.s32.totalorder %s235, %s237
    %p244 = scmp.eq.s32.totalorder %s33, 1
    %p245 = por %p243, %p244
    %p246 = scmp.ne.s32.totalorder %s237, %s238
    %p247 = scmp.eq.s32.totalorder %s33, 0
    %p248 = por %p246, %p247
    %p249 = scmp.ne.s32.totalorder %s237, %s238
    %p250 = scmp.eq.s32.totalorder %s34, 1
    %p251 = por %p249, %p250
    %p253 = scmp.ne.s32.totalorder %s238, %s252
    %p254 = scmp.eq.s32.totalorder %s34, 0
    %p255 = por %p253, %p254
    %s257 = sadd.s32 %s256, 1
    %p260 = scmp.eq.s32.totalorder %s28, 1
    %p261 = scmp.ne.s32.totalorder %s256, %s258
    %p262 = scmp.eq.s32.totalorder %s28, 0
    %p263 = por %p261, %p262
    %p264 = scmp.ne.s32.totalorder %s256, %s258
    %p265 = scmp.eq.s32.totalorder %s33, 1
    %p266 = por %p264, %p265
    %p267 = scmp.ne.s32.totalorder %s258, %s259
    %p268 = scmp.eq.s32.totalorder %s33, 0
    %p269 = por %p267, %p268
    %p270 = scmp.ne.s32.totalorder %s258, %s259
    %p271 = scmp.eq.s32.totalorder %s34, 1
    %p272 = por %p270, %p271
    %p274 = scmp.ne.s32.totalorder %s259, %s273
    %p275 = scmp.eq.s32.totalorder %s34, 0
    %p276 = por %p274, %p275
    %s278 = sadd.s32 %s277, 1
    %p281 = scmp.eq.s32.totalorder %s28, 1
    %p282 = scmp.ne.s32.totalorder %s277, %s279
    %p283 = scmp.eq.s32.totalorder %s28, 0
    %p284 = por %p282, %p283
    %p285 = scmp.ne.s32.totalorder %s277, %s279
    %p286 = scmp.eq.s32.totalorder %s33, 1
    %p287 = por %p285, %p286
    %p288 = scmp.ne.s32.totalorder %s279, %s280
    %p289 = scmp.eq.s32.totalorder %s33, 0
    %p290 = por %p288, %p289
    %p291 = scmp.ne.s32.totalorder %s279, %s280
    %p292 = scmp.eq.s32.totalorder %s34, 1
    %p293 = por %p291, %p292
    %p295 = scmp.ne.s32.totalorder %s280, %s294
    %p296 = scmp.eq.s32.totalorder %s34, 0
    %p297 = por %p295, %p296
    %s299 = sadd.s32 %s298, 1
    %p302 = scmp.eq.s32.totalorder %s28, 1
    %p303 = scmp.ne.s32.totalorder %s298, %s300
    %p304 = scmp.eq.s32.totalorder %s28, 0
    %p305 = por %p303, %p304
    %p306 = scmp.ne.s32.totalorder %s298, %s300
    %p307 = scmp.eq.s32.totalorder %s33, 1
    %p308 = por %p306, %p307
    %p309 = scmp.ne.s32.totalorder %s300, %s301
    %p310 = scmp.eq.s32.totalorder %s33, 0
    %p311 = por %p309, %p310
    %p312 = scmp.ne.s32.totalorder %s300, %s301
    %p313 = scmp.eq.s32.totalorder %s34, 1
    %p314 = por %p312, %p313
    %p316 = scmp.ne.s32.totalorder %s301, %s315
    %p317 = scmp.eq.s32.totalorder %s34, 0
    %p318 = por %p316, %p317
    %s320 = sadd.s32 %s319, 1
    %p323 = scmp.eq.s32.totalorder %s28, 1
    %p324 = scmp.ne.s32.totalorder %s319, %s321
    %p325 = scmp.eq.s32.totalorder %s28, 0
    %p326 = por %p324, %p325
    %p327 = scmp.ne.s32.totalorder %s319, %s321
    %p328 = scmp.eq.s32.totalorder %s33, 1
    %p329 = por %p327, %p328
    %p330 = scmp.ne.s32.totalorder %s321, %s322
    %p331 = scmp.eq.s32.totalorder %s33, 0
    %p332 = por %p330, %p331
    %p333 = scmp.ne.s32.totalorder %s321, %s322
    %p334 = scmp.eq.s32.totalorder %s34, 1
    %p335 = por %p333, %p334
    %p337 = scmp.ne.s32.totalorder %s322, %s336
    %p338 = scmp.eq.s32.totalorder %s34, 0
    %p339 = por %p337, %p338
    %s341 = sadd.s32 %s340, 1
    %p344 = scmp.eq.s32.totalorder %s28, 1
    %p345 = scmp.ne.s32.totalorder %s340, %s342
    %p346 = scmp.eq.s32.totalorder %s28, 0
    %p347 = por %p345, %p346
    %p348 = scmp.ne.s32.totalorder %s340, %s342
    %p349 = scmp.eq.s32.totalorder %s33, 1
    %p350 = por %p348, %p349
    %p351 = scmp.ne.s32.totalorder %s342, %s343
    %p352 = scmp.eq.s32.totalorder %s33, 0
    %p353 = por %p351, %p352
    %p354 = scmp.ne.s32.totalorder %s342, %s343
    %p355 = scmp.eq.s32.totalorder %s34, 1
    %p356 = por %p354, %p355
    %p358 = scmp.ne.s32.totalorder %s343, %s357
    %p359 = scmp.eq.s32.totalorder %s34, 0
    %p360 = por %p358, %p359
    %s362 = sadd.s32 %s361, 1
    %p365 = scmp.eq.s32.totalorder %s28, 1
    %p366 = scmp.ne.s32.totalorder %s361, %s363
    %p367 = scmp.eq.s32.totalorder %s28, 0
    %p368 = por %p366, %p367
    %p369 = scmp.ne.s32.totalorder %s361, %s363
    %p370 = scmp.eq.s32.totalorder %s33, 1
    %p371 = por %p369, %p370
    %p372 = scmp.ne.s32.totalorder %s363, %s364
    %p373 = scmp.eq.s32.totalorder %s33, 0
    %p374 = por %p372, %p373
    %p375 = scmp.ne.s32.totalorder %s363, %s364
    %p376 = scmp.eq.s32.totalorder %s34, 1
    %p377 = por %p375, %p376
    %p379 = scmp.ne.s32.totalorder %s364, %s378
    %p380 = scmp.eq.s32.totalorder %s34, 0
    %p381 = por %p379, %p380
    %s383 = sadd.s32 %s382, 1
    %p386 = scmp.eq.s32.totalorder %s28, 1
    %p387 = scmp.ne.s32.totalorder %s382, %s384
    %p388 = scmp.eq.s32.totalorder %s28, 0
    %p389 = por %p387, %p388
    %p390 = scmp.ne.s32.totalorder %s382, %s384
    %p391 = scmp.eq.s32.totalorder %s33, 1
    %p392 = por %p390, %p391
    %p393 = scmp.ne.s32.totalorder %s384, %s385
    %p394 = scmp.eq.s32.totalorder %s33, 0
    %p395 = por %p393, %p394
    %p396 = scmp.ne.s32.totalorder %s384, %s385
    %p397 = scmp.eq.s32.totalorder %s34, 1
    %p398 = por %p396, %p397
    %p400 = scmp.ne.s32.totalorder %s385, %s399
    %p401 = scmp.eq.s32.totalorder %s34, 0
    %p402 = por %p400, %p401
    %s404 = sadd.s32 %s403, 1
    %p407 = scmp.eq.s32.totalorder %s28, 1
    %p408 = scmp.ne.s32.totalorder %s403, %s405
    %p409 = scmp.eq.s32.totalorder %s28, 0
    %p410 = por %p408, %p409
    %p411 = scmp.ne.s32.totalorder %s403, %s405
    %p412 = scmp.eq.s32.totalorder %s33, 1
    %p413 = por %p411, %p412
    %p414 = scmp.ne.s32.totalorder %s405, %s406
    %p415 = scmp.eq.s32.totalorder %s33, 0
    %p416 = por %p414, %p415
    %p417 = scmp.ne.s32.totalorder %s405, %s406
    %p418 = scmp.eq.s32.totalorder %s34, 1
    %p419 = por %p417, %p418
    %p421 = scmp.ne.s32.totalorder %s406, %s420
    %p422 = scmp.eq.s32.totalorder %s34, 0
    %p423 = por %p421, %p422
    %s425 = sadd.s32 %s424, 1
    %p428 = scmp.eq.s32.totalorder %s28, 1
    %p429 = scmp.ne.s32.totalorder %s424, %s426
    %p430 = scmp.eq.s32.totalorder %s28, 0
    %p431 = por %p429, %p430
    %p432 = scmp.ne.s32.totalorder %s424, %s426
    %p433 = scmp.eq.s32.totalorder %s33, 1
    %p434 = por %p432, %p433
    %p435 = scmp.ne.s32.totalorder %s426, %s427
    %p436 = scmp.eq.s32.totalorder %s33, 0
    %p437 = por %p435, %p436
    %p438 = scmp.ne.s32.totalorder %s426, %s427
    %p439 = scmp.eq.s32.totalorder %s34, 1
    %p440 = por %p438, %p439
    %p442 = scmp.ne.s32.totalorder %s427, %s441
    %p443 = scmp.eq.s32.totalorder %s34, 0
    %p444 = por %p442, %p443
    %s446 = sadd.s32 %s445, 1
    %p449 = scmp.eq.s32.totalorder %s28, 1
    %p450 = scmp.ne.s32.totalorder %s445, %s447
    %p451 = scmp.eq.s32.totalorder %s28, 0
    %p452 = por %p450, %p451
    %p453 = scmp.ne.s32.totalorder %s445, %s447
    %p454 = scmp.eq.s32.totalorder %s33, 1
    %p455 = por %p453, %p454
    %p456 = scmp.ne.s32.totalorder %s447, %s448
    %p457 = scmp.eq.s32.totalorder %s33, 0
    %p458 = por %p456, %p457
    %p459 = scmp.ne.s32.totalorder %s447, %s448
    %p460 = scmp.eq.s32.totalorder %s34, 1
    %p461 = por %p459, %p460
    %p463 = scmp.ne.s32.totalorder %s448, %s462
    %p464 = scmp.eq.s32.totalorder %s34, 0
    %p465 = por %p463, %p464
    %s467 = sadd.s32 %s466, 1
    %p470 = scmp.eq.s32.totalorder %s28, 1
    %p471 = scmp.ne.s32.totalorder %s466, %s468
    %p472 = scmp.eq.s32.totalorder %s28, 0
    %p473 = por %p471, %p472
    %p474 = scmp.ne.s32.totalorder %s466, %s468
    %p475 = scmp.eq.s32.totalorder %s33, 1
    %p476 = por %p474, %p475
    %p477 = scmp.ne.s32.totalorder %s468, %s469
    %p478 = scmp.eq.s32.totalorder %s33, 0
    %p479 = por %p477, %p478
    %p480 = scmp.ne.s32.totalorder %s468, %s469
    %p481 = scmp.eq.s32.totalorder %s34, 1
    %p482 = por %p480, %p481
    %p484 = scmp.ne.s32.totalorder %s469, %s483
    %p485 = scmp.eq.s32.totalorder %s34, 0
    %p486 = por %p484, %p485
    %s488 = sadd.s32 %s487, 1
    %p491 = scmp.eq.s32.totalorder %s28, 1
    %p492 = scmp.ne.s32.totalorder %s487, %s489
    %p493 = scmp.eq.s32.totalorder %s28, 0
    %p494 = por %p492, %p493
    %p495 = scmp.ne.s32.totalorder %s487, %s489
    %p496 = scmp.eq.s32.totalorder %s33, 1
    %p497 = por %p495, %p496
    %p498 = scmp.ne.s32.totalorder %s489, %s490
    %p499 = scmp.eq.s32.totalorder %s33, 0
    %p500 = por %p498, %p499
    %p501 = scmp.ne.s32.totalorder %s489, %s490
    %p502 = scmp.eq.s32.totalorder %s34, 1
    %p503 = por %p501, %p502
    %p505 = scmp.ne.s32.totalorder %s490, %s504
    %p506 = scmp.eq.s32.totalorder %s34, 0
    %p507 = por %p505, %p506
    %s508 = ssub.s32 %s28, %s35
    %p509 = scmp.eq.s32.totalorder %s508, 0
    %s511 = sadd.s32 %s510, 1
    %s512 = scalar_select %p509, %s510, %s511
    %p515 = pneg %p509
    %p516 = scmp.eq.s32.totalorder %s28, 1
    %p517 = por %p515, %p516
    %p518 = scmp.ne.s32.totalorder %s510, %s513
    %p519 = scmp.eq.s32.totalorder %s28, 0
    %p520 = por %p518, %p519
    %p521 = scmp.ne.s32.totalorder %s510, %s513
    %p522 = scmp.eq.s32.totalorder %s33, 1
    %p523 = por %p521, %p522
    %p524 = scmp.ne.s32.totalorder %s513, %s514
    %p525 = scmp.eq.s32.totalorder %s33, 0
    %p526 = por %p524, %p525
    %p527 = scmp.ne.s32.totalorder %s513, %s514
    %p528 = scmp.eq.s32.totalorder %s34, 1
    %p529 = por %p527, %p528
    %p531 = scmp.ne.s32.totalorder %s514, %s530
    %p532 = scmp.eq.s32.totalorder %s34, 0
    %p533 = por %p531, %p532
    %p534 = scmp.le.s32.totalorder 1, %s28
    %p535 = scmp.lt.s32.totalorder %s28, 3
    %p536 = pnand %p534, %p535
    %p537 = pneg %p536
    // Predicated region
    $region9: #{tpu_custom_call.1} parent=5 // pred_check
      _
    $region10: #{tpu_custom_call.1} parent=5 // pred_check_branch
      %539 = sbr.rel (%p536) target = $region12
    $region11: #{tpu_custom_call.1} parent=5 // pred_region
      %s540 = ssub.s32 %s28, 1
      // Predicated region
      $region13: #{tpu_custom_call.1} parent=11 // pred_check
        %p541 = pneg %p101
      $region14: #{tpu_custom_call.1} parent=11 // pred_check_branch
        %543 = sbr.rel (%p541) target = $region16
      $region15: #{tpu_custom_call.1} parent=11 // pred_region
        _
      $region16: #{tpu_custom_call.1} parent=11 // pred_fallthru
        _
      // Predicated region
      $region17: #{tpu_custom_call.1} parent=11 // pred_check
        %p544 = pneg %p122
      $region18: #{tpu_custom_call.1} parent=11 // pred_check_branch
        %546 = sbr.rel (%p544) target = $region20
      $region19: #{tpu_custom_call.1} parent=11 // pred_region
        _
      $region20: #{tpu_custom_call.1} parent=11 // pred_fallthru
        _
      // Predicated region
      $region21: #{tpu_custom_call.1} parent=11 // pred_check
        %p547 = pneg %p143
      $region22: #{tpu_custom_call.1} parent=11 // pred_check_branch
        %549 = sbr.rel (%p547) target = $region24
      $region23: #{tpu_custom_call.1} parent=11 // pred_region
        _
      $region24: #{tpu_custom_call.1} parent=11 // pred_fallthru
        _
      // Predicated region
      $region25: #{tpu_custom_call.1} parent=11 // pred_check
        %p550 = pneg %p164
      $region26: #{tpu_custom_call.1} parent=11 // pred_check_branch
        %552 = sbr.rel (%p550) target = $region28
      $region27: #{tpu_custom_call.1} parent=11 // pred_region
        _
      $region28: #{tpu_custom_call.1} parent=11 // pred_fallthru
        _
      // Predicated region
      $region29: #{tpu_custom_call.1} parent=11 // pred_check
        %p553 = pneg %p185
      $region30: #{tpu_custom_call.1} parent=11 // pred_check_branch
        %555 = sbr.rel (%p553) target = $region32
      $region31: #{tpu_custom_call.1} parent=11 // pred_region
        _
      $region32: #{tpu_custom_call.1} parent=11 // pred_fallthru
        _
      // Predicated region
      $region33: #{tpu_custom_call.1} parent=11 // pred_check
        %p556 = pneg %p206
      $region34: #{tpu_custom_call.1} parent=11 // pred_check_branch
        %558 = sbr.rel (%p556) target = $region36
      $region35: #{tpu_custom_call.1} parent=11 // pred_region
        _
      $region36: #{tpu_custom_call.1} parent=11 // pred_fallthru
        _
      // Predicated region
      $region37: #{tpu_custom_call.1} parent=11 // pred_check
        %p559 = pneg %p227
      $region38: #{tpu_custom_call.1} parent=11 // pred_check_branch
        %561 = sbr.rel (%p559) target = $region40
      $region39: #{tpu_custom_call.1} parent=11 // pred_region
        _
      $region40: #{tpu_custom_call.1} parent=11 // pred_fallthru
        _
      // Predicated region
      $region41: #{tpu_custom_call.1} parent=11 // pred_check
        %p562 = pneg %p248
      $region42: #{tpu_custom_call.1} parent=11 // pred_check_branch
        %564 = sbr.rel (%p562) target = $region44
      $region43: #{tpu_custom_call.1} parent=11 // pred_region
        _
      $region44: #{tpu_custom_call.1} parent=11 // pred_fallthru
        _
      // Predicated region
      $region45: #{tpu_custom_call.1} parent=11 // pred_check
        %p565 = pneg %p269
      $region46: #{tpu_custom_call.1} parent=11 // pred_check_branch
        %567 = sbr.rel (%p565) target = $region48
      $region47: #{tpu_custom_call.1} parent=11 // pred_region
        _
      $region48: #{tpu_custom_call.1} parent=11 // pred_fallthru
        _
      // Predicated region
      $region49: #{tpu_custom_call.1} parent=11 // pred_check
        %p568 = pneg %p290
      $region50: #{tpu_custom_call.1} parent=11 // pred_check_branch
        %570 = sbr.rel (%p568) target = $region52
      $region51: #{tpu_custom_call.1} parent=11 // pred_region
        _
      $region52: #{tpu_custom_call.1} parent=11 // pred_fallthru
        _
      // Predicated region
      $region53: #{tpu_custom_call.1} parent=11 // pred_check
        %p571 = pneg %p311
      $region54: #{tpu_custom_call.1} parent=11 // pred_check_branch
        %573 = sbr.rel (%p571) target = $region56
      $region55: #{tpu_custom_call.1} parent=11 // pred_region
        _
      $region56: #{tpu_custom_call.1} parent=11 // pred_fallthru
        _
      // Predicated region
      $region57: #{tpu_custom_call.1} parent=11 // pred_check
        %p574 = pneg %p332
      $region58: #{tpu_custom_call.1} parent=11 // pred_check_branch
        %576 = sbr.rel (%p574) target = $region60
      $region59: #{tpu_custom_call.1} parent=11 // pred_region
        _
      $region60: #{tpu_custom_call.1} parent=11 // pred_fallthru
        _
      // Predicated region
      $region61: #{tpu_custom_call.1} parent=11 // pred_check
        %p577 = pneg %p353
      $region62: #{tpu_custom_call.1} parent=11 // pred_check_branch
        %579 = sbr.rel (%p577) target = $region64
      $region63: #{tpu_custom_call.1} parent=11 // pred_region
        _
      $region64: #{tpu_custom_call.1} parent=11 // pred_fallthru
        _
      // Predicated region
      $region65: #{tpu_custom_call.1} parent=11 // pred_check
        %p580 = pneg %p374
      $region66: #{tpu_custom_call.1} parent=11 // pred_check_branch
        %582 = sbr.rel (%p580) target = $region68
      $region67: #{tpu_custom_call.1} parent=11 // pred_region
        _
      $region68: #{tpu_custom_call.1} parent=11 // pred_fallthru
        _
      // Predicated region
      $region69: #{tpu_custom_call.1} parent=11 // pred_check
        %p583 = pneg %p395
      $region70: #{tpu_custom_call.1} parent=11 // pred_check_branch
        %585 = sbr.rel (%p583) target = $region72
      $region71: #{tpu_custom_call.1} parent=11 // pred_region
        _
      $region72: #{tpu_custom_call.1} parent=11 // pred_fallthru
        _
      // Predicated region
      $region73: #{tpu_custom_call.1} parent=11 // pred_check
        %p586 = pneg %p416
      $region74: #{tpu_custom_call.1} parent=11 // pred_check_branch
        %588 = sbr.rel (%p586) target = $region76
      $region75: #{tpu_custom_call.1} parent=11 // pred_region
        _
      $region76: #{tpu_custom_call.1} parent=11 // pred_fallthru
        _
      // Predicated region
      $region77: #{tpu_custom_call.1} parent=11 // pred_check
        %p589 = pneg %p437
      $region78: #{tpu_custom_call.1} parent=11 // pred_check_branch
        %591 = sbr.rel (%p589) target = $region80
      $region79: #{tpu_custom_call.1} parent=11 // pred_region
        _
      $region80: #{tpu_custom_call.1} parent=11 // pred_fallthru
        _
      // Predicated region
      $region81: #{tpu_custom_call.1} parent=11 // pred_check
        %p592 = pneg %p458
      $region82: #{tpu_custom_call.1} parent=11 // pred_check_branch
        %594 = sbr.rel (%p592) target = $region84
      $region83: #{tpu_custom_call.1} parent=11 // pred_region
        _
      $region84: #{tpu_custom_call.1} parent=11 // pred_fallthru
        _
      // Predicated region
      $region85: #{tpu_custom_call.1} parent=11 // pred_check
        %p595 = pneg %p479
      $region86: #{tpu_custom_call.1} parent=11 // pred_check_branch
        %597 = sbr.rel (%p595) target = $region88
      $region87: #{tpu_custom_call.1} parent=11 // pred_region
        _
      $region88: #{tpu_custom_call.1} parent=11 // pred_fallthru
        _
      // Predicated region
      $region89: #{tpu_custom_call.1} parent=11 // pred_check
        %p598 = pneg %p500
      $region90: #{tpu_custom_call.1} parent=11 // pred_check_branch
        %600 = sbr.rel (%p598) target = $region92
      $region91: #{tpu_custom_call.1} parent=11 // pred_region
        _
      $region92: #{tpu_custom_call.1} parent=11 // pred_fallthru
        _
    $region12: #{tpu_custom_call.1} parent=5 // pred_fallthru
      _
    %p601 = scmp.lt.s32.totalorder %s28, 2
    // Predicated region
    $region93: #{tpu_custom_call.1} parent=5 // pred_check
      %p602 = pneg %p601
    $region94: #{tpu_custom_call.1} parent=5 // pred_check_branch
      %604 = sbr.rel (%p602) target = $region96
    $region95: #{tpu_custom_call.1} parent=5 // pred_region
      // Predicated region
      $region97: #{tpu_custom_call.1} parent=95 // pred_check
        %p605 = pneg %p48
      $region98: #{tpu_custom_call.1} parent=95 // pred_check_branch
        %607 = sbr.rel (%p605) target = $region100
      $region99: #{tpu_custom_call.1} parent=95 // pred_region
        %s608 = smul.u32 2, %s28
        %p609 = scmp.lt.s32.totalorder %s608, 3
        %s610 = scalar_select %p609, %s608, 3
        %s611 = smul.addr %s610, 8
        %s612 = scalar_lea.vmem %s0, %s611
        %s613 = smul.u32 2, %s28
      $region100: #{tpu_custom_call.1} parent=95 // pred_fallthru
        _
      // Predicated region
      $region101: #{tpu_custom_call.1} parent=95 // pred_check
        %p614 = pneg %p74
      $region102: #{tpu_custom_call.1} parent=95 // pred_check_branch
        %616 = sbr.rel (%p614) target = $region104
      $region103: #{tpu_custom_call.1} parent=95 // pred_region
        %p617 = scmp.lt.s32.totalorder %s28, 1
        %s618 = scalar_select %p617, %s28, 1
        %s619 = scalar_lea.vmem %s1, %s618
      $region104: #{tpu_custom_call.1} parent=95 // pred_fallthru
        _
    $region96: #{tpu_custom_call.1} parent=5 // pred_fallthru
      _
    %p620 = scmp.le.s32.totalorder 1, %s28
    %p621 = scmp.lt.s32.totalorder %s28, 3
    %p622 = pnand %p620, %p621
    %p623 = pneg %p622
    // Predicated region
    $region105: #{tpu_custom_call.1} parent=5 // pred_check
      _
    $region106: #{tpu_custom_call.1} parent=5 // pred_check_branch
      %625 = sbr.rel (%p622) target = $region108
    $region107: #{tpu_custom_call.1} parent=5 // pred_region
      %s626 = ssub.s32 %s28, 1
      %s627 = smul.u32 2, %s33
      %p628 = scmp.lt.s32.totalorder %s627, 3
      %s629 = scalar_select %p628, %s627, 3
      %s630 = smul.addr %s629, 8
      %s631 = scalar_lea.vmem %s0, %s630
      %p632 = pneg %p54
      %p633 = pneg %p51
      %p634 = scmp.lt.s32.totalorder %s33, 1
      %s635 = scalar_select %p634, %s33, 1
      %s636 = scalar_lea.vmem %s1, %s635
      %p637 = pneg %p80
      %p638 = pneg %p77
      %p639 = pneg %p101
      %p640 = pneg %p98
      %p641 = pneg %p122
      %p642 = pneg %p119
      %p643 = pneg %p143
      %p644 = pneg %p140
      %p645 = pneg %p164
      %p646 = pneg %p161
      %p647 = pneg %p185
      %p648 = pneg %p182
      %p649 = pneg %p206
      %p650 = pneg %p203
      %p651 = pneg %p227
      %p652 = pneg %p224
      %p653 = pneg %p248
      %p654 = pneg %p245
      %p655 = pneg %p269
      %p656 = pneg %p266
      %p657 = pneg %p290
      %p658 = pneg %p287
      %p659 = pneg %p311
      %p660 = pneg %p308
      %p661 = pneg %p332
      %p662 = pneg %p329
      %p663 = pneg %p353
      %p664 = pneg %p350
      %p665 = pneg %p374
      %p666 = pneg %p371
      %p667 = pneg %p395
      %p668 = pneg %p392
      %p669 = pneg %p416
      %p670 = pneg %p413
      %p671 = pneg %p437
      %p672 = pneg %p434
      %p673 = pneg %p458
      %p674 = pneg %p455
      %p675 = pneg %p479
      %p676 = pneg %p476
      %p677 = pneg %p500
      %p678 = pneg %p497
      %p679 = pneg %p526
      %p680 = pneg %p523
      %s681 = smul.u32 2, %s33
      %p682 = scmp.lt.s32.totalorder %s681, 3
      %s683 = scalar_select %p682, %s681, 3
      %s684 = smul.addr %s683, 8
      %s685 = scalar_lea.vmem %s22, %s684
      %s686 = smul.u32 2, %s33
      %p687 = scmp.lt.s32.totalorder %s686, 3
      %s688 = scalar_select %p687, %s686, 3
      %s689 = smul.addr %s688, 8
      %s690 = scalar_lea.vmem %s0, %s689
      %s691 = smul.u32 2, %s33
      %p692 = scmp.lt.s32.totalorder %s33, 1
      %s693 = scalar_select %p692, %s33, 1
      %s694 = scalar_lea.vmem %s1, %s693
      %s695 = smul.u32 2, %s33
      %p696 = scmp.lt.s32.totalorder %s695, 3
      %s697 = scalar_select %p696, %s695, 3
      %s698 = smul.addr %s697, 8
      %s699 = scalar_lea.vmem %s22, %s698
      %s700 = smul.u32 2, %s33
      %v702 = vld [vmem:[%s20] sm:$0xff]
      %v703 = vld [vmem:[%s20 + $0x8] sm:$0xff]
      %v704 = vld [vmem:[%s21] sm:$0xff]
      %v705 = vld [vmem:[%s690] sm:$0xff]
      %v706 = vld [vmem:[%s690 + $0x8] sm:$0xff]
      %v707 = vld [vmem:[%s5] sm:$0x1]
      %v708 = vrot.slane %v705, 7
      %v709 = vrot.slane %v706, 7
      %v710 = vlaneseq
      %v711 = vshrl.u32 %v710, 7
      %vm712 = vcmp.lt.s32.totalorder %v711, 1
      %v713 = vsel %vm712, %v708, %v709
      %v714 = vsel %vm712, %v709, %v708
      %v715 = vpack.c.bf16 %v713, %v714
      %v716 = vunpack.c.l.bf16 %v715
      %v717 = vunpack.c.h.bf16 %v715
      %v718 = vsub.f32 %v714, %v716
      %v719 = vsub.f32 %v713, %v717
      %v720 = vpack.c.bf16 %v719, %v718
      %v721 = vld [vmem:[%s3] sm:$0x3]
      %v722 = vld [vmem:[%s4] sm:$0x3]
      %vm723 = vcmask 31744
      %v725 = vsel %vm723, %v715, 0
      %vm727 = vcmask 1041408
      %v729 = vsel %vm727, %v722, 0
      %731 = vmatprep.subr.bf16.mxu0 0
      %732 = vmatpush1.bf16.msra.mxu0 %v729
      %733 = vmatprep.subr.bf16.mxu0 0
      %734 = vmatpush1.bf16.msra.mxu0 0
      %735 = vmatprep.subr.bf16.mxu0 0
      %736 = vmatpush1.bf16.msra.mxu0 0
      %737 = vmatprep.subr.bf16.mxu0 0
      %738 = vmatpush1.bf16.msra.mxu0 0
      %739 = vmatprep.subr.bf16.mxu0 0
      %740 = vmatpush1.bf16.msra.mxu0 0
      %741 = vmatprep.subr.bf16.mxu0 0
      %742 = vmatpush1.bf16.msra.mxu0 0
      %743 = vmatprep.subr.bf16.mxu0 0
      %744 = vmatpush1.bf16.msra.mxu0 0
      %745 = vmatprep.subr.bf16.mxu0 0
      %746 = vmatpush1.bf16.msra.mxu0 0
      %747 = vmatprep.subr.bf16.mxu0 0
      %748 = vmatpush1.bf16.msra.mxu0 0
      %749 = vmatprep.subr.bf16.mxu0 0
      %750 = vmatpush1.bf16.msra.mxu0 0
      %751 = vmatprep.subr.bf16.mxu0 0
      %752 = vmatpush1.bf16.msra.mxu0 0
      %753 = vmatprep.subr.bf16.mxu0 0
      %754 = vmatpush1.bf16.msra.mxu0 0
      %755 = vmatprep.subr.bf16.mxu0 0
      %756 = vmatpush1.bf16.msra.mxu0 0
      %757 = vmatprep.subr.bf16.mxu0 0
      %758 = vmatpush1.bf16.msra.mxu0 0
      %759 = vmatprep.subr.bf16.mxu0 0
      %760 = vmatpush1.bf16.msra.mxu0 0
      %761 = vmatprep.subr.bf16.mxu0 0
      %762 = vmatpush1.bf16.msra.mxu0 0
      %763 = vmatprep.mubr.bf16.mxu0 0
      %764 = vmatmul.mubr.bf16.gmra.mrb[0].mxu0 %v725
      %v765 = vpop.f32.mrb[0].mxu0
      %v766 = vadd.f32 0.0, %v765
      %v767 = vpop.f32.mrb[0].mxu0
      %v768 = vpop.f32.mrb[0].mxu0
      %v769 = vadd.f32 0.0, %v768
      %v770 = vpop.f32.mrb[0].mxu0
      %771 = vdwg.mxu0
      %v773 = vsel %vm727, %v721, 0
      %775 = vmatprep.subr.bf16.mxu0 0
      %776 = vmatpush1.bf16.msra.mxu0 %v773
      %777 = vmatprep.subr.bf16.mxu0 0
      %778 = vmatpush1.bf16.msra.mxu0 0
      %779 = vmatprep.subr.bf16.mxu0 0
      %780 = vmatpush1.bf16.msra.mxu0 0
      %781 = vmatprep.subr.bf16.mxu0 0
      %782 = vmatpush1.bf16.msra.mxu0 0
      %783 = vmatprep.subr.bf16.mxu0 0
      %784 = vmatpush1.bf16.msra.mxu0 0
      %785 = vmatprep.subr.bf16.mxu0 0
      %786 = vmatpush1.bf16.msra.mxu0 0
      %787 = vmatprep.subr.bf16.mxu0 0
      %788 = vmatpush1.bf16.msra.mxu0 0
      %789 = vmatprep.subr.bf16.mxu0 0
      %790 = vmatpush1.bf16.msra.mxu0 0
      %791 = vmatprep.subr.bf16.mxu0 0
      %792 = vmatpush1.bf16.msra.mxu0 0
      %793 = vmatprep.subr.bf16.mxu0 0
      %794 = vmatpush1.bf16.msra.mxu0 0
      %795 = vmatprep.subr.bf16.mxu0 0
      %796 = vmatpush1.bf16.msra.mxu0 0
      %797 = vmatprep.subr.bf16.mxu0 0
      %798 = vmatpush1.bf16.msra.mxu0 0
      %799 = vmatprep.subr.bf16.mxu0 0
      %800 = vmatpush1.bf16.msra.mxu0 0
      %801 = vmatprep.subr.bf16.mxu0 0
      %802 = vmatpush1.bf16.msra.mxu0 0
      %803 = vmatprep.subr.bf16.mxu0 0
      %804 = vmatpush1.bf16.msra.mxu0 0
      %805 = vmatprep.subr.bf16.mxu0 0
      %806 = vmatpush1.bf16.msra.mxu0 0
      %807 = vmatprep.mubr.bf16.mxu0 0
      %808 = vmatmul.mubr.bf16.gmra.mrb[0].mxu0 %v725
      %v809 = vpop.f32.mrb[0].mxu0
      %v810 = vadd.f32 %v766, %v809
      %v811 = vpop.f32.mrb[0].mxu0
      %v812 = vpop.f32.mrb[0].mxu0
      %v813 = vadd.f32 %v769, %v812
      %v814 = vpop.f32.mrb[0].mxu0
      %815 = vdwg.mxu0
      %v817 = vsel %vm723, %v720, 0
      %819 = vmatprep.subr.bf16.mxu0 0
      %820 = vmatpush1.bf16.msra.mxu0 %v773
      %821 = vmatprep.subr.bf16.mxu0 0
      %822 = vmatpush1.bf16.msra.mxu0 0
      %823 = vmatprep.subr.bf16.mxu0 0
      %824 = vmatpush1.bf16.msra.mxu0 0
      %825 = vmatprep.subr.bf16.mxu0 0
      %826 = vmatpush1.bf16.msra.mxu0 0
      %827 = vmatprep.subr.bf16.mxu0 0
      %828 = vmatpush1.bf16.msra.mxu0 0
      %829 = vmatprep.subr.bf16.mxu0 0
      %830 = vmatpush1.bf16.msra.mxu0 0
      %831 = vmatprep.subr.bf16.mxu0 0
      %832 = vmatpush1.bf16.msra.mxu0 0
      %833 = vmatprep.subr.bf16.mxu0 0
      %834 = vmatpush1.bf16.msra.mxu0 0
      %835 = vmatprep.subr.bf16.mxu0 0
      %836 = vmatpush1.bf16.msra.mxu0 0
      %837 = vmatprep.subr.bf16.mxu0 0
      %838 = vmatpush1.bf16.msra.mxu0 0
      %839 = vmatprep.subr.bf16.mxu0 0
      %840 = vmatpush1.bf16.msra.mxu0 0
      %841 = vmatprep.subr.bf16.mxu0 0
      %842 = vmatpush1.bf16.msra.mxu0 0
      %843 = vmatprep.subr.bf16.mxu0 0
      %844 = vmatpush1.bf16.msra.mxu0 0
      %845 = vmatprep.subr.bf16.mxu0 0
      %846 = vmatpush1.bf16.msra.mxu0 0
      %847 = vmatprep.subr.bf16.mxu0 0
      %848 = vmatpush1.bf16.msra.mxu0 0
      %849 = vmatprep.subr.bf16.mxu0 0
      %850 = vmatpush1.bf16.msra.mxu0 0
      %851 = vmatprep.mubr.bf16.mxu0 0
      %852 = vmatmul.mubr.bf16.gmra.mrb[0].mxu0 %v817
      %v853 = vpop.f32.mrb[0].mxu0
      %v854 = vadd.f32 0.0, %v853
      %v855 = vpop.f32.mrb[0].mxu0
      %v856 = vpop.f32.mrb[0].mxu0
      %v857 = vadd.f32 0.0, %v856
      %v858 = vpop.f32.mrb[0].mxu0
      %859 = vdwg.mxu0
      %v860 = vadd.f32 %v810, %v854
      %v861 = vadd.f32 %v813, %v857
      %v862 = vld [vmem:[%s2] sm:$0xff]
      %v863 = vld [vmem:[%s2 + $0x8] sm:$0xff]
      %865 = vset.pattern.permute.xlu0 0
      %866 = vperm.xlu0 %865, %v862
      %v867 = vpop.permute.xlu0 %866
      %870 = vset.pattern.permute.xlu0 0
      %871 = vperm.xlu0 %870, %v863
      %v872 = vpop.permute.xlu0 %871
      %v874 = vmul.f32 %v860, %v867
      %v875 = vmul.f32 %v861, %v872
      %v877 = vlaneseq
      %v878 = vshrl.u32 %v877, 7
      %v879 = vsub.s32 0, %v878
      %v880 = vrot.slane %v707, %v879
      %v882 = vadd.f32 %v880, %v874
      %v883 = vadd.f32 %v880, %v875
      %v884 = vpack.c.bf16 %v706, %v705
      %v885 = vunpack.c.l.bf16 %v884
      %v886 = vunpack.c.h.bf16 %v884
      %v887 = vsub.f32 %v705, %v885
      %v888 = vsub.f32 %v706, %v886
      %v889 = vpack.c.bf16 %v888, %v887
      %s890 = scalar_lea.vmem %s3, 2
      %v891 = vld [vmem:[%s890] sm:$0x3]
      %s892 = scalar_lea.vmem %s4, 2
      %v893 = vld [vmem:[%s892] sm:$0x3]
      %v895 = vsel %vm723, %v884, 0
      %v898 = vsel %vm727, %v893, 0
      %900 = vmatprep.subr.bf16.mxu0 0
      %901 = vmatpush1.bf16.msra.mxu0 %v898
      %902 = vmatprep.subr.bf16.mxu0 0
      %903 = vmatpush1.bf16.msra.mxu0 0
      %904 = vmatprep.subr.bf16.mxu0 0
      %905 = vmatpush1.bf16.msra.mxu0 0
      %906 = vmatprep.subr.bf16.mxu0 0
      %907 = vmatpush1.bf16.msra.mxu0 0
      %908 = vmatprep.subr.bf16.mxu0 0
      %909 = vmatpush1.bf16.msra.mxu0 0
      %910 = vmatprep.subr.bf16.mxu0 0
      %911 = vmatpush1.bf16.msra.mxu0 0
      %912 = vmatprep.subr.bf16.mxu0 0
      %913 = vmatpush1.bf16.msra.mxu0 0
      %914 = vmatprep.subr.bf16.mxu0 0
      %915 = vmatpush1.bf16.msra.mxu0 0
      %916 = vmatprep.subr.bf16.mxu0 0
      %917 = vmatpush1.bf16.msra.mxu0 0
      %918 = vmatprep.subr.bf16.mxu0 0
      %919 = vmatpush1.bf16.msra.mxu0 0
      %920 = vmatprep.subr.bf16.mxu0 0
      %921 = vmatpush1.bf16.msra.mxu0 0
      %922 = vmatprep.subr.bf16.mxu0 0
      %923 = vmatpush1.bf16.msra.mxu0 0
      %924 = vmatprep.subr.bf16.mxu0 0
      %925 = vmatpush1.bf16.msra.mxu0 0
      %926 = vmatprep.subr.bf16.mxu0 0
      %927 = vmatpush1.bf16.msra.mxu0 0
      %928 = vmatprep.subr.bf16.mxu0 0
      %929 = vmatpush1.bf16.msra.mxu0 0
      %930 = vmatprep.subr.bf16.mxu0 0
      %931 = vmatpush1.bf16.msra.mxu0 0
      %932 = vmatprep.mubr.bf16.mxu0 0
      %933 = vmatmul.mubr.bf16.gmra.mrb[0].mxu0 %v895
      %v934 = vpop.f32.mrb[0].mxu0
      %v935 = vadd.f32 0.0, %v934
      %v936 = vpop.f32.mrb[0].mxu0
      %v937 = vpop.f32.mrb[0].mxu0
      %v938 = vadd.f32 0.0, %v937
      %v939 = vpop.f32.mrb[0].mxu0
      %940 = vdwg.mxu0
      %v942 = vsel %vm727, %v891, 0
      %944 = vmatprep.subr.bf16.mxu0 0
      %945 = vmatpush1.bf16.msra.mxu0 %v942
      %946 = vmatprep.subr.bf16.mxu0 0
      %947 = vmatpush1.bf16.msra.mxu0 0
      %948 = vmatprep.subr.bf16.mxu0 0
      %949 = vmatpush1.bf16.msra.mxu0 0
      %950 = vmatprep.subr.bf16.mxu0 0
      %951 = vmatpush1.bf16.msra.mxu0 0
      %952 = vmatprep.subr.bf16.mxu0 0
      %953 = vmatpush1.bf16.msra.mxu0 0
      %954 = vmatprep.subr.bf16.mxu0 0
      %955 = vmatpush1.bf16.msra.mxu0 0
      %956 = vmatprep.subr.bf16.mxu0 0
      %957 = vmatpush1.bf16.msra.mxu0 0
      %958 = vmatprep.subr.bf16.mxu0 0
      %959 = vmatpush1.bf16.msra.mxu0 0
      %960 = vmatprep.subr.bf16.mxu0 0
      %961 = vmatpush1.bf16.msra.mxu0 0
      %962 = vmatprep.subr.bf16.mxu0 0
      %963 = vmatpush1.bf16.msra.mxu0 0
      %964 = vmatprep.subr.bf16.mxu0 0
      %965 = vmatpush1.bf16.msra.mxu0 0
      %966 = vmatprep.subr.bf16.mxu0 0
      %967 = vmatpush1.bf16.msra.mxu0 0
      %968 = vmatprep.subr.bf16.mxu0 0
      %969 = vmatpush1.bf16.msra.mxu0 0
      %970 = vmatprep.subr.bf16.mxu0 0
      %971 = vmatpush1.bf16.msra.mxu0 0
      %972 = vmatprep.subr.bf16.mxu0 0
      %973 = vmatpush1.bf16.msra.mxu0 0
      %974 = vmatprep.subr.bf16.mxu0 0
      %975 = vmatpush1.bf16.msra.mxu0 0
      %976 = vmatprep.mubr.bf16.mxu0 0
      %977 = vmatmul.mubr.bf16.gmra.mrb[0].mxu0 %v895
      %v978 = vpop.f32.mrb[0].mxu0
      %v979 = vadd.f32 %v935, %v978
      %v980 = vpop.f32.mrb[0].mxu0
      %v981 = vpop.f32.mrb[0].mxu0
      %v982 = vadd.f32 %v938, %v981
      %v983 = vpop.f32.mrb[0].mxu0
      %984 = vdwg.mxu0
      %v986 = vsel %vm723, %v889, 0
      %988 = vmatprep.subr.bf16.mxu0 0
      %989 = vmatpush1.bf16.msra.mxu0 %v942
      %990 = vmatprep.subr.bf16.mxu0 0
      %991 = vmatpush1.bf16.msra.mxu0 0
      %992 = vmatprep.subr.bf16.mxu0 0
      %993 = vmatpush1.bf16.msra.mxu0 0
      %994 = vmatprep.subr.bf16.mxu0 0
      %995 = vmatpush1.bf16.msra.mxu0 0
      %996 = vmatprep.subr.bf16.mxu0 0
      %997 = vmatpush1.bf16.msra.mxu0 0
      %998 = vmatprep.subr.bf16.mxu0 0
      %999 = vmatpush1.bf16.msra.mxu0 0
      %1000 = vmatprep.subr.bf16.mxu0 0
      %1001 = vmatpush1.bf16.msra.mxu0 0
      %1002 = vmatprep.subr.bf16.mxu0 0
      %1003 = vmatpush1.bf16.msra.mxu0 0
      %1004 = vmatprep.subr.bf16.mxu0 0
      %1005 = vmatpush1.bf16.msra.mxu0 0
      %1006 = vmatprep.subr.bf16.mxu0 0
      %1007 = vmatpush1.bf16.msra.mxu0 0
      %1008 = vmatprep.subr.bf16.mxu0 0
      %1009 = vmatpush1.bf16.msra.mxu0 0
      %1010 = vmatprep.subr.bf16.mxu0 0
      %1011 = vmatpush1.bf16.msra.mxu0 0
      %1012 = vmatprep.subr.bf16.mxu0 0
      %1013 = vmatpush1.bf16.msra.mxu0 0
      %1014 = vmatprep.subr.bf16.mxu0 0
      %1015 = vmatpush1.bf16.msra.mxu0 0
      %1016 = vmatprep.subr.bf16.mxu0 0
      %1017 = vmatpush1.bf16.msra.mxu0 0
      %1018 = vmatprep.subr.bf16.mxu0 0
      %1019 = vmatpush1.bf16.msra.mxu0 0
      %1020 = vmatprep.mubr.bf16.mxu0 0
      %1021 = vmatmul.mubr.bf16.gmra.mrb[0].mxu0 %v986
      %v1022 = vpop.f32.mrb[0].mxu0
      %v1023 = vadd.f32 0.0, %v1022
      %v1024 = vpop.f32.mrb[0].mxu0
      %v1025 = vpop.f32.mrb[0].mxu0
      %v1026 = vadd.f32 0.0, %v1025
      %v1027 = vpop.f32.mrb[0].mxu0
      %1028 = vdwg.mxu0
      %v1029 = vadd.f32 %v979, %v1023
      %v1030 = vadd.f32 %v982, %v1026
      %v1031 = vadd.f32 %v882, %v1029
      %v1032 = vadd.f32 %v883, %v1030
      %v1033 = vrot.slane %v705, 1
      %v1034 = vrot.slane %v706, 1
      %vm1035 = vcmp.lt.s32.totalorder %v711, 7
      %v1036 = vsel %vm1035, %v1033, %v1034
      %v1037 = vsel %vm1035, %v1034, %v1033
      %v1038 = vpack.c.bf16 %v1037, %v1036
      %v1039 = vunpack.c.l.bf16 %v1038
      %v1040 = vunpack.c.h.bf16 %v1038
      %v1041 = vsub.f32 %v1036, %v1039
      %v1042 = vsub.f32 %v1037, %v1040
      %v1043 = vpack.c.bf16 %v1042, %v1041
      %s1044 = scalar_lea.vmem %s3, 4
      %v1045 = vld [vmem:[%s1044] sm:$0x3]
      %s1046 = scalar_lea.vmem %s4, 4
      %v1047 = vld [vmem:[%s1046] sm:$0x3]
      %v1049 = vsel %vm723, %v1038, 0
      %v1052 = vsel %vm727, %v1047, 0
      %1054 = vmatprep.subr.bf16.mxu0 0
      %1055 = vmatpush1.bf16.msra.mxu0 %v1052
      %1056 = vmatprep.subr.bf16.mxu0 0
      %1057 = vmatpush1.bf16.msra.mxu0 0
      %1058 = vmatprep.subr.bf16.mxu0 0
      %1059 = vmatpush1.bf16.msra.mxu0 0
      %1060 = vmatprep.subr.bf16.mxu0 0
      %1061 = vmatpush1.bf16.msra.mxu0 0
      %1062 = vmatprep.subr.bf16.mxu0 0
      %1063 = vmatpush1.bf16.msra.mxu0 0
      %1064 = vmatprep.subr.bf16.mxu0 0
      %1065 = vmatpush1.bf16.msra.mxu0 0
      %1066 = vmatprep.subr.bf16.mxu0 0
      %1067 = vmatpush1.bf16.msra.mxu0 0
      %1068 = vmatprep.subr.bf16.mxu0 0
      %1069 = vmatpush1.bf16.msra.mxu0 0
      %1070 = vmatprep.subr.bf16.mxu0 0
      %1071 = vmatpush1.bf16.msra.mxu0 0
      %1072 = vmatprep.subr.bf16.mxu0 0
      %1073 = vmatpush1.bf16.msra.mxu0 0
      %1074 = vmatprep.subr.bf16.mxu0 0
      %1075 = vmatpush1.bf16.msra.mxu0 0
      %1076 = vmatprep.subr.bf16.mxu0 0
      %1077 = vmatpush1.bf16.msra.mxu0 0
      %1078 = vmatprep.subr.bf16.mxu0 0
      %1079 = vmatpush1.bf16.msra.mxu0 0
      %1080 = vmatprep.subr.bf16.mxu0 0
      %1081 = vmatpush1.bf16.msra.mxu0 0
      %1082 = vmatprep.subr.bf16.mxu0 0
      %1083 = vmatpush1.bf16.msra.mxu0 0
      %1084 = vmatprep.subr.bf16.mxu0 0
      %1085 = vmatpush1.bf16.msra.mxu0 0
      %1086 = vmatprep.mubr.bf16.mxu0 0
      %1087 = vmatmul.mubr.bf16.gmra.mrb[0].mxu0 %v1049
      %v1088 = vpop.f32.mrb[0].mxu0
      %v1089 = vadd.f32 0.0, %v1088
      %v1090 = vpop.f32.mrb[0].mxu0
      %v1091 = vpop.f32.mrb[0].mxu0
      %v1092 = vadd.f32 0.0, %v1091
      %v1093 = vpop.f32.mrb[0].mxu0
      %1094 = vdwg.mxu0
      %v1096 = vsel %vm727, %v1045, 0
      %1098 = vmatprep.subr.bf16.mxu0 0
      %1099 = vmatpush1.bf16.msra.mxu0 %v1096
      %1100 = vmatprep.subr.bf16.mxu0 0
      %1101 = vmatpush1.bf16.msra.mxu0 0
      %1102 = vmatprep.subr.bf16.mxu0 0
      %1103 = vmatpush1.bf16.msra.mxu0 0
      %1104 = vmatprep.subr.bf16.mxu0 0
      %1105 = vmatpush1.bf16.msra.mxu0 0
      %1106 = vmatprep.subr.bf16.mxu0 0
      %1107 = vmatpush1.bf16.msra.mxu0 0
      %1108 = vmatprep.subr.bf16.mxu0 0
      %1109 = vmatpush1.bf16.msra.mxu0 0
      %1110 = vmatprep.subr.bf16.mxu0 0
      %1111 = vmatpush1.bf16.msra.mxu0 0
      %1112 = vmatprep.subr.bf16.mxu0 0
      %1113 = vmatpush1.bf16.msra.mxu0 0
      %1114 = vmatprep.subr.bf16.mxu0 0
      %1115 = vmatpush1.bf16.msra.mxu0 0
      %1116 = vmatprep.subr.bf16.mxu0 0
      %1117 = vmatpush1.bf16.msra.mxu0 0
      %1118 = vmatprep.subr.bf16.mxu0 0
      %1119 = vmatpush1.bf16.msra.mxu0 0
      %1120 = vmatprep.subr.bf16.mxu0 0
      %1121 = vmatpush1.bf16.msra.mxu0 0
      %1122 = vmatprep.subr.bf16.mxu0 0
      %1123 = vmatpush1.bf16.msra.mxu0 0
      %1124 = vmatprep.subr.bf16.mxu0 0
      %1125 = vmatpush1.bf16.msra.mxu0 0
      %1126 = vmatprep.subr.bf16.mxu0 0
      %1127 = vmatpush1.bf16.msra.mxu0 0
      %1128 = vmatprep.subr.bf16.mxu0 0
      %1129 = vmatpush1.bf16.msra.mxu0 0
      %1130 = vmatprep.mubr.bf16.mxu0 0
      %1131 = vmatmul.mubr.bf16.gmra.mrb[0].mxu0 %v1049
      %v1132 = vpop.f32.mrb[0].mxu0
      %v1133 = vadd.f32 %v1089, %v1132
      %v1134 = vpop.f32.mrb[0].mxu0
      %v1135 = vpop.f32.mrb[0].mxu0
      %v1136 = vadd.f32 %v1092, %v1135
      %v1137 = vpop.f32.mrb[0].mxu0
      %1138 = vdwg.mxu0
      %v1140 = vsel %vm723, %v1043, 0
      %1142 = vmatprep.subr.bf16.mxu0 0
      %1143 = vmatpush1.bf16.msra.mxu0 %v1096
      %1144 = vmatprep.subr.bf16.mxu0 0
      %1145 = vmatpush1.bf16.msra.mxu0 0
      %1146 = vmatprep.subr.bf16.mxu0 0
      %1147 = vmatpush1.bf16.msra.mxu0 0
      %1148 = vmatprep.subr.bf16.mxu0 0
      %1149 = vmatpush1.bf16.msra.mxu0 0
      %1150 = vmatprep.subr.bf16.mxu0 0
      %1151 = vmatpush1.bf16.msra.mxu0 0
      %1152 = vmatprep.subr.bf16.mxu0 0
      %1153 = vmatpush1.bf16.msra.mxu0 0
      %1154 = vmatprep.subr.bf16.mxu0 0
      %1155 = vmatpush1.bf16.msra.mxu0 0
      %1156 = vmatprep.subr.bf16.mxu0 0
      %1157 = vmatpush1.bf16.msra.mxu0 0
      %1158 = vmatprep.subr.bf16.mxu0 0
      %1159 = vmatpush1.bf16.msra.mxu0 0
      %1160 = vmatprep.subr.bf16.mxu0 0
      %1161 = vmatpush1.bf16.msra.mxu0 0
      %1162 = vmatprep.subr.bf16.mxu0 0
      %1163 = vmatpush1.bf16.msra.mxu0 0
      %1164 = vmatprep.subr.bf16.mxu0 0
      %1165 = vmatpush1.bf16.msra.mxu0 0
      %1166 = vmatprep.subr.bf16.mxu0 0
      %1167 = vmatpush1.bf16.msra.mxu0 0
      %1168 = vmatprep.subr.bf16.mxu0 0
      %1169 = vmatpush1.bf16.msra.mxu0 0
      %1170 = vmatprep.subr.bf16.mxu0 0
      %1171 = vmatpush1.bf16.msra.mxu0 0
      %1172 = vmatprep.subr.bf16.mxu0 0
      %1173 = vmatpush1.bf16.msra.mxu0 0
      %1174 = vmatprep.mubr.bf16.mxu0 0
      %1175 = vmatmul.mubr.bf16.gmra.mrb[0].mxu0 %v1140
      %v1176 = vpop.f32.mrb[0].mxu0
      %v1177 = vadd.f32 0.0, %v1176
      %v1178 = vpop.f32.mrb[0].mxu0
      %v1179 = vpop.f32.mrb[0].mxu0
      %v1180 = vadd.f32 0.0, %v1179
      %v1181 = vpop.f32.mrb[0].mxu0
      %1182 = vdwg.mxu0
      %v1183 = vadd.f32 %v1133, %v1177
      %v1184 = vadd.f32 %v1136, %v1180
      %s1185 = scalar_lea.vmem %s2, 32
      %v1186 = vld [vmem:[%s1185] sm:$0xff]
      %v1187 = vld [vmem:[%s1185 + $0x8] sm:$0xff]
      %1189 = vset.pattern.permute.xlu0 0
      %1190 = vperm.xlu0 %1189, %v1186
      %v1191 = vpop.permute.xlu0 %1190
      %1194 = vset.pattern.permute.xlu0 0
      %1195 = vperm.xlu0 %1194, %v1187
      %v1196 = vpop.permute.xlu0 %1195
      %v1198 = vmul.f32 %v1183, %v1191
      %v1199 = vmul.f32 %v1184, %v1196
      %v1200 = vadd.f32 %v1031, %v1198
      %v1201 = vadd.f32 %v1032, %v1199
      %v1202 = vld [vmem:[%s6] sm:$0x1]
      %v1203 = vld [vmem:[%s7] sm:$0x1]
      %vm1204 = vcmask 130048
      %v1205 = vsel %vm1204, %v1200, 0.0
      %v1206 = vsel %vm1204, %v1201, 0.0
      %v1207 = vadd.f32 %v1205, %v1206
      %v1208 = vrot.slane %v1207, 4
      %v1209 = vadd.f32 %v1207, %v1208
      %v1210 = vrot.slane %v1209, 2
      %v1211 = vadd.f32 %v1209, %v1210
      %v1212 = vrot.slane %v1211, 1
      %v1213 = vadd.f32 %v1211, %v1212
      %v1215 = vsel %vm1204, %v1213, 0
      %1217 = vmatprep.subr.mxu0 0.0
      %1218 = vmatpush1.msra.mxu0 %v702
      %1219 = vmatprep.subr.mxu0 0.0
      %1220 = vmatpush1.msra.mxu0 %v703
      %1221 = vmatprep.subr.mxu0 0.0
      %1222 = vmatpush1.msra.mxu0 0.0
      %1223 = vmatprep.subr.mxu0 0.0
      %1224 = vmatpush1.msra.mxu0 0.0
      %1225 = vmatprep.subr.mxu0 0.0
      %1226 = vmatpush1.msra.mxu0 0.0
      %1227 = vmatprep.subr.mxu0 0.0
      %1228 = vmatpush1.msra.mxu0 0.0
      %1229 = vmatprep.subr.mxu0 0.0
      %1230 = vmatpush1.msra.mxu0 0.0
      %1231 = vmatprep.subr.mxu0 0.0
      %1232 = vmatpush1.msra.mxu0 0.0
      %1233 = vmatprep.subr.mxu0 0.0
      %1234 = vmatpush1.msra.mxu0 0.0
      %1235 = vmatprep.subr.mxu0 0.0
      %1236 = vmatpush1.msra.mxu0 0.0
      %1237 = vmatprep.subr.mxu0 0.0
      %1238 = vmatpush1.msra.mxu0 0.0
      %1239 = vmatprep.subr.mxu0 0.0
      %1240 = vmatpush1.msra.mxu0 0.0
      %1241 = vmatprep.subr.mxu0 0.0
      %1242 = vmatpush1.msra.mxu0 0.0
      %1243 = vmatprep.subr.mxu0 0.0
      %1244 = vmatpush1.msra.mxu0 0.0
      %1245 = vmatprep.subr.mxu0 0.0
      %1246 = vmatpush1.msra.mxu0 0.0
      %1247 = vmatprep.subr.mxu0 0.0
      %1248 = vmatpush1.msra.mxu0 0.0
      %1249 = vmatprep.subr.mxu0 0.0
      %1250 = vmatpush1.msra.mxu0 0.0
      %1251 = vmatprep.subr.mxu0 0.0
      %1252 = vmatpush1.msra.mxu0 0.0
      %1253 = vmatprep.subr.mxu0 0.0
      %1254 = vmatpush1.msra.mxu0 0.0
      %1255 = vmatprep.subr.mxu0 0.0
      %1256 = vmatpush1.msra.mxu0 0.0
      %1257 = vmatprep.subr.mxu0 0.0
      %1258 = vmatpush1.msra.mxu0 0.0
      %1259 = vmatprep.subr.mxu0 0.0
      %1260 = vmatpush1.msra.mxu0 0.0
      %1261 = vmatprep.subr.mxu0 0.0
      %1262 = vmatpush1.msra.mxu0 0.0
      %1263 = vmatprep.subr.mxu0 0.0
      %1264 = vmatpush1.msra.mxu0 0.0
      %1265 = vmatprep.subr.mxu0 0.0
      %1266 = vmatpush1.msra.mxu0 0.0
      %1267 = vmatprep.subr.mxu0 0.0
      %1268 = vmatpush1.msra.mxu0 0.0
      %1269 = vmatprep.subr.mxu0 0.0
      %1270 = vmatpush1.msra.mxu0 0.0
      %1271 = vmatprep.subr.mxu0 0.0
      %1272 = vmatpush1.msra.mxu0 0.0
      %1273 = vmatprep.subr.mxu0 0.0
      %1274 = vmatpush1.msra.mxu0 0.0
      %1275 = vmatprep.subr.mxu0 0.0
      %1276 = vmatpush1.msra.mxu0 0.0
      %1277 = vmatprep.subr.mxu0 0.0
      %1278 = vmatpush1.msra.mxu0 0.0
      %1279 = vmatprep.subr.mxu0 0.0
      %1280 = vmatpush1.msra.mxu0 0.0
      %1281 = vmatprep.mubr.f32.mxu0 0.0
      %1282 = vmatmul.mubr.f32.gmra.mrb[0].mxu0 %v1215
      %v1283 = vpop.f32.mrb[0].mxu0
      %v1284 = vadd.f32 0.0, %v1283
      %v1285 = vpop.f32.mrb[0].mxu0
      %1286 = vdwg.mxu0
      %v1287 = vmul.f32 %v1284, 0.03125
      %vm1288 = vcmask 64512
      %v1290 = vsel %vm1288, %v1287, 0
      %1292 = vmatprep.subr.mxu0 0.0
      %1293 = vmatpush1.msra.mxu0 %v704
      %1294 = vmatprep.subr.mxu0 0.0
      %1295 = vmatpush1.msra.mxu0 0.0
      %1296 = vmatprep.subr.mxu0 0.0
      %1297 = vmatpush1.msra.mxu0 0.0
      %1298 = vmatprep.subr.mxu0 0.0
      %1299 = vmatpush1.msra.mxu0 0.0
      %1300 = vmatprep.subr.mxu0 0.0
      %1301 = vmatpush1.msra.mxu0 0.0
      %1302 = vmatprep.subr.mxu0 0.0
      %1303 = vmatpush1.msra.mxu0 0.0
      %1304 = vmatprep.subr.mxu0 0.0
      %1305 = vmatpush1.msra.mxu0 0.0
      %1306 = vmatprep.subr.mxu0 0.0
      %1307 = vmatpush1.msra.mxu0 0.0
      %1308 = vmatprep.subr.mxu0 0.0
      %1309 = vmatpush1.msra.mxu0 0.0
      %1310 = vmatprep.subr.mxu0 0.0
      %1311 = vmatpush1.msra.mxu0 0.0
      %1312 = vmatprep.subr.mxu0 0.0
      %1313 = vmatpush1.msra.mxu0 0.0
      %1314 = vmatprep.subr.mxu0 0.0
      %1315 = vmatpush1.msra.mxu0 0.0
      %1316 = vmatprep.subr.mxu0 0.0
      %1317 = vmatpush1.msra.mxu0 0.0
      %1318 = vmatprep.subr.mxu0 0.0
      %1319 = vmatpush1.msra.mxu0 0.0
      %1320 = vmatprep.subr.mxu0 0.0
      %1321 = vmatpush1.msra.mxu0 0.0
      %1322 = vmatprep.subr.mxu0 0.0
      %1323 = vmatpush1.msra.mxu0 0.0
      %1324 = vmatprep.subr.mxu0 0.0
      %1325 = vmatpush1.msra.mxu0 0.0
      %1326 = vmatprep.subr.mxu0 0.0
      %1327 = vmatpush1.msra.mxu0 0.0
      %1328 = vmatprep.subr.mxu0 0.0
      %1329 = vmatpush1.msra.mxu0 0.0
      %1330 = vmatprep.subr.mxu0 0.0
      %1331 = vmatpush1.msra.mxu0 0.0
      %1332 = vmatprep.subr.mxu0 0.0
      %1333 = vmatpush1.msra.mxu0 0.0
      %1334 = vmatprep.subr.mxu0 0.0
      %1335 = vmatpush1.msra.mxu0 0.0
      %1336 = vmatprep.subr.mxu0 0.0
      %1337 = vmatpush1.msra.mxu0 0.0
      %1338 = vmatprep.subr.mxu0 0.0
      %1339 = vmatpush1.msra.mxu0 0.0
      %1340 = vmatprep.subr.mxu0 0.0
      %1341 = vmatpush1.msra.mxu0 0.0
      %1342 = vmatprep.subr.mxu0 0.0
      %1343 = vmatpush1.msra.mxu0 0.0
      %1344 = vmatprep.subr.mxu0 0.0
      %1345 = vmatpush1.msra.mxu0 0.0
      %1346 = vmatprep.subr.mxu0 0.0
      %1347 = vmatpush1.msra.mxu0 0.0
      %1348 = vmatprep.subr.mxu0 0.0
      %1349 = vmatpush1.msra.mxu0 0.0
      %1350 = vmatprep.subr.mxu0 0.0
      %1351 = vmatpush1.msra.mxu0 0.0
      %1352 = vmatprep.subr.mxu0 0.0
      %1353 = vmatpush1.msra.mxu0 0.0
      %1354 = vmatprep.subr.mxu0 0.0
      %1355 = vmatpush1.msra.mxu0 0.0
      %1356 = vmatprep.mubr.f32.mxu0 0.0
      %1357 = vmatmul.mubr.f32.gmra.mrb[0].mxu0 %v1290
      %v1358 = vpop.f32.mrb[0].mxu0
      %v1359 = vadd.f32 0.0, %v1358
      %v1360 = vpop.f32.mrb[0].mxu0
      %1361 = vdwg.mxu0
      %v1362 = vlaneseq
      %v1363 = vshrl.u32 %v1362, 7
      %v1364 = vsub.s32 0, %v1363
      %v1365 = vrot.slane %v1359, %v1364
      %v1366 = vsub.f32 %v1200, %v1365
      %v1367 = vsub.f32 %v1201, %v1365
      %v1368 = vmul.f32 %v1366, %v1366
      %v1369 = vmul.f32 %v1367, %v1367
      %v1370 = vsel %vm1204, %v1368, 0.0
      %v1371 = vsel %vm1204, %v1369, 0.0
      %v1372 = vadd.f32 %v1370, %v1371
      %v1373 = vrot.slane %v1372, 4
      %v1374 = vadd.f32 %v1372, %v1373
      %v1375 = vrot.slane %v1374, 2
      %v1376 = vadd.f32 %v1374, %v1375
      %v1377 = vrot.slane %v1376, 1
      %v1378 = vadd.f32 %v1376, %v1377
      %v1380 = vsel %vm1204, %v1378, 0
      %1382 = vmatprep.subr.mxu0 0.0
      %1383 = vmatpush1.msra.mxu0 %v702
      %1384 = vmatprep.subr.mxu0 0.0
      %1385 = vmatpush1.msra.mxu0 %v703
      %1386 = vmatprep.subr.mxu0 0.0
      %1387 = vmatpush1.msra.mxu0 0.0
      %1388 = vmatprep.subr.mxu0 0.0
      %1389 = vmatpush1.msra.mxu0 0.0
      %1390 = vmatprep.subr.mxu0 0.0
      %1391 = vmatpush1.msra.mxu0 0.0
      %1392 = vmatprep.subr.mxu0 0.0
      %1393 = vmatpush1.msra.mxu0 0.0
      %1394 = vmatprep.subr.mxu0 0.0
      %1395 = vmatpush1.msra.mxu0 0.0
      %1396 = vmatprep.subr.mxu0 0.0
      %1397 = vmatpush1.msra.mxu0 0.0
      %1398 = vmatprep.subr.mxu0 0.0
      %1399 = vmatpush1.msra.mxu0 0.0
      %1400 = vmatprep.subr.mxu0 0.0
      %1401 = vmatpush1.msra.mxu0 0.0
      %1402 = vmatprep.subr.mxu0 0.0
      %1403 = vmatpush1.msra.mxu0 0.0
      %1404 = vmatprep.subr.mxu0 0.0
      %1405 = vmatpush1.msra.mxu0 0.0
      %1406 = vmatprep.subr.mxu0 0.0
      %1407 = vmatpush1.msra.mxu0 0.0
      %1408 = vmatprep.subr.mxu0 0.0
      %1409 = vmatpush1.msra.mxu0 0.0
      %1410 = vmatprep.subr.mxu0 0.0
      %1411 = vmatpush1.msra.mxu0 0.0
      %1412 = vmatprep.subr.mxu0 0.0
      %1413 = vmatpush1.msra.mxu0 0.0
      %1414 = vmatprep.subr.mxu0 0.0
      %1415 = vmatpush1.msra.mxu0 0.0
      %1416 = vmatprep.subr.mxu0 0.0
      %1417 = vmatpush1.msra.mxu0 0.0
      %1418 = vmatprep.subr.mxu0 0.0
      %1419 = vmatpush1.msra.mxu0 0.0
      %1420 = vmatprep.subr.mxu0 0.0
      %1421 = vmatpush1.msra.mxu0 0.0
      %1422 = vmatprep.subr.mxu0 0.0
      %1423 = vmatpush1.msra.mxu0 0.0
      %1424 = vmatprep.subr.mxu0 0.0
      %1425 = vmatpush1.msra.mxu0 0.0
      %1426 = vmatprep.subr.mxu0 0.0
      %1427 = vmatpush1.msra.mxu0 0.0
      %1428 = vmatprep.subr.mxu0 0.0
      %1429 = vmatpush1.msra.mxu0 0.0
      %1430 = vmatprep.subr.mxu0 0.0
      %1431 = vmatpush1.msra.mxu0 0.0
      %1432 = vmatprep.subr.mxu0 0.0
      %1433 = vmatpush1.msra.mxu0 0.0
      %1434 = vmatprep.subr.mxu0 0.0
      %1435 = vmatpush1.msra.mxu0 0.0
      %1436 = vmatprep.subr.mxu0 0.0
      %1437 = vmatpush1.msra.mxu0 0.0
      %1438 = vmatprep.subr.mxu0 0.0
      %1439 = vmatpush1.msra.mxu0 0.0
      %1440 = vmatprep.subr.mxu0 0.0
      %1441 = vmatpush1.msra.mxu0 0.0
      %1442 = vmatprep.subr.mxu0 0.0
      %1443 = vmatpush1.msra.mxu0 0.0
      %1444 = vmatprep.subr.mxu0 0.0
      %1445 = vmatpush1.msra.mxu0 0.0
      %1446 = vmatprep.mubr.f32.mxu0 0.0
      %1447 = vmatmul.mubr.f32.gmra.mrb[0].mxu0 %v1380
      %v1448 = vpop.f32.mrb[0].mxu0
      %v1449 = vadd.f32 0.0, %v1448
      %v1450 = vpop.f32.mrb[0].mxu0
      %1451 = vdwg.mxu0
      %v1452 = vmul.f32 %v1449, 0.03125
      %v1454 = vsel %vm1288, %v1452, 0
      %1456 = vmatprep.subr.mxu0 0.0
      %1457 = vmatpush1.msra.mxu0 %v704
      %1458 = vmatprep.subr.mxu0 0.0
      %1459 = vmatpush1.msra.mxu0 0.0
      %1460 = vmatprep.subr.mxu0 0.0
      %1461 = vmatpush1.msra.mxu0 0.0
      %1462 = vmatprep.subr.mxu0 0.0
      %1463 = vmatpush1.msra.mxu0 0.0
      %1464 = vmatprep.subr.mxu0 0.0
      %1465 = vmatpush1.msra.mxu0 0.0
      %1466 = vmatprep.subr.mxu0 0.0
      %1467 = vmatpush1.msra.mxu0 0.0
      %1468 = vmatprep.subr.mxu0 0.0
      %1469 = vmatpush1.msra.mxu0 0.0
      %1470 = vmatprep.subr.mxu0 0.0
      %1471 = vmatpush1.msra.mxu0 0.0
      %1472 = vmatprep.subr.mxu0 0.0
      %1473 = vmatpush1.msra.mxu0 0.0
      %1474 = vmatprep.subr.mxu0 0.0
      %1475 = vmatpush1.msra.mxu0 0.0
      %1476 = vmatprep.subr.mxu0 0.0
      %1477 = vmatpush1.msra.mxu0 0.0
      %1478 = vmatprep.subr.mxu0 0.0
      %1479 = vmatpush1.msra.mxu0 0.0
      %1480 = vmatprep.subr.mxu0 0.0
      %1481 = vmatpush1.msra.mxu0 0.0
      %1482 = vmatprep.subr.mxu0 0.0
      %1483 = vmatpush1.msra.mxu0 0.0
      %1484 = vmatprep.subr.mxu0 0.0
      %1485 = vmatpush1.msra.mxu0 0.0
      %1486 = vmatprep.subr.mxu0 0.0
      %1487 = vmatpush1.msra.mxu0 0.0
      %1488 = vmatprep.subr.mxu0 0.0
      %1489 = vmatpush1.msra.mxu0 0.0
      %1490 = vmatprep.subr.mxu0 0.0
      %1491 = vmatpush1.msra.mxu0 0.0
      %1492 = vmatprep.subr.mxu0 0.0
      %1493 = vmatpush1.msra.mxu0 0.0
      %1494 = vmatprep.subr.mxu0 0.0
      %1495 = vmatpush1.msra.mxu0 0.0
      %1496 = vmatprep.subr.mxu0 0.0
      %1497 = vmatpush1.msra.mxu0 0.0
      %1498 = vmatprep.subr.mxu0 0.0
      %1499 = vmatpush1.msra.mxu0 0.0
      %1500 = vmatprep.subr.mxu0 0.0
      %1501 = vmatpush1.msra.mxu0 0.0
      %1502 = vmatprep.subr.mxu0 0.0
      %1503 = vmatpush1.msra.mxu0 0.0
      %1504 = vmatprep.subr.mxu0 0.0
      %1505 = vmatpush1.msra.mxu0 0.0
      %1506 = vmatprep.subr.mxu0 0.0
      %1507 = vmatpush1.msra.mxu0 0.0
      %1508 = vmatprep.subr.mxu0 0.0
      %1509 = vmatpush1.msra.mxu0 0.0
      %1510 = vmatprep.subr.mxu0 0.0
      %1511 = vmatpush1.msra.mxu0 0.0
      %1512 = vmatprep.subr.mxu0 0.0
      %1513 = vmatpush1.msra.mxu0 0.0
      %1514 = vmatprep.subr.mxu0 0.0
      %1515 = vmatpush1.msra.mxu0 0.0
      %1516 = vmatprep.subr.mxu0 0.0
      %1517 = vmatpush1.msra.mxu0 0.0
      %1518 = vmatprep.subr.mxu0 0.0
      %1519 = vmatpush1.msra.mxu0 0.0
      %1520 = vmatprep.mubr.f32.mxu0 0.0
      %1521 = vmatmul.mubr.f32.gmra.mrb[0].mxu0 %v1454
      %v1522 = vpop.f32.mrb[0].mxu0
      %v1523 = vadd.f32 1e-05, %v1522
      %v1524 = vpop.f32.mrb[0].mxu0
      %1525 = vdwg.mxu0
      %v1526 = vrsqrt.pop %v1523
      %v1527 = vlaneseq
      %v1528 = vshrl.u32 %v1527, 7
      %v1529 = vsub.s32 0, %v1528
      %v1530 = vrot.slane %v1526, %v1529
      %v1531 = vmul.f32 %v1366, %v1530
      %v1532 = vmul.f32 %v1367, %v1530
      %v1534 = vlaneseq
      %v1535 = vshrl.u32 %v1534, 7
      %v1536 = vsub.s32 0, %v1535
      %v1537 = vrot.slane %v1202, %v1536
      %v1539 = vmul.f32 %v1531, %v1537
      %v1540 = vmul.f32 %v1532, %v1537
      %v1542 = vlaneseq
      %v1543 = vshrl.u32 %v1542, 7
      %v1544 = vsub.s32 0, %v1543
      %v1545 = vrot.slane %v1203, %v1544
      %v1547 = vadd.f32 %v1539, %v1545
      %v1548 = vadd.f32 %v1540, %v1545
      %v1549 = vand.u32 2147483647, %v1547
      %v1550 = vand.u32 2147483647, %v1548
      %v1551 = vsub.f32 0.0, %v1549
      %v1552 = vsub.f32 0.0, %v1550
      %v1553 = vmul.f32 %v1551, 1.442695
      %v1554 = vpow.pop %v1553
      %v1555 = vmul.f32 %v1552, 1.442695
      %v1556 = vpow.pop %v1555
      %v1557 = vmul.f32 %v1554, %v1554
      %v1558 = vmul.f32 %v1556, %v1556
      %vm1559 = vcmp.ge.f32.partialorder %v1547, 0.0
      %vm1560 = vcmp.ge.f32.partialorder %v1548, 0.0
      %v1561 = vmul.f32 %v1554, 2.0
      %v1562 = vmul.f32 %v1556, 2.0
      %v1563 = vadd.f32 %v1561, 1.0
      %v1564 = vadd.f32 %v1562, 1.0
      %v1565 = vadd.f32 %v1557, %v1561
      %v1566 = vadd.f32 %v1558, %v1562
      %v1567 = vsel %vm1559, %v1563, %v1565
      %v1568 = vsel %vm1560, %v1564, %v1566
      %v1569 = vmul.f32 %v1557, 2.0
      %v1570 = vmul.f32 %v1558, 2.0
      %v1571 = vadd.f32 %v1569, %v1561
      %v1572 = vadd.f32 %v1570, %v1562
      %v1573 = vadd.f32 %v1571, 1.0
      %v1574 = vadd.f32 %v1572, 1.0
      %v1575 = vadd.f32 %v1565, 2.0
      %v1576 = vadd.f32 %v1566, 2.0
      %v1577 = vsel %vm1559, %v1573, %v1575
      %v1578 = vsel %vm1560, %v1574, %v1576
      %v1579 = vrcp.pop %v1577
      %v1580 = vmul.f32 %v1567, %v1579
      %v1581 = vrcp.pop %v1578
      %v1582 = vmul.f32 %v1568, %v1581
      %v1583 = vmul.f32 %v1547, %v1580
      %v1584 = vmul.f32 %v1548, %v1582
      %v1585 = vld [vmem:[%s694] sm:$0x1]
      %v1586 = vand.u32 2147483647, %v1585
      %v1587 = vsub.f32 0.0, %v1586
      %v1588 = vmul.f32 %v1587, 1.442695
      %v1589 = vpow.pop %v1588
      %v1590 = vmul.f32 %v1589, %v1589
      %vm1591 = vcmp.ge.f32.partialorder %v1585, 0.0
      %v1592 = vmul.f32 %v1589, 2.0
      %v1593 = vadd.f32 %v1592, 1.0
      %v1594 = vadd.f32 %v1590, %v1592
      %v1595 = vsel %vm1591, %v1593, %v1594
      %v1596 = vmul.f32 %v1590, 2.0
      %v1597 = vadd.f32 %v1596, %v1592
      %v1598 = vadd.f32 %v1597, 1.0
      %v1599 = vadd.f32 %v1594, 2.0
      %v1600 = vsel %vm1591, %v1598, %v1599
      %v1601 = vrcp.pop %v1600
      %v1602 = vmul.f32 %v1595, %v1601
      %v1603 = vmul.f32 %v1585, %v1602
      %v1604 = vld [vmem:[%s8] sm:$0xff]
      %v1605 = vld [vmem:[%s10] sm:$0x1]
      %v1607 = vsel %vm1288, %v1603, 0
      %1609 = vmatprep.subr.mxu0 0.0
      %1610 = vmatpush1.msra.mxu0 %v1604
      %1611 = vmatprep.subr.mxu0 0.0
      %1612 = vmatpush1.msra.mxu0 0.0
      %1613 = vmatprep.subr.mxu0 0.0
      %1614 = vmatpush1.msra.mxu0 0.0
      %1615 = vmatprep.subr.mxu0 0.0
      %1616 = vmatpush1.msra.mxu0 0.0
      %1617 = vmatprep.subr.mxu0 0.0
      %1618 = vmatpush1.msra.mxu0 0.0
      %1619 = vmatprep.subr.mxu0 0.0
      %1620 = vmatpush1.msra.mxu0 0.0
      %1621 = vmatprep.subr.mxu0 0.0
      %1622 = vmatpush1.msra.mxu0 0.0
      %1623 = vmatprep.subr.mxu0 0.0
      %1624 = vmatpush1.msra.mxu0 0.0
      %1625 = vmatprep.subr.mxu0 0.0
      %1626 = vmatpush1.msra.mxu0 0.0
      %1627 = vmatprep.subr.mxu0 0.0
      %1628 = vmatpush1.msra.mxu0 0.0
      %1629 = vmatprep.subr.mxu0 0.0
      %1630 = vmatpush1.msra.mxu0 0.0
      %1631 = vmatprep.subr.mxu0 0.0
      %1632 = vmatpush1.msra.mxu0 0.0
      %1633 = vmatprep.subr.mxu0 0.0
      %1634 = vmatpush1.msra.mxu0 0.0
      %1635 = vmatprep.subr.mxu0 0.0
      %1636 = vmatpush1.msra.mxu0 0.0
      %1637 = vmatprep.subr.mxu0 0.0
      %1638 = vmatpush1.msra.mxu0 0.0
      %1639 = vmatprep.subr.mxu0 0.0
      %1640 = vmatpush1.msra.mxu0 0.0
      %1641 = vmatprep.subr.mxu0 0.0
      %1642 = vmatpush1.msra.mxu0 0.0
      %1643 = vmatprep.subr.mxu0 0.0
      %1644 = vmatpush1.msra.mxu0 0.0
      %1645 = vmatprep.subr.mxu0 0.0
      %1646 = vmatpush1.msra.mxu0 0.0
      %1647 = vmatprep.subr.mxu0 0.0
      %1648 = vmatpush1.msra.mxu0 0.0
      %1649 = vmatprep.subr.mxu0 0.0
      %1650 = vmatpush1.msra.mxu0 0.0
      %1651 = vmatprep.subr.mxu0 0.0
      %1652 = vmatpush1.msra.mxu0 0.0
      %1653 = vmatprep.subr.mxu0 0.0
      %1654 = vmatpush1.msra.mxu0 0.0
      %1655 = vmatprep.subr.mxu0 0.0
      %1656 = vmatpush1.msra.mxu0 0.0
      %1657 = vmatprep.subr.mxu0 0.0
      %1658 = vmatpush1.msra.mxu0 0.0
      %1659 = vmatprep.subr.mxu0 0.0
      %1660 = vmatpush1.msra.mxu0 0.0
      %1661 = vmatprep.subr.mxu0 0.0
      %1662 = vmatpush1.msra.mxu0 0.0
      %1663 = vmatprep.subr.mxu0 0.0
      %1664 = vmatpush1.msra.mxu0 0.0
      %1665 = vmatprep.subr.mxu0 0.0
      %1666 = vmatpush1.msra.mxu0 0.0
      %1667 = vmatprep.subr.mxu0 0.0
      %1668 = vmatpush1.msra.mxu0 0.0
      %1669 = vmatprep.subr.mxu0 0.0
      %1670 = vmatpush1.msra.mxu0 0.0
      %1671 = vmatprep.subr.mxu0 0.0
      %1672 = vmatpush1.msra.mxu0 0.0
      %1673 = vmatprep.mubr.f32.mxu0 0.0
      %1674 = vmatmul.mubr.f32.gmra.mrb[0].mxu0 %v1607
      %v1675 = vpop.f32.mrb[0].mxu0
      %v1676 = vadd.f32 %v1605, %v1675
      %v1677 = vpop.f32.mrb[0].mxu0
      %1678 = vdwg.mxu0
      %v1679 = vld [vmem:[%s9] sm:$0xff]
      %v1680 = vld [vmem:[%s11] sm:$0x1]
      %1681 = vmatprep.subr.mxu0 0.0
      %1682 = vmatpush1.msra.mxu0 %v1679
      %1683 = vmatprep.subr.mxu0 0.0
      %1684 = vmatpush1.msra.mxu0 0.0
      %1685 = vmatprep.subr.mxu0 0.0
      %1686 = vmatpush1.msra.mxu0 0.0
      %1687 = vmatprep.subr.mxu0 0.0
      %1688 = vmatpush1.msra.mxu0 0.0
      %1689 = vmatprep.subr.mxu0 0.0
      %1690 = vmatpush1.msra.mxu0 0.0
      %1691 = vmatprep.subr.mxu0 0.0
      %1692 = vmatpush1.msra.mxu0 0.0
      %1693 = vmatprep.subr.mxu0 0.0
      %1694 = vmatpush1.msra.mxu0 0.0
      %1695 = vmatprep.subr.mxu0 0.0
      %1696 = vmatpush1.msra.mxu0 0.0
      %1697 = vmatprep.subr.mxu0 0.0
      %1698 = vmatpush1.msra.mxu0 0.0
      %1699 = vmatprep.subr.mxu0 0.0
      %1700 = vmatpush1.msra.mxu0 0.0
      %1701 = vmatprep.subr.mxu0 0.0
      %1702 = vmatpush1.msra.mxu0 0.0
      %1703 = vmatprep.subr.mxu0 0.0
      %1704 = vmatpush1.msra.mxu0 0.0
      %1705 = vmatprep.subr.mxu0 0.0
      %1706 = vmatpush1.msra.mxu0 0.0
      %1707 = vmatprep.subr.mxu0 0.0
      %1708 = vmatpush1.msra.mxu0 0.0
      %1709 = vmatprep.subr.mxu0 0.0
      %1710 = vmatpush1.msra.mxu0 0.0
      %1711 = vmatprep.subr.mxu0 0.0
      %1712 = vmatpush1.msra.mxu0 0.0
      %1713 = vmatprep.subr.mxu0 0.0
      %1714 = vmatpush1.msra.mxu0 0.0
      %1715 = vmatprep.subr.mxu0 0.0
      %1716 = vmatpush1.msra.mxu0 0.0
      %1717 = vmatprep.subr.mxu0 0.0
      %1718 = vmatpush1.msra.mxu0 0.0
      %1719 = vmatprep.subr.mxu0 0.0
      %1720 = vmatpush1.msra.mxu0 0.0
      %1721 = vmatprep.subr.mxu0 0.0
      %1722 = vmatpush1.msra.mxu0 0.0
      %1723 = vmatprep.subr.mxu0 0.0
      %1724 = vmatpush1.msra.mxu0 0.0
      %1725 = vmatprep.subr.mxu0 0.0
      %1726 = vmatpush1.msra.mxu0 0.0
      %1727 = vmatprep.subr.mxu0 0.0
      %1728 = vmatpush1.msra.mxu0 0.0
      %1729 = vmatprep.subr.mxu0 0.0
      %1730 = vmatpush1.msra.mxu0 0.0
      %1731 = vmatprep.subr.mxu0 0.0
      %1732 = vmatpush1.msra.mxu0 0.0
      %1733 = vmatprep.subr.mxu0 0.0
      %1734 = vmatpush1.msra.mxu0 0.0
      %1735 = vmatprep.subr.mxu0 0.0
      %1736 = vmatpush1.msra.mxu0 0.0
      %1737 = vmatprep.subr.mxu0 0.0
      %1738 = vmatpush1.msra.mxu0 0.0
      %1739 = vmatprep.subr.mxu0 0.0
      %1740 = vmatpush1.msra.mxu0 0.0
      %1741 = vmatprep.subr.mxu0 0.0
      %1742 = vmatpush1.msra.mxu0 0.0
      %1743 = vmatprep.subr.mxu0 0.0
      %1744 = vmatpush1.msra.mxu0 0.0
      %1745 = vmatprep.mubr.f32.mxu0 0.0
      %1746 = vmatmul.mubr.f32.gmra.mrb[0].mxu0 %v1607
      %v1747 = vpop.f32.mrb[0].mxu0
      %v1748 = vadd.f32 %v1680, %v1747
      %v1749 = vpop.f32.mrb[0].mxu0
      %1750 = vdwg.mxu0
      %v1751 = vlaneseq
      %v1752 = vshrl.u32 %v1751, 7
      %v1753 = vsub.s32 0, %v1752
      %v1754 = vrot.slane %v1676, %v1753
      %v1755 = vmul.f32 %v1754, %v1583
      %v1756 = vmul.f32 %v1754, %v1584
      %v1757 = vlaneseq
      %v1758 = vshrl.u32 %v1757, 7
      %v1759 = vsub.s32 0, %v1758
      %v1760 = vrot.slane %v1748, %v1759
      %v1761 = vadd.f32 %v1755, %v1760
      %v1762 = vadd.f32 %v1756, %v1760
      %v1763 = vld [vmem:[%s14] sm:$0x1]
      %v1764 = vrot.slane %v1761, 7
      %v1765 = vrot.slane %v1762, 7
      %v1766 = vsel %vm712, %v1764, %v1765
      %v1767 = vsel %vm712, %v1765, %v1764
      %v1768 = vpack.c.bf16 %v1766, %v1767
      %v1769 = vunpack.c.l.bf16 %v1768
      %v1770 = vunpack.c.h.bf16 %v1768
      %v1771 = vsub.f32 %v1767, %v1769
      %v1772 = vsub.f32 %v1766, %v1770
      %v1773 = vpack.c.bf16 %v1772, %v1771
      %v1774 = vld [vmem:[%s12] sm:$0xf]
      %v1775 = vld [vmem:[%s12 + $0x4] sm:$0xf]
      %v1776 = vld [vmem:[%s13] sm:$0xf]
      %v1777 = vld [vmem:[%s13 + $0x4] sm:$0xf]
      %v1780 = vunpack.c.l.b16 %v1776
      %v1781 = vunpack.c.l.b16 %v1777
      %v1782 = vpack.c.b16 %v1781, %v1780
      %v1785 = vsel %vm1204, %v1768, 0
      %1787 = vmatprep.subr.bf16.mxu0 0
      %1788 = vmatpush1.bf16.msra.mxu0 %v1782
      %1789 = vmatprep.subr.bf16.mxu0 0
      %1790 = vmatpush1.bf16.msra.mxu0 0
      %1791 = vmatprep.subr.bf16.mxu0 0
      %1792 = vmatpush1.bf16.msra.mxu0 0
      %1793 = vmatprep.subr.bf16.mxu0 0
      %1794 = vmatpush1.bf16.msra.mxu0 0
      %1795 = vmatprep.subr.bf16.mxu0 0
      %1796 = vmatpush1.bf16.msra.mxu0 0
      %1797 = vmatprep.subr.bf16.mxu0 0
      %1798 = vmatpush1.bf16.msra.mxu0 0
      %1799 = vmatprep.subr.bf16.mxu0 0
      %1800 = vmatpush1.bf16.msra.mxu0 0
      %1801 = vmatprep.subr.bf16.mxu0 0
      %1802 = vmatpush1.bf16.msra.mxu0 0
      %1803 = vmatprep.subr.bf16.mxu0 0
      %1804 = vmatpush1.bf16.msra.mxu0 0
      %1805 = vmatprep.subr.bf16.mxu0 0
      %1806 = vmatpush1.bf16.msra.mxu0 0
      %1807 = vmatprep.subr.bf16.mxu0 0
      %1808 = vmatpush1.bf16.msra.mxu0 0
      %1809 = vmatprep.subr.bf16.mxu0 0
      %1810 = vmatpush1.bf16.msra.mxu0 0
      %1811 = vmatprep.subr.bf16.mxu0 0
      %1812 = vmatpush1.bf16.msra.mxu0 0
      %1813 = vmatprep.subr.bf16.mxu0 0
      %1814 = vmatpush1.bf16.msra.mxu0 0
      %1815 = vmatprep.subr.bf16.mxu0 0
      %1816 = vmatpush1.bf16.msra.mxu0 0
      %1817 = vmatprep.subr.bf16.mxu0 0
      %1818 = vmatpush1.bf16.msra.mxu0 0
      %1819 = vmatprep.mubr.bf16.mxu0 0
      %1820 = vmatmul.mubr.bf16.gmra.mrb[0].mxu0 %v1785
      %v1821 = vpop.f32.mrb[0].mxu0
      %v1822 = vadd.f32 0.0, %v1821
      %v1823 = vpop.f32.mrb[0].mxu0
      %v1824 = vpop.f32.mrb[0].mxu0
      %v1825 = vadd.f32 0.0, %v1824
      %v1826 = vpop.f32.mrb[0].mxu0
      %1827 = vdwg.mxu0
      %v1830 = vunpack.c.l.b16 %v1774
      %v1831 = vunpack.c.l.b16 %v1775
      %v1832 = vpack.c.b16 %v1831, %v1830
      %1834 = vmatprep.subr.bf16.mxu0 0
      %1835 = vmatpush1.bf16.msra.mxu0 %v1832
      %1836 = vmatprep.subr.bf16.mxu0 0
      %1837 = vmatpush1.bf16.msra.mxu0 0
      %1838 = vmatprep.subr.bf16.mxu0 0
      %1839 = vmatpush1.bf16.msra.mxu0 0
      %1840 = vmatprep.subr.bf16.mxu0 0
      %1841 = vmatpush1.bf16.msra.mxu0 0
      %1842 = vmatprep.subr.bf16.mxu0 0
      %1843 = vmatpush1.bf16.msra.mxu0 0
      %1844 = vmatprep.subr.bf16.mxu0 0
      %1845 = vmatpush1.bf16.msra.mxu0 0
      %1846 = vmatprep.subr.bf16.mxu0 0
      %1847 = vmatpush1.bf16.msra.mxu0 0
      %1848 = vmatprep.subr.bf16.mxu0 0
      %1849 = vmatpush1.bf16.msra.mxu0 0
      %1850 = vmatprep.subr.bf16.mxu0 0
      %1851 = vmatpush1.bf16.msra.mxu0 0
      %1852 = vmatprep.subr.bf16.mxu0 0
      %1853 = vmatpush1.bf16.msra.mxu0 0
      %1854 = vmatprep.subr.bf16.mxu0 0
      %1855 = vmatpush1.bf16.msra.mxu0 0
      %1856 = vmatprep.subr.bf16.mxu0 0
      %1857 = vmatpush1.bf16.msra.mxu0 0
      %1858 = vmatprep.subr.bf16.mxu0 0
      %1859 = vmatpush1.bf16.msra.mxu0 0
      %1860 = vmatprep.subr.bf16.mxu0 0
      %1861 = vmatpush1.bf16.msra.mxu0 0
      %1862 = vmatprep.subr.bf16.mxu0 0
      %1863 = vmatpush1.bf16.msra.mxu0 0
      %1864 = vmatprep.subr.bf16.mxu0 0
      %1865 = vmatpush1.bf16.msra.mxu0 0
      %1866 = vmatprep.mubr.bf16.mxu0 0
      %1867 = vmatmul.mubr.bf16.gmra.mrb[0].mxu0 %v1785
      %v1868 = vpop.f32.mrb[0].mxu0
      %v1869 = vadd.f32 %v1822, %v1868
      %v1870 = vpop.f32.mrb[0].mxu0
      %v1871 = vpop.f32.mrb[0].mxu0
      %v1872 = vadd.f32 %v1825, %v1871
      %v1873 = vpop.f32.mrb[0].mxu0
      %1874 = vdwg.mxu0
      %v1876 = vsel %vm1204, %v1773, 0
      %1878 = vmatprep.subr.bf16.mxu0 0
      %1879 = vmatpush1.bf16.msra.mxu0 %v1832
      %1880 = vmatprep.subr.bf16.mxu0 0
      %1881 = vmatpush1.bf16.msra.mxu0 0
      %1882 = vmatprep.subr.bf16.mxu0 0
      %1883 = vmatpush1.bf16.msra.mxu0 0
      %1884 = vmatprep.subr.bf16.mxu0 0
      %1885 = vmatpush1.bf16.msra.mxu0 0
      %1886 = vmatprep.subr.bf16.mxu0 0
      %1887 = vmatpush1.bf16.msra.mxu0 0
      %1888 = vmatprep.subr.bf16.mxu0 0
      %1889 = vmatpush1.bf16.msra.mxu0 0
      %1890 = vmatprep.subr.bf16.mxu0 0
      %1891 = vmatpush1.bf16.msra.mxu0 0
      %1892 = vmatprep.subr.bf16.mxu0 0
      %1893 = vmatpush1.bf16.msra.mxu0 0
      %1894 = vmatprep.subr.bf16.mxu0 0
      %1895 = vmatpush1.bf16.msra.mxu0 0
      %1896 = vmatprep.subr.bf16.mxu0 0
      %1897 = vmatpush1.bf16.msra.mxu0 0
      %1898 = vmatprep.subr.bf16.mxu0 0
      %1899 = vmatpush1.bf16.msra.mxu0 0
      %1900 = vmatprep.subr.bf16.mxu0 0
      %1901 = vmatpush1.bf16.msra.mxu0 0
      %1902 = vmatprep.subr.bf16.mxu0 0
      %1903 = vmatpush1.bf16.msra.mxu0 0
      %1904 = vmatprep.subr.bf16.mxu0 0
      %1905 = vmatpush1.bf16.msra.mxu0 0
      %1906 = vmatprep.subr.bf16.mxu0 0
      %1907 = vmatpush1.bf16.msra.mxu0 0
      %1908 = vmatprep.subr.bf16.mxu0 0
      %1909 = vmatpush1.bf16.msra.mxu0 0
      %1910 = vmatprep.mubr.bf16.mxu0 0
      %1911 = vmatmul.mubr.bf16.gmra.mrb[0].mxu0 %v1876
      %v1912 = vpop.f32.mrb[0].mxu0
      %v1913 = vadd.f32 0.0, %v1912
      %v1914 = vpop.f32.mrb[0].mxu0
      %v1915 = vpop.f32.mrb[0].mxu0
      %v1916 = vadd.f32 0.0, %v1915
      %v1917 = vpop.f32.mrb[0].mxu0
      %1918 = vdwg.mxu0
      %v1919 = vadd.f32 %v1869, %v1913
      %v1920 = vadd.f32 %v1872, %v1916
      %v1921 = vmul.f32 %v1919, %v867
      %v1922 = vmul.f32 %v1920, %v872
      %v1924 = vlaneseq
      %v1925 = vshrl.u32 %v1924, 7
      %v1926 = vsub.s32 0, %v1925
      %v1927 = vrot.slane %v1763, %v1926
      %v1929 = vadd.f32 %v1927, %v1921
      %v1930 = vadd.f32 %v1927, %v1922
      %v1931 = vpack.c.bf16 %v1762, %v1761
      %v1932 = vunpack.c.l.bf16 %v1931
      %v1933 = vunpack.c.h.bf16 %v1931
      %v1934 = vsub.f32 %v1761, %v1932
      %v1935 = vsub.f32 %v1762, %v1933
      %v1936 = vpack.c.bf16 %v1935, %v1934
      %s1937 = scalar_lea.vmem %s12, 8
      %v1938 = vld [vmem:[%s1937] sm:$0xf]
      %v1939 = vld [vmem:[%s1937 + $0x4] sm:$0xf]
      %s1940 = scalar_lea.vmem %s13, 8
      %v1941 = vld [vmem:[%s1940] sm:$0xf]
      %v1942 = vld [vmem:[%s1940 + $0x4] sm:$0xf]
      %v1945 = vunpack.c.l.b16 %v1941
      %v1946 = vunpack.c.l.b16 %v1942
      %v1947 = vpack.c.b16 %v1946, %v1945
      %v1950 = vsel %vm1204, %v1931, 0
      %1952 = vmatprep.subr.bf16.mxu0 0
      %1953 = vmatpush1.bf16.msra.mxu0 %v1947
      %1954 = vmatprep.subr.bf16.mxu0 0
      %1955 = vmatpush1.bf16.msra.mxu0 0
      %1956 = vmatprep.subr.bf16.mxu0 0
      %1957 = vmatpush1.bf16.msra.mxu0 0
      %1958 = vmatprep.subr.bf16.mxu0 0
      %1959 = vmatpush1.bf16.msra.mxu0 0
      %1960 = vmatprep.subr.bf16.mxu0 0
      %1961 = vmatpush1.bf16.msra.mxu0 0
      %1962 = vmatprep.subr.bf16.mxu0 0
      %1963 = vmatpush1.bf16.msra.mxu0 0
      %1964 = vmatprep.subr.bf16.mxu0 0
      %1965 = vmatpush1.bf16.msra.mxu0 0
      %1966 = vmatprep.subr.bf16.mxu0 0
      %1967 = vmatpush1.bf16.msra.mxu0 0
      %1968 = vmatprep.subr.bf16.mxu0 0
      %1969 = vmatpush1.bf16.msra.mxu0 0
      %1970 = vmatprep.subr.bf16.mxu0 0
      %1971 = vmatpush1.bf16.msra.mxu0 0
      %1972 = vmatprep.subr.bf16.mxu0 0
      %1973 = vmatpush1.bf16.msra.mxu0 0
      %1974 = vmatprep.subr.bf16.mxu0 0
      %1975 = vmatpush1.bf16.msra.mxu0 0
      %1976 = vmatprep.subr.bf16.mxu0 0
      %1977 = vmatpush1.bf16.msra.mxu0 0
      %1978 = vmatprep.subr.bf16.mxu0 0
      %1979 = vmatpush1.bf16.msra.mxu0 0
      %1980 = vmatprep.subr.bf16.mxu0 0
      %1981 = vmatpush1.bf16.msra.mxu0 0
      %1982 = vmatprep.subr.bf16.mxu0 0
      %1983 = vmatpush1.bf16.msra.mxu0 0
      %1984 = vmatprep.mubr.bf16.mxu0 0
      %1985 = vmatmul.mubr.bf16.gmra.mrb[0].mxu0 %v1950
      %v1986 = vpop.f32.mrb[0].mxu0
      %v1987 = vadd.f32 0.0, %v1986
      %v1988 = vpop.f32.mrb[0].mxu0
      %v1989 = vpop.f32.mrb[0].mxu0
      %v1990 = vadd.f32 0.0, %v1989
      %v1991 = vpop.f32.mrb[0].mxu0
      %1992 = vdwg.mxu0
      %v1995 = vunpack.c.l.b16 %v1938
      %v1996 = vunpack.c.l.b16 %v1939
      %v1997 = vpack.c.b16 %v1996, %v1995
      %1999 = vmatprep.subr.bf16.mxu0 0
      %2000 = vmatpush1.bf16.msra.mxu0 %v1997
      %2001 = vmatprep.subr.bf16.mxu0 0
      %2002 = vmatpush1.bf16.msra.mxu0 0
      %2003 = vmatprep.subr.bf16.mxu0 0
      %2004 = vmatpush1.bf16.msra.mxu0 0
      %2005 = vmatprep.subr.bf16.mxu0 0
      %2006 = vmatpush1.bf16.msra.mxu0 0
      %2007 = vmatprep.subr.bf16.mxu0 0
      %2008 = vmatpush1.bf16.msra.mxu0 0
      %2009 = vmatprep.subr.bf16.mxu0 0
      %2010 = vmatpush1.bf16.msra.mxu0 0
      %2011 = vmatprep.subr.bf16.mxu0 0
      %2012 = vmatpush1.bf16.msra.mxu0 0
      %2013 = vmatprep.subr.bf16.mxu0 0
      %2014 = vmatpush1.bf16.msra.mxu0 0
      %2015 = vmatprep.subr.bf16.mxu0 0
      %2016 = vmatpush1.bf16.msra.mxu0 0
      %2017 = vmatprep.subr.bf16.mxu0 0
      %2018 = vmatpush1.bf16.msra.mxu0 0
      %2019 = vmatprep.subr.bf16.mxu0 0
      %2020 = vmatpush1.bf16.msra.mxu0 0
      %2021 = vmatprep.subr.bf16.mxu0 0
      %2022 = vmatpush1.bf16.msra.mxu0 0
      %2023 = vmatprep.subr.bf16.mxu0 0
      %2024 = vmatpush1.bf16.msra.mxu0 0
      %2025 = vmatprep.subr.bf16.mxu0 0
      %2026 = vmatpush1.bf16.msra.mxu0 0
      %2027 = vmatprep.subr.bf16.mxu0 0
      %2028 = vmatpush1.bf16.msra.mxu0 0
      %2029 = vmatprep.subr.bf16.mxu0 0
      %2030 = vmatpush1.bf16.msra.mxu0 0
      %2031 = vmatprep.mubr.bf16.mxu0 0
      %2032 = vmatmul.mubr.bf16.gmra.mrb[0].mxu0 %v1950
      %v2033 = vpop.f32.mrb[0].mxu0
      %v2034 = vadd.f32 %v1987, %v2033
      %v2035 = vpop.f32.mrb[0].mxu0
      %v2036 = vpop.f32.mrb[0].mxu0
      %v2037 = vadd.f32 %v1990, %v2036
      %v2038 = vpop.f32.mrb[0].mxu0
      %2039 = vdwg.mxu0
      %v2041 = vsel %vm1204, %v1936, 0
      %2043 = vmatprep.subr.bf16.mxu0 0
      %2044 = vmatpush1.bf16.msra.mxu0 %v1997
      %2045 = vmatprep.subr.bf16.mxu0 0
      %2046 = vmatpush1.bf16.msra.mxu0 0
      %2047 = vmatprep.subr.bf16.mxu0 0
      %2048 = vmatpush1.bf16.msra.mxu0 0
      %2049 = vmatprep.subr.bf16.mxu0 0
      %2050 = vmatpush1.bf16.msra.mxu0 0
      %2051 = vmatprep.subr.bf16.mxu0 0
      %2052 = vmatpush1.bf16.msra.mxu0 0
      %2053 = vmatprep.subr.bf16.mxu0 0
      %2054 = vmatpush1.bf16.msra.mxu0 0
      %2055 = vmatprep.subr.bf16.mxu0 0
      %2056 = vmatpush1.bf16.msra.mxu0 0
      %2057 = vmatprep.subr.bf16.mxu0 0
      %2058 = vmatpush1.bf16.msra.mxu0 0
      %2059 = vmatprep.subr.bf16.mxu0 0
      %2060 = vmatpush1.bf16.msra.mxu0 0
      %2061 = vmatprep.subr.bf16.mxu0 0
      %2062 = vmatpush1.bf16.msra.mxu0 0
      %2063 = vmatprep.subr.bf16.mxu0 0
      %2064 = vmatpush1.bf16.msra.mxu0 0
      %2065 = vmatprep.subr.bf16.mxu0 0
      %2066 = vmatpush1.bf16.msra.mxu0 0
      %2067 = vmatprep.subr.bf16.mxu0 0
      %2068 = vmatpush1.bf16.msra.mxu0 0
      %2069 = vmatprep.subr.bf16.mxu0 0
      %2070 = vmatpush1.bf16.msra.mxu0 0
      %2071 = vmatprep.subr.bf16.mxu0 0
      %2072 = vmatpush1.bf16.msra.mxu0 0
      %2073 = vmatprep.subr.bf16.mxu0 0
      %2074 = vmatpush1.bf16.msra.mxu0 0
      %2075 = vmatprep.mubr.bf16.mxu0 0
      %2076 = vmatmul.mubr.bf16.gmra.mrb[0].mxu0 %v2041
      %v2077 = vpop.f32.mrb[0].mxu0
      %v2078 = vadd.f32 0.0, %v2077
      %v2079 = vpop.f32.mrb[0].mxu0
      %v2080 = vpop.f32.mrb[0].mxu0
      %v2081 = vadd.f32 0.0, %v2080
      %v2082 = vpop.f32.mrb[0].mxu0
      %2083 = vdwg.mxu0
      %v2084 = vadd.f32 %v2034, %v2078
      %v2085 = vadd.f32 %v2037, %v2081
      %v2086 = vadd.f32 %v1929, %v2084
      %v2087 = vadd.f32 %v1930, %v2085
      %v2088 = vrot.slane %v1761, 1
      %v2089 = vrot.slane %v1762, 1
      %v2090 = vsel %vm1035, %v2088, %v2089
      %v2091 = vsel %vm1035, %v2089, %v2088
      %v2092 = vpack.c.bf16 %v2091, %v2090
      %v2093 = vunpack.c.l.bf16 %v2092
      %v2094 = vunpack.c.h.bf16 %v2092
      %v2095 = vsub.f32 %v2090, %v2093
      %v2096 = vsub.f32 %v2091, %v2094
      %v2097 = vpack.c.bf16 %v2096, %v2095
      %s2098 = scalar_lea.vmem %s12, 16
      %v2099 = vld [vmem:[%s2098] sm:$0xf]
      %v2100 = vld [vmem:[%s2098 + $0x4] sm:$0xf]
      %s2101 = scalar_lea.vmem %s13, 16
      %v2102 = vld [vmem:[%s2101] sm:$0xf]
      %v2103 = vld [vmem:[%s2101 + $0x4] sm:$0xf]
      %v2106 = vunpack.c.l.b16 %v2102
      %v2107 = vunpack.c.l.b16 %v2103
      %v2108 = vpack.c.b16 %v2107, %v2106
      %v2111 = vsel %vm1204, %v2092, 0
      %2113 = vmatprep.subr.bf16.mxu0 0
      %2114 = vmatpush1.bf16.msra.mxu0 %v2108
      %2115 = vmatprep.subr.bf16.mxu0 0
      %2116 = vmatpush1.bf16.msra.mxu0 0
      %2117 = vmatprep.subr.bf16.mxu0 0
      %2118 = vmatpush1.bf16.msra.mxu0 0
      %2119 = vmatprep.subr.bf16.mxu0 0
      %2120 = vmatpush1.bf16.msra.mxu0 0
      %2121 = vmatprep.subr.bf16.mxu0 0
      %2122 = vmatpush1.bf16.msra.mxu0 0
      %2123 = vmatprep.subr.bf16.mxu0 0
      %2124 = vmatpush1.bf16.msra.mxu0 0
      %2125 = vmatprep.subr.bf16.mxu0 0
      %2126 = vmatpush1.bf16.msra.mxu0 0
      %2127 = vmatprep.subr.bf16.mxu0 0
      %2128 = vmatpush1.bf16.msra.mxu0 0
      %2129 = vmatprep.subr.bf16.mxu0 0
      %2130 = vmatpush1.bf16.msra.mxu0 0
      %2131 = vmatprep.subr.bf16.mxu0 0
      %2132 = vmatpush1.bf16.msra.mxu0 0
      %2133 = vmatprep.subr.bf16.mxu0 0
      %2134 = vmatpush1.bf16.msra.mxu0 0
      %2135 = vmatprep.subr.bf16.mxu0 0
      %2136 = vmatpush1.bf16.msra.mxu0 0
      %2137 = vmatprep.subr.bf16.mxu0 0
      %2138 = vmatpush1.bf16.msra.mxu0 0
      %2139 = vmatprep.subr.bf16.mxu0 0
      %2140 = vmatpush1.bf16.msra.mxu0 0
      %2141 = vmatprep.subr.bf16.mxu0 0
      %2142 = vmatpush1.bf16.msra.mxu0 0
      %2143 = vmatprep.subr.bf16.mxu0 0
      %2144 = vmatpush1.bf16.msra.mxu0 0
      %2145 = vmatprep.mubr.bf16.mxu0 0
      %2146 = vmatmul.mubr.bf16.gmra.mrb[0].mxu0 %v2111
      %v2147 = vpop.f32.mrb[0].mxu0
      %v2148 = vadd.f32 0.0, %v2147
      %v2149 = vpop.f32.mrb[0].mxu0
      %v2150 = vpop.f32.mrb[0].mxu0
      %v2151 = vadd.f32 0.0, %v2150
      %v2152 = vpop.f32.mrb[0].mxu0
      %2153 = vdwg.mxu0
      %v2156 = vunpack.c.l.b16 %v2099
      %v2157 = vunpack.c.l.b16 %v2100
      %v2158 = vpack.c.b16 %v2157, %v2156
      %2160 = vmatprep.subr.bf16.mxu0 0
      %2161 = vmatpush1.bf16.msra.mxu0 %v2158
      %2162 = vmatprep.subr.bf16.mxu0 0
      %2163 = vmatpush1.bf16.msra.mxu0 0
      %2164 = vmatprep.subr.bf16.mxu0 0
      %2165 = vmatpush1.bf16.msra.mxu0 0
      %2166 = vmatprep.subr.bf16.mxu0 0
      %2167 = vmatpush1.bf16.msra.mxu0 0
      %2168 = vmatprep.subr.bf16.mxu0 0
      %2169 = vmatpush1.bf16.msra.mxu0 0
      %2170 = vmatprep.subr.bf16.mxu0 0
      %2171 = vmatpush1.bf16.msra.mxu0 0
      %2172 = vmatprep.subr.bf16.mxu0 0
      %2173 = vmatpush1.bf16.msra.mxu0 0
      %2174 = vmatprep.subr.bf16.mxu0 0
      %2175 = vmatpush1.bf16.msra.mxu0 0
      %2176 = vmatprep.subr.bf16.mxu0 0
      %2177 = vmatpush1.bf16.msra.mxu0 0
      %2178 = vmatprep.subr.bf16.mxu0 0
      %2179 = vmatpush1.bf16.msra.mxu0 0
      %2180 = vmatprep.subr.bf16.mxu0 0
      %2181 = vmatpush1.bf16.msra.mxu0 0
      %2182 = vmatprep.subr.bf16.mxu0 0
      %2183 = vmatpush1.bf16.msra.mxu0 0
      %2184 = vmatprep.subr.bf16.mxu0 0
      %2185 = vmatpush1.bf16.msra.mxu0 0
      %2186 = vmatprep.subr.bf16.mxu0 0
      %2187 = vmatpush1.bf16.msra.mxu0 0
      %2188 = vmatprep.subr.bf16.mxu0 0
      %2189 = vmatpush1.bf16.msra.mxu0 0
      %2190 = vmatprep.subr.bf16.mxu0 0
      %2191 = vmatpush1.bf16.msra.mxu0 0
      %2192 = vmatprep.mubr.bf16.mxu0 0
      %2193 = vmatmul.mubr.bf16.gmra.mrb[0].mxu0 %v2111
      %v2194 = vpop.f32.mrb[0].mxu0
      %v2195 = vadd.f32 %v2148, %v2194
      %v2196 = vpop.f32.mrb[0].mxu0
      %v2197 = vpop.f32.mrb[0].mxu0
      %v2198 = vadd.f32 %v2151, %v2197
      %v2199 = vpop.f32.mrb[0].mxu0
      %2200 = vdwg.mxu0
      %v2202 = vsel %vm1204, %v2097, 0
      %2204 = vmatprep.subr.bf16.mxu0 0
      %2205 = vmatpush1.bf16.msra.mxu0 %v2158
      %2206 = vmatprep.subr.bf16.mxu0 0
      %2207 = vmatpush1.bf16.msra.mxu0 0
      %2208 = vmatprep.subr.bf16.mxu0 0
      %2209 = vmatpush1.bf16.msra.mxu0 0
      %2210 = vmatprep.subr.bf16.mxu0 0
      %2211 = vmatpush1.bf16.msra.mxu0 0
      %2212 = vmatprep.subr.bf16.mxu0 0
      %2213 = vmatpush1.bf16.msra.mxu0 0
      %2214 = vmatprep.subr.bf16.mxu0 0
      %2215 = vmatpush1.bf16.msra.mxu0 0
      %2216 = vmatprep.subr.bf16.mxu0 0
      %2217 = vmatpush1.bf16.msra.mxu0 0
      %2218 = vmatprep.subr.bf16.mxu0 0
      %2219 = vmatpush1.bf16.msra.mxu0 0
      %2220 = vmatprep.subr.bf16.mxu0 0
      %2221 = vmatpush1.bf16.msra.mxu0 0
      %2222 = vmatprep.subr.bf16.mxu0 0
      %2223 = vmatpush1.bf16.msra.mxu0 0
      %2224 = vmatprep.subr.bf16.mxu0 0
      %2225 = vmatpush1.bf16.msra.mxu0 0
      %2226 = vmatprep.subr.bf16.mxu0 0
      %2227 = vmatpush1.bf16.msra.mxu0 0
      %2228 = vmatprep.subr.bf16.mxu0 0
      %2229 = vmatpush1.bf16.msra.mxu0 0
      %2230 = vmatprep.subr.bf16.mxu0 0
      %2231 = vmatpush1.bf16.msra.mxu0 0
      %2232 = vmatprep.subr.bf16.mxu0 0
      %2233 = vmatpush1.bf16.msra.mxu0 0
      %2234 = vmatprep.subr.bf16.mxu0 0
      %2235 = vmatpush1.bf16.msra.mxu0 0
      %2236 = vmatprep.mubr.bf16.mxu0 0
      %2237 = vmatmul.mubr.bf16.gmra.mrb[0].mxu0 %v2202
      %v2238 = vpop.f32.mrb[0].mxu0
      %v2239 = vadd.f32 0.0, %v2238
      %v2240 = vpop.f32.mrb[0].mxu0
      %v2241 = vpop.f32.mrb[0].mxu0
      %v2242 = vadd.f32 0.0, %v2241
      %v2243 = vpop.f32.mrb[0].mxu0
      %2244 = vdwg.mxu0
      %v2245 = vadd.f32 %v2195, %v2239
      %v2246 = vadd.f32 %v2198, %v2242
      %v2247 = vmul.f32 %v2245, %v1191
      %v2248 = vmul.f32 %v2246, %v1196
      %v2249 = vadd.f32 %v2086, %v2247
      %v2250 = vadd.f32 %v2087, %v2248
      %v2251 = vld [vmem:[%s15] sm:$0x1]
      %v2252 = vld [vmem:[%s16] sm:$0x1]
      %v2253 = vsel %vm1204, %v2249, 0.0
      %v2254 = vsel %vm1204, %v2250, 0.0
      %v2255 = vadd.f32 %v2253, %v2254
      %v2256 = vrot.slane %v2255, 4
      %v2257 = vadd.f32 %v2255, %v2256
      %v2258 = vrot.slane %v2257, 2
      %v2259 = vadd.f32 %v2257, %v2258
      %v2260 = vrot.slane %v2259, 1
      %v2261 = vadd.f32 %v2259, %v2260
      %v2263 = vsel %vm1204, %v2261, 0
      %2265 = vmatprep.subr.mxu0 0.0
      %2266 = vmatpush1.msra.mxu0 %v702
      %2267 = vmatprep.subr.mxu0 0.0
      %2268 = vmatpush1.msra.mxu0 %v703
      %2269 = vmatprep.subr.mxu0 0.0
      %2270 = vmatpush1.msra.mxu0 0.0
      %2271 = vmatprep.subr.mxu0 0.0
      %2272 = vmatpush1.msra.mxu0 0.0
      %2273 = vmatprep.subr.mxu0 0.0
      %2274 = vmatpush1.msra.mxu0 0.0
      %2275 = vmatprep.subr.mxu0 0.0
      %2276 = vmatpush1.msra.mxu0 0.0
      %2277 = vmatprep.subr.mxu0 0.0
      %2278 = vmatpush1.msra.mxu0 0.0
      %2279 = vmatprep.subr.mxu0 0.0
      %2280 = vmatpush1.msra.mxu0 0.0
      %2281 = vmatprep.subr.mxu0 0.0
      %2282 = vmatpush1.msra.mxu0 0.0
      %2283 = vmatprep.subr.mxu0 0.0
      %2284 = vmatpush1.msra.mxu0 0.0
      %2285 = vmatprep.subr.mxu0 0.0
      %2286 = vmatpush1.msra.mxu0 0.0
      %2287 = vmatprep.subr.mxu0 0.0
      %2288 = vmatpush1.msra.mxu0 0.0
      %2289 = vmatprep.subr.mxu0 0.0
      %2290 = vmatpush1.msra.mxu0 0.0
      %2291 = vmatprep.subr.mxu0 0.0
      %2292 = vmatpush1.msra.mxu0 0.0
      %2293 = vmatprep.subr.mxu0 0.0
      %2294 = vmatpush1.msra.mxu0 0.0
      %2295 = vmatprep.subr.mxu0 0.0
      %2296 = vmatpush1.msra.mxu0 0.0
      %2297 = vmatprep.subr.mxu0 0.0
      %2298 = vmatpush1.msra.mxu0 0.0
      %2299 = vmatprep.subr.mxu0 0.0
      %2300 = vmatpush1.msra.mxu0 0.0
      %2301 = vmatprep.subr.mxu0 0.0
      %2302 = vmatpush1.msra.mxu0 0.0
      %2303 = vmatprep.subr.mxu0 0.0
      %2304 = vmatpush1.msra.mxu0 0.0
      %2305 = vmatprep.subr.mxu0 0.0
      %2306 = vmatpush1.msra.mxu0 0.0
      %2307 = vmatprep.subr.mxu0 0.0
      %2308 = vmatpush1.msra.mxu0 0.0
      %2309 = vmatprep.subr.mxu0 0.0
      %2310 = vmatpush1.msra.mxu0 0.0
      %2311 = vmatprep.subr.mxu0 0.0
      %2312 = vmatpush1.msra.mxu0 0.0
      %2313 = vmatprep.subr.mxu0 0.0
      %2314 = vmatpush1.msra.mxu0 0.0
      %2315 = vmatprep.subr.mxu0 0.0
      %2316 = vmatpush1.msra.mxu0 0.0
      %2317 = vmatprep.subr.mxu0 0.0
      %2318 = vmatpush1.msra.mxu0 0.0
      %2319 = vmatprep.subr.mxu0 0.0
      %2320 = vmatpush1.msra.mxu0 0.0
      %2321 = vmatprep.subr.mxu0 0.0
      %2322 = vmatpush1.msra.mxu0 0.0
      %2323 = vmatprep.subr.mxu0 0.0
      %2324 = vmatpush1.msra.mxu0 0.0
      %2325 = vmatprep.subr.mxu0 0.0
      %2326 = vmatpush1.msra.mxu0 0.0
      %2327 = vmatprep.subr.mxu0 0.0
      %2328 = vmatpush1.msra.mxu0 0.0
      %2329 = vmatprep.mubr.f32.mxu0 0.0
      %2330 = vmatmul.mubr.f32.gmra.mrb[0].mxu0 %v2263
      %v2331 = vpop.f32.mrb[0].mxu0
      %v2332 = vadd.f32 0.0, %v2331
      %v2333 = vpop.f32.mrb[0].mxu0
      %2334 = vdwg.mxu0
      %v2335 = vmul.f32 %v2332, 0.03125
      %v2337 = vsel %vm1288, %v2335, 0
      %2339 = vmatprep.subr.mxu0 0.0
      %2340 = vmatpush1.msra.mxu0 %v704
      %2341 = vmatprep.subr.mxu0 0.0
      %2342 = vmatpush1.msra.mxu0 0.0
      %2343 = vmatprep.subr.mxu0 0.0
      %2344 = vmatpush1.msra.mxu0 0.0
      %2345 = vmatprep.subr.mxu0 0.0
      %2346 = vmatpush1.msra.mxu0 0.0
      %2347 = vmatprep.subr.mxu0 0.0
      %2348 = vmatpush1.msra.mxu0 0.0
      %2349 = vmatprep.subr.mxu0 0.0
      %2350 = vmatpush1.msra.mxu0 0.0
      %2351 = vmatprep.subr.mxu0 0.0
      %2352 = vmatpush1.msra.mxu0 0.0
      %2353 = vmatprep.subr.mxu0 0.0
      %2354 = vmatpush1.msra.mxu0 0.0
      %2355 = vmatprep.subr.mxu0 0.0
      %2356 = vmatpush1.msra.mxu0 0.0
      %2357 = vmatprep.subr.mxu0 0.0
      %2358 = vmatpush1.msra.mxu0 0.0
      %2359 = vmatprep.subr.mxu0 0.0
      %2360 = vmatpush1.msra.mxu0 0.0
      %2361 = vmatprep.subr.mxu0 0.0
      %2362 = vmatpush1.msra.mxu0 0.0
      %2363 = vmatprep.subr.mxu0 0.0
      %2364 = vmatpush1.msra.mxu0 0.0
      %2365 = vmatprep.subr.mxu0 0.0
      %2366 = vmatpush1.msra.mxu0 0.0
      %2367 = vmatprep.subr.mxu0 0.0
      %2368 = vmatpush1.msra.mxu0 0.0
      %2369 = vmatprep.subr.mxu0 0.0
      %2370 = vmatpush1.msra.mxu0 0.0
      %2371 = vmatprep.subr.mxu0 0.0
      %2372 = vmatpush1.msra.mxu0 0.0
      %2373 = vmatprep.subr.mxu0 0.0
      %2374 = vmatpush1.msra.mxu0 0.0
      %2375 = vmatprep.subr.mxu0 0.0
      %2376 = vmatpush1.msra.mxu0 0.0
      %2377 = vmatprep.subr.mxu0 0.0
      %2378 = vmatpush1.msra.mxu0 0.0
      %2379 = vmatprep.subr.mxu0 0.0
      %2380 = vmatpush1.msra.mxu0 0.0
      %2381 = vmatprep.subr.mxu0 0.0
      %2382 = vmatpush1.msra.mxu0 0.0
      %2383 = vmatprep.subr.mxu0 0.0
      %2384 = vmatpush1.msra.mxu0 0.0
      %2385 = vmatprep.subr.mxu0 0.0
      %2386 = vmatpush1.msra.mxu0 0.0
      %2387 = vmatprep.subr.mxu0 0.0
      %2388 = vmatpush1.msra.mxu0 0.0
      %2389 = vmatprep.subr.mxu0 0.0
      %2390 = vmatpush1.msra.mxu0 0.0
      %2391 = vmatprep.subr.mxu0 0.0
      %2392 = vmatpush1.msra.mxu0 0.0
      %2393 = vmatprep.subr.mxu0 0.0
      %2394 = vmatpush1.msra.mxu0 0.0
      %2395 = vmatprep.subr.mxu0 0.0
      %2396 = vmatpush1.msra.mxu0 0.0
      %2397 = vmatprep.subr.mxu0 0.0
      %2398 = vmatpush1.msra.mxu0 0.0
      %2399 = vmatprep.subr.mxu0 0.0
      %2400 = vmatpush1.msra.mxu0 0.0
      %2401 = vmatprep.subr.mxu0 0.0
      %2402 = vmatpush1.msra.mxu0 0.0
      %2403 = vmatprep.mubr.f32.mxu0 0.0
      %2404 = vmatmul.mubr.f32.gmra.mrb[0].mxu0 %v2337
      %v2405 = vpop.f32.mrb[0].mxu0
      %v2406 = vadd.f32 0.0, %v2405
      %v2407 = vpop.f32.mrb[0].mxu0
      %2408 = vdwg.mxu0
      %v2409 = vlaneseq
      %v2410 = vshrl.u32 %v2409, 7
      %v2411 = vsub.s32 0, %v2410
      %v2412 = vrot.slane %v2406, %v2411
      %v2413 = vsub.f32 %v2249, %v2412
      %v2414 = vsub.f32 %v2250, %v2412
      %v2415 = vmul.f32 %v2413, %v2413
      %v2416 = vmul.f32 %v2414, %v2414
      %v2417 = vsel %vm1204, %v2415, 0.0
      %v2418 = vsel %vm1204, %v2416, 0.0
      %v2419 = vadd.f32 %v2417, %v2418
      %v2420 = vrot.slane %v2419, 4
      %v2421 = vadd.f32 %v2419, %v2420
      %v2422 = vrot.slane %v2421, 2
      %v2423 = vadd.f32 %v2421, %v2422
      %v2424 = vrot.slane %v2423, 1
      %v2425 = vadd.f32 %v2423, %v2424
      %v2427 = vsel %vm1204, %v2425, 0
      %2429 = vmatprep.subr.mxu0 0.0
      %2430 = vmatpush1.msra.mxu0 %v702
      %2431 = vmatprep.subr.mxu0 0.0
      %2432 = vmatpush1.msra.mxu0 %v703
      %2433 = vmatprep.subr.mxu0 0.0
      %2434 = vmatpush1.msra.mxu0 0.0
      %2435 = vmatprep.subr.mxu0 0.0
      %2436 = vmatpush1.msra.mxu0 0.0
      %2437 = vmatprep.subr.mxu0 0.0
      %2438 = vmatpush1.msra.mxu0 0.0
      %2439 = vmatprep.subr.mxu0 0.0
      %2440 = vmatpush1.msra.mxu0 0.0
      %2441 = vmatprep.subr.mxu0 0.0
      %2442 = vmatpush1.msra.mxu0 0.0
      %2443 = vmatprep.subr.mxu0 0.0
      %2444 = vmatpush1.msra.mxu0 0.0
      %2445 = vmatprep.subr.mxu0 0.0
      %2446 = vmatpush1.msra.mxu0 0.0
      %2447 = vmatprep.subr.mxu0 0.0
      %2448 = vmatpush1.msra.mxu0 0.0
      %2449 = vmatprep.subr.mxu0 0.0
      %2450 = vmatpush1.msra.mxu0 0.0
      %2451 = vmatprep.subr.mxu0 0.0
      %2452 = vmatpush1.msra.mxu0 0.0
      %2453 = vmatprep.subr.mxu0 0.0
      %2454 = vmatpush1.msra.mxu0 0.0
      %2455 = vmatprep.subr.mxu0 0.0
      %2456 = vmatpush1.msra.mxu0 0.0
      %2457 = vmatprep.subr.mxu0 0.0
      %2458 = vmatpush1.msra.mxu0 0.0
      %2459 = vmatprep.subr.mxu0 0.0
      %2460 = vmatpush1.msra.mxu0 0.0
      %2461 = vmatprep.subr.mxu0 0.0
      %2462 = vmatpush1.msra.mxu0 0.0
      %2463 = vmatprep.subr.mxu0 0.0
      %2464 = vmatpush1.msra.mxu0 0.0
      %2465 = vmatprep.subr.mxu0 0.0
      %2466 = vmatpush1.msra.mxu0 0.0
      %2467 = vmatprep.subr.mxu0 0.0
      %2468 = vmatpush1.msra.mxu0 0.0
      %2469 = vmatprep.subr.mxu0 0.0
      %2470 = vmatpush1.msra.mxu0 0.0
      %2471 = vmatprep.subr.mxu0 0.0
      %2472 = vmatpush1.msra.mxu0 0.0
      %2473 = vmatprep.subr.mxu0 0.0
      %2474 = vmatpush1.msra.mxu0 0.0
      %2475 = vmatprep.subr.mxu0 0.0
      %2476 = vmatpush1.msra.mxu0 0.0
      %2477 = vmatprep.subr.mxu0 0.0
      %2478 = vmatpush1.msra.mxu0 0.0
      %2479 = vmatprep.subr.mxu0 0.0
      %2480 = vmatpush1.msra.mxu0 0.0
      %2481 = vmatprep.subr.mxu0 0.0
      %2482 = vmatpush1.msra.mxu0 0.0
      %2483 = vmatprep.subr.mxu0 0.0
      %2484 = vmatpush1.msra.mxu0 0.0
      %2485 = vmatprep.subr.mxu0 0.0
      %2486 = vmatpush1.msra.mxu0 0.0
      %2487 = vmatprep.subr.mxu0 0.0
      %2488 = vmatpush1.msra.mxu0 0.0
      %2489 = vmatprep.subr.mxu0 0.0
      %2490 = vmatpush1.msra.mxu0 0.0
      %2491 = vmatprep.subr.mxu0 0.0
      %2492 = vmatpush1.msra.mxu0 0.0
      %2493 = vmatprep.mubr.f32.mxu0 0.0
      %2494 = vmatmul.mubr.f32.gmra.mrb[0].mxu0 %v2427
      %v2495 = vpop.f32.mrb[0].mxu0
      %v2496 = vadd.f32 0.0, %v2495
      %v2497 = vpop.f32.mrb[0].mxu0
      %2498 = vdwg.mxu0
      %v2499 = vmul.f32 %v2496, 0.03125
      %v2501 = vsel %vm1288, %v2499, 0
      %2503 = vmatprep.subr.mxu0 0.0
      %2504 = vmatpush1.msra.mxu0 %v704
      %2505 = vmatprep.subr.mxu0 0.0
      %2506 = vmatpush1.msra.mxu0 0.0
      %2507 = vmatprep.subr.mxu0 0.0
      %2508 = vmatpush1.msra.mxu0 0.0
      %2509 = vmatprep.subr.mxu0 0.0
      %2510 = vmatpush1.msra.mxu0 0.0
      %2511 = vmatprep.subr.mxu0 0.0
      %2512 = vmatpush1.msra.mxu0 0.0
      %2513 = vmatprep.subr.mxu0 0.0
      %2514 = vmatpush1.msra.mxu0 0.0
      %2515 = vmatprep.subr.mxu0 0.0
      %2516 = vmatpush1.msra.mxu0 0.0
      %2517 = vmatprep.subr.mxu0 0.0
      %2518 = vmatpush1.msra.mxu0 0.0
      %2519 = vmatprep.subr.mxu0 0.0
      %2520 = vmatpush1.msra.mxu0 0.0
      %2521 = vmatprep.subr.mxu0 0.0
      %2522 = vmatpush1.msra.mxu0 0.0
      %2523 = vmatprep.subr.mxu0 0.0
      %2524 = vmatpush1.msra.mxu0 0.0
      %2525 = vmatprep.subr.mxu0 0.0
      %2526 = vmatpush1.msra.mxu0 0.0
      %2527 = vmatprep.subr.mxu0 0.0
      %2528 = vmatpush1.msra.mxu0 0.0
      %2529 = vmatprep.subr.mxu0 0.0
      %2530 = vmatpush1.msra.mxu0 0.0
      %2531 = vmatprep.subr.mxu0 0.0
      %2532 = vmatpush1.msra.mxu0 0.0
      %2533 = vmatprep.subr.mxu0 0.0
      %2534 = vmatpush1.msra.mxu0 0.0
      %2535 = vmatprep.subr.mxu0 0.0
      %2536 = vmatpush1.msra.mxu0 0.0
      %2537 = vmatprep.subr.mxu0 0.0
      %2538 = vmatpush1.msra.mxu0 0.0
      %2539 = vmatprep.subr.mxu0 0.0
      %2540 = vmatpush1.msra.mxu0 0.0
      %2541 = vmatprep.subr.mxu0 0.0
      %2542 = vmatpush1.msra.mxu0 0.0
      %2543 = vmatprep.subr.mxu0 0.0
      %2544 = vmatpush1.msra.mxu0 0.0
      %2545 = vmatprep.subr.mxu0 0.0
      %2546 = vmatpush1.msra.mxu0 0.0
      %2547 = vmatprep.subr.mxu0 0.0
      %2548 = vmatpush1.msra.mxu0 0.0
      %2549 = vmatprep.subr.mxu0 0.0
      %2550 = vmatpush1.msra.mxu0 0.0
      %2551 = vmatprep.subr.mxu0 0.0
      %2552 = vmatpush1.msra.mxu0 0.0
      %2553 = vmatprep.subr.mxu0 0.0
      %2554 = vmatpush1.msra.mxu0 0.0
      %2555 = vmatprep.subr.mxu0 0.0
      %2556 = vmatpush1.msra.mxu0 0.0
      %2557 = vmatprep.subr.mxu0 0.0
      %2558 = vmatpush1.msra.mxu0 0.0
      %2559 = vmatprep.subr.mxu0 0.0
      %2560 = vmatpush1.msra.mxu0 0.0
      %2561 = vmatprep.subr.mxu0 0.0
      %2562 = vmatpush1.msra.mxu0 0.0
      %2563 = vmatprep.subr.mxu0 0.0
      %2564 = vmatpush1.msra.mxu0 0.0
      %2565 = vmatprep.subr.mxu0 0.0
      %2566 = vmatpush1.msra.mxu0 0.0
      %2567 = vmatprep.mubr.f32.mxu0 0.0
      %2568 = vmatmul.mubr.f32.gmra.mrb[0].mxu0 %v2501
      %v2569 = vpop.f32.mrb[0].mxu0
      %v2570 = vadd.f32 1e-05, %v2569
      %v2571 = vpop.f32.mrb[0].mxu0
      %2572 = vdwg.mxu0
      %v2573 = vrsqrt.pop %v2570
      %v2574 = vlaneseq
      %v2575 = vshrl.u32 %v2574, 7
      %v2576 = vsub.s32 0, %v2575
      %v2577 = vrot.slane %v2573, %v2576
      %v2578 = vmul.f32 %v2413, %v2577
      %v2579 = vmul.f32 %v2414, %v2577
      %v2581 = vlaneseq
      %v2582 = vshrl.u32 %v2581, 7
      %v2583 = vsub.s32 0, %v2582
      %v2584 = vrot.slane %v2251, %v2583
      %v2586 = vmul.f32 %v2578, %v2584
      %v2587 = vmul.f32 %v2579, %v2584
      %v2589 = vlaneseq
      %v2590 = vshrl.u32 %v2589, 7
      %v2591 = vsub.s32 0, %v2590
      %v2592 = vrot.slane %v2252, %v2591
      %v2594 = vadd.f32 %v2586, %v2592
      %v2595 = vadd.f32 %v2587, %v2592
      %v2596 = vand.u32 2147483647, %v2594
      %v2597 = vand.u32 2147483647, %v2595
      %v2598 = vsub.f32 0.0, %v2596
      %v2599 = vsub.f32 0.0, %v2597
      %v2600 = vmul.f32 %v2598, 1.442695
      %v2601 = vpow.pop %v2600
      %v2602 = vmul.f32 %v2599, 1.442695
      %v2603 = vpow.pop %v2602
      %v2604 = vmul.f32 %v2601, %v2601
      %v2605 = vmul.f32 %v2603, %v2603
      %vm2606 = vcmp.ge.f32.partialorder %v2594, 0.0
      %vm2607 = vcmp.ge.f32.partialorder %v2595, 0.0
      %v2608 = vmul.f32 %v2601, 2.0
      %v2609 = vmul.f32 %v2603, 2.0
      %v2610 = vadd.f32 %v2608, 1.0
      %v2611 = vadd.f32 %v2609, 1.0
      %v2612 = vadd.f32 %v2604, %v2608
      %v2613 = vadd.f32 %v2605, %v2609
      %v2614 = vsel %vm2606, %v2610, %v2612
      %v2615 = vsel %vm2607, %v2611, %v2613
      %v2616 = vmul.f32 %v2604, 2.0
      %v2617 = vmul.f32 %v2605, 2.0
      %v2618 = vadd.f32 %v2616, %v2608
      %v2619 = vadd.f32 %v2617, %v2609
      %v2620 = vadd.f32 %v2618, 1.0
      %v2621 = vadd.f32 %v2619, 1.0
      %v2622 = vadd.f32 %v2612, 2.0
      %v2623 = vadd.f32 %v2613, 2.0
      %v2624 = vsel %vm2606, %v2620, %v2622
      %v2625 = vsel %vm2607, %v2621, %v2623
      %v2626 = vrcp.pop %v2624
      %v2627 = vmul.f32 %v2614, %v2626
      %v2628 = vrcp.pop %v2625
      %v2629 = vmul.f32 %v2615, %v2628
      %v2630 = vmul.f32 %v2594, %v2627
      %v2631 = vmul.f32 %v2595, %v2629
      %v2632 = vld [vmem:[%s17] sm:$0x3]
      %v2633 = vld [vmem:[%s18] sm:$0x3]
      %v2635 = vsel %vm727, %v2633, 0
      %2637 = vmatprep.subr.bf16.mxu0 0
      %2638 = vmatpush1.bf16.msra.mxu0 %v2635
      %2639 = vmatprep.subr.bf16.mxu0 0
      %2640 = vmatpush1.bf16.msra.mxu0 0
      %2641 = vmatprep.subr.bf16.mxu0 0
      %2642 = vmatpush1.bf16.msra.mxu0 0
      %2643 = vmatprep.subr.bf16.mxu0 0
      %2644 = vmatpush1.bf16.msra.mxu0 0
      %2645 = vmatprep.subr.bf16.mxu0 0
      %2646 = vmatpush1.bf16.msra.mxu0 0
      %2647 = vmatprep.subr.bf16.mxu0 0
      %2648 = vmatpush1.bf16.msra.mxu0 0
      %2649 = vmatprep.subr.bf16.mxu0 0
      %2650 = vmatpush1.bf16.msra.mxu0 0
      %2651 = vmatprep.subr.bf16.mxu0 0
      %2652 = vmatpush1.bf16.msra.mxu0 0
      %2653 = vmatprep.subr.bf16.mxu0 0
      %2654 = vmatpush1.bf16.msra.mxu0 0
      %2655 = vmatprep.subr.bf16.mxu0 0
      %2656 = vmatpush1.bf16.msra.mxu0 0
      %2657 = vmatprep.subr.bf16.mxu0 0
      %2658 = vmatpush1.bf16.msra.mxu0 0
      %2659 = vmatprep.subr.bf16.mxu0 0
      %2660 = vmatpush1.bf16.msra.mxu0 0
      %2661 = vmatprep.subr.bf16.mxu0 0
      %2662 = vmatpush1.bf16.msra.mxu0 0
      %2663 = vmatprep.subr.bf16.mxu0 0
      %2664 = vmatpush1.bf16.msra.mxu0 0
      %2665 = vmatprep.subr.bf16.mxu0 0
      %2666 = vmatpush1.bf16.msra.mxu0 0
      %2667 = vmatprep.subr.bf16.mxu0 0
      %2668 = vmatpush1.bf16.msra.mxu0 0
      %2669 = vmatprep.mubr.bf16.mxu0 0
      %2670 = vmatmul.mubr.bf16.gmra.mrb[0].mxu0 %v895
      %v2671 = vpop.f32.mrb[0].mxu0
      %v2672 = vadd.f32 0.0, %v2671
      %v2673 = vpop.f32.mrb[0].mxu0
      %v2674 = vpop.f32.mrb[0].mxu0
      %v2675 = vadd.f32 0.0, %v2674
      %v2676 = vpop.f32.mrb[0].mxu0
      %2677 = vdwg.mxu0
      %v2679 = vsel %vm727, %v2632, 0
      %2681 = vmatprep.subr.bf16.mxu0 0
      %2682 = vmatpush1.bf16.msra.mxu0 %v2679
      %2683 = vmatprep.subr.bf16.mxu0 0
      %2684 = vmatpush1.bf16.msra.mxu0 0
      %2685 = vmatprep.subr.bf16.mxu0 0
      %2686 = vmatpush1.bf16.msra.mxu0 0
      %2687 = vmatprep.subr.bf16.mxu0 0
      %2688 = vmatpush1.bf16.msra.mxu0 0
      %2689 = vmatprep.subr.bf16.mxu0 0
      %2690 = vmatpush1.bf16.msra.mxu0 0
      %2691 = vmatprep.subr.bf16.mxu0 0
      %2692 = vmatpush1.bf16.msra.mxu0 0
      %2693 = vmatprep.subr.bf16.mxu0 0
      %2694 = vmatpush1.bf16.msra.mxu0 0
      %2695 = vmatprep.subr.bf16.mxu0 0
      %2696 = vmatpush1.bf16.msra.mxu0 0
      %2697 = vmatprep.subr.bf16.mxu0 0
      %2698 = vmatpush1.bf16.msra.mxu0 0
      %2699 = vmatprep.subr.bf16.mxu0 0
      %2700 = vmatpush1.bf16.msra.mxu0 0
      %2701 = vmatprep.subr.bf16.mxu0 0
      %2702 = vmatpush1.bf16.msra.mxu0 0
      %2703 = vmatprep.subr.bf16.mxu0 0
      %2704 = vmatpush1.bf16.msra.mxu0 0
      %2705 = vmatprep.subr.bf16.mxu0 0
      %2706 = vmatpush1.bf16.msra.mxu0 0
      %2707 = vmatprep.subr.bf16.mxu0 0
      %2708 = vmatpush1.bf16.msra.mxu0 0
      %2709 = vmatprep.subr.bf16.mxu0 0
      %2710 = vmatpush1.bf16.msra.mxu0 0
      %2711 = vmatprep.subr.bf16.mxu0 0
      %2712 = vmatpush1.bf16.msra.mxu0 0
      %2713 = vmatprep.mubr.bf16.mxu0 0
      %2714 = vmatmul.mubr.bf16.gmra.mrb[0].mxu0 %v895
      %v2715 = vpop.f32.mrb[0].mxu0
      %v2716 = vadd.f32 %v2672, %v2715
      %v2717 = vpop.f32.mrb[0].mxu0
      %v2718 = vpop.f32.mrb[0].mxu0
      %v2719 = vadd.f32 %v2675, %v2718
      %v2720 = vpop.f32.mrb[0].mxu0
      %2721 = vdwg.mxu0
      %2722 = vmatprep.subr.bf16.mxu0 0
      %2723 = vmatpush1.bf16.msra.mxu0 %v2679
      %2724 = vmatprep.subr.bf16.mxu0 0
      %2725 = vmatpush1.bf16.msra.mxu0 0
      %2726 = vmatprep.subr.bf16.mxu0 0
      %2727 = vmatpush1.bf16.msra.mxu0 0
      %2728 = vmatprep.subr.bf16.mxu0 0
      %2729 = vmatpush1.bf16.msra.mxu0 0
      %2730 = vmatprep.subr.bf16.mxu0 0
      %2731 = vmatpush1.bf16.msra.mxu0 0
      %2732 = vmatprep.subr.bf16.mxu0 0
      %2733 = vmatpush1.bf16.msra.mxu0 0
      %2734 = vmatprep.subr.bf16.mxu0 0
      %2735 = vmatpush1.bf16.msra.mxu0 0
      %2736 = vmatprep.subr.bf16.mxu0 0
      %2737 = vmatpush1.bf16.msra.mxu0 0
      %2738 = vmatprep.subr.bf16.mxu0 0
      %2739 = vmatpush1.bf16.msra.mxu0 0
      %2740 = vmatprep.subr.bf16.mxu0 0
      %2741 = vmatpush1.bf16.msra.mxu0 0
      %2742 = vmatprep.subr.bf16.mxu0 0
      %2743 = vmatpush1.bf16.msra.mxu0 0
      %2744 = vmatprep.subr.bf16.mxu0 0
      %2745 = vmatpush1.bf16.msra.mxu0 0
      %2746 = vmatprep.subr.bf16.mxu0 0
      %2747 = vmatpush1.bf16.msra.mxu0 0
      %2748 = vmatprep.subr.bf16.mxu0 0
      %2749 = vmatpush1.bf16.msra.mxu0 0
      %2750 = vmatprep.subr.bf16.mxu0 0
      %2751 = vmatpush1.bf16.msra.mxu0 0
      %2752 = vmatprep.subr.bf16.mxu0 0
      %2753 = vmatpush1.bf16.msra.mxu0 0
      %2754 = vmatprep.mubr.bf16.mxu0 0
      %2755 = vmatmul.mubr.bf16.gmra.mrb[0].mxu0 %v986
      %v2756 = vpop.f32.mrb[0].mxu0
      %v2757 = vadd.f32 0.0, %v2756
      %v2758 = vpop.f32.mrb[0].mxu0
      %v2759 = vpop.f32.mrb[0].mxu0
      %v2760 = vadd.f32 0.0, %v2759
      %v2761 = vpop.f32.mrb[0].mxu0
      %2762 = vdwg.mxu0
      %v2763 = vadd.f32 %v2716, %v2757
      %v2764 = vadd.f32 %v2719, %v2760
      %v2765 = vld [vmem:[%s19] sm:$0x1]
      %v2767 = vlaneseq
      %v2768 = vshrl.u32 %v2767, 7
      %v2769 = vsub.s32 0, %v2768
      %v2770 = vrot.slane %v2765, %v2769
      %v2772 = vadd.f32 %v2763, %v2770
      %v2773 = vadd.f32 %v2764, %v2770
      %v2774 = vadd.f32 %v2630, %v2772
      %v2775 = vadd.f32 %v2631, %v2773
      %2776 = vst.msk [vmem:[%s699] sm:$0xff] %vm1204, %v2774
      %2777 = vst.msk [vmem:[%s699 + $0x8] sm:$0xff] %vm1204, %v2775
      %s2778 = smul.u32 2, %s33
      %p2779 = scmp.lt.s32.totalorder %s2778, 3
      %s2780 = scalar_select %p2779, %s2778, 3
      %s2781 = smul.addr %s2780, 8
      %s2782 = scalar_lea.vmem %s22, %s2781
      // Predicated region
      $region109: #{tpu_custom_call.1} parent=107 // pred_check
        %p2783 = pneg %p523
      $region110: #{tpu_custom_call.1} parent=107 // pred_check_branch
        %2785 = sbr.rel (%p2783) target = $region112
      $region111: #{tpu_custom_call.1} parent=107 // pred_region
        %s2786 = smul.u32 2, %s33
      $region112: #{tpu_custom_call.1} parent=107 // pred_fallthru
        _
    $region108: #{tpu_custom_call.1} parent=5 // pred_fallthru
      _
    %p2787 = scmp.le.s32.totalorder 2, %s28
    // Predicated region
    $region113: #{tpu_custom_call.1} parent=5 // pred_check
      %p2788 = pneg %p2787
    $region114: #{tpu_custom_call.1} parent=5 // pred_check_branch
      %2790 = sbr.rel (%p2788) target = $region116
    $region115: #{tpu_custom_call.1} parent=5 // pred_region
      %s2791 = ssub.s32 %s28, 2
      // Predicated region
      $region117: #{tpu_custom_call.1} parent=115 // pred_check
        %p2792 = pneg %p529
      $region118: #{tpu_custom_call.1} parent=115 // pred_check_branch
        %2794 = sbr.rel (%p2792) target = $region120
      $region119: #{tpu_custom_call.1} parent=115 // pred_region
        %s2795 = smul.u32 2, %s34
        %p2796 = scmp.lt.s32.totalorder %s2795, 3
        %s2797 = scalar_select %p2796, %s2795, 3
        %s2798 = smul.addr %s2797, 8
        %s2799 = scalar_lea.vmem %s22, %s2798
      $region120: #{tpu_custom_call.1} parent=115 // pred_fallthru
        _
    $region116: #{tpu_custom_call.1} parent=5 // pred_fallthru
      _
  $region6: #{tpu_custom_call.1} parent=0 // loop_footer
    %s32 = sadd.s32 1, %s28
  $region7: #{tpu_custom_call.1} parent=0 // loop_footer_branch
    %27 = sbr.rel target = $region3
  $region8: #{tpu_custom_call.1} parent=0 // loop_exit
    _

</llo_original>
